<compile_context>
chip_gen: v7x
topology: tpu7x:2x2x1
jax: 0.10.0
libtpu: 0.0.40
codegen_flags: <defaults>
</compile_context>

<pallas_src>
import functools
import math

import jax
import jax.numpy as jnp
import numpy as np
from jax.experimental import pallas as pl
from jax.experimental.pallas import tpu as pltpu


def _round_up(n, m):
    return ((n + m - 1) // m) * m


# ---------------------------------------------------------------------------
# Pallas kernel: full forward for one tile of batch rows.
# ---------------------------------------------------------------------------
def _sm_nesh_kernel(x_ref, bt_ref, w0s_ref, w0c_ref, b0_ref,
                    w1_ref, b1_ref, w2_ref, b2_ref,
                    wh_ref, bh_ref, scale_ref, out_ref,
                    *, n_mid, out_size, compute_dtype):
    f32 = jnp.float32
    x = x_ref[...]                                             # (TM, 3) f32

    # --- input_mapping (Fourier features); B pre-transposed host-side -----
    x_proj = (2.0 * jnp.pi) * jnp.dot(x, bt_ref[...],
                                      preferred_element_type=f32)  # (TM, lpos)
    sin_e = jnp.sin(x_proj).astype(compute_dtype)
    cos_e = jnp.cos(x_proj).astype(compute_dtype)

    # --- first MLP layer: progressive mask already folded into w0s/w0c ----
    h = (jnp.dot(sin_e, w0s_ref[...], preferred_element_type=f32)
         + jnp.dot(cos_e, w0c_ref[...], preferred_element_type=f32))
    h = jnp.maximum(h + b0_ref[...], 0.0)                      # (TM, hidden)

    # --- weight-shared middle layers (same Linear reused n_mid times) -----
    tm, hid = h.shape
    w1 = w1_ref[...]
    b1 = jnp.broadcast_to(b1_ref[...], (tm, hid))              # hoisted broadcast
    for _ in range(n_mid):
        h = jnp.maximum(
            jnp.dot(h.astype(compute_dtype), w1,
                    preferred_element_type=f32) + b1, 0.0)

    # --- last MLP layer ----------------------------------------------------
    h = jnp.maximum(
        jnp.dot(h.astype(compute_dtype), w2_ref[...],
                preferred_element_type=f32) + b2_ref[...], 0.0)

    # --- fused heads: [fod (out_size) | intra frac de dp | s0 | zero-pad] --
    heads = jnp.dot(h.astype(compute_dtype), wh_ref[...],
                    preferred_element_type=f32) + bh_ref[...]  # (TM, out_pad)

    lane = jax.lax.broadcasted_iota(jnp.int32, heads.shape, 1)
    # Whole-tile sigmoid / softplus: lanes pad to 128 anyway, so this costs the
    # same vregs as slicing would, with no layout churn.  Exact (non-approx)
    # reciprocal keeps the tight tolerance vs the f32 reference.
    sig = 1.0 / (1.0 + jnp.exp(-heads))
    sp = jnp.maximum(heads, 0.0) + jnp.log(1.0 + jnp.exp(-jnp.abs(heads)))
    act = jnp.where(lane < out_size, heads,
                    jnp.where(lane == out_size + 4, sp, sig))
    # scale: 1 for fod lanes, [4, 1, 4, 1.5, 1] for the heads, 0 for padding.
    out_ref[...] = act * scale_ref[...]


# ---------------------------------------------------------------------------
# Wrapper
# ---------------------------------------------------------------------------
def sm_nesh_forward(x, params, *, n_layers, t_frac=None, tile_m=512,
                    compute_dtype=jnp.float32):
    """x: (N, 3) float32.  Returns (N, 1 + output_size + 5) float32."""
    Bm, w0, b0, w1, b1, w2, b2, wf, bf, wh, bh = params
    N = x.shape[0]
    lpos = Bm.shape[0]
    hidden = w0.shape[1]
    out_size = wf.shape[1]
    emb_dim = 2 * lpos
    n_head = out_size + 5
    out_pad = _round_up(n_head, 128)      # lane-dense output width
    n_mid = n_layers - 2
    assert tile_m % 8 == 0

    # progressive_emb mask (static, computed host-side from t_frac).
    a = np.ones((emb_dim,), dtype=np.float32)
    if t_frac is not None:
        start = int(t_frac * emb_dim + 3)
        end = int(t_frac * emb_dim + 4)
        a[start:end] = t_frac * emb_dim - int(t_frac * emb_dim)
        a[end:] = 0.0

    # Fold the mask into the first-layer weights and split sin/cos halves;
    # avoids the sin/cos concat and the mask multiply inside the kernel.
    mask_sin = jnp.asarray(a[:lpos])[:, None]
    mask_cos = jnp.asarray(a[lpos:])[:, None]
    w0s = (w0[:lpos] * mask_sin).astype(compute_dtype)
    w0c = (w0[lpos:] * mask_cos).astype(compute_dtype)

    BmT = Bm.T                                               # (3, lpos), f32

    # Fuse fod + scalar heads into one matmul, zero-padded to a 128 multiple.
    w_head = jnp.concatenate([wf, wh], axis=1)               # (hidden, n_head)
    b_head = jnp.concatenate([bf, bh], axis=1)               # (1, n_head)
    w_head = jnp.pad(w_head, ((0, 0), (0, out_pad - n_head))).astype(compute_dtype)
    b_head = jnp.pad(b_head, ((0, 0), (0, out_pad - n_head)))

    scale = np.ones((1, out_pad), dtype=np.float32)
    scale[0, out_size:out_size + 4] = [4.0, 1.0, 4.0, 1.5]   # intra/frac/de/dp
    scale[0, n_head:] = 0.0                                  # zero the padding
    scale = jnp.asarray(scale)

    w1c = w1.astype(compute_dtype)
    w2c = w2.astype(compute_dtype)

    # Pad the batch to a multiple of tile_m (ragged tail -> zero padding).
    N_pad = _round_up(max(N, 1), tile_m)
    x_in = jnp.pad(x, ((0, N_pad - N), (0, 0))) if N_pad != N else x
    grid = (N_pad // tile_m,)   # keep an even grid on v7x (2 TCs) when sweeping

    def full(arr):
        nd = arr.ndim
        return pl.BlockSpec(arr.shape, lambda i, _nd=nd: (0,) * _nd)

    in_specs = [
        pl.BlockSpec((tile_m, 3), lambda i: (i, 0)),         # x
        full(BmT), full(w0s), full(w0c), full(b0),
        full(w1c), full(b1), full(w2c), full(b2),
        full(w_head), full(b_head), full(scale),
    ]
    out_specs = pl.BlockSpec((tile_m, out_pad), lambda i: (i, 0))

    kernel = functools.partial(_sm_nesh_kernel, n_mid=n_mid,
                               out_size=out_size, compute_dtype=compute_dtype)
    heads_out = pl.pallas_call(
        kernel,
        out_shape=jax.ShapeDtypeStruct((N_pad, out_pad), jnp.float32),
        grid=grid,
        in_specs=in_specs,
        out_specs=out_specs,
        # VMEM use is tiny even at tile_m=2048 (<3 MiB), so the default scoped
        # limit is fine on v5e/v6e/v7x; no vmem_limit_bytes needed.
        compiler_params=pltpu.CompilerParams(
            dimension_semantics=("parallel",)),
    )(x_in, BmT, w0s, w0c, b0, w1c, b1, w2c, b2, w_head, b_head, scale)

    # Prepend the constant p00 column and drop batch/lane padding in XLA.
    p00 = jnp.full((N, 1), 1.0 / math.sqrt(4.0 * math.pi), dtype=jnp.float32)
    return jnp.concatenate([p00, heads_out[:N, :n_head]], axis=-1)


# ---------------------------------------------------------------------------
# Pure-JAX reference (mirrors the PyTorch forward) for verification.
# ---------------------------------------------------------------------------
def sm_nesh_reference(x, params, *, n_layers, t_frac=None):
    Bm, w0, b0, w1, b1, w2, b2, wf, bf, wh, bh = params
    x_proj = 2.0 * jnp.pi * x @ Bm.T
    x_emb = jnp.concatenate([jnp.sin(x_proj), jnp.cos(x_proj)], axis=-1)
    if t_frac is not None:
        emb_dim = x_emb.shape[1]
        a = np.ones((emb_dim,), dtype=np.float32)
        start = int(t_frac * emb_dim + 3)
        end = int(t_frac * emb_dim + 4)
        a[start:end] = t_frac * emb_dim - int(t_frac * emb_dim)
        a[end:] = 0.0
        x_emb = x_emb * jnp.asarray(a)[None, :]
    h = jnp.maximum(x_emb @ w0 + b0, 0.0)
    for _ in range(n_layers - 2):
        h = jnp.maximum(h @ w1 + b1, 0.0)
    h = jnp.maximum(h @ w2 + b2, 0.0)
    fod = h @ wf + bf
    heads = h @ wh + bh
    sig = jax.nn.sigmoid(heads[:, :4]) * jnp.asarray([4.0, 1.0, 4.0, 1.5])
    s0 = jax.nn.softplus(heads[:, 4:5])
    p00 = jnp.full((x.shape[0], 1), 1.0 / math.sqrt(4.0 * math.pi), dtype=jnp.float32)
    return jnp.concatenate([p00, fod, sig, s0], axis=-1)


# ---------------------------------------------------------------------------
# Deterministic parameter construction (synthetic; no checkpoint loading).
# ---------------------------------------------------------------------------
def make_params(key, *, lpos, hidden, l_max, sigma):
    out_size = (l_max + 1) * (l_max + 2) // 2 - 1
    ks = jax.random.split(key, 12)

    def linear(k, fan_in, fan_out):
        kw, kb = jax.random.split(k)
        bound = 1.0 / math.sqrt(fan_in)
        w = jax.random.uniform(kw, (fan_in, fan_out), jnp.float32, -bound, bound)
        b = jax.random.uniform(kb, (1, fan_out), jnp.float32, -bound, bound)
        return w, b

    Bm = jax.random.normal(ks[0], (lpos, 3), jnp.float32) * sigma
    w0, b0 = linear(ks[1], 2 * lpos, hidden)
    w1, b1 = linear(ks[2], hidden, hidden)     # shared middle layer
    w2, b2 = linear(ks[3], hidden, hidden)
    wf, bf = linear(ks[4], hidden, out_size)   # fod_head
    # intra / frac / de / dp / s0 heads stacked into one (hidden, 5) matmul
    hws, hbs = [], []
    for i in range(5):
        w, b = linear(ks[5 + i], hidden, 1)
        hws.append(w)
        hbs.append(b)
    wh = jnp.concatenate(hws, axis=1)
    bh = jnp.concatenate(hbs, axis=1)
    return (Bm, w0, b0, w1, b1, w2, b2, wf, bf, wh, bh)


if __name__ == "__main__":
    # Small configuration consistent with the module's __init__.
    L_MAX, LPOS, HIDDEN, N_LAYERS, SIGMA = 4, 8, 32, 4, 1.0
    N = 1000          # ragged on purpose: exercises batch padding
    TILE_M = 256      # -> grid of 4 tiles (even split across v7x's 2 TCs)

    key = jax.random.PRNGKey(0)
    kp, kx = jax.random.split(key)
    params = make_params(kp, lpos=LPOS, hidden=HIDDEN, l_max=L_MAX, sigma=SIGMA)
    x = jax.random.uniform(kx, (N, 3), jnp.float32, -1.0, 1.0)

    # f32 MXU path: tight check against the pure-JAX reference.
    for t_frac in (None, 0.5):
        out = sm_nesh_forward(x, params, n_layers=N_LAYERS, t_frac=t_frac,
                              tile_m=TILE_M)
        out = jax.block_until_ready(out)
        ref = sm_nesh_reference(x, params, n_layers=N_LAYERS, t_frac=t_frac)
        np.testing.assert_allclose(np.asarray(out), np.asarray(ref),
                                   rtol=1e-4, atol=1e-5)

    # bf16 MXU operands (v6e/v7x recommendation): run and sanity-check.
    out_bf16 = sm_nesh_forward(x, params, n_layers=N_LAYERS, t_frac=0.5,
                               tile_m=TILE_M, compute_dtype=jnp.bfloat16)
    out_bf16 = jax.block_until_ready(out_bf16)
    assert bool(jnp.isfinite(out_bf16).all())

    print("KERNEL_OK")
</pallas_src>

<mosaic_0001>
module attributes {stable_mosaic.version = 11 : i64} {
  func.func @_sm_nesh_kernel(%arg0: i32, %arg1: memref<256x3xf32, #tpu.memory_space<vmem>>, %arg2: memref<3x8xf32, #tpu.memory_space<vmem>>, %arg3: memref<8x32xf32, #tpu.memory_space<vmem>>, %arg4: memref<8x32xf32, #tpu.memory_space<vmem>>, %arg5: memref<1x32xf32, #tpu.memory_space<vmem>>, %arg6: memref<32x32xf32, #tpu.memory_space<vmem>>, %arg7: memref<1x32xf32, #tpu.memory_space<vmem>>, %arg8: memref<32x32xf32, #tpu.memory_space<vmem>>, %arg9: memref<1x32xf32, #tpu.memory_space<vmem>>, %arg10: memref<32x128xf32, #tpu.memory_space<vmem>>, %arg11: memref<1x128xf32, #tpu.memory_space<vmem>>, %arg12: memref<1x128xf32, #tpu.memory_space<vmem>>, %arg13: memref<256x128xf32, #tpu.memory_space<vmem>>) attributes {dimension_semantics = [#tpu.dimension_semantics<parallel>], iteration_bounds = array<i64: 4>, scalar_prefetch = 0 : i64, scratch_operands = 0 : i64, tpu.core_type = #tpu.core_type<tc>, window_params = [{transform_indices = @transform_0, window_bounds = array<i64: 256, 3>}, {pipeline_mode = #tpu.pipeline_mode<synchronous>, transform_indices = @transform_1, window_bounds = array<i64: 3, 8>}, {pipeline_mode = #tpu.pipeline_mode<synchronous>, transform_indices = @transform_2, window_bounds = array<i64: 8, 32>}, {pipeline_mode = #tpu.pipeline_mode<synchronous>, transform_indices = @transform_3, window_bounds = array<i64: 8, 32>}, {pipeline_mode = #tpu.pipeline_mode<synchronous>, transform_indices = @transform_4, window_bounds = array<i64: 1, 32>}, {pipeline_mode = #tpu.pipeline_mode<synchronous>, transform_indices = @transform_5, window_bounds = array<i64: 32, 32>}, {pipeline_mode = #tpu.pipeline_mode<synchronous>, transform_indices = @transform_6, window_bounds = array<i64: 1, 32>}, {pipeline_mode = #tpu.pipeline_mode<synchronous>, transform_indices = @transform_7, window_bounds = array<i64: 32, 32>}, {pipeline_mode = #tpu.pipeline_mode<synchronous>, transform_indices = @transform_8, window_bounds = array<i64: 1, 32>}, {pipeline_mode = #tpu.pipeline_mode<synchronous>, transform_indices = @transform_9, window_bounds = array<i64: 32, 128>}, {pipeline_mode = #tpu.pipeline_mode<synchronous>, transform_indices = @transform_10, window_bounds = array<i64: 1, 128>}, {pipeline_mode = #tpu.pipeline_mode<synchronous>, transform_indices = @transform_11, window_bounds = array<i64: 1, 128>}, {transform_indices = @transform_12, window_bounds = array<i64: 256, 128>}]} {
    %c0 = arith.constant 0 : index
    %c0_0 = arith.constant 0 : index
    %0 = vector.load %arg1[%c0, %c0_0] : memref<256x3xf32, #tpu.memory_space<vmem>>, vector<256x3xf32>
    %c0_1 = arith.constant 0 : index
    %c0_2 = arith.constant 0 : index
    %1 = vector.load %arg2[%c0_1, %c0_2] : memref<3x8xf32, #tpu.memory_space<vmem>>, vector<3x8xf32>
    %cst = arith.constant dense<0.000000e+00> : vector<256x8xf32>
    %2 = tpu.matmul %0, %1, %cst {dimension_numbers = #tpu.dot_dimension_numbers<[1], [0], [0], [1], [0, 0, 1, 1], [], []>} : vector<256x3xf32>, vector<3x8xf32>, vector<256x8xf32> -> vector<256x8xf32>
    %cst_3 = arith.constant 6.28318548 : f32
    %3 = vector.broadcast %cst_3 : f32 to vector<256x8xf32>
    %4 = arith.mulf %3, %2 : vector<256x8xf32>
    %5 = math.sin %4 : vector<256x8xf32>
    %6 = math.cos %4 : vector<256x8xf32>
    %c0_4 = arith.constant 0 : index
    %c0_5 = arith.constant 0 : index
    %7 = vector.load %arg3[%c0_4, %c0_5] : memref<8x32xf32, #tpu.memory_space<vmem>>, vector<8x32xf32>
    %cst_6 = arith.constant dense<0.000000e+00> : vector<256x32xf32>
    %8 = tpu.matmul %5, %7, %cst_6 {dimension_numbers = #tpu.dot_dimension_numbers<[1], [0], [0], [1], [0, 0, 1, 1], [], []>} : vector<256x8xf32>, vector<8x32xf32>, vector<256x32xf32> -> vector<256x32xf32>
    %c0_7 = arith.constant 0 : index
    %c0_8 = arith.constant 0 : index
    %9 = vector.load %arg4[%c0_7, %c0_8] : memref<8x32xf32, #tpu.memory_space<vmem>>, vector<8x32xf32>
    %cst_9 = arith.constant dense<0.000000e+00> : vector<256x32xf32>
    %10 = tpu.matmul %6, %9, %cst_9 {dimension_numbers = #tpu.dot_dimension_numbers<[1], [0], [0], [1], [0, 0, 1, 1], [], []>} : vector<256x8xf32>, vector<8x32xf32>, vector<256x32xf32> -> vector<256x32xf32>
    %11 = arith.addf %8, %10 : vector<256x32xf32>
    %c0_10 = arith.constant 0 : index
    %c0_11 = arith.constant 0 : index
    %12 = vector.load %arg5[%c0_10, %c0_11] : memref<1x32xf32, #tpu.memory_space<vmem>>, vector<1x32xf32>
    %13 = vector.broadcast %12 : vector<1x32xf32> to vector<256x32xf32>
    %14 = arith.addf %11, %13 : vector<256x32xf32>
    %cst_12 = arith.constant 0.000000e+00 : f32
    %15 = vector.broadcast %cst_12 : f32 to vector<256x32xf32>
    %16 = arith.maximumf %14, %15 : vector<256x32xf32>
    %c0_13 = arith.constant 0 : index
    %c0_14 = arith.constant 0 : index
    %17 = vector.load %arg6[%c0_13, %c0_14] : memref<32x32xf32, #tpu.memory_space<vmem>>, vector<32x32xf32>
    %c0_15 = arith.constant 0 : index
    %c0_16 = arith.constant 0 : index
    %18 = vector.load %arg7[%c0_15, %c0_16] : memref<1x32xf32, #tpu.memory_space<vmem>>, vector<1x32xf32>
    %19 = vector.shape_cast %18 : vector<1x32xf32> to vector<1x32xf32>
    %20 = vector.broadcast %19 : vector<1x32xf32> to vector<256x32xf32>
    %cst_17 = arith.constant dense<0.000000e+00> : vector<256x32xf32>
    %21 = tpu.matmul %16, %17, %cst_17 {dimension_numbers = #tpu.dot_dimension_numbers<[1], [0], [0], [1], [0, 0, 1, 1], [], []>} : vector<256x32xf32>, vector<32x32xf32>, vector<256x32xf32> -> vector<256x32xf32>
    %22 = arith.addf %21, %20 : vector<256x32xf32>
    %cst_18 = arith.constant 0.000000e+00 : f32
    %23 = vector.broadcast %cst_18 : f32 to vector<256x32xf32>
    %24 = arith.maximumf %22, %23 : vector<256x32xf32>
    %cst_19 = arith.constant dense<0.000000e+00> : vector<256x32xf32>
    %25 = tpu.matmul %24, %17, %cst_19 {dimension_numbers = #tpu.dot_dimension_numbers<[1], [0], [0], [1], [0, 0, 1, 1], [], []>} : vector<256x32xf32>, vector<32x32xf32>, vector<256x32xf32> -> vector<256x32xf32>
    %26 = arith.addf %25, %20 : vector<256x32xf32>
    %cst_20 = arith.constant 0.000000e+00 : f32
    %27 = vector.broadcast %cst_20 : f32 to vector<256x32xf32>
    %28 = arith.maximumf %26, %27 : vector<256x32xf32>
    %c0_21 = arith.constant 0 : index
    %c0_22 = arith.constant 0 : index
    %29 = vector.load %arg8[%c0_21, %c0_22] : memref<32x32xf32, #tpu.memory_space<vmem>>, vector<32x32xf32>
    %cst_23 = arith.constant dense<0.000000e+00> : vector<256x32xf32>
    %30 = tpu.matmul %28, %29, %cst_23 {dimension_numbers = #tpu.dot_dimension_numbers<[1], [0], [0], [1], [0, 0, 1, 1], [], []>} : vector<256x32xf32>, vector<32x32xf32>, vector<256x32xf32> -> vector<256x32xf32>
    %c0_24 = arith.constant 0 : index
    %c0_25 = arith.constant 0 : index
    %31 = vector.load %arg9[%c0_24, %c0_25] : memref<1x32xf32, #tpu.memory_space<vmem>>, vector<1x32xf32>
    %32 = vector.broadcast %31 : vector<1x32xf32> to vector<256x32xf32>
    %33 = arith.addf %30, %32 : vector<256x32xf32>
    %cst_26 = arith.constant 0.000000e+00 : f32
    %34 = vector.broadcast %cst_26 : f32 to vector<256x32xf32>
    %35 = arith.maximumf %33, %34 : vector<256x32xf32>
    %c0_27 = arith.constant 0 : index
    %c0_28 = arith.constant 0 : index
    %36 = vector.load %arg10[%c0_27, %c0_28] : memref<32x128xf32, #tpu.memory_space<vmem>>, vector<32x128xf32>
    %cst_29 = arith.constant dense<0.000000e+00> : vector<256x128xf32>
    %37 = tpu.matmul %35, %36, %cst_29 {dimension_numbers = #tpu.dot_dimension_numbers<[1], [0], [0], [1], [0, 0, 1, 1], [], []>} : vector<256x32xf32>, vector<32x128xf32>, vector<256x128xf32> -> vector<256x128xf32>
    %c0_30 = arith.constant 0 : index
    %c0_31 = arith.constant 0 : index
    %38 = vector.load %arg11[%c0_30, %c0_31] : memref<1x128xf32, #tpu.memory_space<vmem>>, vector<1x128xf32>
    %39 = vector.broadcast %38 : vector<1x128xf32> to vector<256x128xf32>
    %40 = arith.addf %37, %39 : vector<256x128xf32>
    %41 = tpu.iota {dimensions = array<i32: 1>} : vector<256x128xi32>
    %cst_32 = arith.constant 0.000000e+00 : f32
    %42 = vector.broadcast %cst_32 : f32 to vector<256x128xf32>
    %43 = arith.subf %42, %40 : vector<256x128xf32>
    %44 = math.exp %43 : vector<256x128xf32>
    %cst_33 = arith.constant 1.000000e+00 : f32
    %45 = vector.broadcast %cst_33 : f32 to vector<256x128xf32>
    %46 = arith.addf %45, %44 : vector<256x128xf32>
    %cst_34 = arith.constant 1.000000e+00 : f32
    %47 = vector.broadcast %cst_34 : f32 to vector<256x128xf32>
    %48 = arith.divf %47, %46 : vector<256x128xf32>
    %cst_35 = arith.constant 0.000000e+00 : f32
    %49 = vector.broadcast %cst_35 : f32 to vector<256x128xf32>
    %50 = arith.maximumf %40, %49 : vector<256x128xf32>
    %51 = math.absf %40 : vector<256x128xf32>
    %cst_36 = arith.constant 0.000000e+00 : f32
    %52 = vector.broadcast %cst_36 : f32 to vector<256x128xf32>
    %53 = arith.subf %52, %51 : vector<256x128xf32>
    %54 = math.exp %53 : vector<256x128xf32>
    %cst_37 = arith.constant 1.000000e+00 : f32
    %55 = vector.broadcast %cst_37 : f32 to vector<256x128xf32>
    %56 = arith.addf %55, %54 : vector<256x128xf32>
    %57 = math.log %56 : vector<256x128xf32>
    %58 = arith.addf %50, %57 : vector<256x128xf32>
    %c14_i32 = arith.constant 14 : i32
    %59 = vector.broadcast %c14_i32 : i32 to vector<256x128xi32>
    %60 = arith.cmpi slt, %41, %59 : vector<256x128xi32>
    %c18_i32 = arith.constant 18 : i32
    %61 = vector.broadcast %c18_i32 : i32 to vector<256x128xi32>
    %62 = arith.cmpi eq, %41, %61 : vector<256x128xi32>
    %63 = arith.select %62, %58, %48 : vector<256x128xi1>, vector<256x128xf32>
    %64 = arith.select %60, %40, %63 : vector<256x128xi1>, vector<256x128xf32>
    %c0_38 = arith.constant 0 : index
    %c0_39 = arith.constant 0 : index
    %65 = vector.load %arg12[%c0_38, %c0_39] : memref<1x128xf32, #tpu.memory_space<vmem>>, vector<1x128xf32>
    %66 = vector.broadcast %65 : vector<1x128xf32> to vector<256x128xf32>
    %67 = arith.mulf %64, %66 : vector<256x128xf32>
    %c0_40 = arith.constant 0 : index
    %c0_41 = arith.constant 0 : index
    %68 = vector.load %arg13[%c0_40, %c0_41] : memref<256x128xf32, #tpu.memory_space<vmem>>, vector<256x128xf32>
    tpu.vector_store %arg13[%c0_40, %c0_41], %67 {strides = array<i32>} : memref<256x128xf32, #tpu.memory_space<vmem>>, vector<256x128xf32>,
    return
  }
  func.func @transform_0(%arg0: i32) -> (i32, i32) {
    %c0_i32 = arith.constant 0 : i32
    %c0_i32_0 = arith.constant 0 : i32
    return %arg0, %c0_i32 : i32, i32
  }
  func.func @transform_1(%arg0: i32) -> (i32, i32) {
    %c0_i32 = arith.constant 0 : i32
    %c0_i32_0 = arith.constant 0 : i32
    %c0_i32_1 = arith.constant 0 : i32
    return %c0_i32, %c0_i32_0 : i32, i32
  }
  func.func @transform_2(%arg0: i32) -> (i32, i32) {
    %c0_i32 = arith.constant 0 : i32
    %c0_i32_0 = arith.constant 0 : i32
    %c0_i32_1 = arith.constant 0 : i32
    return %c0_i32, %c0_i32_0 : i32, i32
  }
  func.func @transform_3(%arg0: i32) -> (i32, i32) {
    %c0_i32 = arith.constant 0 : i32
    %c0_i32_0 = arith.constant 0 : i32
    %c0_i32_1 = arith.constant 0 : i32
    return %c0_i32, %c0_i32_0 : i32, i32
  }
  func.func @transform_4(%arg0: i32) -> (i32, i32) {
    %c0_i32 = arith.constant 0 : i32
    %c0_i32_0 = arith.constant 0 : i32
    %c0_i32_1 = arith.constant 0 : i32
    return %c0_i32, %c0_i32_0 : i32, i32
  }
  func.func @transform_5(%arg0: i32) -> (i32, i32) {
    %c0_i32 = arith.constant 0 : i32
    %c0_i32_0 = arith.constant 0 : i32
    %c0_i32_1 = arith.constant 0 : i32
    return %c0_i32, %c0_i32_0 : i32, i32
  }
  func.func @transform_6(%arg0: i32) -> (i32, i32) {
    %c0_i32 = arith.constant 0 : i32
    %c0_i32_0 = arith.constant 0 : i32
    %c0_i32_1 = arith.constant 0 : i32
    return %c0_i32, %c0_i32_0 : i32, i32
  }
  func.func @transform_7(%arg0: i32) -> (i32, i32) {
    %c0_i32 = arith.constant 0 : i32
    %c0_i32_0 = arith.constant 0 : i32
    %c0_i32_1 = arith.constant 0 : i32
    return %c0_i32, %c0_i32_0 : i32, i32
  }
  func.func @transform_8(%arg0: i32) -> (i32, i32) {
    %c0_i32 = arith.constant 0 : i32
    %c0_i32_0 = arith.constant 0 : i32
    %c0_i32_1 = arith.constant 0 : i32
    return %c0_i32, %c0_i32_0 : i32, i32
  }
  func.func @transform_9(%arg0: i32) -> (i32, i32) {
    %c0_i32 = arith.constant 0 : i32
    %c0_i32_0 = arith.constant 0 : i32
    %c0_i32_1 = arith.constant 0 : i32
    return %c0_i32, %c0_i32_0 : i32, i32
  }
  func.func @transform_10(%arg0: i32) -> (i32, i32) {
    %c0_i32 = arith.constant 0 : i32
    %c0_i32_0 = arith.constant 0 : i32
    %c0_i32_1 = arith.constant 0 : i32
    return %c0_i32, %c0_i32_0 : i32, i32
  }
  func.func @transform_11(%arg0: i32) -> (i32, i32) {
    %c0_i32 = arith.constant 0 : i32
    %c0_i32_0 = arith.constant 0 : i32
    %c0_i32_1 = arith.constant 0 : i32
    return %c0_i32, %c0_i32_0 : i32, i32
  }
  func.func @transform_12(%arg0: i32) -> (i32, i32) {
    %c0_i32 = arith.constant 0 : i32
    %c0_i32_0 = arith.constant 0 : i32
    return %arg0, %c0_i32 : i32, i32
  }
}

</mosaic_0001>

<llo_original>
// kernel: tpu_custom_call.1
$region0: #{tpu_custom_call.1}
  #allocation0 [shape = 'u32[]', space=smem, size = 0x4, offset = 0x4, fixed_abs, tag = 'smem constant byte address 0x4 - core index']
  #allocation1 [shape = 'u32[144,128]{1,0:T(1,128)}', space=vmem, size = 0x12000, scoped, tag = 'internal scratch']
  %s0 = inlined_call_operand.vmem [shape: f32[1024,3], index: 0, kind: input, shape index: {}]
  %s1 = inlined_call_operand.vmem [shape: f32[3,8], index: 1, kind: input, shape index: {}]
  %s2 = inlined_call_operand.vmem [shape: f32[8,32], index: 2, kind: input, shape index: {}]
  %s3 = inlined_call_operand.vmem [shape: f32[8,32], index: 3, kind: input, shape index: {}]
  %s4 = inlined_call_operand.vmem [shape: f32[1,32], index: 4, kind: input, shape index: {}]
  %s5 = inlined_call_operand.vmem [shape: f32[32,32], index: 5, kind: input, shape index: {}]
  %s6 = inlined_call_operand.vmem [shape: f32[1,32], index: 6, kind: input, shape index: {}]
  %s7 = inlined_call_operand.vmem [shape: f32[32,32], index: 7, kind: input, shape index: {}]
  %s8 = inlined_call_operand.vmem [shape: f32[1,32], index: 8, kind: input, shape index: {}]
  %s9 = inlined_call_operand.vmem [shape: f32[32,128], index: 9, kind: input, shape index: {}]
  %s10 = inlined_call_operand.vmem [shape: f32[1,128], index: 10, kind: input, shape index: {}]
  %s11 = inlined_call_operand.vmem [shape: f32[1,128], index: 11, kind: input, shape index: {}]
  %s12 = inlined_call_operand.hbm [shape: f32[1024,128], index: 12, kind: output, shape index: {}]
  %s13 = sld [smem:[#allocation0]]
  $region81: #{tpu_custom_call.1} parent=0
    _
  %s15 = ssub.s32 1, %s13
  %s16 = scalar_select 0, %s15, %s13
  $region1: #{tpu_custom_call.1} parent=0
    #allocation2 [shape = 'u8[262144]{0}', space=vmem, size = 0x40000, scoped, tag = 'output window, operand 0']
    #allocation3 [shape = 's32[2]{0}', space=sflag, size = 0x8, scoped, tag = 'scoped memory for tpu_custom_call.1']
    %17 = vsyncpa [#allocation3], 0
    %s18 = scalar_lea.sflag [#allocation3], 1
    %19 = vsyncpa %s18, 0
    loop: start=0, step=1, limit=6
    $region2: #{tpu_custom_call.1} parent=1 // loop_pre_header
      _
    $region3: #{tpu_custom_call.1} parent=1 // loop_header
      %s21 = sphi 0, %s25
      %p22 = scmp.ge.s32.totalorder %s21, 6
      %s31 = sphi 0, %s33
      %s34 = sphi 0, %s31
      %s35 = sphi 0, %s34
      %s51 = sphi 0, %s35
      %s55 = sphi 0, %s55
      %s57 = sphi 0, %s55
      %s58 = sphi 0, %s57
      %s72 = sphi 0, %s58
      %s76 = sphi 0, %s76
      %s78 = sphi 0, %s76
      %s79 = sphi 0, %s78
      %s93 = sphi 0, %s79
      %s97 = sphi 0, %s97
      %s99 = sphi 0, %s97
      %s100 = sphi 0, %s99
      %s114 = sphi 0, %s100
      %s118 = sphi 0, %s118
      %s120 = sphi 0, %s118
      %s121 = sphi 0, %s120
      %s135 = sphi 0, %s121
      %s139 = sphi 0, %s139
      %s141 = sphi 0, %s139
      %s142 = sphi 0, %s141
      %s156 = sphi 0, %s142
      %s160 = sphi 0, %s160
      %s162 = sphi 0, %s160
      %s163 = sphi 0, %s162
      %s177 = sphi 0, %s163
      %s181 = sphi 0, %s181
      %s183 = sphi 0, %s181
      %s184 = sphi 0, %s183
      %s198 = sphi 0, %s184
      %s202 = sphi 0, %s202
      %s204 = sphi 0, %s202
      %s205 = sphi 0, %s204
      %s219 = sphi 0, %s205
      %s223 = sphi 0, %s223
      %s225 = sphi 0, %s223
      %s226 = sphi 0, %s225
      %s240 = sphi 0, %s226
      %s244 = sphi 0, %s244
      %s246 = sphi 0, %s244
      %s247 = sphi 0, %s246
      %s261 = sphi 0, %s247
      %s265 = sphi 0, %s265
      %s267 = sphi 0, %s265
      %s268 = sphi 0, %s267
      %s282 = sphi 0, %s268
      %s288 = sphi 0, %s290
      %s291 = sphi 0, %s288
      %s292 = sphi 0, %s291
      %s308 = sphi 0, %s292
    $region4: #{tpu_custom_call.1} parent=1 // loop_header_branch
      %24 = sbr.rel (%p22) target = $region8
    $region5: #{tpu_custom_call.1} parent=1 // loop_body
      %s26 = ssub.s32 %s21, 1
      %s27 = ssub.s32 %s21, 2
      %s28 = sadd.s32 %s21, 1
      %s29 = ssub.s32 %s21, %s28
      %p30 = scmp.eq.s32.totalorder %s29, 0
      %s32 = sadd.s32 %s31, 1
      %s33 = scalar_select %p30, %s31, %s32
      %p36 = pneg %p30
      %p37 = scmp.eq.s32.totalorder %s21, 3
      %p38 = por %p36, %p37
      %p39 = scmp.ne.s32.totalorder %s31, %s34
      %p40 = scmp.eq.s32.totalorder %s21, 0
      %p41 = por %p39, %p40
      %p42 = scmp.ne.s32.totalorder %s31, %s34
      %p43 = scmp.eq.s32.totalorder %s26, 3
      %p44 = por %p42, %p43
      %p45 = scmp.ne.s32.totalorder %s34, %s35
      %p46 = scmp.eq.s32.totalorder %s26, 0
      %p47 = por %p45, %p46
      %p48 = scmp.ne.s32.totalorder %s34, %s35
      %p49 = scmp.eq.s32.totalorder %s27, 3
      %p50 = por %p48, %p49
      %p52 = scmp.ne.s32.totalorder %s35, %s51
      %p53 = scmp.eq.s32.totalorder %s27, 0
      %p54 = por %p52, %p53
      %s56 = sadd.s32 %s55, 1
      %p59 = scmp.eq.s32.totalorder %s21, 3
      %p60 = scmp.ne.s32.totalorder %s55, %s57
      %p61 = scmp.eq.s32.totalorder %s21, 0
      %p62 = por %p60, %p61
      %p63 = scmp.ne.s32.totalorder %s55, %s57
      %p64 = scmp.eq.s32.totalorder %s26, 3
      %p65 = por %p63, %p64
      %p66 = scmp.ne.s32.totalorder %s57, %s58
      %p67 = scmp.eq.s32.totalorder %s26, 0
      %p68 = por %p66, %p67
      %p69 = scmp.ne.s32.totalorder %s57, %s58
      %p70 = scmp.eq.s32.totalorder %s27, 3
      %p71 = por %p69, %p70
      %p73 = scmp.ne.s32.totalorder %s58, %s72
      %p74 = scmp.eq.s32.totalorder %s27, 0
      %p75 = por %p73, %p74
      %s77 = sadd.s32 %s76, 1
      %p80 = scmp.eq.s32.totalorder %s21, 3
      %p81 = scmp.ne.s32.totalorder %s76, %s78
      %p82 = scmp.eq.s32.totalorder %s21, 0
      %p83 = por %p81, %p82
      %p84 = scmp.ne.s32.totalorder %s76, %s78
      %p85 = scmp.eq.s32.totalorder %s26, 3
      %p86 = por %p84, %p85
      %p87 = scmp.ne.s32.totalorder %s78, %s79
      %p88 = scmp.eq.s32.totalorder %s26, 0
      %p89 = por %p87, %p88
      %p90 = scmp.ne.s32.totalorder %s78, %s79
      %p91 = scmp.eq.s32.totalorder %s27, 3
      %p92 = por %p90, %p91
      %p94 = scmp.ne.s32.totalorder %s79, %s93
      %p95 = scmp.eq.s32.totalorder %s27, 0
      %p96 = por %p94, %p95
      %s98 = sadd.s32 %s97, 1
      %p101 = scmp.eq.s32.totalorder %s21, 3
      %p102 = scmp.ne.s32.totalorder %s97, %s99
      %p103 = scmp.eq.s32.totalorder %s21, 0
      %p104 = por %p102, %p103
      %p105 = scmp.ne.s32.totalorder %s97, %s99
      %p106 = scmp.eq.s32.totalorder %s26, 3
      %p107 = por %p105, %p106
      %p108 = scmp.ne.s32.totalorder %s99, %s100
      %p109 = scmp.eq.s32.totalorder %s26, 0
      %p110 = por %p108, %p109
      %p111 = scmp.ne.s32.totalorder %s99, %s100
      %p112 = scmp.eq.s32.totalorder %s27, 3
      %p113 = por %p111, %p112
      %p115 = scmp.ne.s32.totalorder %s100, %s114
      %p116 = scmp.eq.s32.totalorder %s27, 0
      %p117 = por %p115, %p116
      %s119 = sadd.s32 %s118, 1
      %p122 = scmp.eq.s32.totalorder %s21, 3
      %p123 = scmp.ne.s32.totalorder %s118, %s120
      %p124 = scmp.eq.s32.totalorder %s21, 0
      %p125 = por %p123, %p124
      %p126 = scmp.ne.s32.totalorder %s118, %s120
      %p127 = scmp.eq.s32.totalorder %s26, 3
      %p128 = por %p126, %p127
      %p129 = scmp.ne.s32.totalorder %s120, %s121
      %p130 = scmp.eq.s32.totalorder %s26, 0
      %p131 = por %p129, %p130
      %p132 = scmp.ne.s32.totalorder %s120, %s121
      %p133 = scmp.eq.s32.totalorder %s27, 3
      %p134 = por %p132, %p133
      %p136 = scmp.ne.s32.totalorder %s121, %s135
      %p137 = scmp.eq.s32.totalorder %s27, 0
      %p138 = por %p136, %p137
      %s140 = sadd.s32 %s139, 1
      %p143 = scmp.eq.s32.totalorder %s21, 3
      %p144 = scmp.ne.s32.totalorder %s139, %s141
      %p145 = scmp.eq.s32.totalorder %s21, 0
      %p146 = por %p144, %p145
      %p147 = scmp.ne.s32.totalorder %s139, %s141
      %p148 = scmp.eq.s32.totalorder %s26, 3
      %p149 = por %p147, %p148
      %p150 = scmp.ne.s32.totalorder %s141, %s142
      %p151 = scmp.eq.s32.totalorder %s26, 0
      %p152 = por %p150, %p151
      %p153 = scmp.ne.s32.totalorder %s141, %s142
      %p154 = scmp.eq.s32.totalorder %s27, 3
      %p155 = por %p153, %p154
      %p157 = scmp.ne.s32.totalorder %s142, %s156
      %p158 = scmp.eq.s32.totalorder %s27, 0
      %p159 = por %p157, %p158
      %s161 = sadd.s32 %s160, 1
      %p164 = scmp.eq.s32.totalorder %s21, 3
      %p165 = scmp.ne.s32.totalorder %s160, %s162
      %p166 = scmp.eq.s32.totalorder %s21, 0
      %p167 = por %p165, %p166
      %p168 = scmp.ne.s32.totalorder %s160, %s162
      %p169 = scmp.eq.s32.totalorder %s26, 3
      %p170 = por %p168, %p169
      %p171 = scmp.ne.s32.totalorder %s162, %s163
      %p172 = scmp.eq.s32.totalorder %s26, 0
      %p173 = por %p171, %p172
      %p174 = scmp.ne.s32.totalorder %s162, %s163
      %p175 = scmp.eq.s32.totalorder %s27, 3
      %p176 = por %p174, %p175
      %p178 = scmp.ne.s32.totalorder %s163, %s177
      %p179 = scmp.eq.s32.totalorder %s27, 0
      %p180 = por %p178, %p179
      %s182 = sadd.s32 %s181, 1
      %p185 = scmp.eq.s32.totalorder %s21, 3
      %p186 = scmp.ne.s32.totalorder %s181, %s183
      %p187 = scmp.eq.s32.totalorder %s21, 0
      %p188 = por %p186, %p187
      %p189 = scmp.ne.s32.totalorder %s181, %s183
      %p190 = scmp.eq.s32.totalorder %s26, 3
      %p191 = por %p189, %p190
      %p192 = scmp.ne.s32.totalorder %s183, %s184
      %p193 = scmp.eq.s32.totalorder %s26, 0
      %p194 = por %p192, %p193
      %p195 = scmp.ne.s32.totalorder %s183, %s184
      %p196 = scmp.eq.s32.totalorder %s27, 3
      %p197 = por %p195, %p196
      %p199 = scmp.ne.s32.totalorder %s184, %s198
      %p200 = scmp.eq.s32.totalorder %s27, 0
      %p201 = por %p199, %p200
      %s203 = sadd.s32 %s202, 1
      %p206 = scmp.eq.s32.totalorder %s21, 3
      %p207 = scmp.ne.s32.totalorder %s202, %s204
      %p208 = scmp.eq.s32.totalorder %s21, 0
      %p209 = por %p207, %p208
      %p210 = scmp.ne.s32.totalorder %s202, %s204
      %p211 = scmp.eq.s32.totalorder %s26, 3
      %p212 = por %p210, %p211
      %p213 = scmp.ne.s32.totalorder %s204, %s205
      %p214 = scmp.eq.s32.totalorder %s26, 0
      %p215 = por %p213, %p214
      %p216 = scmp.ne.s32.totalorder %s204, %s205
      %p217 = scmp.eq.s32.totalorder %s27, 3
      %p218 = por %p216, %p217
      %p220 = scmp.ne.s32.totalorder %s205, %s219
      %p221 = scmp.eq.s32.totalorder %s27, 0
      %p222 = por %p220, %p221
      %s224 = sadd.s32 %s223, 1
      %p227 = scmp.eq.s32.totalorder %s21, 3
      %p228 = scmp.ne.s32.totalorder %s223, %s225
      %p229 = scmp.eq.s32.totalorder %s21, 0
      %p230 = por %p228, %p229
      %p231 = scmp.ne.s32.totalorder %s223, %s225
      %p232 = scmp.eq.s32.totalorder %s26, 3
      %p233 = por %p231, %p232
      %p234 = scmp.ne.s32.totalorder %s225, %s226
      %p235 = scmp.eq.s32.totalorder %s26, 0
      %p236 = por %p234, %p235
      %p237 = scmp.ne.s32.totalorder %s225, %s226
      %p238 = scmp.eq.s32.totalorder %s27, 3
      %p239 = por %p237, %p238
      %p241 = scmp.ne.s32.totalorder %s226, %s240
      %p242 = scmp.eq.s32.totalorder %s27, 0
      %p243 = por %p241, %p242
      %s245 = sadd.s32 %s244, 1
      %p248 = scmp.eq.s32.totalorder %s21, 3
      %p249 = scmp.ne.s32.totalorder %s244, %s246
      %p250 = scmp.eq.s32.totalorder %s21, 0
      %p251 = por %p249, %p250
      %p252 = scmp.ne.s32.totalorder %s244, %s246
      %p253 = scmp.eq.s32.totalorder %s26, 3
      %p254 = por %p252, %p253
      %p255 = scmp.ne.s32.totalorder %s246, %s247
      %p256 = scmp.eq.s32.totalorder %s26, 0
      %p257 = por %p255, %p256
      %p258 = scmp.ne.s32.totalorder %s246, %s247
      %p259 = scmp.eq.s32.totalorder %s27, 3
      %p260 = por %p258, %p259
      %p262 = scmp.ne.s32.totalorder %s247, %s261
      %p263 = scmp.eq.s32.totalorder %s27, 0
      %p264 = por %p262, %p263
      %s266 = sadd.s32 %s265, 1
      %p269 = scmp.eq.s32.totalorder %s21, 3
      %p270 = scmp.ne.s32.totalorder %s265, %s267
      %p271 = scmp.eq.s32.totalorder %s21, 0
      %p272 = por %p270, %p271
      %p273 = scmp.ne.s32.totalorder %s265, %s267
      %p274 = scmp.eq.s32.totalorder %s26, 3
      %p275 = por %p273, %p274
      %p276 = scmp.ne.s32.totalorder %s267, %s268
      %p277 = scmp.eq.s32.totalorder %s26, 0
      %p278 = por %p276, %p277
      %p279 = scmp.ne.s32.totalorder %s267, %s268
      %p280 = scmp.eq.s32.totalorder %s27, 3
      %p281 = por %p279, %p280
      %p283 = scmp.ne.s32.totalorder %s268, %s282
      %p284 = scmp.eq.s32.totalorder %s27, 0
      %p285 = por %p283, %p284
      %s286 = ssub.s32 %s21, %s28
      %p287 = scmp.eq.s32.totalorder %s286, 0
      %s289 = sadd.s32 %s288, 1
      %s290 = scalar_select %p287, %s288, %s289
      %p293 = pneg %p287
      %p294 = scmp.eq.s32.totalorder %s21, 3
      %p295 = por %p293, %p294
      %p296 = scmp.ne.s32.totalorder %s288, %s291
      %p297 = scmp.eq.s32.totalorder %s21, 0
      %p298 = por %p296, %p297
      %p299 = scmp.ne.s32.totalorder %s288, %s291
      %p300 = scmp.eq.s32.totalorder %s26, 3
      %p301 = por %p299, %p300
      %p302 = scmp.ne.s32.totalorder %s291, %s292
      %p303 = scmp.eq.s32.totalorder %s26, 0
      %p304 = por %p302, %p303
      %p305 = scmp.ne.s32.totalorder %s291, %s292
      %p306 = scmp.eq.s32.totalorder %s27, 3
      %p307 = por %p305, %p306
      %p309 = scmp.ne.s32.totalorder %s292, %s308
      %p310 = scmp.eq.s32.totalorder %s27, 0
      %p311 = por %p309, %p310
      %p312 = scmp.le.s32.totalorder 1, %s21
      %p313 = scmp.lt.s32.totalorder %s21, 5
      %p314 = pnand %p312, %p313
      %p315 = pneg %p314
      // Predicated region
      $region9: #{tpu_custom_call.1} parent=5 // pred_check
        _
      $region10: #{tpu_custom_call.1} parent=5 // pred_check_branch
        %317 = sbr.rel (%p314) target = $region12
      $region11: #{tpu_custom_call.1} parent=5 // pred_region
        %s318 = ssub.s32 %s21, 1
        // Predicated region
        $region13: #{tpu_custom_call.1} parent=11 // pred_check
          %p319 = pneg %p68
        $region14: #{tpu_custom_call.1} parent=11 // pred_check_branch
          %321 = sbr.rel (%p319) target = $region16
        $region15: #{tpu_custom_call.1} parent=11 // pred_region
          _
        $region16: #{tpu_custom_call.1} parent=11 // pred_fallthru
          _
        // Predicated region
        $region17: #{tpu_custom_call.1} parent=11 // pred_check
          %p322 = pneg %p89
        $region18: #{tpu_custom_call.1} parent=11 // pred_check_branch
          %324 = sbr.rel (%p322) target = $region20
        $region19: #{tpu_custom_call.1} parent=11 // pred_region
          _
        $region20: #{tpu_custom_call.1} parent=11 // pred_fallthru
          _
        // Predicated region
        $region21: #{tpu_custom_call.1} parent=11 // pred_check
          %p325 = pneg %p110
        $region22: #{tpu_custom_call.1} parent=11 // pred_check_branch
          %327 = sbr.rel (%p325) target = $region24
        $region23: #{tpu_custom_call.1} parent=11 // pred_region
          _
        $region24: #{tpu_custom_call.1} parent=11 // pred_fallthru
          _
        // Predicated region
        $region25: #{tpu_custom_call.1} parent=11 // pred_check
          %p328 = pneg %p131
        $region26: #{tpu_custom_call.1} parent=11 // pred_check_branch
          %330 = sbr.rel (%p328) target = $region28
        $region27: #{tpu_custom_call.1} parent=11 // pred_region
          _
        $region28: #{tpu_custom_call.1} parent=11 // pred_fallthru
          _
        // Predicated region
        $region29: #{tpu_custom_call.1} parent=11 // pred_check
          %p331 = pneg %p152
        $region30: #{tpu_custom_call.1} parent=11 // pred_check_branch
          %333 = sbr.rel (%p331) target = $region32
        $region31: #{tpu_custom_call.1} parent=11 // pred_region
          _
        $region32: #{tpu_custom_call.1} parent=11 // pred_fallthru
          _
        // Predicated region
        $region33: #{tpu_custom_call.1} parent=11 // pred_check
          %p334 = pneg %p173
        $region34: #{tpu_custom_call.1} parent=11 // pred_check_branch
          %336 = sbr.rel (%p334) target = $region36
        $region35: #{tpu_custom_call.1} parent=11 // pred_region
          _
        $region36: #{tpu_custom_call.1} parent=11 // pred_fallthru
          _
        // Predicated region
        $region37: #{tpu_custom_call.1} parent=11 // pred_check
          %p337 = pneg %p194
        $region38: #{tpu_custom_call.1} parent=11 // pred_check_branch
          %339 = sbr.rel (%p337) target = $region40
        $region39: #{tpu_custom_call.1} parent=11 // pred_region
          _
        $region40: #{tpu_custom_call.1} parent=11 // pred_fallthru
          _
        // Predicated region
        $region41: #{tpu_custom_call.1} parent=11 // pred_check
          %p340 = pneg %p215
        $region42: #{tpu_custom_call.1} parent=11 // pred_check_branch
          %342 = sbr.rel (%p340) target = $region44
        $region43: #{tpu_custom_call.1} parent=11 // pred_region
          _
        $region44: #{tpu_custom_call.1} parent=11 // pred_fallthru
          _
        // Predicated region
        $region45: #{tpu_custom_call.1} parent=11 // pred_check
          %p343 = pneg %p236
        $region46: #{tpu_custom_call.1} parent=11 // pred_check_branch
          %345 = sbr.rel (%p343) target = $region48
        $region47: #{tpu_custom_call.1} parent=11 // pred_region
          _
        $region48: #{tpu_custom_call.1} parent=11 // pred_fallthru
          _
        // Predicated region
        $region49: #{tpu_custom_call.1} parent=11 // pred_check
          %p346 = pneg %p257
        $region50: #{tpu_custom_call.1} parent=11 // pred_check_branch
          %348 = sbr.rel (%p346) target = $region52
        $region51: #{tpu_custom_call.1} parent=11 // pred_region
          _
        $region52: #{tpu_custom_call.1} parent=11 // pred_fallthru
          _
        // Predicated region
        $region53: #{tpu_custom_call.1} parent=11 // pred_check
          %p349 = pneg %p278
        $region54: #{tpu_custom_call.1} parent=11 // pred_check_branch
          %351 = sbr.rel (%p349) target = $region56
        $region55: #{tpu_custom_call.1} parent=11 // pred_region
          _
        $region56: #{tpu_custom_call.1} parent=11 // pred_fallthru
          _
      $region12: #{tpu_custom_call.1} parent=5 // pred_fallthru
        _
      %p352 = scmp.lt.s32.totalorder %s21, 4
      // Predicated region
      $region57: #{tpu_custom_call.1} parent=5 // pred_check
        %p353 = pneg %p352
      $region58: #{tpu_custom_call.1} parent=5 // pred_check_branch
        %355 = sbr.rel (%p353) target = $region60
      $region59: #{tpu_custom_call.1} parent=5 // pred_region
        // Predicated region
        $region61: #{tpu_custom_call.1} parent=59 // pred_check
          %p356 = pneg %p41
        $region62: #{tpu_custom_call.1} parent=59 // pred_check_branch
          %358 = sbr.rel (%p356) target = $region64
        $region63: #{tpu_custom_call.1} parent=59 // pred_region
          %s359 = smul.u32 32, %s21
          %p360 = scmp.lt.s32.totalorder %s359, 127
          %s361 = scalar_select %p360, %s359, 127
          %s362 = smul.addr %s361, 8
          %s363 = scalar_lea.vmem %s0, %s362
          %s364 = smul.u32 32, %s21
        $region64: #{tpu_custom_call.1} parent=59 // pred_fallthru
          _
      $region60: #{tpu_custom_call.1} parent=5 // pred_fallthru
        _
      %p365 = scmp.le.s32.totalorder 1, %s21
      %p366 = scmp.lt.s32.totalorder %s21, 5
      %p367 = pnand %p365, %p366
      %p368 = pneg %p367
      // Predicated region
      $region65: #{tpu_custom_call.1} parent=5 // pred_check
        _
      $region66: #{tpu_custom_call.1} parent=5 // pred_check_branch
        %370 = sbr.rel (%p367) target = $region68
      $region67: #{tpu_custom_call.1} parent=5 // pred_region
        %s371 = ssub.s32 %s21, 1
        %s372 = smul.u32 32, %s26
        %p373 = scmp.lt.s32.totalorder %s372, 127
        %s374 = scalar_select %p373, %s372, 127
        %s375 = smul.addr %s374, 8
        %s376 = scalar_lea.vmem %s0, %s375
        %p377 = pneg %p47
        %p378 = pneg %p44
        %p379 = pneg %p68
        %p380 = pneg %p65
        %p381 = pneg %p89
        %p382 = pneg %p86
        %p383 = pneg %p110
        %p384 = pneg %p107
        %p385 = pneg %p131
        %p386 = pneg %p128
        %p387 = pneg %p152
        %p388 = pneg %p149
        %p389 = pneg %p173
        %p390 = pneg %p170
        %p391 = pneg %p194
        %p392 = pneg %p191
        %p393 = pneg %p215
        %p394 = pneg %p212
        %p395 = pneg %p236
        %p396 = pneg %p233
        %p397 = pneg %p257
        %p398 = pneg %p254
        %p399 = pneg %p278
        %p400 = pneg %p275
        %p401 = pneg %p304
        %p402 = pneg %p301
        %s403 = sand.u32 %s291, 1
        %s404 = scalar_lea.sflag [#allocation3], %s403
        %s405 = sand.u32 %s291, 1
        %s406 = smul.addr %s405, 256
        %s407 = scalar_lea.vmem [#allocation2], %s406
        %s408 = smul.u32 32, %s26
        %p409 = scmp.lt.s32.totalorder %s408, 127
        %s410 = scalar_select %p409, %s408, 127
        %s411 = smul.addr %s410, 8
        %s412 = scalar_lea.vmem %s0, %s411
        %s413 = smul.u32 32, %s26
        %s414 = smul.u32 32, %s26
        %v415 = vld [vmem:[%s412] sm:$0xff]
        %v416 = vld [vmem:[%s412 + $0x8] sm:$0xff]
        %v417 = vld [vmem:[%s412 + $0x10] sm:$0xff]
        %v418 = vld [vmem:[%s412 + $0x18] sm:$0xff]
        %v419 = vld [vmem:[%s412 + $0x20] sm:$0xff]
        %v420 = vld [vmem:[%s412 + $0x28] sm:$0xff]
        %v421 = vld [vmem:[%s412 + $0x30] sm:$0xff]
        %v422 = vld [vmem:[%s412 + $0x38] sm:$0xff]
        %v423 = vld [vmem:[%s412 + $0x40] sm:$0xff]
        %v424 = vld [vmem:[%s412 + $0x48] sm:$0xff]
        %v425 = vld [vmem:[%s412 + $0x50] sm:$0xff]
        %v426 = vld [vmem:[%s412 + $0x58] sm:$0xff]
        %v427 = vld [vmem:[%s412 + $0x60] sm:$0xff]
        %v428 = vld [vmem:[%s412 + $0x68] sm:$0xff]
        %v429 = vld [vmem:[%s412 + $0x70] sm:$0xff]
        %v430 = vld [vmem:[%s412 + $0x78] sm:$0xff]
        %v431 = vld [vmem:[%s412 + $0x80] sm:$0xff]
        %v432 = vld [vmem:[%s412 + $0x88] sm:$0xff]
        %v433 = vld [vmem:[%s412 + $0x90] sm:$0xff]
        %v434 = vld [vmem:[%s412 + $0x98] sm:$0xff]
        %v435 = vld [vmem:[%s412 + $0xa0] sm:$0xff]
        %v436 = vld [vmem:[%s412 + $0xa8] sm:$0xff]
        %v437 = vld [vmem:[%s412 + $0xb0] sm:$0xff]
        %v438 = vld [vmem:[%s412 + $0xb8] sm:$0xff]
        %v439 = vld [vmem:[%s412 + $0xc0] sm:$0xff]
        %v440 = vld [vmem:[%s412 + $0xc8] sm:$0xff]
        %v441 = vld [vmem:[%s412 + $0xd0] sm:$0xff]
        %v442 = vld [vmem:[%s412 + $0xd8] sm:$0xff]
        %v443 = vld [vmem:[%s412 + $0xe0] sm:$0xff]
        %v444 = vld [vmem:[%s412 + $0xe8] sm:$0xff]
        %v445 = vld [vmem:[%s412 + $0xf0] sm:$0xff]
        %v446 = vld [vmem:[%s412 + $0xf8] sm:$0xff]
        %v447 = vld [vmem:[%s1] sm:$0x7]
        %vm448 = vcmask 23552
        %v450 = vsel %vm448, %v415, 0
        %v453 = vsel %vm448, %v416, 0
        %v456 = vsel %vm448, %v417, 0
        %v459 = vsel %vm448, %v418, 0
        %v462 = vsel %vm448, %v419, 0
        %v465 = vsel %vm448, %v420, 0
        %v468 = vsel %vm448, %v421, 0
        %v471 = vsel %vm448, %v422, 0
        %v474 = vsel %vm448, %v423, 0
        %v477 = vsel %vm448, %v424, 0
        %v480 = vsel %vm448, %v425, 0
        %v483 = vsel %vm448, %v426, 0
        %v486 = vsel %vm448, %v427, 0
        %v489 = vsel %vm448, %v428, 0
        %v492 = vsel %vm448, %v429, 0
        %v495 = vsel %vm448, %v430, 0
        %v498 = vsel %vm448, %v431, 0
        %v501 = vsel %vm448, %v432, 0
        %v504 = vsel %vm448, %v433, 0
        %v507 = vsel %vm448, %v434, 0
        %v510 = vsel %vm448, %v435, 0
        %v513 = vsel %vm448, %v436, 0
        %v516 = vsel %vm448, %v437, 0
        %v519 = vsel %vm448, %v438, 0
        %v522 = vsel %vm448, %v439, 0
        %v525 = vsel %vm448, %v440, 0
        %v528 = vsel %vm448, %v441, 0
        %v531 = vsel %vm448, %v442, 0
        %v534 = vsel %vm448, %v443, 0
        %v537 = vsel %vm448, %v444, 0
        %v540 = vsel %vm448, %v445, 0
        %v543 = vsel %vm448, %v446, 0
        %vm545 = vcmask 1042432
        %v547 = vsel %vm545, %v447, 0
        %549 = vmatprep.subr.mxu0 0.0
        %550 = vmatpush1.msra.mxu0 %v547
        %551 = vmatprep.subr.mxu0 0.0
        %552 = vmatpush1.msra.mxu0 0.0
        %553 = vmatprep.subr.mxu0 0.0
        %554 = vmatpush1.msra.mxu0 0.0
        %555 = vmatprep.subr.mxu0 0.0
        %556 = vmatpush1.msra.mxu0 0.0
        %557 = vmatprep.subr.mxu0 0.0
        %558 = vmatpush1.msra.mxu0 0.0
        %559 = vmatprep.subr.mxu0 0.0
        %560 = vmatpush1.msra.mxu0 0.0
        %561 = vmatprep.subr.mxu0 0.0
        %562 = vmatpush1.msra.mxu0 0.0
        %563 = vmatprep.subr.mxu0 0.0
        %564 = vmatpush1.msra.mxu0 0.0
        %565 = vmatprep.subr.mxu0 0.0
        %566 = vmatpush1.msra.mxu0 0.0
        %567 = vmatprep.subr.mxu0 0.0
        %568 = vmatpush1.msra.mxu0 0.0
        %569 = vmatprep.subr.mxu0 0.0
        %570 = vmatpush1.msra.mxu0 0.0
        %571 = vmatprep.subr.mxu0 0.0
        %572 = vmatpush1.msra.mxu0 0.0
        %573 = vmatprep.subr.mxu0 0.0
        %574 = vmatpush1.msra.mxu0 0.0
        %575 = vmatprep.subr.mxu0 0.0
        %576 = vmatpush1.msra.mxu0 0.0
        %577 = vmatprep.subr.mxu0 0.0
        %578 = vmatpush1.msra.mxu0 0.0
        %579 = vmatprep.subr.mxu0 0.0
        %580 = vmatpush1.msra.mxu0 0.0
        %581 = vmatprep.subr.mxu0 0.0
        %582 = vmatpush1.msra.mxu0 0.0
        %583 = vmatprep.subr.mxu0 0.0
        %584 = vmatpush1.msra.mxu0 0.0
        %585 = vmatprep.subr.mxu0 0.0
        %586 = vmatpush1.msra.mxu0 0.0
        %587 = vmatprep.subr.mxu0 0.0
        %588 = vmatpush1.msra.mxu0 0.0
        %589 = vmatprep.subr.mxu0 0.0
        %590 = vmatpush1.msra.mxu0 0.0
        %591 = vmatprep.subr.mxu0 0.0
        %592 = vmatpush1.msra.mxu0 0.0
        %593 = vmatprep.subr.mxu0 0.0
        %594 = vmatpush1.msra.mxu0 0.0
        %595 = vmatprep.subr.mxu0 0.0
        %596 = vmatpush1.msra.mxu0 0.0
        %597 = vmatprep.subr.mxu0 0.0
        %598 = vmatpush1.msra.mxu0 0.0
        %599 = vmatprep.subr.mxu0 0.0
        %600 = vmatpush1.msra.mxu0 0.0
        %601 = vmatprep.subr.mxu0 0.0
        %602 = vmatpush1.msra.mxu0 0.0
        %603 = vmatprep.subr.mxu0 0.0
        %604 = vmatpush1.msra.mxu0 0.0
        %605 = vmatprep.subr.mxu0 0.0
        %606 = vmatpush1.msra.mxu0 0.0
        %607 = vmatprep.subr.mxu0 0.0
        %608 = vmatpush1.msra.mxu0 0.0
        %609 = vmatprep.subr.mxu0 0.0
        %610 = vmatpush1.msra.mxu0 0.0
        %611 = vmatprep.subr.mxu0 0.0
        %612 = vmatpush1.msra.mxu0 0.0
        %613 = vmatprep.mubr.f32.mxu0 0.0
        %614 = vmatmul.mubr.f32.gmra.mrb[0].mxu0 %v450
        %v615 = vpop.f32.mrb[0].mxu0
        %v616 = vadd.f32 0.0, %v615
        %v617 = vpop.f32.mrb[0].mxu0
        %618 = vmatprep.mubr.f32.mxu0 0.0
        %619 = vmatmul.mubr.f32.gmra.mrb[0].mxu0 %v453
        %v620 = vpop.f32.mrb[0].mxu0
        %v621 = vadd.f32 0.0, %v620
        %v622 = vpop.f32.mrb[0].mxu0
        %623 = vmatprep.mubr.f32.mxu0 0.0
        %624 = vmatmul.mubr.f32.gmra.mrb[0].mxu0 %v456
        %v625 = vpop.f32.mrb[0].mxu0
        %v626 = vadd.f32 0.0, %v625
        %v627 = vpop.f32.mrb[0].mxu0
        %628 = vmatprep.mubr.f32.mxu0 0.0
        %629 = vmatmul.mubr.f32.gmra.mrb[0].mxu0 %v459
        %v630 = vpop.f32.mrb[0].mxu0
        %v631 = vadd.f32 0.0, %v630
        %v632 = vpop.f32.mrb[0].mxu0
        %633 = vmatprep.mubr.f32.mxu0 0.0
        %634 = vmatmul.mubr.f32.gmra.mrb[0].mxu0 %v462
        %v635 = vpop.f32.mrb[0].mxu0
        %v636 = vadd.f32 0.0, %v635
        %v637 = vpop.f32.mrb[0].mxu0
        %638 = vmatprep.mubr.f32.mxu0 0.0
        %639 = vmatmul.mubr.f32.gmra.mrb[0].mxu0 %v465
        %v640 = vpop.f32.mrb[0].mxu0
        %v641 = vadd.f32 0.0, %v640
        %v642 = vpop.f32.mrb[0].mxu0
        %643 = vmatprep.mubr.f32.mxu0 0.0
        %644 = vmatmul.mubr.f32.gmra.mrb[0].mxu0 %v468
        %v645 = vpop.f32.mrb[0].mxu0
        %v646 = vadd.f32 0.0, %v645
        %v647 = vpop.f32.mrb[0].mxu0
        %648 = vmatprep.mubr.f32.mxu0 0.0
        %649 = vmatmul.mubr.f32.gmra.mrb[0].mxu0 %v471
        %v650 = vpop.f32.mrb[0].mxu0
        %v651 = vadd.f32 0.0, %v650
        %v652 = vpop.f32.mrb[0].mxu0
        %653 = vmatprep.mubr.f32.mxu0 0.0
        %654 = vmatmul.mubr.f32.gmra.mrb[0].mxu0 %v474
        %v655 = vpop.f32.mrb[0].mxu0
        %v656 = vadd.f32 0.0, %v655
        %v657 = vpop.f32.mrb[0].mxu0
        %658 = vmatprep.mubr.f32.mxu0 0.0
        %659 = vmatmul.mubr.f32.gmra.mrb[0].mxu0 %v477
        %v660 = vpop.f32.mrb[0].mxu0
        %v661 = vadd.f32 0.0, %v660
        %v662 = vpop.f32.mrb[0].mxu0
        %663 = vmatprep.mubr.f32.mxu0 0.0
        %664 = vmatmul.mubr.f32.gmra.mrb[0].mxu0 %v480
        %v665 = vpop.f32.mrb[0].mxu0
        %v666 = vadd.f32 0.0, %v665
        %v667 = vpop.f32.mrb[0].mxu0
        %668 = vmatprep.mubr.f32.mxu0 0.0
        %669 = vmatmul.mubr.f32.gmra.mrb[0].mxu0 %v483
        %v670 = vpop.f32.mrb[0].mxu0
        %v671 = vadd.f32 0.0, %v670
        %v672 = vpop.f32.mrb[0].mxu0
        %673 = vmatprep.mubr.f32.mxu0 0.0
        %674 = vmatmul.mubr.f32.gmra.mrb[0].mxu0 %v486
        %v675 = vpop.f32.mrb[0].mxu0
        %v676 = vadd.f32 0.0, %v675
        %v677 = vpop.f32.mrb[0].mxu0
        %678 = vmatprep.mubr.f32.mxu0 0.0
        %679 = vmatmul.mubr.f32.gmra.mrb[0].mxu0 %v489
        %v680 = vpop.f32.mrb[0].mxu0
        %v681 = vadd.f32 0.0, %v680
        %v682 = vpop.f32.mrb[0].mxu0
        %683 = vmatprep.mubr.f32.mxu0 0.0
        %684 = vmatmul.mubr.f32.gmra.mrb[0].mxu0 %v492
        %v685 = vpop.f32.mrb[0].mxu0
        %v686 = vadd.f32 0.0, %v685
        %v687 = vpop.f32.mrb[0].mxu0
        %688 = vmatprep.mubr.f32.mxu0 0.0
        %689 = vmatmul.mubr.f32.gmra.mrb[0].mxu0 %v495
        %v690 = vpop.f32.mrb[0].mxu0
        %v691 = vadd.f32 0.0, %v690
        %v692 = vpop.f32.mrb[0].mxu0
        %693 = vmatprep.mubr.f32.mxu0 0.0
        %694 = vmatmul.mubr.f32.gmra.mrb[0].mxu0 %v498
        %v695 = vpop.f32.mrb[0].mxu0
        %v696 = vadd.f32 0.0, %v695
        %v697 = vpop.f32.mrb[0].mxu0
        %698 = vmatprep.mubr.f32.mxu0 0.0
        %699 = vmatmul.mubr.f32.gmra.mrb[0].mxu0 %v501
        %v700 = vpop.f32.mrb[0].mxu0
        %v701 = vadd.f32 0.0, %v700
        %v702 = vpop.f32.mrb[0].mxu0
        %703 = vmatprep.mubr.f32.mxu0 0.0
        %704 = vmatmul.mubr.f32.gmra.mrb[0].mxu0 %v504
        %v705 = vpop.f32.mrb[0].mxu0
        %v706 = vadd.f32 0.0, %v705
        %v707 = vpop.f32.mrb[0].mxu0
        %708 = vmatprep.mubr.f32.mxu0 0.0
        %709 = vmatmul.mubr.f32.gmra.mrb[0].mxu0 %v507
        %v710 = vpop.f32.mrb[0].mxu0
        %v711 = vadd.f32 0.0, %v710
        %v712 = vpop.f32.mrb[0].mxu0
        %713 = vmatprep.mubr.f32.mxu0 0.0
        %714 = vmatmul.mubr.f32.gmra.mrb[0].mxu0 %v510
        %v715 = vpop.f32.mrb[0].mxu0
        %v716 = vadd.f32 0.0, %v715
        %v717 = vpop.f32.mrb[0].mxu0
        %718 = vmatprep.mubr.f32.mxu0 0.0
        %719 = vmatmul.mubr.f32.gmra.mrb[0].mxu0 %v513
        %v720 = vpop.f32.mrb[0].mxu0
        %v721 = vadd.f32 0.0, %v720
        %v722 = vpop.f32.mrb[0].mxu0
        %723 = vmatprep.mubr.f32.mxu0 0.0
        %724 = vmatmul.mubr.f32.gmra.mrb[0].mxu0 %v516
        %v725 = vpop.f32.mrb[0].mxu0
        %v726 = vadd.f32 0.0, %v725
        %v727 = vpop.f32.mrb[0].mxu0
        %728 = vmatprep.mubr.f32.mxu0 0.0
        %729 = vmatmul.mubr.f32.gmra.mrb[0].mxu0 %v519
        %v730 = vpop.f32.mrb[0].mxu0
        %v731 = vadd.f32 0.0, %v730
        %v732 = vpop.f32.mrb[0].mxu0
        %733 = vmatprep.mubr.f32.mxu0 0.0
        %734 = vmatmul.mubr.f32.gmra.mrb[0].mxu0 %v522
        %v735 = vpop.f32.mrb[0].mxu0
        %v736 = vadd.f32 0.0, %v735
        %v737 = vpop.f32.mrb[0].mxu0
        %738 = vmatprep.mubr.f32.mxu0 0.0
        %739 = vmatmul.mubr.f32.gmra.mrb[0].mxu0 %v525
        %v740 = vpop.f32.mrb[0].mxu0
        %v741 = vadd.f32 0.0, %v740
        %v742 = vpop.f32.mrb[0].mxu0
        %743 = vmatprep.mubr.f32.mxu0 0.0
        %744 = vmatmul.mubr.f32.gmra.mrb[0].mxu0 %v528
        %v745 = vpop.f32.mrb[0].mxu0
        %v746 = vadd.f32 0.0, %v745
        %v747 = vpop.f32.mrb[0].mxu0
        %748 = vmatprep.mubr.f32.mxu0 0.0
        %749 = vmatmul.mubr.f32.gmra.mrb[0].mxu0 %v531
        %v750 = vpop.f32.mrb[0].mxu0
        %v751 = vadd.f32 0.0, %v750
        %v752 = vpop.f32.mrb[0].mxu0
        %753 = vmatprep.mubr.f32.mxu0 0.0
        %754 = vmatmul.mubr.f32.gmra.mrb[0].mxu0 %v534
        %v755 = vpop.f32.mrb[0].mxu0
        %v756 = vadd.f32 0.0, %v755
        %v757 = vpop.f32.mrb[0].mxu0
        %758 = vmatprep.mubr.f32.mxu0 0.0
        %759 = vmatmul.mubr.f32.gmra.mrb[0].mxu0 %v537
        %v760 = vpop.f32.mrb[0].mxu0
        %v761 = vadd.f32 0.0, %v760
        %v762 = vpop.f32.mrb[0].mxu0
        %763 = vmatprep.mubr.f32.mxu0 0.0
        %764 = vmatmul.mubr.f32.gmra.mrb[0].mxu0 %v540
        %v765 = vpop.f32.mrb[0].mxu0
        %v766 = vadd.f32 0.0, %v765
        %v767 = vpop.f32.mrb[0].mxu0
        %768 = vmatprep.mubr.f32.mxu0 0.0
        %769 = vmatmul.mubr.f32.gmra.mrb[0].mxu0 %v543
        %v770 = vpop.f32.mrb[0].mxu0
        %v771 = vadd.f32 0.0, %v770
        %v772 = vpop.f32.mrb[0].mxu0
        %773 = vdwg.mxu0
        %v774 = vmul.f32 %v616, 6.2831855
        %v775 = vmul.f32 %v621, 6.2831855
        %v776 = vmul.f32 %v626, 6.2831855
        %v777 = vmul.f32 %v631, 6.2831855
        %v778 = vmul.f32 %v636, 6.2831855
        %v779 = vmul.f32 %v641, 6.2831855
        %v780 = vmul.f32 %v646, 6.2831855
        %v781 = vmul.f32 %v651, 6.2831855
        %v782 = vmul.f32 %v656, 6.2831855
        %v783 = vmul.f32 %v661, 6.2831855
        %v784 = vmul.f32 %v666, 6.2831855
        %v785 = vmul.f32 %v671, 6.2831855
        %v786 = vmul.f32 %v676, 6.2831855
        %v787 = vmul.f32 %v681, 6.2831855
        %v788 = vmul.f32 %v686, 6.2831855
        %v789 = vmul.f32 %v691, 6.2831855
        %v790 = vmul.f32 %v696, 6.2831855
        %v791 = vmul.f32 %v701, 6.2831855
        %v792 = vmul.f32 %v706, 6.2831855
        %v793 = vmul.f32 %v711, 6.2831855
        %v794 = vmul.f32 %v716, 6.2831855
        %v795 = vmul.f32 %v721, 6.2831855
        %v796 = vmul.f32 %v726, 6.2831855
        %v797 = vmul.f32 %v731, 6.2831855
        %v798 = vmul.f32 %v736, 6.2831855
        %v799 = vmul.f32 %v741, 6.2831855
        %v800 = vmul.f32 %v746, 6.2831855
        %v801 = vmul.f32 %v751, 6.2831855
        %v802 = vmul.f32 %v756, 6.2831855
        %v803 = vmul.f32 %v761, 6.2831855
        %v804 = vmul.f32 %v766, 6.2831855
        %v805 = vmul.f32 %v771, 6.2831855
        %v806 = vand.u32 2147483647, %v774
        %vm807 = vcmp.le.f32.partialorder %v806, 0.7853982
        %vm808 = vcmp.lt.s32.totalorder %v774, 0
        %v809 = vand.u32 %v774, 2139095040
        %v810 = vshrl.u32 %v809, 23
        %v811 = vsub.s32 %v810, 127
        %v812 = vand.u32 2147483647, %v774
        %v813 = vand.u32 %v812, 8388607
        %v814 = vor.u32 %v813, 8388608
        %v815 = vsub.s32 0, %v814
        %v816 = vadd.s32 %v811, 1
        %vm817 = vcmp.gt.s32.totalorder %v816, 0
        %v818 = vsel %vm817, %v816, 0
        %v819 = vshrl.u32 %v818, 5
        %v820 = vand.u32 %v818, 31
        %v821 = vsub.s32 32, %v820
        %v822 = vshrl.u32 683565275, %v821
        %v823 = vshll.u32 683565275, %v820
        %v824 = vshrl.u32 2475754826, %v821
        %v825 = vor.u32 %v823, %v824
        %v826 = vshll.u32 2475754826, %v820
        %v827 = vshrl.u32 2131351028, %v821
        %v828 = vor.u32 %v826, %v827
        %v829 = vshll.u32 2131351028, %v820
        %v830 = vshrl.u32 2102212464, %v821
        %v831 = vor.u32 %v829, %v830
        %v832 = vshll.u32 2102212464, %v820
        %v833 = vshrl.u32 920167782, %v821
        %v834 = vor.u32 %v832, %v833
        %v835 = vshll.u32 920167782, %v820
        %v836 = vshrl.u32 1326507024, %v821
        %v837 = vor.u32 %v835, %v836
        %vm838 = vcmp.lt.s32.totalorder %v819, 1
        %vm839 = vcmp.lt.s32.totalorder %v819, 2
        %vm840 = vcmp.lt.s32.totalorder %v819, 3
        %vm841 = vcmp.lt.s32.totalorder %v819, 4
        %v842 = vsel %vm838, %v822, %v825
        %v843 = vsel %vm841, %v831, 2102212464
        %v844 = vsel %vm840, %v828, %v843
        %v845 = vsel %vm839, %v842, %v844
        %v846 = vsel %vm838, %v825, %v828
        %v847 = vsel %vm841, %v834, 920167782
        %v848 = vsel %vm840, %v831, %v847
        %v849 = vsel %vm839, %v846, %v848
        %v850 = vsel %vm838, %v828, %v831
        %v851 = vsel %vm841, %v837, 1326507024
        %v852 = vsel %vm840, %v834, %v851
        %v853 = vsel %vm839, %v850, %v852
        %v854 = vshll.u32 %v814, 8
        %v855 = vmul.u32.u64.compose %v854, %v853
        %v856 = vextract.low.u32 %v855
        %v857 = vextract.high.u32 %v855
        %v858 = vmul.u32.u64.compose %v854, %v849
        %v859 = vextract.low.u32 %v858
        %v860 = vextract.high.u32 %v858
        %v861 = vmul.u32 %v854, %v845
        %v862 = vadd.s32 %v857, %v859
        %vm863 = vc.u32 %v857, %v859
        %v864 = vadd.s32 %v860, 1
        %v865 = vsel %vm863, %v864, %v860
        %v866 = vadd.s32 %v861, %v865
        %v867 = vadd.s32 %v866, 536870912
        %v868 = vshrl.u32 %v867, 30
        %v869 = vshll.u32 %v868, 30
        %v870 = vsub.s32 %v866, %v869
        %vm871 = vcmp.lt.s32.totalorder %v870, 0
        %v872 = vsub.s32 0, %v870
        %v873 = vsel %vm871, %v872, %v870
        %v874 = vclz %v873
        %v875 = vsub.s32 %v874, 2
        %vm876 = vcmp.gt.s32.totalorder 0, %v875
        %v877 = vsel %vm876, 0, %v875
        %v878 = vsub.s32 32, %v877
        %v879 = vshll.u32 %v870, %v877
        %v880 = vshrl.u32 %v862, %v878
        %v881 = vor.u32 %v879, %v880
        %v882 = vsub.s32 4294967266, %v877
        %v883 = vadd.s32 %v882, 127
        %v884 = vshll.u32 %v883, 23
        %v885 = vor.u32 4788187, %v884
        %v886 = vand.u32 2147483647, %v885
        %v888 = vcvt.s32.f32 %v881
        %v889 = vmul.f32 %v888, %v886
        %v890 = vxor.u32 %v889, 2147483648
        %v891 = vsel %vm808, %v890, %v889
        %v892 = vsub.s32 4, %v868
        %v893 = vsel %vm808, %v892, %v868
        %v894 = vsel %vm807, %v774, %v891
        %v895 = vsel %vm807, 0, %v893
        %v896 = vcosq.f32.pop %v894
        %v897 = vsinq.f32.pop %v894
        %vm898 = vweird.f32 %v774
        %v899 = vadd.s32 %v895, 3
        %v900 = vand.u32 %v899, 3
        %vm901 = vcmp.lt.s32.totalorder %v900, 2
        %vm902 = vcmp.eq.s32.totalorder %v900, 0
        %v903 = vxor.u32 %v897, 2147483648
        %v904 = vsel %vm902, %v896, %v903
        %vm905 = vcmp.eq.s32.totalorder %v900, 2
        %v906 = vxor.u32 %v896, 2147483648
        %v907 = vsel %vm905, %v906, %v897
        %v908 = vsel %vm901, %v904, %v907
        %v909 = vsel %vm898, nan, %v908
        %v910 = vand.u32 2147483647, %v775
        %vm911 = vcmp.le.f32.partialorder %v910, 0.7853982
        %vm912 = vcmp.lt.s32.totalorder %v775, 0
        %v913 = vand.u32 %v775, 2139095040
        %v914 = vshrl.u32 %v913, 23
        %v915 = vsub.s32 %v914, 127
        %v916 = vand.u32 2147483647, %v775
        %v917 = vand.u32 %v916, 8388607
        %v918 = vor.u32 %v917, 8388608
        %v919 = vsub.s32 0, %v918
        %v920 = vadd.s32 %v915, 1
        %vm921 = vcmp.gt.s32.totalorder %v920, 0
        %v922 = vsel %vm921, %v920, 0
        %v923 = vshrl.u32 %v922, 5
        %v924 = vand.u32 %v922, 31
        %v925 = vsub.s32 32, %v924
        %v926 = vshrl.u32 683565275, %v925
        %v927 = vshll.u32 683565275, %v924
        %v928 = vshrl.u32 2475754826, %v925
        %v929 = vor.u32 %v927, %v928
        %v930 = vshll.u32 2475754826, %v924
        %v931 = vshrl.u32 2131351028, %v925
        %v932 = vor.u32 %v930, %v931
        %v933 = vshll.u32 2131351028, %v924
        %v934 = vshrl.u32 2102212464, %v925
        %v935 = vor.u32 %v933, %v934
        %v936 = vshll.u32 2102212464, %v924
        %v937 = vshrl.u32 920167782, %v925
        %v938 = vor.u32 %v936, %v937
        %v939 = vshll.u32 920167782, %v924
        %v940 = vshrl.u32 1326507024, %v925
        %v941 = vor.u32 %v939, %v940
        %vm942 = vcmp.lt.s32.totalorder %v923, 1
        %vm943 = vcmp.lt.s32.totalorder %v923, 2
        %vm944 = vcmp.lt.s32.totalorder %v923, 3
        %vm945 = vcmp.lt.s32.totalorder %v923, 4
        %v946 = vsel %vm942, %v926, %v929
        %v947 = vsel %vm945, %v935, 2102212464
        %v948 = vsel %vm944, %v932, %v947
        %v949 = vsel %vm943, %v946, %v948
        %v950 = vsel %vm942, %v929, %v932
        %v951 = vsel %vm945, %v938, 920167782
        %v952 = vsel %vm944, %v935, %v951
        %v953 = vsel %vm943, %v950, %v952
        %v954 = vsel %vm942, %v932, %v935
        %v955 = vsel %vm945, %v941, 1326507024
        %v956 = vsel %vm944, %v938, %v955
        %v957 = vsel %vm943, %v954, %v956
        %v958 = vshll.u32 %v918, 8
        %v959 = vmul.u32.u64.compose %v958, %v957
        %v960 = vextract.low.u32 %v959
        %v961 = vextract.high.u32 %v959
        %v962 = vmul.u32.u64.compose %v958, %v953
        %v963 = vextract.low.u32 %v962
        %v964 = vextract.high.u32 %v962
        %v965 = vmul.u32 %v958, %v949
        %v966 = vadd.s32 %v961, %v963
        %vm967 = vc.u32 %v961, %v963
        %v968 = vadd.s32 %v964, 1
        %v969 = vsel %vm967, %v968, %v964
        %v970 = vadd.s32 %v965, %v969
        %v971 = vadd.s32 %v970, 536870912
        %v972 = vshrl.u32 %v971, 30
        %v973 = vshll.u32 %v972, 30
        %v974 = vsub.s32 %v970, %v973
        %vm975 = vcmp.lt.s32.totalorder %v974, 0
        %v976 = vsub.s32 0, %v974
        %v977 = vsel %vm975, %v976, %v974
        %v978 = vclz %v977
        %v979 = vsub.s32 %v978, 2
        %vm980 = vcmp.gt.s32.totalorder 0, %v979
        %v981 = vsel %vm980, 0, %v979
        %v982 = vsub.s32 32, %v981
        %v983 = vshll.u32 %v974, %v981
        %v984 = vshrl.u32 %v966, %v982
        %v985 = vor.u32 %v983, %v984
        %v986 = vsub.s32 4294967266, %v981
        %v987 = vadd.s32 %v986, 127
        %v988 = vshll.u32 %v987, 23
        %v989 = vor.u32 4788187, %v988
        %v990 = vand.u32 2147483647, %v989
        %v992 = vcvt.s32.f32 %v985
        %v993 = vmul.f32 %v992, %v990
        %v994 = vxor.u32 %v993, 2147483648
        %v995 = vsel %vm912, %v994, %v993
        %v996 = vsub.s32 4, %v972
        %v997 = vsel %vm912, %v996, %v972
        %v998 = vsel %vm911, %v775, %v995
        %v999 = vsel %vm911, 0, %v997
        %v1000 = vcosq.f32.pop %v998
        %v1001 = vsinq.f32.pop %v998
        %vm1002 = vweird.f32 %v775
        %v1003 = vadd.s32 %v999, 3
        %v1004 = vand.u32 %v1003, 3
        %vm1005 = vcmp.lt.s32.totalorder %v1004, 2
        %vm1006 = vcmp.eq.s32.totalorder %v1004, 0
        %v1007 = vxor.u32 %v1001, 2147483648
        %v1008 = vsel %vm1006, %v1000, %v1007
        %vm1009 = vcmp.eq.s32.totalorder %v1004, 2
        %v1010 = vxor.u32 %v1000, 2147483648
        %v1011 = vsel %vm1009, %v1010, %v1001
        %v1012 = vsel %vm1005, %v1008, %v1011
        %v1013 = vsel %vm1002, nan, %v1012
        %v1014 = vand.u32 2147483647, %v776
        %vm1015 = vcmp.le.f32.partialorder %v1014, 0.7853982
        %vm1016 = vcmp.lt.s32.totalorder %v776, 0
        %v1017 = vand.u32 %v776, 2139095040
        %v1018 = vshrl.u32 %v1017, 23
        %v1019 = vsub.s32 %v1018, 127
        %v1020 = vand.u32 2147483647, %v776
        %v1021 = vand.u32 %v1020, 8388607
        %v1022 = vor.u32 %v1021, 8388608
        %v1023 = vsub.s32 0, %v1022
        %v1024 = vadd.s32 %v1019, 1
        %vm1025 = vcmp.gt.s32.totalorder %v1024, 0
        %v1026 = vsel %vm1025, %v1024, 0
        %v1027 = vshrl.u32 %v1026, 5
        %v1028 = vand.u32 %v1026, 31
        %v1029 = vsub.s32 32, %v1028
        %v1030 = vshrl.u32 683565275, %v1029
        %v1031 = vshll.u32 683565275, %v1028
        %v1032 = vshrl.u32 2475754826, %v1029
        %v1033 = vor.u32 %v1031, %v1032
        %v1034 = vshll.u32 2475754826, %v1028
        %v1035 = vshrl.u32 2131351028, %v1029
        %v1036 = vor.u32 %v1034, %v1035
        %v1037 = vshll.u32 2131351028, %v1028
        %v1038 = vshrl.u32 2102212464, %v1029
        %v1039 = vor.u32 %v1037, %v1038
        %v1040 = vshll.u32 2102212464, %v1028
        %v1041 = vshrl.u32 920167782, %v1029
        %v1042 = vor.u32 %v1040, %v1041
        %v1043 = vshll.u32 920167782, %v1028
        %v1044 = vshrl.u32 1326507024, %v1029
        %v1045 = vor.u32 %v1043, %v1044
        %vm1046 = vcmp.lt.s32.totalorder %v1027, 1
        %vm1047 = vcmp.lt.s32.totalorder %v1027, 2
        %vm1048 = vcmp.lt.s32.totalorder %v1027, 3
        %vm1049 = vcmp.lt.s32.totalorder %v1027, 4
        %v1050 = vsel %vm1046, %v1030, %v1033
        %v1051 = vsel %vm1049, %v1039, 2102212464
        %v1052 = vsel %vm1048, %v1036, %v1051
        %v1053 = vsel %vm1047, %v1050, %v1052
        %v1054 = vsel %vm1046, %v1033, %v1036
        %v1055 = vsel %vm1049, %v1042, 920167782
        %v1056 = vsel %vm1048, %v1039, %v1055
        %v1057 = vsel %vm1047, %v1054, %v1056
        %v1058 = vsel %vm1046, %v1036, %v1039
        %v1059 = vsel %vm1049, %v1045, 1326507024
        %v1060 = vsel %vm1048, %v1042, %v1059
        %v1061 = vsel %vm1047, %v1058, %v1060
        %v1062 = vshll.u32 %v1022, 8
        %v1063 = vmul.u32.u64.compose %v1062, %v1061
        %v1064 = vextract.low.u32 %v1063
        %v1065 = vextract.high.u32 %v1063
        %v1066 = vmul.u32.u64.compose %v1062, %v1057
        %v1067 = vextract.low.u32 %v1066
        %v1068 = vextract.high.u32 %v1066
        %v1069 = vmul.u32 %v1062, %v1053
        %v1070 = vadd.s32 %v1065, %v1067
        %vm1071 = vc.u32 %v1065, %v1067
        %v1072 = vadd.s32 %v1068, 1
        %v1073 = vsel %vm1071, %v1072, %v1068
        %v1074 = vadd.s32 %v1069, %v1073
        %v1075 = vadd.s32 %v1074, 536870912
        %v1076 = vshrl.u32 %v1075, 30
        %v1077 = vshll.u32 %v1076, 30
        %v1078 = vsub.s32 %v1074, %v1077
        %vm1079 = vcmp.lt.s32.totalorder %v1078, 0
        %v1080 = vsub.s32 0, %v1078
        %v1081 = vsel %vm1079, %v1080, %v1078
        %v1082 = vclz %v1081
        %v1083 = vsub.s32 %v1082, 2
        %vm1084 = vcmp.gt.s32.totalorder 0, %v1083
        %v1085 = vsel %vm1084, 0, %v1083
        %v1086 = vsub.s32 32, %v1085
        %v1087 = vshll.u32 %v1078, %v1085
        %v1088 = vshrl.u32 %v1070, %v1086
        %v1089 = vor.u32 %v1087, %v1088
        %v1090 = vsub.s32 4294967266, %v1085
        %v1091 = vadd.s32 %v1090, 127
        %v1092 = vshll.u32 %v1091, 23
        %v1093 = vor.u32 4788187, %v1092
        %v1094 = vand.u32 2147483647, %v1093
        %v1096 = vcvt.s32.f32 %v1089
        %v1097 = vmul.f32 %v1096, %v1094
        %v1098 = vxor.u32 %v1097, 2147483648
        %v1099 = vsel %vm1016, %v1098, %v1097
        %v1100 = vsub.s32 4, %v1076
        %v1101 = vsel %vm1016, %v1100, %v1076
        %v1102 = vsel %vm1015, %v776, %v1099
        %v1103 = vsel %vm1015, 0, %v1101
        %v1104 = vcosq.f32.pop %v1102
        %v1105 = vsinq.f32.pop %v1102
        %vm1106 = vweird.f32 %v776
        %v1107 = vadd.s32 %v1103, 3
        %v1108 = vand.u32 %v1107, 3
        %vm1109 = vcmp.lt.s32.totalorder %v1108, 2
        %vm1110 = vcmp.eq.s32.totalorder %v1108, 0
        %v1111 = vxor.u32 %v1105, 2147483648
        %v1112 = vsel %vm1110, %v1104, %v1111
        %vm1113 = vcmp.eq.s32.totalorder %v1108, 2
        %v1114 = vxor.u32 %v1104, 2147483648
        %v1115 = vsel %vm1113, %v1114, %v1105
        %v1116 = vsel %vm1109, %v1112, %v1115
        %v1117 = vsel %vm1106, nan, %v1116
        %v1118 = vand.u32 2147483647, %v777
        %vm1119 = vcmp.le.f32.partialorder %v1118, 0.7853982
        %vm1120 = vcmp.lt.s32.totalorder %v777, 0
        %v1121 = vand.u32 %v777, 2139095040
        %v1122 = vshrl.u32 %v1121, 23
        %v1123 = vsub.s32 %v1122, 127
        %v1124 = vand.u32 2147483647, %v777
        %v1125 = vand.u32 %v1124, 8388607
        %v1126 = vor.u32 %v1125, 8388608
        %v1127 = vsub.s32 0, %v1126
        %v1128 = vadd.s32 %v1123, 1
        %vm1129 = vcmp.gt.s32.totalorder %v1128, 0
        %v1130 = vsel %vm1129, %v1128, 0
        %v1131 = vshrl.u32 %v1130, 5
        %v1132 = vand.u32 %v1130, 31
        %v1133 = vsub.s32 32, %v1132
        %v1134 = vshrl.u32 683565275, %v1133
        %v1135 = vshll.u32 683565275, %v1132
        %v1136 = vshrl.u32 2475754826, %v1133
        %v1137 = vor.u32 %v1135, %v1136
        %v1138 = vshll.u32 2475754826, %v1132
        %v1139 = vshrl.u32 2131351028, %v1133
        %v1140 = vor.u32 %v1138, %v1139
        %v1141 = vshll.u32 2131351028, %v1132
        %v1142 = vshrl.u32 2102212464, %v1133
        %v1143 = vor.u32 %v1141, %v1142
        %v1144 = vshll.u32 2102212464, %v1132
        %v1145 = vshrl.u32 920167782, %v1133
        %v1146 = vor.u32 %v1144, %v1145
        %v1147 = vshll.u32 920167782, %v1132
        %v1148 = vshrl.u32 1326507024, %v1133
        %v1149 = vor.u32 %v1147, %v1148
        %vm1150 = vcmp.lt.s32.totalorder %v1131, 1
        %vm1151 = vcmp.lt.s32.totalorder %v1131, 2
        %vm1152 = vcmp.lt.s32.totalorder %v1131, 3
        %vm1153 = vcmp.lt.s32.totalorder %v1131, 4
        %v1154 = vsel %vm1150, %v1134, %v1137
        %v1155 = vsel %vm1153, %v1143, 2102212464
        %v1156 = vsel %vm1152, %v1140, %v1155
        %v1157 = vsel %vm1151, %v1154, %v1156
        %v1158 = vsel %vm1150, %v1137, %v1140
        %v1159 = vsel %vm1153, %v1146, 920167782
        %v1160 = vsel %vm1152, %v1143, %v1159
        %v1161 = vsel %vm1151, %v1158, %v1160
        %v1162 = vsel %vm1150, %v1140, %v1143
        %v1163 = vsel %vm1153, %v1149, 1326507024
        %v1164 = vsel %vm1152, %v1146, %v1163
        %v1165 = vsel %vm1151, %v1162, %v1164
        %v1166 = vshll.u32 %v1126, 8
        %v1167 = vmul.u32.u64.compose %v1166, %v1165
        %v1168 = vextract.low.u32 %v1167
        %v1169 = vextract.high.u32 %v1167
        %v1170 = vmul.u32.u64.compose %v1166, %v1161
        %v1171 = vextract.low.u32 %v1170
        %v1172 = vextract.high.u32 %v1170
        %v1173 = vmul.u32 %v1166, %v1157
        %v1174 = vadd.s32 %v1169, %v1171
        %vm1175 = vc.u32 %v1169, %v1171
        %v1176 = vadd.s32 %v1172, 1
        %v1177 = vsel %vm1175, %v1176, %v1172
        %v1178 = vadd.s32 %v1173, %v1177
        %v1179 = vadd.s32 %v1178, 536870912
        %v1180 = vshrl.u32 %v1179, 30
        %v1181 = vshll.u32 %v1180, 30
        %v1182 = vsub.s32 %v1178, %v1181
        %vm1183 = vcmp.lt.s32.totalorder %v1182, 0
        %v1184 = vsub.s32 0, %v1182
        %v1185 = vsel %vm1183, %v1184, %v1182
        %v1186 = vclz %v1185
        %v1187 = vsub.s32 %v1186, 2
        %vm1188 = vcmp.gt.s32.totalorder 0, %v1187
        %v1189 = vsel %vm1188, 0, %v1187
        %v1190 = vsub.s32 32, %v1189
        %v1191 = vshll.u32 %v1182, %v1189
        %v1192 = vshrl.u32 %v1174, %v1190
        %v1193 = vor.u32 %v1191, %v1192
        %v1194 = vsub.s32 4294967266, %v1189
        %v1195 = vadd.s32 %v1194, 127
        %v1196 = vshll.u32 %v1195, 23
        %v1197 = vor.u32 4788187, %v1196
        %v1198 = vand.u32 2147483647, %v1197
        %v1200 = vcvt.s32.f32 %v1193
        %v1201 = vmul.f32 %v1200, %v1198
        %v1202 = vxor.u32 %v1201, 2147483648
        %v1203 = vsel %vm1120, %v1202, %v1201
        %v1204 = vsub.s32 4, %v1180
        %v1205 = vsel %vm1120, %v1204, %v1180
        %v1206 = vsel %vm1119, %v777, %v1203
        %v1207 = vsel %vm1119, 0, %v1205
        %v1208 = vcosq.f32.pop %v1206
        %v1209 = vsinq.f32.pop %v1206
        %vm1210 = vweird.f32 %v777
        %v1211 = vadd.s32 %v1207, 3
        %v1212 = vand.u32 %v1211, 3
        %vm1213 = vcmp.lt.s32.totalorder %v1212, 2
        %vm1214 = vcmp.eq.s32.totalorder %v1212, 0
        %v1215 = vxor.u32 %v1209, 2147483648
        %v1216 = vsel %vm1214, %v1208, %v1215
        %vm1217 = vcmp.eq.s32.totalorder %v1212, 2
        %v1218 = vxor.u32 %v1208, 2147483648
        %v1219 = vsel %vm1217, %v1218, %v1209
        %v1220 = vsel %vm1213, %v1216, %v1219
        %v1221 = vsel %vm1210, nan, %v1220
        %v1222 = vand.u32 2147483647, %v778
        %vm1223 = vcmp.le.f32.partialorder %v1222, 0.7853982
        %vm1224 = vcmp.lt.s32.totalorder %v778, 0
        %v1225 = vand.u32 %v778, 2139095040
        %v1226 = vshrl.u32 %v1225, 23
        %v1227 = vsub.s32 %v1226, 127
        %v1228 = vand.u32 2147483647, %v778
        %v1229 = vand.u32 %v1228, 8388607
        %v1230 = vor.u32 %v1229, 8388608
        %v1231 = vsub.s32 0, %v1230
        %v1232 = vadd.s32 %v1227, 1
        %vm1233 = vcmp.gt.s32.totalorder %v1232, 0
        %v1234 = vsel %vm1233, %v1232, 0
        %v1235 = vshrl.u32 %v1234, 5
        %v1236 = vand.u32 %v1234, 31
        %v1237 = vsub.s32 32, %v1236
        %v1238 = vshrl.u32 683565275, %v1237
        %v1239 = vshll.u32 683565275, %v1236
        %v1240 = vshrl.u32 2475754826, %v1237
        %v1241 = vor.u32 %v1239, %v1240
        %v1242 = vshll.u32 2475754826, %v1236
        %v1243 = vshrl.u32 2131351028, %v1237
        %v1244 = vor.u32 %v1242, %v1243
        %v1245 = vshll.u32 2131351028, %v1236
        %v1246 = vshrl.u32 2102212464, %v1237
        %v1247 = vor.u32 %v1245, %v1246
        %v1248 = vshll.u32 2102212464, %v1236
        %v1249 = vshrl.u32 920167782, %v1237
        %v1250 = vor.u32 %v1248, %v1249
        %v1251 = vshll.u32 920167782, %v1236
        %v1252 = vshrl.u32 1326507024, %v1237
        %v1253 = vor.u32 %v1251, %v1252
        %vm1254 = vcmp.lt.s32.totalorder %v1235, 1
        %vm1255 = vcmp.lt.s32.totalorder %v1235, 2
        %vm1256 = vcmp.lt.s32.totalorder %v1235, 3
        %vm1257 = vcmp.lt.s32.totalorder %v1235, 4
        %v1258 = vsel %vm1254, %v1238, %v1241
        %v1259 = vsel %vm1257, %v1247, 2102212464
        %v1260 = vsel %vm1256, %v1244, %v1259
        %v1261 = vsel %vm1255, %v1258, %v1260
        %v1262 = vsel %vm1254, %v1241, %v1244
        %v1263 = vsel %vm1257, %v1250, 920167782
        %v1264 = vsel %vm1256, %v1247, %v1263
        %v1265 = vsel %vm1255, %v1262, %v1264
        %v1266 = vsel %vm1254, %v1244, %v1247
        %v1267 = vsel %vm1257, %v1253, 1326507024
        %v1268 = vsel %vm1256, %v1250, %v1267
        %v1269 = vsel %vm1255, %v1266, %v1268
        %v1270 = vshll.u32 %v1230, 8
        %v1271 = vmul.u32.u64.compose %v1270, %v1269
        %v1272 = vextract.low.u32 %v1271
        %v1273 = vextract.high.u32 %v1271
        %v1274 = vmul.u32.u64.compose %v1270, %v1265
        %v1275 = vextract.low.u32 %v1274
        %v1276 = vextract.high.u32 %v1274
        %v1277 = vmul.u32 %v1270, %v1261
        %v1278 = vadd.s32 %v1273, %v1275
        %vm1279 = vc.u32 %v1273, %v1275
        %v1280 = vadd.s32 %v1276, 1
        %v1281 = vsel %vm1279, %v1280, %v1276
        %v1282 = vadd.s32 %v1277, %v1281
        %v1283 = vadd.s32 %v1282, 536870912
        %v1284 = vshrl.u32 %v1283, 30
        %v1285 = vshll.u32 %v1284, 30
        %v1286 = vsub.s32 %v1282, %v1285
        %vm1287 = vcmp.lt.s32.totalorder %v1286, 0
        %v1288 = vsub.s32 0, %v1286
        %v1289 = vsel %vm1287, %v1288, %v1286
        %v1290 = vclz %v1289
        %v1291 = vsub.s32 %v1290, 2
        %vm1292 = vcmp.gt.s32.totalorder 0, %v1291
        %v1293 = vsel %vm1292, 0, %v1291
        %v1294 = vsub.s32 32, %v1293
        %v1295 = vshll.u32 %v1286, %v1293
        %v1296 = vshrl.u32 %v1278, %v1294
        %v1297 = vor.u32 %v1295, %v1296
        %v1298 = vsub.s32 4294967266, %v1293
        %v1299 = vadd.s32 %v1298, 127
        %v1300 = vshll.u32 %v1299, 23
        %v1301 = vor.u32 4788187, %v1300
        %v1302 = vand.u32 2147483647, %v1301
        %v1304 = vcvt.s32.f32 %v1297
        %v1305 = vmul.f32 %v1304, %v1302
        %v1306 = vxor.u32 %v1305, 2147483648
        %v1307 = vsel %vm1224, %v1306, %v1305
        %v1308 = vsub.s32 4, %v1284
        %v1309 = vsel %vm1224, %v1308, %v1284
        %v1310 = vsel %vm1223, %v778, %v1307
        %v1311 = vsel %vm1223, 0, %v1309
        %v1312 = vcosq.f32.pop %v1310
        %v1313 = vsinq.f32.pop %v1310
        %vm1314 = vweird.f32 %v778
        %v1315 = vadd.s32 %v1311, 3
        %v1316 = vand.u32 %v1315, 3
        %vm1317 = vcmp.lt.s32.totalorder %v1316, 2
        %vm1318 = vcmp.eq.s32.totalorder %v1316, 0
        %v1319 = vxor.u32 %v1313, 2147483648
        %v1320 = vsel %vm1318, %v1312, %v1319
        %vm1321 = vcmp.eq.s32.totalorder %v1316, 2
        %v1322 = vxor.u32 %v1312, 2147483648
        %v1323 = vsel %vm1321, %v1322, %v1313
        %v1324 = vsel %vm1317, %v1320, %v1323
        %v1325 = vsel %vm1314, nan, %v1324
        %v1326 = vand.u32 2147483647, %v779
        %vm1327 = vcmp.le.f32.partialorder %v1326, 0.7853982
        %vm1328 = vcmp.lt.s32.totalorder %v779, 0
        %v1329 = vand.u32 %v779, 2139095040
        %v1330 = vshrl.u32 %v1329, 23
        %v1331 = vsub.s32 %v1330, 127
        %v1332 = vand.u32 2147483647, %v779
        %v1333 = vand.u32 %v1332, 8388607
        %v1334 = vor.u32 %v1333, 8388608
        %v1335 = vsub.s32 0, %v1334
        %v1336 = vadd.s32 %v1331, 1
        %vm1337 = vcmp.gt.s32.totalorder %v1336, 0
        %v1338 = vsel %vm1337, %v1336, 0
        %v1339 = vshrl.u32 %v1338, 5
        %v1340 = vand.u32 %v1338, 31
        %v1341 = vsub.s32 32, %v1340
        %v1342 = vshrl.u32 683565275, %v1341
        %v1343 = vshll.u32 683565275, %v1340
        %v1344 = vshrl.u32 2475754826, %v1341
        %v1345 = vor.u32 %v1343, %v1344
        %v1346 = vshll.u32 2475754826, %v1340
        %v1347 = vshrl.u32 2131351028, %v1341
        %v1348 = vor.u32 %v1346, %v1347
        %v1349 = vshll.u32 2131351028, %v1340
        %v1350 = vshrl.u32 2102212464, %v1341
        %v1351 = vor.u32 %v1349, %v1350
        %v1352 = vshll.u32 2102212464, %v1340
        %v1353 = vshrl.u32 920167782, %v1341
        %v1354 = vor.u32 %v1352, %v1353
        %v1355 = vshll.u32 920167782, %v1340
        %v1356 = vshrl.u32 1326507024, %v1341
        %v1357 = vor.u32 %v1355, %v1356
        %vm1358 = vcmp.lt.s32.totalorder %v1339, 1
        %vm1359 = vcmp.lt.s32.totalorder %v1339, 2
        %vm1360 = vcmp.lt.s32.totalorder %v1339, 3
        %vm1361 = vcmp.lt.s32.totalorder %v1339, 4
        %v1362 = vsel %vm1358, %v1342, %v1345
        %v1363 = vsel %vm1361, %v1351, 2102212464
        %v1364 = vsel %vm1360, %v1348, %v1363
        %v1365 = vsel %vm1359, %v1362, %v1364
        %v1366 = vsel %vm1358, %v1345, %v1348
        %v1367 = vsel %vm1361, %v1354, 920167782
        %v1368 = vsel %vm1360, %v1351, %v1367
        %v1369 = vsel %vm1359, %v1366, %v1368
        %v1370 = vsel %vm1358, %v1348, %v1351
        %v1371 = vsel %vm1361, %v1357, 1326507024
        %v1372 = vsel %vm1360, %v1354, %v1371
        %v1373 = vsel %vm1359, %v1370, %v1372
        %v1374 = vshll.u32 %v1334, 8
        %v1375 = vmul.u32.u64.compose %v1374, %v1373
        %v1376 = vextract.low.u32 %v1375
        %v1377 = vextract.high.u32 %v1375
        %v1378 = vmul.u32.u64.compose %v1374, %v1369
        %v1379 = vextract.low.u32 %v1378
        %v1380 = vextract.high.u32 %v1378
        %v1381 = vmul.u32 %v1374, %v1365
        %v1382 = vadd.s32 %v1377, %v1379
        %vm1383 = vc.u32 %v1377, %v1379
        %v1384 = vadd.s32 %v1380, 1
        %v1385 = vsel %vm1383, %v1384, %v1380
        %v1386 = vadd.s32 %v1381, %v1385
        %v1387 = vadd.s32 %v1386, 536870912
        %v1388 = vshrl.u32 %v1387, 30
        %v1389 = vshll.u32 %v1388, 30
        %v1390 = vsub.s32 %v1386, %v1389
        %vm1391 = vcmp.lt.s32.totalorder %v1390, 0
        %v1392 = vsub.s32 0, %v1390
        %v1393 = vsel %vm1391, %v1392, %v1390
        %v1394 = vclz %v1393
        %v1395 = vsub.s32 %v1394, 2
        %vm1396 = vcmp.gt.s32.totalorder 0, %v1395
        %v1397 = vsel %vm1396, 0, %v1395
        %v1398 = vsub.s32 32, %v1397
        %v1399 = vshll.u32 %v1390, %v1397
        %v1400 = vshrl.u32 %v1382, %v1398
        %v1401 = vor.u32 %v1399, %v1400
        %v1402 = vsub.s32 4294967266, %v1397
        %v1403 = vadd.s32 %v1402, 127
        %v1404 = vshll.u32 %v1403, 23
        %v1405 = vor.u32 4788187, %v1404
        %v1406 = vand.u32 2147483647, %v1405
        %v1408 = vcvt.s32.f32 %v1401
        %v1409 = vmul.f32 %v1408, %v1406
        %v1410 = vxor.u32 %v1409, 2147483648
        %v1411 = vsel %vm1328, %v1410, %v1409
        %v1412 = vsub.s32 4, %v1388
        %v1413 = vsel %vm1328, %v1412, %v1388
        %v1414 = vsel %vm1327, %v779, %v1411
        %v1415 = vsel %vm1327, 0, %v1413
        %v1416 = vcosq.f32.pop %v1414
        %v1417 = vsinq.f32.pop %v1414
        %vm1418 = vweird.f32 %v779
        %v1419 = vadd.s32 %v1415, 3
        %v1420 = vand.u32 %v1419, 3
        %vm1421 = vcmp.lt.s32.totalorder %v1420, 2
        %vm1422 = vcmp.eq.s32.totalorder %v1420, 0
        %v1423 = vxor.u32 %v1417, 2147483648
        %v1424 = vsel %vm1422, %v1416, %v1423
        %vm1425 = vcmp.eq.s32.totalorder %v1420, 2
        %v1426 = vxor.u32 %v1416, 2147483648
        %v1427 = vsel %vm1425, %v1426, %v1417
        %v1428 = vsel %vm1421, %v1424, %v1427
        %v1429 = vsel %vm1418, nan, %v1428
        %v1430 = vand.u32 2147483647, %v780
        %vm1431 = vcmp.le.f32.partialorder %v1430, 0.7853982
        %vm1432 = vcmp.lt.s32.totalorder %v780, 0
        %v1433 = vand.u32 %v780, 2139095040
        %v1434 = vshrl.u32 %v1433, 23
        %v1435 = vsub.s32 %v1434, 127
        %v1436 = vand.u32 2147483647, %v780
        %v1437 = vand.u32 %v1436, 8388607
        %v1438 = vor.u32 %v1437, 8388608
        %v1439 = vsub.s32 0, %v1438
        %v1440 = vadd.s32 %v1435, 1
        %vm1441 = vcmp.gt.s32.totalorder %v1440, 0
        %v1442 = vsel %vm1441, %v1440, 0
        %v1443 = vshrl.u32 %v1442, 5
        %v1444 = vand.u32 %v1442, 31
        %v1445 = vsub.s32 32, %v1444
        %v1446 = vshrl.u32 683565275, %v1445
        %v1447 = vshll.u32 683565275, %v1444
        %v1448 = vshrl.u32 2475754826, %v1445
        %v1449 = vor.u32 %v1447, %v1448
        %v1450 = vshll.u32 2475754826, %v1444
        %v1451 = vshrl.u32 2131351028, %v1445
        %v1452 = vor.u32 %v1450, %v1451
        %v1453 = vshll.u32 2131351028, %v1444
        %v1454 = vshrl.u32 2102212464, %v1445
        %v1455 = vor.u32 %v1453, %v1454
        %v1456 = vshll.u32 2102212464, %v1444
        %v1457 = vshrl.u32 920167782, %v1445
        %v1458 = vor.u32 %v1456, %v1457
        %v1459 = vshll.u32 920167782, %v1444
        %v1460 = vshrl.u32 1326507024, %v1445
        %v1461 = vor.u32 %v1459, %v1460
        %vm1462 = vcmp.lt.s32.totalorder %v1443, 1
        %vm1463 = vcmp.lt.s32.totalorder %v1443, 2
        %vm1464 = vcmp.lt.s32.totalorder %v1443, 3
        %vm1465 = vcmp.lt.s32.totalorder %v1443, 4
        %v1466 = vsel %vm1462, %v1446, %v1449
        %v1467 = vsel %vm1465, %v1455, 2102212464
        %v1468 = vsel %vm1464, %v1452, %v1467
        %v1469 = vsel %vm1463, %v1466, %v1468
        %v1470 = vsel %vm1462, %v1449, %v1452
        %v1471 = vsel %vm1465, %v1458, 920167782
        %v1472 = vsel %vm1464, %v1455, %v1471
        %v1473 = vsel %vm1463, %v1470, %v1472
        %v1474 = vsel %vm1462, %v1452, %v1455
        %v1475 = vsel %vm1465, %v1461, 1326507024
        %v1476 = vsel %vm1464, %v1458, %v1475
        %v1477 = vsel %vm1463, %v1474, %v1476
        %v1478 = vshll.u32 %v1438, 8
        %v1479 = vmul.u32.u64.compose %v1478, %v1477
        %v1480 = vextract.low.u32 %v1479
        %v1481 = vextract.high.u32 %v1479
        %v1482 = vmul.u32.u64.compose %v1478, %v1473
        %v1483 = vextract.low.u32 %v1482
        %v1484 = vextract.high.u32 %v1482
        %v1485 = vmul.u32 %v1478, %v1469
        %v1486 = vadd.s32 %v1481, %v1483
        %vm1487 = vc.u32 %v1481, %v1483
        %v1488 = vadd.s32 %v1484, 1
        %v1489 = vsel %vm1487, %v1488, %v1484
        %v1490 = vadd.s32 %v1485, %v1489
        %v1491 = vadd.s32 %v1490, 536870912
        %v1492 = vshrl.u32 %v1491, 30
        %v1493 = vshll.u32 %v1492, 30
        %v1494 = vsub.s32 %v1490, %v1493
        %vm1495 = vcmp.lt.s32.totalorder %v1494, 0
        %v1496 = vsub.s32 0, %v1494
        %v1497 = vsel %vm1495, %v1496, %v1494
        %v1498 = vclz %v1497
        %v1499 = vsub.s32 %v1498, 2
        %vm1500 = vcmp.gt.s32.totalorder 0, %v1499
        %v1501 = vsel %vm1500, 0, %v1499
        %v1502 = vsub.s32 32, %v1501
        %v1503 = vshll.u32 %v1494, %v1501
        %v1504 = vshrl.u32 %v1486, %v1502
        %v1505 = vor.u32 %v1503, %v1504
        %v1506 = vsub.s32 4294967266, %v1501
        %v1507 = vadd.s32 %v1506, 127
        %v1508 = vshll.u32 %v1507, 23
        %v1509 = vor.u32 4788187, %v1508
        %v1510 = vand.u32 2147483647, %v1509
        %v1512 = vcvt.s32.f32 %v1505
        %v1513 = vmul.f32 %v1512, %v1510
        %v1514 = vxor.u32 %v1513, 2147483648
        %v1515 = vsel %vm1432, %v1514, %v1513
        %v1516 = vsub.s32 4, %v1492
        %v1517 = vsel %vm1432, %v1516, %v1492
        %v1518 = vsel %vm1431, %v780, %v1515
        %v1519 = vsel %vm1431, 0, %v1517
        %v1520 = vcosq.f32.pop %v1518
        %v1521 = vsinq.f32.pop %v1518
        %vm1522 = vweird.f32 %v780
        %v1523 = vadd.s32 %v1519, 3
        %v1524 = vand.u32 %v1523, 3
        %vm1525 = vcmp.lt.s32.totalorder %v1524, 2
        %vm1526 = vcmp.eq.s32.totalorder %v1524, 0
        %v1527 = vxor.u32 %v1521, 2147483648
        %v1528 = vsel %vm1526, %v1520, %v1527
        %vm1529 = vcmp.eq.s32.totalorder %v1524, 2
        %v1530 = vxor.u32 %v1520, 2147483648
        %v1531 = vsel %vm1529, %v1530, %v1521
        %v1532 = vsel %vm1525, %v1528, %v1531
        %v1533 = vsel %vm1522, nan, %v1532
        %v1534 = vand.u32 2147483647, %v781
        %vm1535 = vcmp.le.f32.partialorder %v1534, 0.7853982
        %vm1536 = vcmp.lt.s32.totalorder %v781, 0
        %v1537 = vand.u32 %v781, 2139095040
        %v1538 = vshrl.u32 %v1537, 23
        %v1539 = vsub.s32 %v1538, 127
        %v1540 = vand.u32 2147483647, %v781
        %v1541 = vand.u32 %v1540, 8388607
        %v1542 = vor.u32 %v1541, 8388608
        %v1543 = vsub.s32 0, %v1542
        %v1544 = vadd.s32 %v1539, 1
        %vm1545 = vcmp.gt.s32.totalorder %v1544, 0
        %v1546 = vsel %vm1545, %v1544, 0
        %v1547 = vshrl.u32 %v1546, 5
        %v1548 = vand.u32 %v1546, 31
        %v1549 = vsub.s32 32, %v1548
        %v1550 = vshrl.u32 683565275, %v1549
        %v1551 = vshll.u32 683565275, %v1548
        %v1552 = vshrl.u32 2475754826, %v1549
        %v1553 = vor.u32 %v1551, %v1552
        %v1554 = vshll.u32 2475754826, %v1548
        %v1555 = vshrl.u32 2131351028, %v1549
        %v1556 = vor.u32 %v1554, %v1555
        %v1557 = vshll.u32 2131351028, %v1548
        %v1558 = vshrl.u32 2102212464, %v1549
        %v1559 = vor.u32 %v1557, %v1558
        %v1560 = vshll.u32 2102212464, %v1548
        %v1561 = vshrl.u32 920167782, %v1549
        %v1562 = vor.u32 %v1560, %v1561
        %v1563 = vshll.u32 920167782, %v1548
        %v1564 = vshrl.u32 1326507024, %v1549
        %v1565 = vor.u32 %v1563, %v1564
        %vm1566 = vcmp.lt.s32.totalorder %v1547, 1
        %vm1567 = vcmp.lt.s32.totalorder %v1547, 2
        %vm1568 = vcmp.lt.s32.totalorder %v1547, 3
        %vm1569 = vcmp.lt.s32.totalorder %v1547, 4
        %v1570 = vsel %vm1566, %v1550, %v1553
        %v1571 = vsel %vm1569, %v1559, 2102212464
        %v1572 = vsel %vm1568, %v1556, %v1571
        %v1573 = vsel %vm1567, %v1570, %v1572
        %v1574 = vsel %vm1566, %v1553, %v1556
        %v1575 = vsel %vm1569, %v1562, 920167782
        %v1576 = vsel %vm1568, %v1559, %v1575
        %v1577 = vsel %vm1567, %v1574, %v1576
        %v1578 = vsel %vm1566, %v1556, %v1559
        %v1579 = vsel %vm1569, %v1565, 1326507024
        %v1580 = vsel %vm1568, %v1562, %v1579
        %v1581 = vsel %vm1567, %v1578, %v1580
        %v1582 = vshll.u32 %v1542, 8
        %v1583 = vmul.u32.u64.compose %v1582, %v1581
        %v1584 = vextract.low.u32 %v1583
        %v1585 = vextract.high.u32 %v1583
        %v1586 = vmul.u32.u64.compose %v1582, %v1577
        %v1587 = vextract.low.u32 %v1586
        %v1588 = vextract.high.u32 %v1586
        %v1589 = vmul.u32 %v1582, %v1573
        %v1590 = vadd.s32 %v1585, %v1587
        %vm1591 = vc.u32 %v1585, %v1587
        %v1592 = vadd.s32 %v1588, 1
        %v1593 = vsel %vm1591, %v1592, %v1588
        %v1594 = vadd.s32 %v1589, %v1593
        %v1595 = vadd.s32 %v1594, 536870912
        %v1596 = vshrl.u32 %v1595, 30
        %v1597 = vshll.u32 %v1596, 30
        %v1598 = vsub.s32 %v1594, %v1597
        %vm1599 = vcmp.lt.s32.totalorder %v1598, 0
        %v1600 = vsub.s32 0, %v1598
        %v1601 = vsel %vm1599, %v1600, %v1598
        %v1602 = vclz %v1601
        %v1603 = vsub.s32 %v1602, 2
        %vm1604 = vcmp.gt.s32.totalorder 0, %v1603
        %v1605 = vsel %vm1604, 0, %v1603
        %v1606 = vsub.s32 32, %v1605
        %v1607 = vshll.u32 %v1598, %v1605
        %v1608 = vshrl.u32 %v1590, %v1606
        %v1609 = vor.u32 %v1607, %v1608
        %v1610 = vsub.s32 4294967266, %v1605
        %v1611 = vadd.s32 %v1610, 127
        %v1612 = vshll.u32 %v1611, 23
        %v1613 = vor.u32 4788187, %v1612
        %v1614 = vand.u32 2147483647, %v1613
        %v1616 = vcvt.s32.f32 %v1609
        %v1617 = vmul.f32 %v1616, %v1614
        %v1618 = vxor.u32 %v1617, 2147483648
        %v1619 = vsel %vm1536, %v1618, %v1617
        %v1620 = vsub.s32 4, %v1596
        %v1621 = vsel %vm1536, %v1620, %v1596
        %v1622 = vsel %vm1535, %v781, %v1619
        %v1623 = vsel %vm1535, 0, %v1621
        %v1624 = vcosq.f32.pop %v1622
        %v1625 = vsinq.f32.pop %v1622
        %vm1626 = vweird.f32 %v781
        %v1627 = vadd.s32 %v1623, 3
        %v1628 = vand.u32 %v1627, 3
        %vm1629 = vcmp.lt.s32.totalorder %v1628, 2
        %vm1630 = vcmp.eq.s32.totalorder %v1628, 0
        %v1631 = vxor.u32 %v1625, 2147483648
        %v1632 = vsel %vm1630, %v1624, %v1631
        %vm1633 = vcmp.eq.s32.totalorder %v1628, 2
        %v1634 = vxor.u32 %v1624, 2147483648
        %v1635 = vsel %vm1633, %v1634, %v1625
        %v1636 = vsel %vm1629, %v1632, %v1635
        %v1637 = vsel %vm1626, nan, %v1636
        %v1638 = vand.u32 2147483647, %v782
        %vm1639 = vcmp.le.f32.partialorder %v1638, 0.7853982
        %vm1640 = vcmp.lt.s32.totalorder %v782, 0
        %v1641 = vand.u32 %v782, 2139095040
        %v1642 = vshrl.u32 %v1641, 23
        %v1643 = vsub.s32 %v1642, 127
        %v1644 = vand.u32 2147483647, %v782
        %v1645 = vand.u32 %v1644, 8388607
        %v1646 = vor.u32 %v1645, 8388608
        %v1647 = vsub.s32 0, %v1646
        %v1648 = vadd.s32 %v1643, 1
        %vm1649 = vcmp.gt.s32.totalorder %v1648, 0
        %v1650 = vsel %vm1649, %v1648, 0
        %v1651 = vshrl.u32 %v1650, 5
        %v1652 = vand.u32 %v1650, 31
        %v1653 = vsub.s32 32, %v1652
        %v1654 = vshrl.u32 683565275, %v1653
        %v1655 = vshll.u32 683565275, %v1652
        %v1656 = vshrl.u32 2475754826, %v1653
        %v1657 = vor.u32 %v1655, %v1656
        %v1658 = vshll.u32 2475754826, %v1652
        %v1659 = vshrl.u32 2131351028, %v1653
        %v1660 = vor.u32 %v1658, %v1659
        %v1661 = vshll.u32 2131351028, %v1652
        %v1662 = vshrl.u32 2102212464, %v1653
        %v1663 = vor.u32 %v1661, %v1662
        %v1664 = vshll.u32 2102212464, %v1652
        %v1665 = vshrl.u32 920167782, %v1653
        %v1666 = vor.u32 %v1664, %v1665
        %v1667 = vshll.u32 920167782, %v1652
        %v1668 = vshrl.u32 1326507024, %v1653
        %v1669 = vor.u32 %v1667, %v1668
        %vm1670 = vcmp.lt.s32.totalorder %v1651, 1
        %vm1671 = vcmp.lt.s32.totalorder %v1651, 2
        %vm1672 = vcmp.lt.s32.totalorder %v1651, 3
        %vm1673 = vcmp.lt.s32.totalorder %v1651, 4
        %v1674 = vsel %vm1670, %v1654, %v1657
        %v1675 = vsel %vm1673, %v1663, 2102212464
        %v1676 = vsel %vm1672, %v1660, %v1675
        %v1677 = vsel %vm1671, %v1674, %v1676
        %v1678 = vsel %vm1670, %v1657, %v1660
        %v1679 = vsel %vm1673, %v1666, 920167782
        %v1680 = vsel %vm1672, %v1663, %v1679
        %v1681 = vsel %vm1671, %v1678, %v1680
        %v1682 = vsel %vm1670, %v1660, %v1663
        %v1683 = vsel %vm1673, %v1669, 1326507024
        %v1684 = vsel %vm1672, %v1666, %v1683
        %v1685 = vsel %vm1671, %v1682, %v1684
        %v1686 = vshll.u32 %v1646, 8
        %v1687 = vmul.u32.u64.compose %v1686, %v1685
        %v1688 = vextract.low.u32 %v1687
        %v1689 = vextract.high.u32 %v1687
        %v1690 = vmul.u32.u64.compose %v1686, %v1681
        %v1691 = vextract.low.u32 %v1690
        %v1692 = vextract.high.u32 %v1690
        %v1693 = vmul.u32 %v1686, %v1677
        %v1694 = vadd.s32 %v1689, %v1691
        %vm1695 = vc.u32 %v1689, %v1691
        %v1696 = vadd.s32 %v1692, 1
        %v1697 = vsel %vm1695, %v1696, %v1692
        %v1698 = vadd.s32 %v1693, %v1697
        %v1699 = vadd.s32 %v1698, 536870912
        %v1700 = vshrl.u32 %v1699, 30
        %v1701 = vshll.u32 %v1700, 30
        %v1702 = vsub.s32 %v1698, %v1701
        %vm1703 = vcmp.lt.s32.totalorder %v1702, 0
        %v1704 = vsub.s32 0, %v1702
        %v1705 = vsel %vm1703, %v1704, %v1702
        %v1706 = vclz %v1705
        %v1707 = vsub.s32 %v1706, 2
        %vm1708 = vcmp.gt.s32.totalorder 0, %v1707
        %v1709 = vsel %vm1708, 0, %v1707
        %v1710 = vsub.s32 32, %v1709
        %v1711 = vshll.u32 %v1702, %v1709
        %v1712 = vshrl.u32 %v1694, %v1710
        %v1713 = vor.u32 %v1711, %v1712
        %v1714 = vsub.s32 4294967266, %v1709
        %v1715 = vadd.s32 %v1714, 127
        %v1716 = vshll.u32 %v1715, 23
        %v1717 = vor.u32 4788187, %v1716
        %v1718 = vand.u32 2147483647, %v1717
        %v1720 = vcvt.s32.f32 %v1713
        %v1721 = vmul.f32 %v1720, %v1718
        %v1722 = vxor.u32 %v1721, 2147483648
        %v1723 = vsel %vm1640, %v1722, %v1721
        %v1724 = vsub.s32 4, %v1700
        %v1725 = vsel %vm1640, %v1724, %v1700
        %v1726 = vsel %vm1639, %v782, %v1723
        %v1727 = vsel %vm1639, 0, %v1725
        %v1728 = vcosq.f32.pop %v1726
        %v1729 = vsinq.f32.pop %v1726
        %vm1730 = vweird.f32 %v782
        %v1731 = vadd.s32 %v1727, 3
        %v1732 = vand.u32 %v1731, 3
        %vm1733 = vcmp.lt.s32.totalorder %v1732, 2
        %vm1734 = vcmp.eq.s32.totalorder %v1732, 0
        %v1735 = vxor.u32 %v1729, 2147483648
        %v1736 = vsel %vm1734, %v1728, %v1735
        %vm1737 = vcmp.eq.s32.totalorder %v1732, 2
        %v1738 = vxor.u32 %v1728, 2147483648
        %v1739 = vsel %vm1737, %v1738, %v1729
        %v1740 = vsel %vm1733, %v1736, %v1739
        %v1741 = vsel %vm1730, nan, %v1740
        %v1742 = vand.u32 2147483647, %v783
        %vm1743 = vcmp.le.f32.partialorder %v1742, 0.7853982
        %vm1744 = vcmp.lt.s32.totalorder %v783, 0
        %v1745 = vand.u32 %v783, 2139095040
        %v1746 = vshrl.u32 %v1745, 23
        %v1747 = vsub.s32 %v1746, 127
        %v1748 = vand.u32 2147483647, %v783
        %v1749 = vand.u32 %v1748, 8388607
        %v1750 = vor.u32 %v1749, 8388608
        %v1751 = vsub.s32 0, %v1750
        %v1752 = vadd.s32 %v1747, 1
        %vm1753 = vcmp.gt.s32.totalorder %v1752, 0
        %v1754 = vsel %vm1753, %v1752, 0
        %v1755 = vshrl.u32 %v1754, 5
        %v1756 = vand.u32 %v1754, 31
        %v1757 = vsub.s32 32, %v1756
        %v1758 = vshrl.u32 683565275, %v1757
        %v1759 = vshll.u32 683565275, %v1756
        %v1760 = vshrl.u32 2475754826, %v1757
        %v1761 = vor.u32 %v1759, %v1760
        %v1762 = vshll.u32 2475754826, %v1756
        %v1763 = vshrl.u32 2131351028, %v1757
        %v1764 = vor.u32 %v1762, %v1763
        %v1765 = vshll.u32 2131351028, %v1756
        %v1766 = vshrl.u32 2102212464, %v1757
        %v1767 = vor.u32 %v1765, %v1766
        %v1768 = vshll.u32 2102212464, %v1756
        %v1769 = vshrl.u32 920167782, %v1757
        %v1770 = vor.u32 %v1768, %v1769
        %v1771 = vshll.u32 920167782, %v1756
        %v1772 = vshrl.u32 1326507024, %v1757
        %v1773 = vor.u32 %v1771, %v1772
        %vm1774 = vcmp.lt.s32.totalorder %v1755, 1
        %vm1775 = vcmp.lt.s32.totalorder %v1755, 2
        %vm1776 = vcmp.lt.s32.totalorder %v1755, 3
        %vm1777 = vcmp.lt.s32.totalorder %v1755, 4
        %v1778 = vsel %vm1774, %v1758, %v1761
        %v1779 = vsel %vm1777, %v1767, 2102212464
        %v1780 = vsel %vm1776, %v1764, %v1779
        %v1781 = vsel %vm1775, %v1778, %v1780
        %v1782 = vsel %vm1774, %v1761, %v1764
        %v1783 = vsel %vm1777, %v1770, 920167782
        %v1784 = vsel %vm1776, %v1767, %v1783
        %v1785 = vsel %vm1775, %v1782, %v1784
        %v1786 = vsel %vm1774, %v1764, %v1767
        %v1787 = vsel %vm1777, %v1773, 1326507024
        %v1788 = vsel %vm1776, %v1770, %v1787
        %v1789 = vsel %vm1775, %v1786, %v1788
        %v1790 = vshll.u32 %v1750, 8
        %v1791 = vmul.u32.u64.compose %v1790, %v1789
        %v1792 = vextract.low.u32 %v1791
        %v1793 = vextract.high.u32 %v1791
        %v1794 = vmul.u32.u64.compose %v1790, %v1785
        %v1795 = vextract.low.u32 %v1794
        %v1796 = vextract.high.u32 %v1794
        %v1797 = vmul.u32 %v1790, %v1781
        %v1798 = vadd.s32 %v1793, %v1795
        %vm1799 = vc.u32 %v1793, %v1795
        %v1800 = vadd.s32 %v1796, 1
        %v1801 = vsel %vm1799, %v1800, %v1796
        %v1802 = vadd.s32 %v1797, %v1801
        %v1803 = vadd.s32 %v1802, 536870912
        %v1804 = vshrl.u32 %v1803, 30
        %v1805 = vshll.u32 %v1804, 30
        %v1806 = vsub.s32 %v1802, %v1805
        %vm1807 = vcmp.lt.s32.totalorder %v1806, 0
        %v1808 = vsub.s32 0, %v1806
        %v1809 = vsel %vm1807, %v1808, %v1806
        %v1810 = vclz %v1809
        %v1811 = vsub.s32 %v1810, 2
        %vm1812 = vcmp.gt.s32.totalorder 0, %v1811
        %v1813 = vsel %vm1812, 0, %v1811
        %v1814 = vsub.s32 32, %v1813
        %v1815 = vshll.u32 %v1806, %v1813
        %v1816 = vshrl.u32 %v1798, %v1814
        %v1817 = vor.u32 %v1815, %v1816
        %v1818 = vsub.s32 4294967266, %v1813
        %v1819 = vadd.s32 %v1818, 127
        %v1820 = vshll.u32 %v1819, 23
        %v1821 = vor.u32 4788187, %v1820
        %v1822 = vand.u32 2147483647, %v1821
        %v1824 = vcvt.s32.f32 %v1817
        %v1825 = vmul.f32 %v1824, %v1822
        %v1826 = vxor.u32 %v1825, 2147483648
        %v1827 = vsel %vm1744, %v1826, %v1825
        %v1828 = vsub.s32 4, %v1804
        %v1829 = vsel %vm1744, %v1828, %v1804
        %v1830 = vsel %vm1743, %v783, %v1827
        %v1831 = vsel %vm1743, 0, %v1829
        %v1832 = vcosq.f32.pop %v1830
        %v1833 = vsinq.f32.pop %v1830
        %vm1834 = vweird.f32 %v783
        %v1835 = vadd.s32 %v1831, 3
        %v1836 = vand.u32 %v1835, 3
        %vm1837 = vcmp.lt.s32.totalorder %v1836, 2
        %vm1838 = vcmp.eq.s32.totalorder %v1836, 0
        %v1839 = vxor.u32 %v1833, 2147483648
        %v1840 = vsel %vm1838, %v1832, %v1839
        %vm1841 = vcmp.eq.s32.totalorder %v1836, 2
        %v1842 = vxor.u32 %v1832, 2147483648
        %v1843 = vsel %vm1841, %v1842, %v1833
        %v1844 = vsel %vm1837, %v1840, %v1843
        %v1845 = vsel %vm1834, nan, %v1844
        %v1846 = vand.u32 2147483647, %v784
        %vm1847 = vcmp.le.f32.partialorder %v1846, 0.7853982
        %vm1848 = vcmp.lt.s32.totalorder %v784, 0
        %v1849 = vand.u32 %v784, 2139095040
        %v1850 = vshrl.u32 %v1849, 23
        %v1851 = vsub.s32 %v1850, 127
        %v1852 = vand.u32 2147483647, %v784
        %v1853 = vand.u32 %v1852, 8388607
        %v1854 = vor.u32 %v1853, 8388608
        %v1855 = vsub.s32 0, %v1854
        %v1856 = vadd.s32 %v1851, 1
        %vm1857 = vcmp.gt.s32.totalorder %v1856, 0
        %v1858 = vsel %vm1857, %v1856, 0
        %v1859 = vshrl.u32 %v1858, 5
        %v1860 = vand.u32 %v1858, 31
        %v1861 = vsub.s32 32, %v1860
        %v1862 = vshrl.u32 683565275, %v1861
        %v1863 = vshll.u32 683565275, %v1860
        %v1864 = vshrl.u32 2475754826, %v1861
        %v1865 = vor.u32 %v1863, %v1864
        %v1866 = vshll.u32 2475754826, %v1860
        %v1867 = vshrl.u32 2131351028, %v1861
        %v1868 = vor.u32 %v1866, %v1867
        %v1869 = vshll.u32 2131351028, %v1860
        %v1870 = vshrl.u32 2102212464, %v1861
        %v1871 = vor.u32 %v1869, %v1870
        %v1872 = vshll.u32 2102212464, %v1860
        %v1873 = vshrl.u32 920167782, %v1861
        %v1874 = vor.u32 %v1872, %v1873
        %v1875 = vshll.u32 920167782, %v1860
        %v1876 = vshrl.u32 1326507024, %v1861
        %v1877 = vor.u32 %v1875, %v1876
        %vm1878 = vcmp.lt.s32.totalorder %v1859, 1
        %vm1879 = vcmp.lt.s32.totalorder %v1859, 2
        %vm1880 = vcmp.lt.s32.totalorder %v1859, 3
        %vm1881 = vcmp.lt.s32.totalorder %v1859, 4
        %v1882 = vsel %vm1878, %v1862, %v1865
        %v1883 = vsel %vm1881, %v1871, 2102212464
        %v1884 = vsel %vm1880, %v1868, %v1883
        %v1885 = vsel %vm1879, %v1882, %v1884
        %v1886 = vsel %vm1878, %v1865, %v1868
        %v1887 = vsel %vm1881, %v1874, 920167782
        %v1888 = vsel %vm1880, %v1871, %v1887
        %v1889 = vsel %vm1879, %v1886, %v1888
        %v1890 = vsel %vm1878, %v1868, %v1871
        %v1891 = vsel %vm1881, %v1877, 1326507024
        %v1892 = vsel %vm1880, %v1874, %v1891
        %v1893 = vsel %vm1879, %v1890, %v1892
        %v1894 = vshll.u32 %v1854, 8
        %v1895 = vmul.u32.u64.compose %v1894, %v1893
        %v1896 = vextract.low.u32 %v1895
        %v1897 = vextract.high.u32 %v1895
        %v1898 = vmul.u32.u64.compose %v1894, %v1889
        %v1899 = vextract.low.u32 %v1898
        %v1900 = vextract.high.u32 %v1898
        %v1901 = vmul.u32 %v1894, %v1885
        %v1902 = vadd.s32 %v1897, %v1899
        %vm1903 = vc.u32 %v1897, %v1899
        %v1904 = vadd.s32 %v1900, 1
        %v1905 = vsel %vm1903, %v1904, %v1900
        %v1906 = vadd.s32 %v1901, %v1905
        %v1907 = vadd.s32 %v1906, 536870912
        %v1908 = vshrl.u32 %v1907, 30
        %v1909 = vshll.u32 %v1908, 30
        %v1910 = vsub.s32 %v1906, %v1909
        %vm1911 = vcmp.lt.s32.totalorder %v1910, 0
        %v1912 = vsub.s32 0, %v1910
        %v1913 = vsel %vm1911, %v1912, %v1910
        %v1914 = vclz %v1913
        %v1915 = vsub.s32 %v1914, 2
        %vm1916 = vcmp.gt.s32.totalorder 0, %v1915
        %v1917 = vsel %vm1916, 0, %v1915
        %v1918 = vsub.s32 32, %v1917
        %v1919 = vshll.u32 %v1910, %v1917
        %v1920 = vshrl.u32 %v1902, %v1918
        %v1921 = vor.u32 %v1919, %v1920
        %v1922 = vsub.s32 4294967266, %v1917
        %v1923 = vadd.s32 %v1922, 127
        %v1924 = vshll.u32 %v1923, 23
        %v1925 = vor.u32 4788187, %v1924
        %v1926 = vand.u32 2147483647, %v1925
        %v1928 = vcvt.s32.f32 %v1921
        %v1929 = vmul.f32 %v1928, %v1926
        %v1930 = vxor.u32 %v1929, 2147483648
        %v1931 = vsel %vm1848, %v1930, %v1929
        %v1932 = vsub.s32 4, %v1908
        %v1933 = vsel %vm1848, %v1932, %v1908
        %v1934 = vsel %vm1847, %v784, %v1931
        %v1935 = vsel %vm1847, 0, %v1933
        %v1936 = vcosq.f32.pop %v1934
        %v1937 = vsinq.f32.pop %v1934
        %vm1938 = vweird.f32 %v784
        %v1939 = vadd.s32 %v1935, 3
        %v1940 = vand.u32 %v1939, 3
        %vm1941 = vcmp.lt.s32.totalorder %v1940, 2
        %vm1942 = vcmp.eq.s32.totalorder %v1940, 0
        %v1943 = vxor.u32 %v1937, 2147483648
        %v1944 = vsel %vm1942, %v1936, %v1943
        %vm1945 = vcmp.eq.s32.totalorder %v1940, 2
        %v1946 = vxor.u32 %v1936, 2147483648
        %v1947 = vsel %vm1945, %v1946, %v1937
        %v1948 = vsel %vm1941, %v1944, %v1947
        %v1949 = vsel %vm1938, nan, %v1948
        %v1950 = vand.u32 2147483647, %v785
        %vm1951 = vcmp.le.f32.partialorder %v1950, 0.7853982
        %vm1952 = vcmp.lt.s32.totalorder %v785, 0
        %v1953 = vand.u32 %v785, 2139095040
        %v1954 = vshrl.u32 %v1953, 23
        %v1955 = vsub.s32 %v1954, 127
        %v1956 = vand.u32 2147483647, %v785
        %v1957 = vand.u32 %v1956, 8388607
        %v1958 = vor.u32 %v1957, 8388608
        %v1959 = vsub.s32 0, %v1958
        %v1960 = vadd.s32 %v1955, 1
        %vm1961 = vcmp.gt.s32.totalorder %v1960, 0
        %v1962 = vsel %vm1961, %v1960, 0
        %v1963 = vshrl.u32 %v1962, 5
        %v1964 = vand.u32 %v1962, 31
        %v1965 = vsub.s32 32, %v1964
        %v1966 = vshrl.u32 683565275, %v1965
        %v1967 = vshll.u32 683565275, %v1964
        %v1968 = vshrl.u32 2475754826, %v1965
        %v1969 = vor.u32 %v1967, %v1968
        %v1970 = vshll.u32 2475754826, %v1964
        %v1971 = vshrl.u32 2131351028, %v1965
        %v1972 = vor.u32 %v1970, %v1971
        %v1973 = vshll.u32 2131351028, %v1964
        %v1974 = vshrl.u32 2102212464, %v1965
        %v1975 = vor.u32 %v1973, %v1974
        %v1976 = vshll.u32 2102212464, %v1964
        %v1977 = vshrl.u32 920167782, %v1965
        %v1978 = vor.u32 %v1976, %v1977
        %v1979 = vshll.u32 920167782, %v1964
        %v1980 = vshrl.u32 1326507024, %v1965
        %v1981 = vor.u32 %v1979, %v1980
        %vm1982 = vcmp.lt.s32.totalorder %v1963, 1
        %vm1983 = vcmp.lt.s32.totalorder %v1963, 2
        %vm1984 = vcmp.lt.s32.totalorder %v1963, 3
        %vm1985 = vcmp.lt.s32.totalorder %v1963, 4
        %v1986 = vsel %vm1982, %v1966, %v1969
        %v1987 = vsel %vm1985, %v1975, 2102212464
        %v1988 = vsel %vm1984, %v1972, %v1987
        %v1989 = vsel %vm1983, %v1986, %v1988
        %v1990 = vsel %vm1982, %v1969, %v1972
        %v1991 = vsel %vm1985, %v1978, 920167782
        %v1992 = vsel %vm1984, %v1975, %v1991
        %v1993 = vsel %vm1983, %v1990, %v1992
        %v1994 = vsel %vm1982, %v1972, %v1975
        %v1995 = vsel %vm1985, %v1981, 1326507024
        %v1996 = vsel %vm1984, %v1978, %v1995
        %v1997 = vsel %vm1983, %v1994, %v1996
        %v1998 = vshll.u32 %v1958, 8
        %v1999 = vmul.u32.u64.compose %v1998, %v1997
        %v2000 = vextract.low.u32 %v1999
        %v2001 = vextract.high.u32 %v1999
        %v2002 = vmul.u32.u64.compose %v1998, %v1993
        %v2003 = vextract.low.u32 %v2002
        %v2004 = vextract.high.u32 %v2002
        %v2005 = vmul.u32 %v1998, %v1989
        %v2006 = vadd.s32 %v2001, %v2003
        %vm2007 = vc.u32 %v2001, %v2003
        %v2008 = vadd.s32 %v2004, 1
        %v2009 = vsel %vm2007, %v2008, %v2004
        %v2010 = vadd.s32 %v2005, %v2009
        %v2011 = vadd.s32 %v2010, 536870912
        %v2012 = vshrl.u32 %v2011, 30
        %v2013 = vshll.u32 %v2012, 30
        %v2014 = vsub.s32 %v2010, %v2013
        %vm2015 = vcmp.lt.s32.totalorder %v2014, 0
        %v2016 = vsub.s32 0, %v2014
        %v2017 = vsel %vm2015, %v2016, %v2014
        %v2018 = vclz %v2017
        %v2019 = vsub.s32 %v2018, 2
        %vm2020 = vcmp.gt.s32.totalorder 0, %v2019
        %v2021 = vsel %vm2020, 0, %v2019
        %v2022 = vsub.s32 32, %v2021
        %v2023 = vshll.u32 %v2014, %v2021
        %v2024 = vshrl.u32 %v2006, %v2022
        %v2025 = vor.u32 %v2023, %v2024
        %v2026 = vsub.s32 4294967266, %v2021
        %v2027 = vadd.s32 %v2026, 127
        %v2028 = vshll.u32 %v2027, 23
        %v2029 = vor.u32 4788187, %v2028
        %v2030 = vand.u32 2147483647, %v2029
        %v2032 = vcvt.s32.f32 %v2025
        %v2033 = vmul.f32 %v2032, %v2030
        %v2034 = vxor.u32 %v2033, 2147483648
        %v2035 = vsel %vm1952, %v2034, %v2033
        %v2036 = vsub.s32 4, %v2012
        %v2037 = vsel %vm1952, %v2036, %v2012
        %v2038 = vsel %vm1951, %v785, %v2035
        %v2039 = vsel %vm1951, 0, %v2037
        %v2040 = vcosq.f32.pop %v2038
        %v2041 = vsinq.f32.pop %v2038
        %vm2042 = vweird.f32 %v785
        %v2043 = vadd.s32 %v2039, 3
        %v2044 = vand.u32 %v2043, 3
        %vm2045 = vcmp.lt.s32.totalorder %v2044, 2
        %vm2046 = vcmp.eq.s32.totalorder %v2044, 0
        %v2047 = vxor.u32 %v2041, 2147483648
        %v2048 = vsel %vm2046, %v2040, %v2047
        %vm2049 = vcmp.eq.s32.totalorder %v2044, 2
        %v2050 = vxor.u32 %v2040, 2147483648
        %v2051 = vsel %vm2049, %v2050, %v2041
        %v2052 = vsel %vm2045, %v2048, %v2051
        %v2053 = vsel %vm2042, nan, %v2052
        %v2054 = vand.u32 2147483647, %v786
        %vm2055 = vcmp.le.f32.partialorder %v2054, 0.7853982
        %vm2056 = vcmp.lt.s32.totalorder %v786, 0
        %v2057 = vand.u32 %v786, 2139095040
        %v2058 = vshrl.u32 %v2057, 23
        %v2059 = vsub.s32 %v2058, 127
        %v2060 = vand.u32 2147483647, %v786
        %v2061 = vand.u32 %v2060, 8388607
        %v2062 = vor.u32 %v2061, 8388608
        %v2063 = vsub.s32 0, %v2062
        %v2064 = vadd.s32 %v2059, 1
        %vm2065 = vcmp.gt.s32.totalorder %v2064, 0
        %v2066 = vsel %vm2065, %v2064, 0
        %v2067 = vshrl.u32 %v2066, 5
        %v2068 = vand.u32 %v2066, 31
        %v2069 = vsub.s32 32, %v2068
        %v2070 = vshrl.u32 683565275, %v2069
        %v2071 = vshll.u32 683565275, %v2068
        %v2072 = vshrl.u32 2475754826, %v2069
        %v2073 = vor.u32 %v2071, %v2072
        %v2074 = vshll.u32 2475754826, %v2068
        %v2075 = vshrl.u32 2131351028, %v2069
        %v2076 = vor.u32 %v2074, %v2075
        %v2077 = vshll.u32 2131351028, %v2068
        %v2078 = vshrl.u32 2102212464, %v2069
        %v2079 = vor.u32 %v2077, %v2078
        %v2080 = vshll.u32 2102212464, %v2068
        %v2081 = vshrl.u32 920167782, %v2069
        %v2082 = vor.u32 %v2080, %v2081
        %v2083 = vshll.u32 920167782, %v2068
        %v2084 = vshrl.u32 1326507024, %v2069
        %v2085 = vor.u32 %v2083, %v2084
        %vm2086 = vcmp.lt.s32.totalorder %v2067, 1
        %vm2087 = vcmp.lt.s32.totalorder %v2067, 2
        %vm2088 = vcmp.lt.s32.totalorder %v2067, 3
        %vm2089 = vcmp.lt.s32.totalorder %v2067, 4
        %v2090 = vsel %vm2086, %v2070, %v2073
        %v2091 = vsel %vm2089, %v2079, 2102212464
        %v2092 = vsel %vm2088, %v2076, %v2091
        %v2093 = vsel %vm2087, %v2090, %v2092
        %v2094 = vsel %vm2086, %v2073, %v2076
        %v2095 = vsel %vm2089, %v2082, 920167782
        %v2096 = vsel %vm2088, %v2079, %v2095
        %v2097 = vsel %vm2087, %v2094, %v2096
        %v2098 = vsel %vm2086, %v2076, %v2079
        %v2099 = vsel %vm2089, %v2085, 1326507024
        %v2100 = vsel %vm2088, %v2082, %v2099
        %v2101 = vsel %vm2087, %v2098, %v2100
        %v2102 = vshll.u32 %v2062, 8
        %v2103 = vmul.u32.u64.compose %v2102, %v2101
        %v2104 = vextract.low.u32 %v2103
        %v2105 = vextract.high.u32 %v2103
        %v2106 = vmul.u32.u64.compose %v2102, %v2097
        %v2107 = vextract.low.u32 %v2106
        %v2108 = vextract.high.u32 %v2106
        %v2109 = vmul.u32 %v2102, %v2093
        %v2110 = vadd.s32 %v2105, %v2107
        %vm2111 = vc.u32 %v2105, %v2107
        %v2112 = vadd.s32 %v2108, 1
        %v2113 = vsel %vm2111, %v2112, %v2108
        %v2114 = vadd.s32 %v2109, %v2113
        %v2115 = vadd.s32 %v2114, 536870912
        %v2116 = vshrl.u32 %v2115, 30
        %v2117 = vshll.u32 %v2116, 30
        %v2118 = vsub.s32 %v2114, %v2117
        %vm2119 = vcmp.lt.s32.totalorder %v2118, 0
        %v2120 = vsub.s32 0, %v2118
        %v2121 = vsel %vm2119, %v2120, %v2118
        %v2122 = vclz %v2121
        %v2123 = vsub.s32 %v2122, 2
        %vm2124 = vcmp.gt.s32.totalorder 0, %v2123
        %v2125 = vsel %vm2124, 0, %v2123
        %v2126 = vsub.s32 32, %v2125
        %v2127 = vshll.u32 %v2118, %v2125
        %v2128 = vshrl.u32 %v2110, %v2126
        %v2129 = vor.u32 %v2127, %v2128
        %v2130 = vsub.s32 4294967266, %v2125
        %v2131 = vadd.s32 %v2130, 127
        %v2132 = vshll.u32 %v2131, 23
        %v2133 = vor.u32 4788187, %v2132
        %v2134 = vand.u32 2147483647, %v2133
        %v2136 = vcvt.s32.f32 %v2129
        %v2137 = vmul.f32 %v2136, %v2134
        %v2138 = vxor.u32 %v2137, 2147483648
        %v2139 = vsel %vm2056, %v2138, %v2137
        %v2140 = vsub.s32 4, %v2116
        %v2141 = vsel %vm2056, %v2140, %v2116
        %v2142 = vsel %vm2055, %v786, %v2139
        %v2143 = vsel %vm2055, 0, %v2141
        %v2144 = vcosq.f32.pop %v2142
        %v2145 = vsinq.f32.pop %v2142
        %vm2146 = vweird.f32 %v786
        %v2147 = vadd.s32 %v2143, 3
        %v2148 = vand.u32 %v2147, 3
        %vm2149 = vcmp.lt.s32.totalorder %v2148, 2
        %vm2150 = vcmp.eq.s32.totalorder %v2148, 0
        %v2151 = vxor.u32 %v2145, 2147483648
        %v2152 = vsel %vm2150, %v2144, %v2151
        %vm2153 = vcmp.eq.s32.totalorder %v2148, 2
        %v2154 = vxor.u32 %v2144, 2147483648
        %v2155 = vsel %vm2153, %v2154, %v2145
        %v2156 = vsel %vm2149, %v2152, %v2155
        %v2157 = vsel %vm2146, nan, %v2156
        %v2158 = vand.u32 2147483647, %v787
        %vm2159 = vcmp.le.f32.partialorder %v2158, 0.7853982
        %vm2160 = vcmp.lt.s32.totalorder %v787, 0
        %v2161 = vand.u32 %v787, 2139095040
        %v2162 = vshrl.u32 %v2161, 23
        %v2163 = vsub.s32 %v2162, 127
        %v2164 = vand.u32 2147483647, %v787
        %v2165 = vand.u32 %v2164, 8388607
        %v2166 = vor.u32 %v2165, 8388608
        %v2167 = vsub.s32 0, %v2166
        %v2168 = vadd.s32 %v2163, 1
        %vm2169 = vcmp.gt.s32.totalorder %v2168, 0
        %v2170 = vsel %vm2169, %v2168, 0
        %v2171 = vshrl.u32 %v2170, 5
        %v2172 = vand.u32 %v2170, 31
        %v2173 = vsub.s32 32, %v2172
        %v2174 = vshrl.u32 683565275, %v2173
        %v2175 = vshll.u32 683565275, %v2172
        %v2176 = vshrl.u32 2475754826, %v2173
        %v2177 = vor.u32 %v2175, %v2176
        %v2178 = vshll.u32 2475754826, %v2172
        %v2179 = vshrl.u32 2131351028, %v2173
        %v2180 = vor.u32 %v2178, %v2179
        %v2181 = vshll.u32 2131351028, %v2172
        %v2182 = vshrl.u32 2102212464, %v2173
        %v2183 = vor.u32 %v2181, %v2182
        %v2184 = vshll.u32 2102212464, %v2172
        %v2185 = vshrl.u32 920167782, %v2173
        %v2186 = vor.u32 %v2184, %v2185
        %v2187 = vshll.u32 920167782, %v2172
        %v2188 = vshrl.u32 1326507024, %v2173
        %v2189 = vor.u32 %v2187, %v2188
        %vm2190 = vcmp.lt.s32.totalorder %v2171, 1
        %vm2191 = vcmp.lt.s32.totalorder %v2171, 2
        %vm2192 = vcmp.lt.s32.totalorder %v2171, 3
        %vm2193 = vcmp.lt.s32.totalorder %v2171, 4
        %v2194 = vsel %vm2190, %v2174, %v2177
        %v2195 = vsel %vm2193, %v2183, 2102212464
        %v2196 = vsel %vm2192, %v2180, %v2195
        %v2197 = vsel %vm2191, %v2194, %v2196
        %v2198 = vsel %vm2190, %v2177, %v2180
        %v2199 = vsel %vm2193, %v2186, 920167782
        %v2200 = vsel %vm2192, %v2183, %v2199
        %v2201 = vsel %vm2191, %v2198, %v2200
        %v2202 = vsel %vm2190, %v2180, %v2183
        %v2203 = vsel %vm2193, %v2189, 1326507024
        %v2204 = vsel %vm2192, %v2186, %v2203
        %v2205 = vsel %vm2191, %v2202, %v2204
        %v2206 = vshll.u32 %v2166, 8
        %v2207 = vmul.u32.u64.compose %v2206, %v2205
        %v2208 = vextract.low.u32 %v2207
        %v2209 = vextract.high.u32 %v2207
        %v2210 = vmul.u32.u64.compose %v2206, %v2201
        %v2211 = vextract.low.u32 %v2210
        %v2212 = vextract.high.u32 %v2210
        %v2213 = vmul.u32 %v2206, %v2197
        %v2214 = vadd.s32 %v2209, %v2211
        %vm2215 = vc.u32 %v2209, %v2211
        %v2216 = vadd.s32 %v2212, 1
        %v2217 = vsel %vm2215, %v2216, %v2212
        %v2218 = vadd.s32 %v2213, %v2217
        %v2219 = vadd.s32 %v2218, 536870912
        %v2220 = vshrl.u32 %v2219, 30
        %v2221 = vshll.u32 %v2220, 30
        %v2222 = vsub.s32 %v2218, %v2221
        %vm2223 = vcmp.lt.s32.totalorder %v2222, 0
        %v2224 = vsub.s32 0, %v2222
        %v2225 = vsel %vm2223, %v2224, %v2222
        %v2226 = vclz %v2225
        %v2227 = vsub.s32 %v2226, 2
        %vm2228 = vcmp.gt.s32.totalorder 0, %v2227
        %v2229 = vsel %vm2228, 0, %v2227
        %v2230 = vsub.s32 32, %v2229
        %v2231 = vshll.u32 %v2222, %v2229
        %v2232 = vshrl.u32 %v2214, %v2230
        %v2233 = vor.u32 %v2231, %v2232
        %v2234 = vsub.s32 4294967266, %v2229
        %v2235 = vadd.s32 %v2234, 127
        %v2236 = vshll.u32 %v2235, 23
        %v2237 = vor.u32 4788187, %v2236
        %v2238 = vand.u32 2147483647, %v2237
        %v2240 = vcvt.s32.f32 %v2233
        %v2241 = vmul.f32 %v2240, %v2238
        %v2242 = vxor.u32 %v2241, 2147483648
        %v2243 = vsel %vm2160, %v2242, %v2241
        %v2244 = vsub.s32 4, %v2220
        %v2245 = vsel %vm2160, %v2244, %v2220
        %v2246 = vsel %vm2159, %v787, %v2243
        %v2247 = vsel %vm2159, 0, %v2245
        %v2248 = vcosq.f32.pop %v2246
        %v2249 = vsinq.f32.pop %v2246
        %vm2250 = vweird.f32 %v787
        %v2251 = vadd.s32 %v2247, 3
        %v2252 = vand.u32 %v2251, 3
        %vm2253 = vcmp.lt.s32.totalorder %v2252, 2
        %vm2254 = vcmp.eq.s32.totalorder %v2252, 0
        %v2255 = vxor.u32 %v2249, 2147483648
        %v2256 = vsel %vm2254, %v2248, %v2255
        %vm2257 = vcmp.eq.s32.totalorder %v2252, 2
        %v2258 = vxor.u32 %v2248, 2147483648
        %v2259 = vsel %vm2257, %v2258, %v2249
        %v2260 = vsel %vm2253, %v2256, %v2259
        %v2261 = vsel %vm2250, nan, %v2260
        %v2262 = vand.u32 2147483647, %v788
        %vm2263 = vcmp.le.f32.partialorder %v2262, 0.7853982
        %vm2264 = vcmp.lt.s32.totalorder %v788, 0
        %v2265 = vand.u32 %v788, 2139095040
        %v2266 = vshrl.u32 %v2265, 23
        %v2267 = vsub.s32 %v2266, 127
        %v2268 = vand.u32 2147483647, %v788
        %v2269 = vand.u32 %v2268, 8388607
        %v2270 = vor.u32 %v2269, 8388608
        %v2271 = vsub.s32 0, %v2270
        %v2272 = vadd.s32 %v2267, 1
        %vm2273 = vcmp.gt.s32.totalorder %v2272, 0
        %v2274 = vsel %vm2273, %v2272, 0
        %v2275 = vshrl.u32 %v2274, 5
        %v2276 = vand.u32 %v2274, 31
        %v2277 = vsub.s32 32, %v2276
        %v2278 = vshrl.u32 683565275, %v2277
        %v2279 = vshll.u32 683565275, %v2276
        %v2280 = vshrl.u32 2475754826, %v2277
        %v2281 = vor.u32 %v2279, %v2280
        %v2282 = vshll.u32 2475754826, %v2276
        %v2283 = vshrl.u32 2131351028, %v2277
        %v2284 = vor.u32 %v2282, %v2283
        %v2285 = vshll.u32 2131351028, %v2276
        %v2286 = vshrl.u32 2102212464, %v2277
        %v2287 = vor.u32 %v2285, %v2286
        %v2288 = vshll.u32 2102212464, %v2276
        %v2289 = vshrl.u32 920167782, %v2277
        %v2290 = vor.u32 %v2288, %v2289
        %v2291 = vshll.u32 920167782, %v2276
        %v2292 = vshrl.u32 1326507024, %v2277
        %v2293 = vor.u32 %v2291, %v2292
        %vm2294 = vcmp.lt.s32.totalorder %v2275, 1
        %vm2295 = vcmp.lt.s32.totalorder %v2275, 2
        %vm2296 = vcmp.lt.s32.totalorder %v2275, 3
        %vm2297 = vcmp.lt.s32.totalorder %v2275, 4
        %v2298 = vsel %vm2294, %v2278, %v2281
        %v2299 = vsel %vm2297, %v2287, 2102212464
        %v2300 = vsel %vm2296, %v2284, %v2299
        %v2301 = vsel %vm2295, %v2298, %v2300
        %v2302 = vsel %vm2294, %v2281, %v2284
        %v2303 = vsel %vm2297, %v2290, 920167782
        %v2304 = vsel %vm2296, %v2287, %v2303
        %v2305 = vsel %vm2295, %v2302, %v2304
        %v2306 = vsel %vm2294, %v2284, %v2287
        %v2307 = vsel %vm2297, %v2293, 1326507024
        %v2308 = vsel %vm2296, %v2290, %v2307
        %v2309 = vsel %vm2295, %v2306, %v2308
        %v2310 = vshll.u32 %v2270, 8
        %v2311 = vmul.u32.u64.compose %v2310, %v2309
        %v2312 = vextract.low.u32 %v2311
        %v2313 = vextract.high.u32 %v2311
        %v2314 = vmul.u32.u64.compose %v2310, %v2305
        %v2315 = vextract.low.u32 %v2314
        %v2316 = vextract.high.u32 %v2314
        %v2317 = vmul.u32 %v2310, %v2301
        %v2318 = vadd.s32 %v2313, %v2315
        %vm2319 = vc.u32 %v2313, %v2315
        %v2320 = vadd.s32 %v2316, 1
        %v2321 = vsel %vm2319, %v2320, %v2316
        %v2322 = vadd.s32 %v2317, %v2321
        %v2323 = vadd.s32 %v2322, 536870912
        %v2324 = vshrl.u32 %v2323, 30
        %v2325 = vshll.u32 %v2324, 30
        %v2326 = vsub.s32 %v2322, %v2325
        %vm2327 = vcmp.lt.s32.totalorder %v2326, 0
        %v2328 = vsub.s32 0, %v2326
        %v2329 = vsel %vm2327, %v2328, %v2326
        %v2330 = vclz %v2329
        %v2331 = vsub.s32 %v2330, 2
        %vm2332 = vcmp.gt.s32.totalorder 0, %v2331
        %v2333 = vsel %vm2332, 0, %v2331
        %v2334 = vsub.s32 32, %v2333
        %v2335 = vshll.u32 %v2326, %v2333
        %v2336 = vshrl.u32 %v2318, %v2334
        %v2337 = vor.u32 %v2335, %v2336
        %v2338 = vsub.s32 4294967266, %v2333
        %v2339 = vadd.s32 %v2338, 127
        %v2340 = vshll.u32 %v2339, 23
        %v2341 = vor.u32 4788187, %v2340
        %v2342 = vand.u32 2147483647, %v2341
        %v2344 = vcvt.s32.f32 %v2337
        %v2345 = vmul.f32 %v2344, %v2342
        %v2346 = vxor.u32 %v2345, 2147483648
        %v2347 = vsel %vm2264, %v2346, %v2345
        %v2348 = vsub.s32 4, %v2324
        %v2349 = vsel %vm2264, %v2348, %v2324
        %v2350 = vsel %vm2263, %v788, %v2347
        %v2351 = vsel %vm2263, 0, %v2349
        %v2352 = vcosq.f32.pop %v2350
        %v2353 = vsinq.f32.pop %v2350
        %vm2354 = vweird.f32 %v788
        %v2355 = vadd.s32 %v2351, 3
        %v2356 = vand.u32 %v2355, 3
        %vm2357 = vcmp.lt.s32.totalorder %v2356, 2
        %vm2358 = vcmp.eq.s32.totalorder %v2356, 0
        %v2359 = vxor.u32 %v2353, 2147483648
        %v2360 = vsel %vm2358, %v2352, %v2359
        %vm2361 = vcmp.eq.s32.totalorder %v2356, 2
        %v2362 = vxor.u32 %v2352, 2147483648
        %v2363 = vsel %vm2361, %v2362, %v2353
        %v2364 = vsel %vm2357, %v2360, %v2363
        %v2365 = vsel %vm2354, nan, %v2364
        %v2366 = vand.u32 2147483647, %v789
        %vm2367 = vcmp.le.f32.partialorder %v2366, 0.7853982
        %vm2368 = vcmp.lt.s32.totalorder %v789, 0
        %v2369 = vand.u32 %v789, 2139095040
        %v2370 = vshrl.u32 %v2369, 23
        %v2371 = vsub.s32 %v2370, 127
        %v2372 = vand.u32 2147483647, %v789
        %v2373 = vand.u32 %v2372, 8388607
        %v2374 = vor.u32 %v2373, 8388608
        %v2375 = vsub.s32 0, %v2374
        %v2376 = vadd.s32 %v2371, 1
        %vm2377 = vcmp.gt.s32.totalorder %v2376, 0
        %v2378 = vsel %vm2377, %v2376, 0
        %v2379 = vshrl.u32 %v2378, 5
        %v2380 = vand.u32 %v2378, 31
        %v2381 = vsub.s32 32, %v2380
        %v2382 = vshrl.u32 683565275, %v2381
        %v2383 = vshll.u32 683565275, %v2380
        %v2384 = vshrl.u32 2475754826, %v2381
        %v2385 = vor.u32 %v2383, %v2384
        %v2386 = vshll.u32 2475754826, %v2380
        %v2387 = vshrl.u32 2131351028, %v2381
        %v2388 = vor.u32 %v2386, %v2387
        %v2389 = vshll.u32 2131351028, %v2380
        %v2390 = vshrl.u32 2102212464, %v2381
        %v2391 = vor.u32 %v2389, %v2390
        %v2392 = vshll.u32 2102212464, %v2380
        %v2393 = vshrl.u32 920167782, %v2381
        %v2394 = vor.u32 %v2392, %v2393
        %v2395 = vshll.u32 920167782, %v2380
        %v2396 = vshrl.u32 1326507024, %v2381
        %v2397 = vor.u32 %v2395, %v2396
        %vm2398 = vcmp.lt.s32.totalorder %v2379, 1
        %vm2399 = vcmp.lt.s32.totalorder %v2379, 2
        %vm2400 = vcmp.lt.s32.totalorder %v2379, 3
        %vm2401 = vcmp.lt.s32.totalorder %v2379, 4
        %v2402 = vsel %vm2398, %v2382, %v2385
        %v2403 = vsel %vm2401, %v2391, 2102212464
        %v2404 = vsel %vm2400, %v2388, %v2403
        %v2405 = vsel %vm2399, %v2402, %v2404
        %v2406 = vsel %vm2398, %v2385, %v2388
        %v2407 = vsel %vm2401, %v2394, 920167782
        %v2408 = vsel %vm2400, %v2391, %v2407
        %v2409 = vsel %vm2399, %v2406, %v2408
        %v2410 = vsel %vm2398, %v2388, %v2391
        %v2411 = vsel %vm2401, %v2397, 1326507024
        %v2412 = vsel %vm2400, %v2394, %v2411
        %v2413 = vsel %vm2399, %v2410, %v2412
        %v2414 = vshll.u32 %v2374, 8
        %v2415 = vmul.u32.u64.compose %v2414, %v2413
        %v2416 = vextract.low.u32 %v2415
        %v2417 = vextract.high.u32 %v2415
        %v2418 = vmul.u32.u64.compose %v2414, %v2409
        %v2419 = vextract.low.u32 %v2418
        %v2420 = vextract.high.u32 %v2418
        %v2421 = vmul.u32 %v2414, %v2405
        %v2422 = vadd.s32 %v2417, %v2419
        %vm2423 = vc.u32 %v2417, %v2419
        %v2424 = vadd.s32 %v2420, 1
        %v2425 = vsel %vm2423, %v2424, %v2420
        %v2426 = vadd.s32 %v2421, %v2425
        %v2427 = vadd.s32 %v2426, 536870912
        %v2428 = vshrl.u32 %v2427, 30
        %v2429 = vshll.u32 %v2428, 30
        %v2430 = vsub.s32 %v2426, %v2429
        %vm2431 = vcmp.lt.s32.totalorder %v2430, 0
        %v2432 = vsub.s32 0, %v2430
        %v2433 = vsel %vm2431, %v2432, %v2430
        %v2434 = vclz %v2433
        %v2435 = vsub.s32 %v2434, 2
        %vm2436 = vcmp.gt.s32.totalorder 0, %v2435
        %v2437 = vsel %vm2436, 0, %v2435
        %v2438 = vsub.s32 32, %v2437
        %v2439 = vshll.u32 %v2430, %v2437
        %v2440 = vshrl.u32 %v2422, %v2438
        %v2441 = vor.u32 %v2439, %v2440
        %v2442 = vsub.s32 4294967266, %v2437
        %v2443 = vadd.s32 %v2442, 127
        %v2444 = vshll.u32 %v2443, 23
        %v2445 = vor.u32 4788187, %v2444
        %v2446 = vand.u32 2147483647, %v2445
        %v2448 = vcvt.s32.f32 %v2441
        %v2449 = vmul.f32 %v2448, %v2446
        %v2450 = vxor.u32 %v2449, 2147483648
        %v2451 = vsel %vm2368, %v2450, %v2449
        %v2452 = vsub.s32 4, %v2428
        %v2453 = vsel %vm2368, %v2452, %v2428
        %v2454 = vsel %vm2367, %v789, %v2451
        %v2455 = vsel %vm2367, 0, %v2453
        %v2456 = vcosq.f32.pop %v2454
        %v2457 = vsinq.f32.pop %v2454
        %vm2458 = vweird.f32 %v789
        %v2459 = vadd.s32 %v2455, 3
        %v2460 = vand.u32 %v2459, 3
        %vm2461 = vcmp.lt.s32.totalorder %v2460, 2
        %vm2462 = vcmp.eq.s32.totalorder %v2460, 0
        %v2463 = vxor.u32 %v2457, 2147483648
        %v2464 = vsel %vm2462, %v2456, %v2463
        %vm2465 = vcmp.eq.s32.totalorder %v2460, 2
        %v2466 = vxor.u32 %v2456, 2147483648
        %v2467 = vsel %vm2465, %v2466, %v2457
        %v2468 = vsel %vm2461, %v2464, %v2467
        %v2469 = vsel %vm2458, nan, %v2468
        %v2470 = vand.u32 2147483647, %v790
        %vm2471 = vcmp.le.f32.partialorder %v2470, 0.7853982
        %vm2472 = vcmp.lt.s32.totalorder %v790, 0
        %v2473 = vand.u32 %v790, 2139095040
        %v2474 = vshrl.u32 %v2473, 23
        %v2475 = vsub.s32 %v2474, 127
        %v2476 = vand.u32 2147483647, %v790
        %v2477 = vand.u32 %v2476, 8388607
        %v2478 = vor.u32 %v2477, 8388608
        %v2479 = vsub.s32 0, %v2478
        %v2480 = vadd.s32 %v2475, 1
        %vm2481 = vcmp.gt.s32.totalorder %v2480, 0
        %v2482 = vsel %vm2481, %v2480, 0
        %v2483 = vshrl.u32 %v2482, 5
        %v2484 = vand.u32 %v2482, 31
        %v2485 = vsub.s32 32, %v2484
        %v2486 = vshrl.u32 683565275, %v2485
        %v2487 = vshll.u32 683565275, %v2484
        %v2488 = vshrl.u32 2475754826, %v2485
        %v2489 = vor.u32 %v2487, %v2488
        %v2490 = vshll.u32 2475754826, %v2484
        %v2491 = vshrl.u32 2131351028, %v2485
        %v2492 = vor.u32 %v2490, %v2491
        %v2493 = vshll.u32 2131351028, %v2484
        %v2494 = vshrl.u32 2102212464, %v2485
        %v2495 = vor.u32 %v2493, %v2494
        %v2496 = vshll.u32 2102212464, %v2484
        %v2497 = vshrl.u32 920167782, %v2485
        %v2498 = vor.u32 %v2496, %v2497
        %v2499 = vshll.u32 920167782, %v2484
        %v2500 = vshrl.u32 1326507024, %v2485
        %v2501 = vor.u32 %v2499, %v2500
        %vm2502 = vcmp.lt.s32.totalorder %v2483, 1
        %vm2503 = vcmp.lt.s32.totalorder %v2483, 2
        %vm2504 = vcmp.lt.s32.totalorder %v2483, 3
        %vm2505 = vcmp.lt.s32.totalorder %v2483, 4
        %v2506 = vsel %vm2502, %v2486, %v2489
        %v2507 = vsel %vm2505, %v2495, 2102212464
        %v2508 = vsel %vm2504, %v2492, %v2507
        %v2509 = vsel %vm2503, %v2506, %v2508
        %v2510 = vsel %vm2502, %v2489, %v2492
        %v2511 = vsel %vm2505, %v2498, 920167782
        %v2512 = vsel %vm2504, %v2495, %v2511
        %v2513 = vsel %vm2503, %v2510, %v2512
        %v2514 = vsel %vm2502, %v2492, %v2495
        %v2515 = vsel %vm2505, %v2501, 1326507024
        %v2516 = vsel %vm2504, %v2498, %v2515
        %v2517 = vsel %vm2503, %v2514, %v2516
        %v2518 = vshll.u32 %v2478, 8
        %v2519 = vmul.u32.u64.compose %v2518, %v2517
        %v2520 = vextract.low.u32 %v2519
        %v2521 = vextract.high.u32 %v2519
        %v2522 = vmul.u32.u64.compose %v2518, %v2513
        %v2523 = vextract.low.u32 %v2522
        %v2524 = vextract.high.u32 %v2522
        %v2525 = vmul.u32 %v2518, %v2509
        %v2526 = vadd.s32 %v2521, %v2523
        %vm2527 = vc.u32 %v2521, %v2523
        %v2528 = vadd.s32 %v2524, 1
        %v2529 = vsel %vm2527, %v2528, %v2524
        %v2530 = vadd.s32 %v2525, %v2529
        %v2531 = vadd.s32 %v2530, 536870912
        %v2532 = vshrl.u32 %v2531, 30
        %v2533 = vshll.u32 %v2532, 30
        %v2534 = vsub.s32 %v2530, %v2533
        %vm2535 = vcmp.lt.s32.totalorder %v2534, 0
        %v2536 = vsub.s32 0, %v2534
        %v2537 = vsel %vm2535, %v2536, %v2534
        %v2538 = vclz %v2537
        %v2539 = vsub.s32 %v2538, 2
        %vm2540 = vcmp.gt.s32.totalorder 0, %v2539
        %v2541 = vsel %vm2540, 0, %v2539
        %v2542 = vsub.s32 32, %v2541
        %v2543 = vshll.u32 %v2534, %v2541
        %v2544 = vshrl.u32 %v2526, %v2542
        %v2545 = vor.u32 %v2543, %v2544
        %v2546 = vsub.s32 4294967266, %v2541
        %v2547 = vadd.s32 %v2546, 127
        %v2548 = vshll.u32 %v2547, 23
        %v2549 = vor.u32 4788187, %v2548
        %v2550 = vand.u32 2147483647, %v2549
        %v2552 = vcvt.s32.f32 %v2545
        %v2553 = vmul.f32 %v2552, %v2550
        %v2554 = vxor.u32 %v2553, 2147483648
        %v2555 = vsel %vm2472, %v2554, %v2553
        %v2556 = vsub.s32 4, %v2532
        %v2557 = vsel %vm2472, %v2556, %v2532
        %v2558 = vsel %vm2471, %v790, %v2555
        %v2559 = vsel %vm2471, 0, %v2557
        %v2560 = vcosq.f32.pop %v2558
        %v2561 = vsinq.f32.pop %v2558
        %vm2562 = vweird.f32 %v790
        %v2563 = vadd.s32 %v2559, 3
        %v2564 = vand.u32 %v2563, 3
        %vm2565 = vcmp.lt.s32.totalorder %v2564, 2
        %vm2566 = vcmp.eq.s32.totalorder %v2564, 0
        %v2567 = vxor.u32 %v2561, 2147483648
        %v2568 = vsel %vm2566, %v2560, %v2567
        %vm2569 = vcmp.eq.s32.totalorder %v2564, 2
        %v2570 = vxor.u32 %v2560, 2147483648
        %v2571 = vsel %vm2569, %v2570, %v2561
        %v2572 = vsel %vm2565, %v2568, %v2571
        %v2573 = vsel %vm2562, nan, %v2572
        %v2574 = vand.u32 2147483647, %v791
        %vm2575 = vcmp.le.f32.partialorder %v2574, 0.7853982
        %vm2576 = vcmp.lt.s32.totalorder %v791, 0
        %v2577 = vand.u32 %v791, 2139095040
        %v2578 = vshrl.u32 %v2577, 23
        %v2579 = vsub.s32 %v2578, 127
        %v2580 = vand.u32 2147483647, %v791
        %v2581 = vand.u32 %v2580, 8388607
        %v2582 = vor.u32 %v2581, 8388608
        %v2583 = vsub.s32 0, %v2582
        %v2584 = vadd.s32 %v2579, 1
        %vm2585 = vcmp.gt.s32.totalorder %v2584, 0
        %v2586 = vsel %vm2585, %v2584, 0
        %v2587 = vshrl.u32 %v2586, 5
        %v2588 = vand.u32 %v2586, 31
        %v2589 = vsub.s32 32, %v2588
        %v2590 = vshrl.u32 683565275, %v2589
        %v2591 = vshll.u32 683565275, %v2588
        %v2592 = vshrl.u32 2475754826, %v2589
        %v2593 = vor.u32 %v2591, %v2592
        %v2594 = vshll.u32 2475754826, %v2588
        %v2595 = vshrl.u32 2131351028, %v2589
        %v2596 = vor.u32 %v2594, %v2595
        %v2597 = vshll.u32 2131351028, %v2588
        %v2598 = vshrl.u32 2102212464, %v2589
        %v2599 = vor.u32 %v2597, %v2598
        %v2600 = vshll.u32 2102212464, %v2588
        %v2601 = vshrl.u32 920167782, %v2589
        %v2602 = vor.u32 %v2600, %v2601
        %v2603 = vshll.u32 920167782, %v2588
        %v2604 = vshrl.u32 1326507024, %v2589
        %v2605 = vor.u32 %v2603, %v2604
        %vm2606 = vcmp.lt.s32.totalorder %v2587, 1
        %vm2607 = vcmp.lt.s32.totalorder %v2587, 2
        %vm2608 = vcmp.lt.s32.totalorder %v2587, 3
        %vm2609 = vcmp.lt.s32.totalorder %v2587, 4
        %v2610 = vsel %vm2606, %v2590, %v2593
        %v2611 = vsel %vm2609, %v2599, 2102212464
        %v2612 = vsel %vm2608, %v2596, %v2611
        %v2613 = vsel %vm2607, %v2610, %v2612
        %v2614 = vsel %vm2606, %v2593, %v2596
        %v2615 = vsel %vm2609, %v2602, 920167782
        %v2616 = vsel %vm2608, %v2599, %v2615
        %v2617 = vsel %vm2607, %v2614, %v2616
        %v2618 = vsel %vm2606, %v2596, %v2599
        %v2619 = vsel %vm2609, %v2605, 1326507024
        %v2620 = vsel %vm2608, %v2602, %v2619
        %v2621 = vsel %vm2607, %v2618, %v2620
        %v2622 = vshll.u32 %v2582, 8
        %v2623 = vmul.u32.u64.compose %v2622, %v2621
        %v2624 = vextract.low.u32 %v2623
        %v2625 = vextract.high.u32 %v2623
        %v2626 = vmul.u32.u64.compose %v2622, %v2617
        %v2627 = vextract.low.u32 %v2626
        %v2628 = vextract.high.u32 %v2626
        %v2629 = vmul.u32 %v2622, %v2613
        %v2630 = vadd.s32 %v2625, %v2627
        %vm2631 = vc.u32 %v2625, %v2627
        %v2632 = vadd.s32 %v2628, 1
        %v2633 = vsel %vm2631, %v2632, %v2628
        %v2634 = vadd.s32 %v2629, %v2633
        %v2635 = vadd.s32 %v2634, 536870912
        %v2636 = vshrl.u32 %v2635, 30
        %v2637 = vshll.u32 %v2636, 30
        %v2638 = vsub.s32 %v2634, %v2637
        %vm2639 = vcmp.lt.s32.totalorder %v2638, 0
        %v2640 = vsub.s32 0, %v2638
        %v2641 = vsel %vm2639, %v2640, %v2638
        %v2642 = vclz %v2641
        %v2643 = vsub.s32 %v2642, 2
        %vm2644 = vcmp.gt.s32.totalorder 0, %v2643
        %v2645 = vsel %vm2644, 0, %v2643
        %v2646 = vsub.s32 32, %v2645
        %v2647 = vshll.u32 %v2638, %v2645
        %v2648 = vshrl.u32 %v2630, %v2646
        %v2649 = vor.u32 %v2647, %v2648
        %v2650 = vsub.s32 4294967266, %v2645
        %v2651 = vadd.s32 %v2650, 127
        %v2652 = vshll.u32 %v2651, 23
        %v2653 = vor.u32 4788187, %v2652
        %v2654 = vand.u32 2147483647, %v2653
        %v2656 = vcvt.s32.f32 %v2649
        %v2657 = vmul.f32 %v2656, %v2654
        %v2658 = vxor.u32 %v2657, 2147483648
        %v2659 = vsel %vm2576, %v2658, %v2657
        %v2660 = vsub.s32 4, %v2636
        %v2661 = vsel %vm2576, %v2660, %v2636
        %v2662 = vsel %vm2575, %v791, %v2659
        %v2663 = vsel %vm2575, 0, %v2661
        %v2664 = vcosq.f32.pop %v2662
        %v2665 = vsinq.f32.pop %v2662
        %vm2666 = vweird.f32 %v791
        %v2667 = vadd.s32 %v2663, 3
        %v2668 = vand.u32 %v2667, 3
        %vm2669 = vcmp.lt.s32.totalorder %v2668, 2
        %vm2670 = vcmp.eq.s32.totalorder %v2668, 0
        %v2671 = vxor.u32 %v2665, 2147483648
        %v2672 = vsel %vm2670, %v2664, %v2671
        %vm2673 = vcmp.eq.s32.totalorder %v2668, 2
        %v2674 = vxor.u32 %v2664, 2147483648
        %v2675 = vsel %vm2673, %v2674, %v2665
        %v2676 = vsel %vm2669, %v2672, %v2675
        %v2677 = vsel %vm2666, nan, %v2676
        %v2678 = vand.u32 2147483647, %v792
        %vm2679 = vcmp.le.f32.partialorder %v2678, 0.7853982
        %vm2680 = vcmp.lt.s32.totalorder %v792, 0
        %v2681 = vand.u32 %v792, 2139095040
        %v2682 = vshrl.u32 %v2681, 23
        %v2683 = vsub.s32 %v2682, 127
        %v2684 = vand.u32 2147483647, %v792
        %v2685 = vand.u32 %v2684, 8388607
        %v2686 = vor.u32 %v2685, 8388608
        %v2687 = vsub.s32 0, %v2686
        %v2688 = vadd.s32 %v2683, 1
        %vm2689 = vcmp.gt.s32.totalorder %v2688, 0
        %v2690 = vsel %vm2689, %v2688, 0
        %v2691 = vshrl.u32 %v2690, 5
        %v2692 = vand.u32 %v2690, 31
        %v2693 = vsub.s32 32, %v2692
        %v2694 = vshrl.u32 683565275, %v2693
        %v2695 = vshll.u32 683565275, %v2692
        %v2696 = vshrl.u32 2475754826, %v2693
        %v2697 = vor.u32 %v2695, %v2696
        %v2698 = vshll.u32 2475754826, %v2692
        %v2699 = vshrl.u32 2131351028, %v2693
        %v2700 = vor.u32 %v2698, %v2699
        %v2701 = vshll.u32 2131351028, %v2692
        %v2702 = vshrl.u32 2102212464, %v2693
        %v2703 = vor.u32 %v2701, %v2702
        %v2704 = vshll.u32 2102212464, %v2692
        %v2705 = vshrl.u32 920167782, %v2693
        %v2706 = vor.u32 %v2704, %v2705
        %v2707 = vshll.u32 920167782, %v2692
        %v2708 = vshrl.u32 1326507024, %v2693
        %v2709 = vor.u32 %v2707, %v2708
        %vm2710 = vcmp.lt.s32.totalorder %v2691, 1
        %vm2711 = vcmp.lt.s32.totalorder %v2691, 2
        %vm2712 = vcmp.lt.s32.totalorder %v2691, 3
        %vm2713 = vcmp.lt.s32.totalorder %v2691, 4
        %v2714 = vsel %vm2710, %v2694, %v2697
        %v2715 = vsel %vm2713, %v2703, 2102212464
        %v2716 = vsel %vm2712, %v2700, %v2715
        %v2717 = vsel %vm2711, %v2714, %v2716
        %v2718 = vsel %vm2710, %v2697, %v2700
        %v2719 = vsel %vm2713, %v2706, 920167782
        %v2720 = vsel %vm2712, %v2703, %v2719
        %v2721 = vsel %vm2711, %v2718, %v2720
        %v2722 = vsel %vm2710, %v2700, %v2703
        %v2723 = vsel %vm2713, %v2709, 1326507024
        %v2724 = vsel %vm2712, %v2706, %v2723
        %v2725 = vsel %vm2711, %v2722, %v2724
        %v2726 = vshll.u32 %v2686, 8
        %v2727 = vmul.u32.u64.compose %v2726, %v2725
        %v2728 = vextract.low.u32 %v2727
        %v2729 = vextract.high.u32 %v2727
        %v2730 = vmul.u32.u64.compose %v2726, %v2721
        %v2731 = vextract.low.u32 %v2730
        %v2732 = vextract.high.u32 %v2730
        %v2733 = vmul.u32 %v2726, %v2717
        %v2734 = vadd.s32 %v2729, %v2731
        %vm2735 = vc.u32 %v2729, %v2731
        %v2736 = vadd.s32 %v2732, 1
        %v2737 = vsel %vm2735, %v2736, %v2732
        %v2738 = vadd.s32 %v2733, %v2737
        %v2739 = vadd.s32 %v2738, 536870912
        %v2740 = vshrl.u32 %v2739, 30
        %v2741 = vshll.u32 %v2740, 30
        %v2742 = vsub.s32 %v2738, %v2741
        %vm2743 = vcmp.lt.s32.totalorder %v2742, 0
        %v2744 = vsub.s32 0, %v2742
        %v2745 = vsel %vm2743, %v2744, %v2742
        %v2746 = vclz %v2745
        %v2747 = vsub.s32 %v2746, 2
        %vm2748 = vcmp.gt.s32.totalorder 0, %v2747
        %v2749 = vsel %vm2748, 0, %v2747
        %v2750 = vsub.s32 32, %v2749
        %v2751 = vshll.u32 %v2742, %v2749
        %v2752 = vshrl.u32 %v2734, %v2750
        %v2753 = vor.u32 %v2751, %v2752
        %v2754 = vsub.s32 4294967266, %v2749
        %v2755 = vadd.s32 %v2754, 127
        %v2756 = vshll.u32 %v2755, 23
        %v2757 = vor.u32 4788187, %v2756
        %v2758 = vand.u32 2147483647, %v2757
        %v2760 = vcvt.s32.f32 %v2753
        %v2761 = vmul.f32 %v2760, %v2758
        %v2762 = vxor.u32 %v2761, 2147483648
        %v2763 = vsel %vm2680, %v2762, %v2761
        %v2764 = vsub.s32 4, %v2740
        %v2765 = vsel %vm2680, %v2764, %v2740
        %v2766 = vsel %vm2679, %v792, %v2763
        %v2767 = vsel %vm2679, 0, %v2765
        %v2768 = vcosq.f32.pop %v2766
        %v2769 = vsinq.f32.pop %v2766
        %vm2770 = vweird.f32 %v792
        %v2771 = vadd.s32 %v2767, 3
        %v2772 = vand.u32 %v2771, 3
        %vm2773 = vcmp.lt.s32.totalorder %v2772, 2
        %vm2774 = vcmp.eq.s32.totalorder %v2772, 0
        %v2775 = vxor.u32 %v2769, 2147483648
        %v2776 = vsel %vm2774, %v2768, %v2775
        %vm2777 = vcmp.eq.s32.totalorder %v2772, 2
        %v2778 = vxor.u32 %v2768, 2147483648
        %v2779 = vsel %vm2777, %v2778, %v2769
        %v2780 = vsel %vm2773, %v2776, %v2779
        %v2781 = vsel %vm2770, nan, %v2780
        %v2782 = vand.u32 2147483647, %v793
        %vm2783 = vcmp.le.f32.partialorder %v2782, 0.7853982
        %vm2784 = vcmp.lt.s32.totalorder %v793, 0
        %v2785 = vand.u32 %v793, 2139095040
        %v2786 = vshrl.u32 %v2785, 23
        %v2787 = vsub.s32 %v2786, 127
        %v2788 = vand.u32 2147483647, %v793
        %v2789 = vand.u32 %v2788, 8388607
        %v2790 = vor.u32 %v2789, 8388608
        %v2791 = vsub.s32 0, %v2790
        %v2792 = vadd.s32 %v2787, 1
        %vm2793 = vcmp.gt.s32.totalorder %v2792, 0
        %v2794 = vsel %vm2793, %v2792, 0
        %v2795 = vshrl.u32 %v2794, 5
        %v2796 = vand.u32 %v2794, 31
        %v2797 = vsub.s32 32, %v2796
        %v2798 = vshrl.u32 683565275, %v2797
        %v2799 = vshll.u32 683565275, %v2796
        %v2800 = vshrl.u32 2475754826, %v2797
        %v2801 = vor.u32 %v2799, %v2800
        %v2802 = vshll.u32 2475754826, %v2796
        %v2803 = vshrl.u32 2131351028, %v2797
        %v2804 = vor.u32 %v2802, %v2803
        %v2805 = vshll.u32 2131351028, %v2796
        %v2806 = vshrl.u32 2102212464, %v2797
        %v2807 = vor.u32 %v2805, %v2806
        %v2808 = vshll.u32 2102212464, %v2796
        %v2809 = vshrl.u32 920167782, %v2797
        %v2810 = vor.u32 %v2808, %v2809
        %v2811 = vshll.u32 920167782, %v2796
        %v2812 = vshrl.u32 1326507024, %v2797
        %v2813 = vor.u32 %v2811, %v2812
        %vm2814 = vcmp.lt.s32.totalorder %v2795, 1
        %vm2815 = vcmp.lt.s32.totalorder %v2795, 2
        %vm2816 = vcmp.lt.s32.totalorder %v2795, 3
        %vm2817 = vcmp.lt.s32.totalorder %v2795, 4
        %v2818 = vsel %vm2814, %v2798, %v2801
        %v2819 = vsel %vm2817, %v2807, 2102212464
        %v2820 = vsel %vm2816, %v2804, %v2819
        %v2821 = vsel %vm2815, %v2818, %v2820
        %v2822 = vsel %vm2814, %v2801, %v2804
        %v2823 = vsel %vm2817, %v2810, 920167782
        %v2824 = vsel %vm2816, %v2807, %v2823
        %v2825 = vsel %vm2815, %v2822, %v2824
        %v2826 = vsel %vm2814, %v2804, %v2807
        %v2827 = vsel %vm2817, %v2813, 1326507024
        %v2828 = vsel %vm2816, %v2810, %v2827
        %v2829 = vsel %vm2815, %v2826, %v2828
        %v2830 = vshll.u32 %v2790, 8
        %v2831 = vmul.u32.u64.compose %v2830, %v2829
        %v2832 = vextract.low.u32 %v2831
        %v2833 = vextract.high.u32 %v2831
        %v2834 = vmul.u32.u64.compose %v2830, %v2825
        %v2835 = vextract.low.u32 %v2834
        %v2836 = vextract.high.u32 %v2834
        %v2837 = vmul.u32 %v2830, %v2821
        %v2838 = vadd.s32 %v2833, %v2835
        %vm2839 = vc.u32 %v2833, %v2835
        %v2840 = vadd.s32 %v2836, 1
        %v2841 = vsel %vm2839, %v2840, %v2836
        %v2842 = vadd.s32 %v2837, %v2841
        %v2843 = vadd.s32 %v2842, 536870912
        %v2844 = vshrl.u32 %v2843, 30
        %v2845 = vshll.u32 %v2844, 30
        %v2846 = vsub.s32 %v2842, %v2845
        %vm2847 = vcmp.lt.s32.totalorder %v2846, 0
        %v2848 = vsub.s32 0, %v2846
        %v2849 = vsel %vm2847, %v2848, %v2846
        %v2850 = vclz %v2849
        %v2851 = vsub.s32 %v2850, 2
        %vm2852 = vcmp.gt.s32.totalorder 0, %v2851
        %v2853 = vsel %vm2852, 0, %v2851
        %v2854 = vsub.s32 32, %v2853
        %v2855 = vshll.u32 %v2846, %v2853
        %v2856 = vshrl.u32 %v2838, %v2854
        %v2857 = vor.u32 %v2855, %v2856
        %v2858 = vsub.s32 4294967266, %v2853
        %v2859 = vadd.s32 %v2858, 127
        %v2860 = vshll.u32 %v2859, 23
        %v2861 = vor.u32 4788187, %v2860
        %v2862 = vand.u32 2147483647, %v2861
        %v2864 = vcvt.s32.f32 %v2857
        %v2865 = vmul.f32 %v2864, %v2862
        %v2866 = vxor.u32 %v2865, 2147483648
        %v2867 = vsel %vm2784, %v2866, %v2865
        %v2868 = vsub.s32 4, %v2844
        %v2869 = vsel %vm2784, %v2868, %v2844
        %v2870 = vsel %vm2783, %v793, %v2867
        %v2871 = vsel %vm2783, 0, %v2869
        %v2872 = vcosq.f32.pop %v2870
        %v2873 = vsinq.f32.pop %v2870
        %vm2874 = vweird.f32 %v793
        %v2875 = vadd.s32 %v2871, 3
        %v2876 = vand.u32 %v2875, 3
        %vm2877 = vcmp.lt.s32.totalorder %v2876, 2
        %vm2878 = vcmp.eq.s32.totalorder %v2876, 0
        %v2879 = vxor.u32 %v2873, 2147483648
        %v2880 = vsel %vm2878, %v2872, %v2879
        %vm2881 = vcmp.eq.s32.totalorder %v2876, 2
        %v2882 = vxor.u32 %v2872, 2147483648
        %v2883 = vsel %vm2881, %v2882, %v2873
        %v2884 = vsel %vm2877, %v2880, %v2883
        %v2885 = vsel %vm2874, nan, %v2884
        %v2886 = vand.u32 2147483647, %v794
        %vm2887 = vcmp.le.f32.partialorder %v2886, 0.7853982
        %vm2888 = vcmp.lt.s32.totalorder %v794, 0
        %v2889 = vand.u32 %v794, 2139095040
        %v2890 = vshrl.u32 %v2889, 23
        %v2891 = vsub.s32 %v2890, 127
        %v2892 = vand.u32 2147483647, %v794
        %v2893 = vand.u32 %v2892, 8388607
        %v2894 = vor.u32 %v2893, 8388608
        %v2895 = vsub.s32 0, %v2894
        %v2896 = vadd.s32 %v2891, 1
        %vm2897 = vcmp.gt.s32.totalorder %v2896, 0
        %v2898 = vsel %vm2897, %v2896, 0
        %v2899 = vshrl.u32 %v2898, 5
        %v2900 = vand.u32 %v2898, 31
        %v2901 = vsub.s32 32, %v2900
        %v2902 = vshrl.u32 683565275, %v2901
        %v2903 = vshll.u32 683565275, %v2900
        %v2904 = vshrl.u32 2475754826, %v2901
        %v2905 = vor.u32 %v2903, %v2904
        %v2906 = vshll.u32 2475754826, %v2900
        %v2907 = vshrl.u32 2131351028, %v2901
        %v2908 = vor.u32 %v2906, %v2907
        %v2909 = vshll.u32 2131351028, %v2900
        %v2910 = vshrl.u32 2102212464, %v2901
        %v2911 = vor.u32 %v2909, %v2910
        %v2912 = vshll.u32 2102212464, %v2900
        %v2913 = vshrl.u32 920167782, %v2901
        %v2914 = vor.u32 %v2912, %v2913
        %v2915 = vshll.u32 920167782, %v2900
        %v2916 = vshrl.u32 1326507024, %v2901
        %v2917 = vor.u32 %v2915, %v2916
        %vm2918 = vcmp.lt.s32.totalorder %v2899, 1
        %vm2919 = vcmp.lt.s32.totalorder %v2899, 2
        %vm2920 = vcmp.lt.s32.totalorder %v2899, 3
        %vm2921 = vcmp.lt.s32.totalorder %v2899, 4
        %v2922 = vsel %vm2918, %v2902, %v2905
        %v2923 = vsel %vm2921, %v2911, 2102212464
        %v2924 = vsel %vm2920, %v2908, %v2923
        %v2925 = vsel %vm2919, %v2922, %v2924
        %v2926 = vsel %vm2918, %v2905, %v2908
        %v2927 = vsel %vm2921, %v2914, 920167782
        %v2928 = vsel %vm2920, %v2911, %v2927
        %v2929 = vsel %vm2919, %v2926, %v2928
        %v2930 = vsel %vm2918, %v2908, %v2911
        %v2931 = vsel %vm2921, %v2917, 1326507024
        %v2932 = vsel %vm2920, %v2914, %v2931
        %v2933 = vsel %vm2919, %v2930, %v2932
        %v2934 = vshll.u32 %v2894, 8
        %v2935 = vmul.u32.u64.compose %v2934, %v2933
        %v2936 = vextract.low.u32 %v2935
        %v2937 = vextract.high.u32 %v2935
        %v2938 = vmul.u32.u64.compose %v2934, %v2929
        %v2939 = vextract.low.u32 %v2938
        %v2940 = vextract.high.u32 %v2938
        %v2941 = vmul.u32 %v2934, %v2925
        %v2942 = vadd.s32 %v2937, %v2939
        %vm2943 = vc.u32 %v2937, %v2939
        %v2944 = vadd.s32 %v2940, 1
        %v2945 = vsel %vm2943, %v2944, %v2940
        %v2946 = vadd.s32 %v2941, %v2945
        %v2947 = vadd.s32 %v2946, 536870912
        %v2948 = vshrl.u32 %v2947, 30
        %v2949 = vshll.u32 %v2948, 30
        %v2950 = vsub.s32 %v2946, %v2949
        %vm2951 = vcmp.lt.s32.totalorder %v2950, 0
        %v2952 = vsub.s32 0, %v2950
        %v2953 = vsel %vm2951, %v2952, %v2950
        %v2954 = vclz %v2953
        %v2955 = vsub.s32 %v2954, 2
        %vm2956 = vcmp.gt.s32.totalorder 0, %v2955
        %v2957 = vsel %vm2956, 0, %v2955
        %v2958 = vsub.s32 32, %v2957
        %v2959 = vshll.u32 %v2950, %v2957
        %v2960 = vshrl.u32 %v2942, %v2958
        %v2961 = vor.u32 %v2959, %v2960
        %v2962 = vsub.s32 4294967266, %v2957
        %v2963 = vadd.s32 %v2962, 127
        %v2964 = vshll.u32 %v2963, 23
        %v2965 = vor.u32 4788187, %v2964
        %v2966 = vand.u32 2147483647, %v2965
        %v2968 = vcvt.s32.f32 %v2961
        %v2969 = vmul.f32 %v2968, %v2966
        %v2970 = vxor.u32 %v2969, 2147483648
        %v2971 = vsel %vm2888, %v2970, %v2969
        %v2972 = vsub.s32 4, %v2948
        %v2973 = vsel %vm2888, %v2972, %v2948
        %v2974 = vsel %vm2887, %v794, %v2971
        %v2975 = vsel %vm2887, 0, %v2973
        %v2976 = vcosq.f32.pop %v2974
        %v2977 = vsinq.f32.pop %v2974
        %vm2978 = vweird.f32 %v794
        %v2979 = vadd.s32 %v2975, 3
        %v2980 = vand.u32 %v2979, 3
        %vm2981 = vcmp.lt.s32.totalorder %v2980, 2
        %vm2982 = vcmp.eq.s32.totalorder %v2980, 0
        %v2983 = vxor.u32 %v2977, 2147483648
        %v2984 = vsel %vm2982, %v2976, %v2983
        %vm2985 = vcmp.eq.s32.totalorder %v2980, 2
        %v2986 = vxor.u32 %v2976, 2147483648
        %v2987 = vsel %vm2985, %v2986, %v2977
        %v2988 = vsel %vm2981, %v2984, %v2987
        %v2989 = vsel %vm2978, nan, %v2988
        %v2990 = vand.u32 2147483647, %v795
        %vm2991 = vcmp.le.f32.partialorder %v2990, 0.7853982
        %vm2992 = vcmp.lt.s32.totalorder %v795, 0
        %v2993 = vand.u32 %v795, 2139095040
        %v2994 = vshrl.u32 %v2993, 23
        %v2995 = vsub.s32 %v2994, 127
        %v2996 = vand.u32 2147483647, %v795
        %v2997 = vand.u32 %v2996, 8388607
        %v2998 = vor.u32 %v2997, 8388608
        %v2999 = vsub.s32 0, %v2998
        %v3000 = vadd.s32 %v2995, 1
        %vm3001 = vcmp.gt.s32.totalorder %v3000, 0
        %v3002 = vsel %vm3001, %v3000, 0
        %v3003 = vshrl.u32 %v3002, 5
        %v3004 = vand.u32 %v3002, 31
        %v3005 = vsub.s32 32, %v3004
        %v3006 = vshrl.u32 683565275, %v3005
        %v3007 = vshll.u32 683565275, %v3004
        %v3008 = vshrl.u32 2475754826, %v3005
        %v3009 = vor.u32 %v3007, %v3008
        %v3010 = vshll.u32 2475754826, %v3004
        %v3011 = vshrl.u32 2131351028, %v3005
        %v3012 = vor.u32 %v3010, %v3011
        %v3013 = vshll.u32 2131351028, %v3004
        %v3014 = vshrl.u32 2102212464, %v3005
        %v3015 = vor.u32 %v3013, %v3014
        %v3016 = vshll.u32 2102212464, %v3004
        %v3017 = vshrl.u32 920167782, %v3005
        %v3018 = vor.u32 %v3016, %v3017
        %v3019 = vshll.u32 920167782, %v3004
        %v3020 = vshrl.u32 1326507024, %v3005
        %v3021 = vor.u32 %v3019, %v3020
        %vm3022 = vcmp.lt.s32.totalorder %v3003, 1
        %vm3023 = vcmp.lt.s32.totalorder %v3003, 2
        %vm3024 = vcmp.lt.s32.totalorder %v3003, 3
        %vm3025 = vcmp.lt.s32.totalorder %v3003, 4
        %v3026 = vsel %vm3022, %v3006, %v3009
        %v3027 = vsel %vm3025, %v3015, 2102212464
        %v3028 = vsel %vm3024, %v3012, %v3027
        %v3029 = vsel %vm3023, %v3026, %v3028
        %v3030 = vsel %vm3022, %v3009, %v3012
        %v3031 = vsel %vm3025, %v3018, 920167782
        %v3032 = vsel %vm3024, %v3015, %v3031
        %v3033 = vsel %vm3023, %v3030, %v3032
        %v3034 = vsel %vm3022, %v3012, %v3015
        %v3035 = vsel %vm3025, %v3021, 1326507024
        %v3036 = vsel %vm3024, %v3018, %v3035
        %v3037 = vsel %vm3023, %v3034, %v3036
        %v3038 = vshll.u32 %v2998, 8
        %v3039 = vmul.u32.u64.compose %v3038, %v3037
        %v3040 = vextract.low.u32 %v3039
        %v3041 = vextract.high.u32 %v3039
        %v3042 = vmul.u32.u64.compose %v3038, %v3033
        %v3043 = vextract.low.u32 %v3042
        %v3044 = vextract.high.u32 %v3042
        %v3045 = vmul.u32 %v3038, %v3029
        %v3046 = vadd.s32 %v3041, %v3043
        %vm3047 = vc.u32 %v3041, %v3043
        %v3048 = vadd.s32 %v3044, 1
        %v3049 = vsel %vm3047, %v3048, %v3044
        %v3050 = vadd.s32 %v3045, %v3049
        %v3051 = vadd.s32 %v3050, 536870912
        %v3052 = vshrl.u32 %v3051, 30
        %v3053 = vshll.u32 %v3052, 30
        %v3054 = vsub.s32 %v3050, %v3053
        %vm3055 = vcmp.lt.s32.totalorder %v3054, 0
        %v3056 = vsub.s32 0, %v3054
        %v3057 = vsel %vm3055, %v3056, %v3054
        %v3058 = vclz %v3057
        %v3059 = vsub.s32 %v3058, 2
        %vm3060 = vcmp.gt.s32.totalorder 0, %v3059
        %v3061 = vsel %vm3060, 0, %v3059
        %v3062 = vsub.s32 32, %v3061
        %v3063 = vshll.u32 %v3054, %v3061
        %v3064 = vshrl.u32 %v3046, %v3062
        %v3065 = vor.u32 %v3063, %v3064
        %v3066 = vsub.s32 4294967266, %v3061
        %v3067 = vadd.s32 %v3066, 127
        %v3068 = vshll.u32 %v3067, 23
        %v3069 = vor.u32 4788187, %v3068
        %v3070 = vand.u32 2147483647, %v3069
        %v3072 = vcvt.s32.f32 %v3065
        %v3073 = vmul.f32 %v3072, %v3070
        %v3074 = vxor.u32 %v3073, 2147483648
        %v3075 = vsel %vm2992, %v3074, %v3073
        %v3076 = vsub.s32 4, %v3052
        %v3077 = vsel %vm2992, %v3076, %v3052
        %v3078 = vsel %vm2991, %v795, %v3075
        %v3079 = vsel %vm2991, 0, %v3077
        %v3080 = vcosq.f32.pop %v3078
        %v3081 = vsinq.f32.pop %v3078
        %vm3082 = vweird.f32 %v795
        %v3083 = vadd.s32 %v3079, 3
        %v3084 = vand.u32 %v3083, 3
        %vm3085 = vcmp.lt.s32.totalorder %v3084, 2
        %vm3086 = vcmp.eq.s32.totalorder %v3084, 0
        %v3087 = vxor.u32 %v3081, 2147483648
        %v3088 = vsel %vm3086, %v3080, %v3087
        %vm3089 = vcmp.eq.s32.totalorder %v3084, 2
        %v3090 = vxor.u32 %v3080, 2147483648
        %v3091 = vsel %vm3089, %v3090, %v3081
        %v3092 = vsel %vm3085, %v3088, %v3091
        %v3093 = vsel %vm3082, nan, %v3092
        %v3094 = vand.u32 2147483647, %v796
        %vm3095 = vcmp.le.f32.partialorder %v3094, 0.7853982
        %vm3096 = vcmp.lt.s32.totalorder %v796, 0
        %v3097 = vand.u32 %v796, 2139095040
        %v3098 = vshrl.u32 %v3097, 23
        %v3099 = vsub.s32 %v3098, 127
        %v3100 = vand.u32 2147483647, %v796
        %v3101 = vand.u32 %v3100, 8388607
        %v3102 = vor.u32 %v3101, 8388608
        %v3103 = vsub.s32 0, %v3102
        %v3104 = vadd.s32 %v3099, 1
        %vm3105 = vcmp.gt.s32.totalorder %v3104, 0
        %v3106 = vsel %vm3105, %v3104, 0
        %v3107 = vshrl.u32 %v3106, 5
        %v3108 = vand.u32 %v3106, 31
        %v3109 = vsub.s32 32, %v3108
        %v3110 = vshrl.u32 683565275, %v3109
        %v3111 = vshll.u32 683565275, %v3108
        %v3112 = vshrl.u32 2475754826, %v3109
        %v3113 = vor.u32 %v3111, %v3112
        %v3114 = vshll.u32 2475754826, %v3108
        %v3115 = vshrl.u32 2131351028, %v3109
        %v3116 = vor.u32 %v3114, %v3115
        %v3117 = vshll.u32 2131351028, %v3108
        %v3118 = vshrl.u32 2102212464, %v3109
        %v3119 = vor.u32 %v3117, %v3118
        %v3120 = vshll.u32 2102212464, %v3108
        %v3121 = vshrl.u32 920167782, %v3109
        %v3122 = vor.u32 %v3120, %v3121
        %v3123 = vshll.u32 920167782, %v3108
        %v3124 = vshrl.u32 1326507024, %v3109
        %v3125 = vor.u32 %v3123, %v3124
        %vm3126 = vcmp.lt.s32.totalorder %v3107, 1
        %vm3127 = vcmp.lt.s32.totalorder %v3107, 2
        %vm3128 = vcmp.lt.s32.totalorder %v3107, 3
        %vm3129 = vcmp.lt.s32.totalorder %v3107, 4
        %v3130 = vsel %vm3126, %v3110, %v3113
        %v3131 = vsel %vm3129, %v3119, 2102212464
        %v3132 = vsel %vm3128, %v3116, %v3131
        %v3133 = vsel %vm3127, %v3130, %v3132
        %v3134 = vsel %vm3126, %v3113, %v3116
        %v3135 = vsel %vm3129, %v3122, 920167782
        %v3136 = vsel %vm3128, %v3119, %v3135
        %v3137 = vsel %vm3127, %v3134, %v3136
        %v3138 = vsel %vm3126, %v3116, %v3119
        %v3139 = vsel %vm3129, %v3125, 1326507024
        %v3140 = vsel %vm3128, %v3122, %v3139
        %v3141 = vsel %vm3127, %v3138, %v3140
        %v3142 = vshll.u32 %v3102, 8
        %v3143 = vmul.u32.u64.compose %v3142, %v3141
        %v3144 = vextract.low.u32 %v3143
        %v3145 = vextract.high.u32 %v3143
        %v3146 = vmul.u32.u64.compose %v3142, %v3137
        %v3147 = vextract.low.u32 %v3146
        %v3148 = vextract.high.u32 %v3146
        %v3149 = vmul.u32 %v3142, %v3133
        %v3150 = vadd.s32 %v3145, %v3147
        %vm3151 = vc.u32 %v3145, %v3147
        %v3152 = vadd.s32 %v3148, 1
        %v3153 = vsel %vm3151, %v3152, %v3148
        %v3154 = vadd.s32 %v3149, %v3153
        %v3155 = vadd.s32 %v3154, 536870912
        %v3156 = vshrl.u32 %v3155, 30
        %v3157 = vshll.u32 %v3156, 30
        %v3158 = vsub.s32 %v3154, %v3157
        %vm3159 = vcmp.lt.s32.totalorder %v3158, 0
        %v3160 = vsub.s32 0, %v3158
        %v3161 = vsel %vm3159, %v3160, %v3158
        %v3162 = vclz %v3161
        %v3163 = vsub.s32 %v3162, 2
        %vm3164 = vcmp.gt.s32.totalorder 0, %v3163
        %v3165 = vsel %vm3164, 0, %v3163
        %v3166 = vsub.s32 32, %v3165
        %v3167 = vshll.u32 %v3158, %v3165
        %v3168 = vshrl.u32 %v3150, %v3166
        %v3169 = vor.u32 %v3167, %v3168
        %v3170 = vsub.s32 4294967266, %v3165
        %v3171 = vadd.s32 %v3170, 127
        %v3172 = vshll.u32 %v3171, 23
        %v3173 = vor.u32 4788187, %v3172
        %v3174 = vand.u32 2147483647, %v3173
        %v3176 = vcvt.s32.f32 %v3169
        %v3177 = vmul.f32 %v3176, %v3174
        %v3178 = vxor.u32 %v3177, 2147483648
        %v3179 = vsel %vm3096, %v3178, %v3177
        %v3180 = vsub.s32 4, %v3156
        %v3181 = vsel %vm3096, %v3180, %v3156
        %v3182 = vsel %vm3095, %v796, %v3179
        %v3183 = vsel %vm3095, 0, %v3181
        %v3184 = vcosq.f32.pop %v3182
        %v3185 = vsinq.f32.pop %v3182
        %vm3186 = vweird.f32 %v796
        %v3187 = vadd.s32 %v3183, 3
        %v3188 = vand.u32 %v3187, 3
        %vm3189 = vcmp.lt.s32.totalorder %v3188, 2
        %vm3190 = vcmp.eq.s32.totalorder %v3188, 0
        %v3191 = vxor.u32 %v3185, 2147483648
        %v3192 = vsel %vm3190, %v3184, %v3191
        %vm3193 = vcmp.eq.s32.totalorder %v3188, 2
        %v3194 = vxor.u32 %v3184, 2147483648
        %v3195 = vsel %vm3193, %v3194, %v3185
        %v3196 = vsel %vm3189, %v3192, %v3195
        %v3197 = vsel %vm3186, nan, %v3196
        %v3198 = vand.u32 2147483647, %v797
        %vm3199 = vcmp.le.f32.partialorder %v3198, 0.7853982
        %vm3200 = vcmp.lt.s32.totalorder %v797, 0
        %v3201 = vand.u32 %v797, 2139095040
        %v3202 = vshrl.u32 %v3201, 23
        %v3203 = vsub.s32 %v3202, 127
        %v3204 = vand.u32 2147483647, %v797
        %v3205 = vand.u32 %v3204, 8388607
        %v3206 = vor.u32 %v3205, 8388608
        %v3207 = vsub.s32 0, %v3206
        %v3208 = vadd.s32 %v3203, 1
        %vm3209 = vcmp.gt.s32.totalorder %v3208, 0
        %v3210 = vsel %vm3209, %v3208, 0
        %v3211 = vshrl.u32 %v3210, 5
        %v3212 = vand.u32 %v3210, 31
        %v3213 = vsub.s32 32, %v3212
        %v3214 = vshrl.u32 683565275, %v3213
        %v3215 = vshll.u32 683565275, %v3212
        %v3216 = vshrl.u32 2475754826, %v3213
        %v3217 = vor.u32 %v3215, %v3216
        %v3218 = vshll.u32 2475754826, %v3212
        %v3219 = vshrl.u32 2131351028, %v3213
        %v3220 = vor.u32 %v3218, %v3219
        %v3221 = vshll.u32 2131351028, %v3212
        %v3222 = vshrl.u32 2102212464, %v3213
        %v3223 = vor.u32 %v3221, %v3222
        %v3224 = vshll.u32 2102212464, %v3212
        %v3225 = vshrl.u32 920167782, %v3213
        %v3226 = vor.u32 %v3224, %v3225
        %v3227 = vshll.u32 920167782, %v3212
        %v3228 = vshrl.u32 1326507024, %v3213
        %v3229 = vor.u32 %v3227, %v3228
        %vm3230 = vcmp.lt.s32.totalorder %v3211, 1
        %vm3231 = vcmp.lt.s32.totalorder %v3211, 2
        %vm3232 = vcmp.lt.s32.totalorder %v3211, 3
        %vm3233 = vcmp.lt.s32.totalorder %v3211, 4
        %v3234 = vsel %vm3230, %v3214, %v3217
        %v3235 = vsel %vm3233, %v3223, 2102212464
        %v3236 = vsel %vm3232, %v3220, %v3235
        %v3237 = vsel %vm3231, %v3234, %v3236
        %v3238 = vsel %vm3230, %v3217, %v3220
        %v3239 = vsel %vm3233, %v3226, 920167782
        %v3240 = vsel %vm3232, %v3223, %v3239
        %v3241 = vsel %vm3231, %v3238, %v3240
        %v3242 = vsel %vm3230, %v3220, %v3223
        %v3243 = vsel %vm3233, %v3229, 1326507024
        %v3244 = vsel %vm3232, %v3226, %v3243
        %v3245 = vsel %vm3231, %v3242, %v3244
        %v3246 = vshll.u32 %v3206, 8
        %v3247 = vmul.u32.u64.compose %v3246, %v3245
        %v3248 = vextract.low.u32 %v3247
        %v3249 = vextract.high.u32 %v3247
        %v3250 = vmul.u32.u64.compose %v3246, %v3241
        %v3251 = vextract.low.u32 %v3250
        %v3252 = vextract.high.u32 %v3250
        %v3253 = vmul.u32 %v3246, %v3237
        %v3254 = vadd.s32 %v3249, %v3251
        %vm3255 = vc.u32 %v3249, %v3251
        %v3256 = vadd.s32 %v3252, 1
        %v3257 = vsel %vm3255, %v3256, %v3252
        %v3258 = vadd.s32 %v3253, %v3257
        %v3259 = vadd.s32 %v3258, 536870912
        %v3260 = vshrl.u32 %v3259, 30
        %v3261 = vshll.u32 %v3260, 30
        %v3262 = vsub.s32 %v3258, %v3261
        %vm3263 = vcmp.lt.s32.totalorder %v3262, 0
        %v3264 = vsub.s32 0, %v3262
        %v3265 = vsel %vm3263, %v3264, %v3262
        %v3266 = vclz %v3265
        %v3267 = vsub.s32 %v3266, 2
        %vm3268 = vcmp.gt.s32.totalorder 0, %v3267
        %v3269 = vsel %vm3268, 0, %v3267
        %v3270 = vsub.s32 32, %v3269
        %v3271 = vshll.u32 %v3262, %v3269
        %v3272 = vshrl.u32 %v3254, %v3270
        %v3273 = vor.u32 %v3271, %v3272
        %v3274 = vsub.s32 4294967266, %v3269
        %v3275 = vadd.s32 %v3274, 127
        %v3276 = vshll.u32 %v3275, 23
        %v3277 = vor.u32 4788187, %v3276
        %v3278 = vand.u32 2147483647, %v3277
        %v3280 = vcvt.s32.f32 %v3273
        %v3281 = vmul.f32 %v3280, %v3278
        %v3282 = vxor.u32 %v3281, 2147483648
        %v3283 = vsel %vm3200, %v3282, %v3281
        %v3284 = vsub.s32 4, %v3260
        %v3285 = vsel %vm3200, %v3284, %v3260
        %v3286 = vsel %vm3199, %v797, %v3283
        %v3287 = vsel %vm3199, 0, %v3285
        %v3288 = vcosq.f32.pop %v3286
        %v3289 = vsinq.f32.pop %v3286
        %vm3290 = vweird.f32 %v797
        %v3291 = vadd.s32 %v3287, 3
        %v3292 = vand.u32 %v3291, 3
        %vm3293 = vcmp.lt.s32.totalorder %v3292, 2
        %vm3294 = vcmp.eq.s32.totalorder %v3292, 0
        %v3295 = vxor.u32 %v3289, 2147483648
        %v3296 = vsel %vm3294, %v3288, %v3295
        %vm3297 = vcmp.eq.s32.totalorder %v3292, 2
        %v3298 = vxor.u32 %v3288, 2147483648
        %v3299 = vsel %vm3297, %v3298, %v3289
        %v3300 = vsel %vm3293, %v3296, %v3299
        %v3301 = vsel %vm3290, nan, %v3300
        %v3302 = vand.u32 2147483647, %v798
        %vm3303 = vcmp.le.f32.partialorder %v3302, 0.7853982
        %vm3304 = vcmp.lt.s32.totalorder %v798, 0
        %v3305 = vand.u32 %v798, 2139095040
        %v3306 = vshrl.u32 %v3305, 23
        %v3307 = vsub.s32 %v3306, 127
        %v3308 = vand.u32 2147483647, %v798
        %v3309 = vand.u32 %v3308, 8388607
        %v3310 = vor.u32 %v3309, 8388608
        %v3311 = vsub.s32 0, %v3310
        %v3312 = vadd.s32 %v3307, 1
        %vm3313 = vcmp.gt.s32.totalorder %v3312, 0
        %v3314 = vsel %vm3313, %v3312, 0
        %v3315 = vshrl.u32 %v3314, 5
        %v3316 = vand.u32 %v3314, 31
        %v3317 = vsub.s32 32, %v3316
        %v3318 = vshrl.u32 683565275, %v3317
        %v3319 = vshll.u32 683565275, %v3316
        %v3320 = vshrl.u32 2475754826, %v3317
        %v3321 = vor.u32 %v3319, %v3320
        %v3322 = vshll.u32 2475754826, %v3316
        %v3323 = vshrl.u32 2131351028, %v3317
        %v3324 = vor.u32 %v3322, %v3323
        %v3325 = vshll.u32 2131351028, %v3316
        %v3326 = vshrl.u32 2102212464, %v3317
        %v3327 = vor.u32 %v3325, %v3326
        %v3328 = vshll.u32 2102212464, %v3316
        %v3329 = vshrl.u32 920167782, %v3317
        %v3330 = vor.u32 %v3328, %v3329
        %v3331 = vshll.u32 920167782, %v3316
        %v3332 = vshrl.u32 1326507024, %v3317
        %v3333 = vor.u32 %v3331, %v3332
        %vm3334 = vcmp.lt.s32.totalorder %v3315, 1
        %vm3335 = vcmp.lt.s32.totalorder %v3315, 2
        %vm3336 = vcmp.lt.s32.totalorder %v3315, 3
        %vm3337 = vcmp.lt.s32.totalorder %v3315, 4
        %v3338 = vsel %vm3334, %v3318, %v3321
        %v3339 = vsel %vm3337, %v3327, 2102212464
        %v3340 = vsel %vm3336, %v3324, %v3339
        %v3341 = vsel %vm3335, %v3338, %v3340
        %v3342 = vsel %vm3334, %v3321, %v3324
        %v3343 = vsel %vm3337, %v3330, 920167782
        %v3344 = vsel %vm3336, %v3327, %v3343
        %v3345 = vsel %vm3335, %v3342, %v3344
        %v3346 = vsel %vm3334, %v3324, %v3327
        %v3347 = vsel %vm3337, %v3333, 1326507024
        %v3348 = vsel %vm3336, %v3330, %v3347
        %v3349 = vsel %vm3335, %v3346, %v3348
        %v3350 = vshll.u32 %v3310, 8
        %v3351 = vmul.u32.u64.compose %v3350, %v3349
        %v3352 = vextract.low.u32 %v3351
        %v3353 = vextract.high.u32 %v3351
        %v3354 = vmul.u32.u64.compose %v3350, %v3345
        %v3355 = vextract.low.u32 %v3354
        %v3356 = vextract.high.u32 %v3354
        %v3357 = vmul.u32 %v3350, %v3341
        %v3358 = vadd.s32 %v3353, %v3355
        %vm3359 = vc.u32 %v3353, %v3355
        %v3360 = vadd.s32 %v3356, 1
        %v3361 = vsel %vm3359, %v3360, %v3356
        %v3362 = vadd.s32 %v3357, %v3361
        %v3363 = vadd.s32 %v3362, 536870912
        %v3364 = vshrl.u32 %v3363, 30
        %v3365 = vshll.u32 %v3364, 30
        %v3366 = vsub.s32 %v3362, %v3365
        %vm3367 = vcmp.lt.s32.totalorder %v3366, 0
        %v3368 = vsub.s32 0, %v3366
        %v3369 = vsel %vm3367, %v3368, %v3366
        %v3370 = vclz %v3369
        %v3371 = vsub.s32 %v3370, 2
        %vm3372 = vcmp.gt.s32.totalorder 0, %v3371
        %v3373 = vsel %vm3372, 0, %v3371
        %v3374 = vsub.s32 32, %v3373
        %v3375 = vshll.u32 %v3366, %v3373
        %v3376 = vshrl.u32 %v3358, %v3374
        %v3377 = vor.u32 %v3375, %v3376
        %v3378 = vsub.s32 4294967266, %v3373
        %v3379 = vadd.s32 %v3378, 127
        %v3380 = vshll.u32 %v3379, 23
        %v3381 = vor.u32 4788187, %v3380
        %v3382 = vand.u32 2147483647, %v3381
        %v3384 = vcvt.s32.f32 %v3377
        %v3385 = vmul.f32 %v3384, %v3382
        %v3386 = vxor.u32 %v3385, 2147483648
        %v3387 = vsel %vm3304, %v3386, %v3385
        %v3388 = vsub.s32 4, %v3364
        %v3389 = vsel %vm3304, %v3388, %v3364
        %v3390 = vsel %vm3303, %v798, %v3387
        %v3391 = vsel %vm3303, 0, %v3389
        %v3392 = vcosq.f32.pop %v3390
        %v3393 = vsinq.f32.pop %v3390
        %vm3394 = vweird.f32 %v798
        %v3395 = vadd.s32 %v3391, 3
        %v3396 = vand.u32 %v3395, 3
        %vm3397 = vcmp.lt.s32.totalorder %v3396, 2
        %vm3398 = vcmp.eq.s32.totalorder %v3396, 0
        %v3399 = vxor.u32 %v3393, 2147483648
        %v3400 = vsel %vm3398, %v3392, %v3399
        %vm3401 = vcmp.eq.s32.totalorder %v3396, 2
        %v3402 = vxor.u32 %v3392, 2147483648
        %v3403 = vsel %vm3401, %v3402, %v3393
        %v3404 = vsel %vm3397, %v3400, %v3403
        %v3405 = vsel %vm3394, nan, %v3404
        %v3406 = vand.u32 2147483647, %v799
        %vm3407 = vcmp.le.f32.partialorder %v3406, 0.7853982
        %vm3408 = vcmp.lt.s32.totalorder %v799, 0
        %v3409 = vand.u32 %v799, 2139095040
        %v3410 = vshrl.u32 %v3409, 23
        %v3411 = vsub.s32 %v3410, 127
        %v3412 = vand.u32 2147483647, %v799
        %v3413 = vand.u32 %v3412, 8388607
        %v3414 = vor.u32 %v3413, 8388608
        %v3415 = vsub.s32 0, %v3414
        %v3416 = vadd.s32 %v3411, 1
        %vm3417 = vcmp.gt.s32.totalorder %v3416, 0
        %v3418 = vsel %vm3417, %v3416, 0
        %v3419 = vshrl.u32 %v3418, 5
        %v3420 = vand.u32 %v3418, 31
        %v3421 = vsub.s32 32, %v3420
        %v3422 = vshrl.u32 683565275, %v3421
        %v3423 = vshll.u32 683565275, %v3420
        %v3424 = vshrl.u32 2475754826, %v3421
        %v3425 = vor.u32 %v3423, %v3424
        %v3426 = vshll.u32 2475754826, %v3420
        %v3427 = vshrl.u32 2131351028, %v3421
        %v3428 = vor.u32 %v3426, %v3427
        %v3429 = vshll.u32 2131351028, %v3420
        %v3430 = vshrl.u32 2102212464, %v3421
        %v3431 = vor.u32 %v3429, %v3430
        %v3432 = vshll.u32 2102212464, %v3420
        %v3433 = vshrl.u32 920167782, %v3421
        %v3434 = vor.u32 %v3432, %v3433
        %v3435 = vshll.u32 920167782, %v3420
        %v3436 = vshrl.u32 1326507024, %v3421
        %v3437 = vor.u32 %v3435, %v3436
        %vm3438 = vcmp.lt.s32.totalorder %v3419, 1
        %vm3439 = vcmp.lt.s32.totalorder %v3419, 2
        %vm3440 = vcmp.lt.s32.totalorder %v3419, 3
        %vm3441 = vcmp.lt.s32.totalorder %v3419, 4
        %v3442 = vsel %vm3438, %v3422, %v3425
        %v3443 = vsel %vm3441, %v3431, 2102212464
        %v3444 = vsel %vm3440, %v3428, %v3443
        %v3445 = vsel %vm3439, %v3442, %v3444
        %v3446 = vsel %vm3438, %v3425, %v3428
        %v3447 = vsel %vm3441, %v3434, 920167782
        %v3448 = vsel %vm3440, %v3431, %v3447
        %v3449 = vsel %vm3439, %v3446, %v3448
        %v3450 = vsel %vm3438, %v3428, %v3431
        %v3451 = vsel %vm3441, %v3437, 1326507024
        %v3452 = vsel %vm3440, %v3434, %v3451
        %v3453 = vsel %vm3439, %v3450, %v3452
        %v3454 = vshll.u32 %v3414, 8
        %v3455 = vmul.u32.u64.compose %v3454, %v3453
        %v3456 = vextract.low.u32 %v3455
        %v3457 = vextract.high.u32 %v3455
        %v3458 = vmul.u32.u64.compose %v3454, %v3449
        %v3459 = vextract.low.u32 %v3458
        %v3460 = vextract.high.u32 %v3458
        %v3461 = vmul.u32 %v3454, %v3445
        %v3462 = vadd.s32 %v3457, %v3459
        %vm3463 = vc.u32 %v3457, %v3459
        %v3464 = vadd.s32 %v3460, 1
        %v3465 = vsel %vm3463, %v3464, %v3460
        %v3466 = vadd.s32 %v3461, %v3465
        %v3467 = vadd.s32 %v3466, 536870912
        %v3468 = vshrl.u32 %v3467, 30
        %v3469 = vshll.u32 %v3468, 30
        %v3470 = vsub.s32 %v3466, %v3469
        %vm3471 = vcmp.lt.s32.totalorder %v3470, 0
        %v3472 = vsub.s32 0, %v3470
        %v3473 = vsel %vm3471, %v3472, %v3470
        %v3474 = vclz %v3473
        %v3475 = vsub.s32 %v3474, 2
        %vm3476 = vcmp.gt.s32.totalorder 0, %v3475
        %v3477 = vsel %vm3476, 0, %v3475
        %v3478 = vsub.s32 32, %v3477
        %v3479 = vshll.u32 %v3470, %v3477
        %v3480 = vshrl.u32 %v3462, %v3478
        %v3481 = vor.u32 %v3479, %v3480
        %v3482 = vsub.s32 4294967266, %v3477
        %v3483 = vadd.s32 %v3482, 127
        %v3484 = vshll.u32 %v3483, 23
        %v3485 = vor.u32 4788187, %v3484
        %v3486 = vand.u32 2147483647, %v3485
        %v3488 = vcvt.s32.f32 %v3481
        %v3489 = vmul.f32 %v3488, %v3486
        %v3490 = vxor.u32 %v3489, 2147483648
        %v3491 = vsel %vm3408, %v3490, %v3489
        %v3492 = vsub.s32 4, %v3468
        %v3493 = vsel %vm3408, %v3492, %v3468
        %v3494 = vsel %vm3407, %v799, %v3491
        %v3495 = vsel %vm3407, 0, %v3493
        %v3496 = vcosq.f32.pop %v3494
        %v3497 = vsinq.f32.pop %v3494
        %vm3498 = vweird.f32 %v799
        %v3499 = vadd.s32 %v3495, 3
        %v3500 = vand.u32 %v3499, 3
        %vm3501 = vcmp.lt.s32.totalorder %v3500, 2
        %vm3502 = vcmp.eq.s32.totalorder %v3500, 0
        %v3503 = vxor.u32 %v3497, 2147483648
        %v3504 = vsel %vm3502, %v3496, %v3503
        %vm3505 = vcmp.eq.s32.totalorder %v3500, 2
        %v3506 = vxor.u32 %v3496, 2147483648
        %v3507 = vsel %vm3505, %v3506, %v3497
        %v3508 = vsel %vm3501, %v3504, %v3507
        %v3509 = vsel %vm3498, nan, %v3508
        %v3510 = vand.u32 2147483647, %v800
        %vm3511 = vcmp.le.f32.partialorder %v3510, 0.7853982
        %vm3512 = vcmp.lt.s32.totalorder %v800, 0
        %v3513 = vand.u32 %v800, 2139095040
        %v3514 = vshrl.u32 %v3513, 23
        %v3515 = vsub.s32 %v3514, 127
        %v3516 = vand.u32 2147483647, %v800
        %v3517 = vand.u32 %v3516, 8388607
        %v3518 = vor.u32 %v3517, 8388608
        %v3519 = vsub.s32 0, %v3518
        %v3520 = vadd.s32 %v3515, 1
        %vm3521 = vcmp.gt.s32.totalorder %v3520, 0
        %v3522 = vsel %vm3521, %v3520, 0
        %v3523 = vshrl.u32 %v3522, 5
        %v3524 = vand.u32 %v3522, 31
        %v3525 = vsub.s32 32, %v3524
        %v3526 = vshrl.u32 683565275, %v3525
        %v3527 = vshll.u32 683565275, %v3524
        %v3528 = vshrl.u32 2475754826, %v3525
        %v3529 = vor.u32 %v3527, %v3528
        %v3530 = vshll.u32 2475754826, %v3524
        %v3531 = vshrl.u32 2131351028, %v3525
        %v3532 = vor.u32 %v3530, %v3531
        %v3533 = vshll.u32 2131351028, %v3524
        %v3534 = vshrl.u32 2102212464, %v3525
        %v3535 = vor.u32 %v3533, %v3534
        %v3536 = vshll.u32 2102212464, %v3524
        %v3537 = vshrl.u32 920167782, %v3525
        %v3538 = vor.u32 %v3536, %v3537
        %v3539 = vshll.u32 920167782, %v3524
        %v3540 = vshrl.u32 1326507024, %v3525
        %v3541 = vor.u32 %v3539, %v3540
        %vm3542 = vcmp.lt.s32.totalorder %v3523, 1
        %vm3543 = vcmp.lt.s32.totalorder %v3523, 2
        %vm3544 = vcmp.lt.s32.totalorder %v3523, 3
        %vm3545 = vcmp.lt.s32.totalorder %v3523, 4
        %v3546 = vsel %vm3542, %v3526, %v3529
        %v3547 = vsel %vm3545, %v3535, 2102212464
        %v3548 = vsel %vm3544, %v3532, %v3547
        %v3549 = vsel %vm3543, %v3546, %v3548
        %v3550 = vsel %vm3542, %v3529, %v3532
        %v3551 = vsel %vm3545, %v3538, 920167782
        %v3552 = vsel %vm3544, %v3535, %v3551
        %v3553 = vsel %vm3543, %v3550, %v3552
        %v3554 = vsel %vm3542, %v3532, %v3535
        %v3555 = vsel %vm3545, %v3541, 1326507024
        %v3556 = vsel %vm3544, %v3538, %v3555
        %v3557 = vsel %vm3543, %v3554, %v3556
        %v3558 = vshll.u32 %v3518, 8
        %v3559 = vmul.u32.u64.compose %v3558, %v3557
        %v3560 = vextract.low.u32 %v3559
        %v3561 = vextract.high.u32 %v3559
        %v3562 = vmul.u32.u64.compose %v3558, %v3553
        %v3563 = vextract.low.u32 %v3562
        %v3564 = vextract.high.u32 %v3562
        %v3565 = vmul.u32 %v3558, %v3549
        %v3566 = vadd.s32 %v3561, %v3563
        %vm3567 = vc.u32 %v3561, %v3563
        %v3568 = vadd.s32 %v3564, 1
        %v3569 = vsel %vm3567, %v3568, %v3564
        %v3570 = vadd.s32 %v3565, %v3569
        %v3571 = vadd.s32 %v3570, 536870912
        %v3572 = vshrl.u32 %v3571, 30
        %v3573 = vshll.u32 %v3572, 30
        %v3574 = vsub.s32 %v3570, %v3573
        %vm3575 = vcmp.lt.s32.totalorder %v3574, 0
        %v3576 = vsub.s32 0, %v3574
        %v3577 = vsel %vm3575, %v3576, %v3574
        %v3578 = vclz %v3577
        %v3579 = vsub.s32 %v3578, 2
        %vm3580 = vcmp.gt.s32.totalorder 0, %v3579
        %v3581 = vsel %vm3580, 0, %v3579
        %v3582 = vsub.s32 32, %v3581
        %v3583 = vshll.u32 %v3574, %v3581
        %v3584 = vshrl.u32 %v3566, %v3582
        %v3585 = vor.u32 %v3583, %v3584
        %v3586 = vsub.s32 4294967266, %v3581
        %v3587 = vadd.s32 %v3586, 127
        %v3588 = vshll.u32 %v3587, 23
        %v3589 = vor.u32 4788187, %v3588
        %v3590 = vand.u32 2147483647, %v3589
        %v3592 = vcvt.s32.f32 %v3585
        %v3593 = vmul.f32 %v3592, %v3590
        %v3594 = vxor.u32 %v3593, 2147483648
        %v3595 = vsel %vm3512, %v3594, %v3593
        %v3596 = vsub.s32 4, %v3572
        %v3597 = vsel %vm3512, %v3596, %v3572
        %v3598 = vsel %vm3511, %v800, %v3595
        %v3599 = vsel %vm3511, 0, %v3597
        %v3600 = vcosq.f32.pop %v3598
        %v3601 = vsinq.f32.pop %v3598
        %vm3602 = vweird.f32 %v800
        %v3603 = vadd.s32 %v3599, 3
        %v3604 = vand.u32 %v3603, 3
        %vm3605 = vcmp.lt.s32.totalorder %v3604, 2
        %vm3606 = vcmp.eq.s32.totalorder %v3604, 0
        %v3607 = vxor.u32 %v3601, 2147483648
        %v3608 = vsel %vm3606, %v3600, %v3607
        %vm3609 = vcmp.eq.s32.totalorder %v3604, 2
        %v3610 = vxor.u32 %v3600, 2147483648
        %v3611 = vsel %vm3609, %v3610, %v3601
        %v3612 = vsel %vm3605, %v3608, %v3611
        %v3613 = vsel %vm3602, nan, %v3612
        %v3614 = vand.u32 2147483647, %v801
        %vm3615 = vcmp.le.f32.partialorder %v3614, 0.7853982
        %vm3616 = vcmp.lt.s32.totalorder %v801, 0
        %v3617 = vand.u32 %v801, 2139095040
        %v3618 = vshrl.u32 %v3617, 23
        %v3619 = vsub.s32 %v3618, 127
        %v3620 = vand.u32 2147483647, %v801
        %v3621 = vand.u32 %v3620, 8388607
        %v3622 = vor.u32 %v3621, 8388608
        %v3623 = vsub.s32 0, %v3622
        %v3624 = vadd.s32 %v3619, 1
        %vm3625 = vcmp.gt.s32.totalorder %v3624, 0
        %v3626 = vsel %vm3625, %v3624, 0
        %v3627 = vshrl.u32 %v3626, 5
        %v3628 = vand.u32 %v3626, 31
        %v3629 = vsub.s32 32, %v3628
        %v3630 = vshrl.u32 683565275, %v3629
        %v3631 = vshll.u32 683565275, %v3628
        %v3632 = vshrl.u32 2475754826, %v3629
        %v3633 = vor.u32 %v3631, %v3632
        %v3634 = vshll.u32 2475754826, %v3628
        %v3635 = vshrl.u32 2131351028, %v3629
        %v3636 = vor.u32 %v3634, %v3635
        %v3637 = vshll.u32 2131351028, %v3628
        %v3638 = vshrl.u32 2102212464, %v3629
        %v3639 = vor.u32 %v3637, %v3638
        %v3640 = vshll.u32 2102212464, %v3628
        %v3641 = vshrl.u32 920167782, %v3629
        %v3642 = vor.u32 %v3640, %v3641
        %v3643 = vshll.u32 920167782, %v3628
        %v3644 = vshrl.u32 1326507024, %v3629
        %v3645 = vor.u32 %v3643, %v3644
        %vm3646 = vcmp.lt.s32.totalorder %v3627, 1
        %vm3647 = vcmp.lt.s32.totalorder %v3627, 2
        %vm3648 = vcmp.lt.s32.totalorder %v3627, 3
        %vm3649 = vcmp.lt.s32.totalorder %v3627, 4
        %v3650 = vsel %vm3646, %v3630, %v3633
        %v3651 = vsel %vm3649, %v3639, 2102212464
        %v3652 = vsel %vm3648, %v3636, %v3651
        %v3653 = vsel %vm3647, %v3650, %v3652
        %v3654 = vsel %vm3646, %v3633, %v3636
        %v3655 = vsel %vm3649, %v3642, 920167782
        %v3656 = vsel %vm3648, %v3639, %v3655
        %v3657 = vsel %vm3647, %v3654, %v3656
        %v3658 = vsel %vm3646, %v3636, %v3639
        %v3659 = vsel %vm3649, %v3645, 1326507024
        %v3660 = vsel %vm3648, %v3642, %v3659
        %v3661 = vsel %vm3647, %v3658, %v3660
        %v3662 = vshll.u32 %v3622, 8
        %v3663 = vmul.u32.u64.compose %v3662, %v3661
        %v3664 = vextract.low.u32 %v3663
        %v3665 = vextract.high.u32 %v3663
        %v3666 = vmul.u32.u64.compose %v3662, %v3657
        %v3667 = vextract.low.u32 %v3666
        %v3668 = vextract.high.u32 %v3666
        %v3669 = vmul.u32 %v3662, %v3653
        %v3670 = vadd.s32 %v3665, %v3667
        %vm3671 = vc.u32 %v3665, %v3667
        %v3672 = vadd.s32 %v3668, 1
        %v3673 = vsel %vm3671, %v3672, %v3668
        %v3674 = vadd.s32 %v3669, %v3673
        %v3675 = vadd.s32 %v3674, 536870912
        %v3676 = vshrl.u32 %v3675, 30
        %v3677 = vshll.u32 %v3676, 30
        %v3678 = vsub.s32 %v3674, %v3677
        %vm3679 = vcmp.lt.s32.totalorder %v3678, 0
        %v3680 = vsub.s32 0, %v3678
        %v3681 = vsel %vm3679, %v3680, %v3678
        %v3682 = vclz %v3681
        %v3683 = vsub.s32 %v3682, 2
        %vm3684 = vcmp.gt.s32.totalorder 0, %v3683
        %v3685 = vsel %vm3684, 0, %v3683
        %v3686 = vsub.s32 32, %v3685
        %v3687 = vshll.u32 %v3678, %v3685
        %v3688 = vshrl.u32 %v3670, %v3686
        %v3689 = vor.u32 %v3687, %v3688
        %v3690 = vsub.s32 4294967266, %v3685
        %v3691 = vadd.s32 %v3690, 127
        %v3692 = vshll.u32 %v3691, 23
        %v3693 = vor.u32 4788187, %v3692
        %v3694 = vand.u32 2147483647, %v3693
        %v3696 = vcvt.s32.f32 %v3689
        %v3697 = vmul.f32 %v3696, %v3694
        %v3698 = vxor.u32 %v3697, 2147483648
        %v3699 = vsel %vm3616, %v3698, %v3697
        %v3700 = vsub.s32 4, %v3676
        %v3701 = vsel %vm3616, %v3700, %v3676
        %v3702 = vsel %vm3615, %v801, %v3699
        %v3703 = vsel %vm3615, 0, %v3701
        %v3704 = vcosq.f32.pop %v3702
        %v3705 = vsinq.f32.pop %v3702
        %vm3706 = vweird.f32 %v801
        %v3707 = vadd.s32 %v3703, 3
        %v3708 = vand.u32 %v3707, 3
        %vm3709 = vcmp.lt.s32.totalorder %v3708, 2
        %vm3710 = vcmp.eq.s32.totalorder %v3708, 0
        %v3711 = vxor.u32 %v3705, 2147483648
        %v3712 = vsel %vm3710, %v3704, %v3711
        %vm3713 = vcmp.eq.s32.totalorder %v3708, 2
        %v3714 = vxor.u32 %v3704, 2147483648
        %v3715 = vsel %vm3713, %v3714, %v3705
        %v3716 = vsel %vm3709, %v3712, %v3715
        %v3717 = vsel %vm3706, nan, %v3716
        %v3718 = vand.u32 2147483647, %v802
        %vm3719 = vcmp.le.f32.partialorder %v3718, 0.7853982
        %vm3720 = vcmp.lt.s32.totalorder %v802, 0
        %v3721 = vand.u32 %v802, 2139095040
        %v3722 = vshrl.u32 %v3721, 23
        %v3723 = vsub.s32 %v3722, 127
        %v3724 = vand.u32 2147483647, %v802
        %v3725 = vand.u32 %v3724, 8388607
        %v3726 = vor.u32 %v3725, 8388608
        %v3727 = vsub.s32 0, %v3726
        %v3728 = vadd.s32 %v3723, 1
        %vm3729 = vcmp.gt.s32.totalorder %v3728, 0
        %v3730 = vsel %vm3729, %v3728, 0
        %v3731 = vshrl.u32 %v3730, 5
        %v3732 = vand.u32 %v3730, 31
        %v3733 = vsub.s32 32, %v3732
        %v3734 = vshrl.u32 683565275, %v3733
        %v3735 = vshll.u32 683565275, %v3732
        %v3736 = vshrl.u32 2475754826, %v3733
        %v3737 = vor.u32 %v3735, %v3736
        %v3738 = vshll.u32 2475754826, %v3732
        %v3739 = vshrl.u32 2131351028, %v3733
        %v3740 = vor.u32 %v3738, %v3739
        %v3741 = vshll.u32 2131351028, %v3732
        %v3742 = vshrl.u32 2102212464, %v3733
        %v3743 = vor.u32 %v3741, %v3742
        %v3744 = vshll.u32 2102212464, %v3732
        %v3745 = vshrl.u32 920167782, %v3733
        %v3746 = vor.u32 %v3744, %v3745
        %v3747 = vshll.u32 920167782, %v3732
        %v3748 = vshrl.u32 1326507024, %v3733
        %v3749 = vor.u32 %v3747, %v3748
        %vm3750 = vcmp.lt.s32.totalorder %v3731, 1
        %vm3751 = vcmp.lt.s32.totalorder %v3731, 2
        %vm3752 = vcmp.lt.s32.totalorder %v3731, 3
        %vm3753 = vcmp.lt.s32.totalorder %v3731, 4
        %v3754 = vsel %vm3750, %v3734, %v3737
        %v3755 = vsel %vm3753, %v3743, 2102212464
        %v3756 = vsel %vm3752, %v3740, %v3755
        %v3757 = vsel %vm3751, %v3754, %v3756
        %v3758 = vsel %vm3750, %v3737, %v3740
        %v3759 = vsel %vm3753, %v3746, 920167782
        %v3760 = vsel %vm3752, %v3743, %v3759
        %v3761 = vsel %vm3751, %v3758, %v3760
        %v3762 = vsel %vm3750, %v3740, %v3743
        %v3763 = vsel %vm3753, %v3749, 1326507024
        %v3764 = vsel %vm3752, %v3746, %v3763
        %v3765 = vsel %vm3751, %v3762, %v3764
        %v3766 = vshll.u32 %v3726, 8
        %v3767 = vmul.u32.u64.compose %v3766, %v3765
        %v3768 = vextract.low.u32 %v3767
        %v3769 = vextract.high.u32 %v3767
        %v3770 = vmul.u32.u64.compose %v3766, %v3761
        %v3771 = vextract.low.u32 %v3770
        %v3772 = vextract.high.u32 %v3770
        %v3773 = vmul.u32 %v3766, %v3757
        %v3774 = vadd.s32 %v3769, %v3771
        %vm3775 = vc.u32 %v3769, %v3771
        %v3776 = vadd.s32 %v3772, 1
        %v3777 = vsel %vm3775, %v3776, %v3772
        %v3778 = vadd.s32 %v3773, %v3777
        %v3779 = vadd.s32 %v3778, 536870912
        %v3780 = vshrl.u32 %v3779, 30
        %v3781 = vshll.u32 %v3780, 30
        %v3782 = vsub.s32 %v3778, %v3781
        %vm3783 = vcmp.lt.s32.totalorder %v3782, 0
        %v3784 = vsub.s32 0, %v3782
        %v3785 = vsel %vm3783, %v3784, %v3782
        %v3786 = vclz %v3785
        %v3787 = vsub.s32 %v3786, 2
        %vm3788 = vcmp.gt.s32.totalorder 0, %v3787
        %v3789 = vsel %vm3788, 0, %v3787
        %v3790 = vsub.s32 32, %v3789
        %v3791 = vshll.u32 %v3782, %v3789
        %v3792 = vshrl.u32 %v3774, %v3790
        %v3793 = vor.u32 %v3791, %v3792
        %v3794 = vsub.s32 4294967266, %v3789
        %v3795 = vadd.s32 %v3794, 127
        %v3796 = vshll.u32 %v3795, 23
        %v3797 = vor.u32 4788187, %v3796
        %v3798 = vand.u32 2147483647, %v3797
        %v3800 = vcvt.s32.f32 %v3793
        %v3801 = vmul.f32 %v3800, %v3798
        %v3802 = vxor.u32 %v3801, 2147483648
        %v3803 = vsel %vm3720, %v3802, %v3801
        %v3804 = vsub.s32 4, %v3780
        %v3805 = vsel %vm3720, %v3804, %v3780
        %v3806 = vsel %vm3719, %v802, %v3803
        %v3807 = vsel %vm3719, 0, %v3805
        %v3808 = vcosq.f32.pop %v3806
        %v3809 = vsinq.f32.pop %v3806
        %vm3810 = vweird.f32 %v802
        %v3811 = vadd.s32 %v3807, 3
        %v3812 = vand.u32 %v3811, 3
        %vm3813 = vcmp.lt.s32.totalorder %v3812, 2
        %vm3814 = vcmp.eq.s32.totalorder %v3812, 0
        %v3815 = vxor.u32 %v3809, 2147483648
        %v3816 = vsel %vm3814, %v3808, %v3815
        %vm3817 = vcmp.eq.s32.totalorder %v3812, 2
        %v3818 = vxor.u32 %v3808, 2147483648
        %v3819 = vsel %vm3817, %v3818, %v3809
        %v3820 = vsel %vm3813, %v3816, %v3819
        %v3821 = vsel %vm3810, nan, %v3820
        %v3822 = vand.u32 2147483647, %v803
        %vm3823 = vcmp.le.f32.partialorder %v3822, 0.7853982
        %vm3824 = vcmp.lt.s32.totalorder %v803, 0
        %v3825 = vand.u32 %v803, 2139095040
        %v3826 = vshrl.u32 %v3825, 23
        %v3827 = vsub.s32 %v3826, 127
        %v3828 = vand.u32 2147483647, %v803
        %v3829 = vand.u32 %v3828, 8388607
        %v3830 = vor.u32 %v3829, 8388608
        %v3831 = vsub.s32 0, %v3830
        %v3832 = vadd.s32 %v3827, 1
        %vm3833 = vcmp.gt.s32.totalorder %v3832, 0
        %v3834 = vsel %vm3833, %v3832, 0
        %v3835 = vshrl.u32 %v3834, 5
        %v3836 = vand.u32 %v3834, 31
        %v3837 = vsub.s32 32, %v3836
        %v3838 = vshrl.u32 683565275, %v3837
        %v3839 = vshll.u32 683565275, %v3836
        %v3840 = vshrl.u32 2475754826, %v3837
        %v3841 = vor.u32 %v3839, %v3840
        %v3842 = vshll.u32 2475754826, %v3836
        %v3843 = vshrl.u32 2131351028, %v3837
        %v3844 = vor.u32 %v3842, %v3843
        %v3845 = vshll.u32 2131351028, %v3836
        %v3846 = vshrl.u32 2102212464, %v3837
        %v3847 = vor.u32 %v3845, %v3846
        %v3848 = vshll.u32 2102212464, %v3836
        %v3849 = vshrl.u32 920167782, %v3837
        %v3850 = vor.u32 %v3848, %v3849
        %v3851 = vshll.u32 920167782, %v3836
        %v3852 = vshrl.u32 1326507024, %v3837
        %v3853 = vor.u32 %v3851, %v3852
        %vm3854 = vcmp.lt.s32.totalorder %v3835, 1
        %vm3855 = vcmp.lt.s32.totalorder %v3835, 2
        %vm3856 = vcmp.lt.s32.totalorder %v3835, 3
        %vm3857 = vcmp.lt.s32.totalorder %v3835, 4
        %v3858 = vsel %vm3854, %v3838, %v3841
        %v3859 = vsel %vm3857, %v3847, 2102212464
        %v3860 = vsel %vm3856, %v3844, %v3859
        %v3861 = vsel %vm3855, %v3858, %v3860
        %v3862 = vsel %vm3854, %v3841, %v3844
        %v3863 = vsel %vm3857, %v3850, 920167782
        %v3864 = vsel %vm3856, %v3847, %v3863
        %v3865 = vsel %vm3855, %v3862, %v3864
        %v3866 = vsel %vm3854, %v3844, %v3847
        %v3867 = vsel %vm3857, %v3853, 1326507024
        %v3868 = vsel %vm3856, %v3850, %v3867
        %v3869 = vsel %vm3855, %v3866, %v3868
        %v3870 = vshll.u32 %v3830, 8
        %v3871 = vmul.u32.u64.compose %v3870, %v3869
        %v3872 = vextract.low.u32 %v3871
        %v3873 = vextract.high.u32 %v3871
        %v3874 = vmul.u32.u64.compose %v3870, %v3865
        %v3875 = vextract.low.u32 %v3874
        %v3876 = vextract.high.u32 %v3874
        %v3877 = vmul.u32 %v3870, %v3861
        %v3878 = vadd.s32 %v3873, %v3875
        %vm3879 = vc.u32 %v3873, %v3875
        %v3880 = vadd.s32 %v3876, 1
        %v3881 = vsel %vm3879, %v3880, %v3876
        %v3882 = vadd.s32 %v3877, %v3881
        %v3883 = vadd.s32 %v3882, 536870912
        %v3884 = vshrl.u32 %v3883, 30
        %v3885 = vshll.u32 %v3884, 30
        %v3886 = vsub.s32 %v3882, %v3885
        %vm3887 = vcmp.lt.s32.totalorder %v3886, 0
        %v3888 = vsub.s32 0, %v3886
        %v3889 = vsel %vm3887, %v3888, %v3886
        %v3890 = vclz %v3889
        %v3891 = vsub.s32 %v3890, 2
        %vm3892 = vcmp.gt.s32.totalorder 0, %v3891
        %v3893 = vsel %vm3892, 0, %v3891
        %v3894 = vsub.s32 32, %v3893
        %v3895 = vshll.u32 %v3886, %v3893
        %v3896 = vshrl.u32 %v3878, %v3894
        %v3897 = vor.u32 %v3895, %v3896
        %v3898 = vsub.s32 4294967266, %v3893
        %v3899 = vadd.s32 %v3898, 127
        %v3900 = vshll.u32 %v3899, 23
        %v3901 = vor.u32 4788187, %v3900
        %v3902 = vand.u32 2147483647, %v3901
        %v3904 = vcvt.s32.f32 %v3897
        %v3905 = vmul.f32 %v3904, %v3902
        %v3906 = vxor.u32 %v3905, 2147483648
        %v3907 = vsel %vm3824, %v3906, %v3905
        %v3908 = vsub.s32 4, %v3884
        %v3909 = vsel %vm3824, %v3908, %v3884
        %v3910 = vsel %vm3823, %v803, %v3907
        %v3911 = vsel %vm3823, 0, %v3909
        %v3912 = vcosq.f32.pop %v3910
        %v3913 = vsinq.f32.pop %v3910
        %vm3914 = vweird.f32 %v803
        %v3915 = vadd.s32 %v3911, 3
        %v3916 = vand.u32 %v3915, 3
        %vm3917 = vcmp.lt.s32.totalorder %v3916, 2
        %vm3918 = vcmp.eq.s32.totalorder %v3916, 0
        %v3919 = vxor.u32 %v3913, 2147483648
        %v3920 = vsel %vm3918, %v3912, %v3919
        %vm3921 = vcmp.eq.s32.totalorder %v3916, 2
        %v3922 = vxor.u32 %v3912, 2147483648
        %v3923 = vsel %vm3921, %v3922, %v3913
        %v3924 = vsel %vm3917, %v3920, %v3923
        %v3925 = vsel %vm3914, nan, %v3924
        %v3926 = vand.u32 2147483647, %v804
        %vm3927 = vcmp.le.f32.partialorder %v3926, 0.7853982
        %vm3928 = vcmp.lt.s32.totalorder %v804, 0
        %v3929 = vand.u32 %v804, 2139095040
        %v3930 = vshrl.u32 %v3929, 23
        %v3931 = vsub.s32 %v3930, 127
        %v3932 = vand.u32 2147483647, %v804
        %v3933 = vand.u32 %v3932, 8388607
        %v3934 = vor.u32 %v3933, 8388608
        %v3935 = vsub.s32 0, %v3934
        %v3936 = vadd.s32 %v3931, 1
        %vm3937 = vcmp.gt.s32.totalorder %v3936, 0
        %v3938 = vsel %vm3937, %v3936, 0
        %v3939 = vshrl.u32 %v3938, 5
        %v3940 = vand.u32 %v3938, 31
        %v3941 = vsub.s32 32, %v3940
        %v3942 = vshrl.u32 683565275, %v3941
        %v3943 = vshll.u32 683565275, %v3940
        %v3944 = vshrl.u32 2475754826, %v3941
        %v3945 = vor.u32 %v3943, %v3944
        %v3946 = vshll.u32 2475754826, %v3940
        %v3947 = vshrl.u32 2131351028, %v3941
        %v3948 = vor.u32 %v3946, %v3947
        %v3949 = vshll.u32 2131351028, %v3940
        %v3950 = vshrl.u32 2102212464, %v3941
        %v3951 = vor.u32 %v3949, %v3950
        %v3952 = vshll.u32 2102212464, %v3940
        %v3953 = vshrl.u32 920167782, %v3941
        %v3954 = vor.u32 %v3952, %v3953
        %v3955 = vshll.u32 920167782, %v3940
        %v3956 = vshrl.u32 1326507024, %v3941
        %v3957 = vor.u32 %v3955, %v3956
        %vm3958 = vcmp.lt.s32.totalorder %v3939, 1
        %vm3959 = vcmp.lt.s32.totalorder %v3939, 2
        %vm3960 = vcmp.lt.s32.totalorder %v3939, 3
        %vm3961 = vcmp.lt.s32.totalorder %v3939, 4
        %v3962 = vsel %vm3958, %v3942, %v3945
        %v3963 = vsel %vm3961, %v3951, 2102212464
        %v3964 = vsel %vm3960, %v3948, %v3963
        %v3965 = vsel %vm3959, %v3962, %v3964
        %v3966 = vsel %vm3958, %v3945, %v3948
        %v3967 = vsel %vm3961, %v3954, 920167782
        %v3968 = vsel %vm3960, %v3951, %v3967
        %v3969 = vsel %vm3959, %v3966, %v3968
        %v3970 = vsel %vm3958, %v3948, %v3951
        %v3971 = vsel %vm3961, %v3957, 1326507024
        %v3972 = vsel %vm3960, %v3954, %v3971
        %v3973 = vsel %vm3959, %v3970, %v3972
        %v3974 = vshll.u32 %v3934, 8
        %v3975 = vmul.u32.u64.compose %v3974, %v3973
        %v3976 = vextract.low.u32 %v3975
        %v3977 = vextract.high.u32 %v3975
        %v3978 = vmul.u32.u64.compose %v3974, %v3969
        %v3979 = vextract.low.u32 %v3978
        %v3980 = vextract.high.u32 %v3978
        %v3981 = vmul.u32 %v3974, %v3965
        %v3982 = vadd.s32 %v3977, %v3979
        %vm3983 = vc.u32 %v3977, %v3979
        %v3984 = vadd.s32 %v3980, 1
        %v3985 = vsel %vm3983, %v3984, %v3980
        %v3986 = vadd.s32 %v3981, %v3985
        %v3987 = vadd.s32 %v3986, 536870912
        %v3988 = vshrl.u32 %v3987, 30
        %v3989 = vshll.u32 %v3988, 30
        %v3990 = vsub.s32 %v3986, %v3989
        %vm3991 = vcmp.lt.s32.totalorder %v3990, 0
        %v3992 = vsub.s32 0, %v3990
        %v3993 = vsel %vm3991, %v3992, %v3990
        %v3994 = vclz %v3993
        %v3995 = vsub.s32 %v3994, 2
        %vm3996 = vcmp.gt.s32.totalorder 0, %v3995
        %v3997 = vsel %vm3996, 0, %v3995
        %v3998 = vsub.s32 32, %v3997
        %v3999 = vshll.u32 %v3990, %v3997
        %v4000 = vshrl.u32 %v3982, %v3998
        %v4001 = vor.u32 %v3999, %v4000
        %v4002 = vsub.s32 4294967266, %v3997
        %v4003 = vadd.s32 %v4002, 127
        %v4004 = vshll.u32 %v4003, 23
        %v4005 = vor.u32 4788187, %v4004
        %v4006 = vand.u32 2147483647, %v4005
        %v4008 = vcvt.s32.f32 %v4001
        %v4009 = vmul.f32 %v4008, %v4006
        %v4010 = vxor.u32 %v4009, 2147483648
        %v4011 = vsel %vm3928, %v4010, %v4009
        %v4012 = vsub.s32 4, %v3988
        %v4013 = vsel %vm3928, %v4012, %v3988
        %v4014 = vsel %vm3927, %v804, %v4011
        %v4015 = vsel %vm3927, 0, %v4013
        %v4016 = vcosq.f32.pop %v4014
        %v4017 = vsinq.f32.pop %v4014
        %vm4018 = vweird.f32 %v804
        %v4019 = vadd.s32 %v4015, 3
        %v4020 = vand.u32 %v4019, 3
        %vm4021 = vcmp.lt.s32.totalorder %v4020, 2
        %vm4022 = vcmp.eq.s32.totalorder %v4020, 0
        %v4023 = vxor.u32 %v4017, 2147483648
        %v4024 = vsel %vm4022, %v4016, %v4023
        %vm4025 = vcmp.eq.s32.totalorder %v4020, 2
        %v4026 = vxor.u32 %v4016, 2147483648
        %v4027 = vsel %vm4025, %v4026, %v4017
        %v4028 = vsel %vm4021, %v4024, %v4027
        %v4029 = vsel %vm4018, nan, %v4028
        %v4030 = vand.u32 2147483647, %v805
        %vm4031 = vcmp.le.f32.partialorder %v4030, 0.7853982
        %vm4032 = vcmp.lt.s32.totalorder %v805, 0
        %v4033 = vand.u32 %v805, 2139095040
        %v4034 = vshrl.u32 %v4033, 23
        %v4035 = vsub.s32 %v4034, 127
        %v4036 = vand.u32 2147483647, %v805
        %v4037 = vand.u32 %v4036, 8388607
        %v4038 = vor.u32 %v4037, 8388608
        %v4039 = vsub.s32 0, %v4038
        %v4040 = vadd.s32 %v4035, 1
        %vm4041 = vcmp.gt.s32.totalorder %v4040, 0
        %v4042 = vsel %vm4041, %v4040, 0
        %v4043 = vshrl.u32 %v4042, 5
        %v4044 = vand.u32 %v4042, 31
        %v4045 = vsub.s32 32, %v4044
        %v4046 = vshrl.u32 683565275, %v4045
        %v4047 = vshll.u32 683565275, %v4044
        %v4048 = vshrl.u32 2475754826, %v4045
        %v4049 = vor.u32 %v4047, %v4048
        %v4050 = vshll.u32 2475754826, %v4044
        %v4051 = vshrl.u32 2131351028, %v4045
        %v4052 = vor.u32 %v4050, %v4051
        %v4053 = vshll.u32 2131351028, %v4044
        %v4054 = vshrl.u32 2102212464, %v4045
        %v4055 = vor.u32 %v4053, %v4054
        %v4056 = vshll.u32 2102212464, %v4044
        %v4057 = vshrl.u32 920167782, %v4045
        %v4058 = vor.u32 %v4056, %v4057
        %v4059 = vshll.u32 920167782, %v4044
        %v4060 = vshrl.u32 1326507024, %v4045
        %v4061 = vor.u32 %v4059, %v4060
        %vm4062 = vcmp.lt.s32.totalorder %v4043, 1
        %vm4063 = vcmp.lt.s32.totalorder %v4043, 2
        %vm4064 = vcmp.lt.s32.totalorder %v4043, 3
        %vm4065 = vcmp.lt.s32.totalorder %v4043, 4
        %v4066 = vsel %vm4062, %v4046, %v4049
        %v4067 = vsel %vm4065, %v4055, 2102212464
        %v4068 = vsel %vm4064, %v4052, %v4067
        %v4069 = vsel %vm4063, %v4066, %v4068
        %v4070 = vsel %vm4062, %v4049, %v4052
        %v4071 = vsel %vm4065, %v4058, 920167782
        %v4072 = vsel %vm4064, %v4055, %v4071
        %v4073 = vsel %vm4063, %v4070, %v4072
        %v4074 = vsel %vm4062, %v4052, %v4055
        %v4075 = vsel %vm4065, %v4061, 1326507024
        %v4076 = vsel %vm4064, %v4058, %v4075
        %v4077 = vsel %vm4063, %v4074, %v4076
        %v4078 = vshll.u32 %v4038, 8
        %v4079 = vmul.u32.u64.compose %v4078, %v4077
        %v4080 = vextract.low.u32 %v4079
        %v4081 = vextract.high.u32 %v4079
        %v4082 = vmul.u32.u64.compose %v4078, %v4073
        %v4083 = vextract.low.u32 %v4082
        %v4084 = vextract.high.u32 %v4082
        %v4085 = vmul.u32 %v4078, %v4069
        %v4086 = vadd.s32 %v4081, %v4083
        %vm4087 = vc.u32 %v4081, %v4083
        %v4088 = vadd.s32 %v4084, 1
        %v4089 = vsel %vm4087, %v4088, %v4084
        %v4090 = vadd.s32 %v4085, %v4089
        %v4091 = vadd.s32 %v4090, 536870912
        %v4092 = vshrl.u32 %v4091, 30
        %v4093 = vshll.u32 %v4092, 30
        %v4094 = vsub.s32 %v4090, %v4093
        %vm4095 = vcmp.lt.s32.totalorder %v4094, 0
        %v4096 = vsub.s32 0, %v4094
        %v4097 = vsel %vm4095, %v4096, %v4094
        %v4098 = vclz %v4097
        %v4099 = vsub.s32 %v4098, 2
        %vm4100 = vcmp.gt.s32.totalorder 0, %v4099
        %v4101 = vsel %vm4100, 0, %v4099
        %v4102 = vsub.s32 32, %v4101
        %v4103 = vshll.u32 %v4094, %v4101
        %v4104 = vshrl.u32 %v4086, %v4102
        %v4105 = vor.u32 %v4103, %v4104
        %v4106 = vsub.s32 4294967266, %v4101
        %v4107 = vadd.s32 %v4106, 127
        %v4108 = vshll.u32 %v4107, 23
        %v4109 = vor.u32 4788187, %v4108
        %v4110 = vand.u32 2147483647, %v4109
        %v4112 = vcvt.s32.f32 %v4105
        %v4113 = vmul.f32 %v4112, %v4110
        %v4114 = vxor.u32 %v4113, 2147483648
        %v4115 = vsel %vm4032, %v4114, %v4113
        %v4116 = vsub.s32 4, %v4092
        %v4117 = vsel %vm4032, %v4116, %v4092
        %v4118 = vsel %vm4031, %v805, %v4115
        %v4119 = vsel %vm4031, 0, %v4117
        %v4120 = vcosq.f32.pop %v4118
        %v4121 = vsinq.f32.pop %v4118
        %vm4122 = vweird.f32 %v805
        %v4123 = vadd.s32 %v4119, 3
        %v4124 = vand.u32 %v4123, 3
        %vm4125 = vcmp.lt.s32.totalorder %v4124, 2
        %vm4126 = vcmp.eq.s32.totalorder %v4124, 0
        %v4127 = vxor.u32 %v4121, 2147483648
        %v4128 = vsel %vm4126, %v4120, %v4127
        %vm4129 = vcmp.eq.s32.totalorder %v4124, 2
        %v4130 = vxor.u32 %v4120, 2147483648
        %v4131 = vsel %vm4129, %v4130, %v4121
        %v4132 = vsel %vm4125, %v4128, %v4131
        %v4133 = vsel %vm4122, nan, %v4132
        %v4134 = vand.u32 2147483647, %v774
        %vm4135 = vcmp.le.f32.partialorder %v4134, 0.7853982
        %vm4136 = vcmp.lt.s32.totalorder %v774, 0
        %v4137 = vand.u32 %v774, 2139095040
        %v4138 = vshrl.u32 %v4137, 23
        %v4139 = vsub.s32 %v4138, 127
        %v4140 = vand.u32 2147483647, %v774
        %v4141 = vand.u32 %v4140, 8388607
        %v4142 = vor.u32 %v4141, 8388608
        %v4143 = vsub.s32 0, %v4142
        %v4144 = vadd.s32 %v4139, 1
        %vm4145 = vcmp.gt.s32.totalorder %v4144, 0
        %v4146 = vsel %vm4145, %v4144, 0
        %v4147 = vshrl.u32 %v4146, 5
        %v4148 = vand.u32 %v4146, 31
        %v4149 = vsub.s32 32, %v4148
        %v4150 = vshrl.u32 683565275, %v4149
        %v4151 = vshll.u32 683565275, %v4148
        %v4152 = vshrl.u32 2475754826, %v4149
        %v4153 = vor.u32 %v4151, %v4152
        %v4154 = vshll.u32 2475754826, %v4148
        %v4155 = vshrl.u32 2131351028, %v4149
        %v4156 = vor.u32 %v4154, %v4155
        %v4157 = vshll.u32 2131351028, %v4148
        %v4158 = vshrl.u32 2102212464, %v4149
        %v4159 = vor.u32 %v4157, %v4158
        %v4160 = vshll.u32 2102212464, %v4148
        %v4161 = vshrl.u32 920167782, %v4149
        %v4162 = vor.u32 %v4160, %v4161
        %v4163 = vshll.u32 920167782, %v4148
        %v4164 = vshrl.u32 1326507024, %v4149
        %v4165 = vor.u32 %v4163, %v4164
        %vm4166 = vcmp.lt.s32.totalorder %v4147, 1
        %vm4167 = vcmp.lt.s32.totalorder %v4147, 2
        %vm4168 = vcmp.lt.s32.totalorder %v4147, 3
        %vm4169 = vcmp.lt.s32.totalorder %v4147, 4
        %v4170 = vsel %vm4166, %v4150, %v4153
        %v4171 = vsel %vm4169, %v4159, 2102212464
        %v4172 = vsel %vm4168, %v4156, %v4171
        %v4173 = vsel %vm4167, %v4170, %v4172
        %v4174 = vsel %vm4166, %v4153, %v4156
        %v4175 = vsel %vm4169, %v4162, 920167782
        %v4176 = vsel %vm4168, %v4159, %v4175
        %v4177 = vsel %vm4167, %v4174, %v4176
        %v4178 = vsel %vm4166, %v4156, %v4159
        %v4179 = vsel %vm4169, %v4165, 1326507024
        %v4180 = vsel %vm4168, %v4162, %v4179
        %v4181 = vsel %vm4167, %v4178, %v4180
        %v4182 = vshll.u32 %v4142, 8
        %v4183 = vmul.u32.u64.compose %v4182, %v4181
        %v4184 = vextract.low.u32 %v4183
        %v4185 = vextract.high.u32 %v4183
        %v4186 = vmul.u32.u64.compose %v4182, %v4177
        %v4187 = vextract.low.u32 %v4186
        %v4188 = vextract.high.u32 %v4186
        %v4189 = vmul.u32 %v4182, %v4173
        %v4190 = vadd.s32 %v4185, %v4187
        %vm4191 = vc.u32 %v4185, %v4187
        %v4192 = vadd.s32 %v4188, 1
        %v4193 = vsel %vm4191, %v4192, %v4188
        %v4194 = vadd.s32 %v4189, %v4193
        %v4195 = vadd.s32 %v4194, 536870912
        %v4196 = vshrl.u32 %v4195, 30
        %v4197 = vshll.u32 %v4196, 30
        %v4198 = vsub.s32 %v4194, %v4197
        %vm4199 = vcmp.lt.s32.totalorder %v4198, 0
        %v4200 = vsub.s32 0, %v4198
        %v4201 = vsel %vm4199, %v4200, %v4198
        %v4202 = vclz %v4201
        %v4203 = vsub.s32 %v4202, 2
        %vm4204 = vcmp.gt.s32.totalorder 0, %v4203
        %v4205 = vsel %vm4204, 0, %v4203
        %v4206 = vsub.s32 32, %v4205
        %v4207 = vshll.u32 %v4198, %v4205
        %v4208 = vshrl.u32 %v4190, %v4206
        %v4209 = vor.u32 %v4207, %v4208
        %v4210 = vsub.s32 4294967266, %v4205
        %v4211 = vadd.s32 %v4210, 127
        %v4212 = vshll.u32 %v4211, 23
        %v4213 = vor.u32 4788187, %v4212
        %v4214 = vand.u32 2147483647, %v4213
        %v4216 = vcvt.s32.f32 %v4209
        %v4217 = vmul.f32 %v4216, %v4214
        %v4218 = vxor.u32 %v4217, 2147483648
        %v4219 = vsel %vm4136, %v4218, %v4217
        %v4220 = vsub.s32 4, %v4196
        %v4221 = vsel %vm4136, %v4220, %v4196
        %v4222 = vsel %vm4135, %v774, %v4219
        %v4223 = vsel %vm4135, 0, %v4221
        %v4224 = vcosq.f32.pop %v4222
        %v4225 = vsinq.f32.pop %v4222
        %vm4226 = vweird.f32 %v774
        %v4227 = vand.u32 %v4223, 3
        %vm4228 = vcmp.lt.s32.totalorder %v4227, 2
        %vm4229 = vcmp.eq.s32.totalorder %v4227, 0
        %v4230 = vxor.u32 %v4225, 2147483648
        %v4231 = vsel %vm4229, %v4224, %v4230
        %vm4232 = vcmp.eq.s32.totalorder %v4227, 2
        %v4233 = vxor.u32 %v4224, 2147483648
        %v4234 = vsel %vm4232, %v4233, %v4225
        %v4235 = vsel %vm4228, %v4231, %v4234
        %v4236 = vsel %vm4226, nan, %v4235
        %v4237 = vand.u32 2147483647, %v775
        %vm4238 = vcmp.le.f32.partialorder %v4237, 0.7853982
        %vm4239 = vcmp.lt.s32.totalorder %v775, 0
        %v4240 = vand.u32 %v775, 2139095040
        %v4241 = vshrl.u32 %v4240, 23
        %v4242 = vsub.s32 %v4241, 127
        %v4243 = vand.u32 2147483647, %v775
        %v4244 = vand.u32 %v4243, 8388607
        %v4245 = vor.u32 %v4244, 8388608
        %v4246 = vsub.s32 0, %v4245
        %v4247 = vadd.s32 %v4242, 1
        %vm4248 = vcmp.gt.s32.totalorder %v4247, 0
        %v4249 = vsel %vm4248, %v4247, 0
        %v4250 = vshrl.u32 %v4249, 5
        %v4251 = vand.u32 %v4249, 31
        %v4252 = vsub.s32 32, %v4251
        %v4253 = vshrl.u32 683565275, %v4252
        %v4254 = vshll.u32 683565275, %v4251
        %v4255 = vshrl.u32 2475754826, %v4252
        %v4256 = vor.u32 %v4254, %v4255
        %v4257 = vshll.u32 2475754826, %v4251
        %v4258 = vshrl.u32 2131351028, %v4252
        %v4259 = vor.u32 %v4257, %v4258
        %v4260 = vshll.u32 2131351028, %v4251
        %v4261 = vshrl.u32 2102212464, %v4252
        %v4262 = vor.u32 %v4260, %v4261
        %v4263 = vshll.u32 2102212464, %v4251
        %v4264 = vshrl.u32 920167782, %v4252
        %v4265 = vor.u32 %v4263, %v4264
        %v4266 = vshll.u32 920167782, %v4251
        %v4267 = vshrl.u32 1326507024, %v4252
        %v4268 = vor.u32 %v4266, %v4267
        %vm4269 = vcmp.lt.s32.totalorder %v4250, 1
        %vm4270 = vcmp.lt.s32.totalorder %v4250, 2
        %vm4271 = vcmp.lt.s32.totalorder %v4250, 3
        %vm4272 = vcmp.lt.s32.totalorder %v4250, 4
        %v4273 = vsel %vm4269, %v4253, %v4256
        %v4274 = vsel %vm4272, %v4262, 2102212464
        %v4275 = vsel %vm4271, %v4259, %v4274
        %v4276 = vsel %vm4270, %v4273, %v4275
        %v4277 = vsel %vm4269, %v4256, %v4259
        %v4278 = vsel %vm4272, %v4265, 920167782
        %v4279 = vsel %vm4271, %v4262, %v4278
        %v4280 = vsel %vm4270, %v4277, %v4279
        %v4281 = vsel %vm4269, %v4259, %v4262
        %v4282 = vsel %vm4272, %v4268, 1326507024
        %v4283 = vsel %vm4271, %v4265, %v4282
        %v4284 = vsel %vm4270, %v4281, %v4283
        %v4285 = vshll.u32 %v4245, 8
        %v4286 = vmul.u32.u64.compose %v4285, %v4284
        %v4287 = vextract.low.u32 %v4286
        %v4288 = vextract.high.u32 %v4286
        %v4289 = vmul.u32.u64.compose %v4285, %v4280
        %v4290 = vextract.low.u32 %v4289
        %v4291 = vextract.high.u32 %v4289
        %v4292 = vmul.u32 %v4285, %v4276
        %v4293 = vadd.s32 %v4288, %v4290
        %vm4294 = vc.u32 %v4288, %v4290
        %v4295 = vadd.s32 %v4291, 1
        %v4296 = vsel %vm4294, %v4295, %v4291
        %v4297 = vadd.s32 %v4292, %v4296
        %v4298 = vadd.s32 %v4297, 536870912
        %v4299 = vshrl.u32 %v4298, 30
        %v4300 = vshll.u32 %v4299, 30
        %v4301 = vsub.s32 %v4297, %v4300
        %vm4302 = vcmp.lt.s32.totalorder %v4301, 0
        %v4303 = vsub.s32 0, %v4301
        %v4304 = vsel %vm4302, %v4303, %v4301
        %v4305 = vclz %v4304
        %v4306 = vsub.s32 %v4305, 2
        %vm4307 = vcmp.gt.s32.totalorder 0, %v4306
        %v4308 = vsel %vm4307, 0, %v4306
        %v4309 = vsub.s32 32, %v4308
        %v4310 = vshll.u32 %v4301, %v4308
        %v4311 = vshrl.u32 %v4293, %v4309
        %v4312 = vor.u32 %v4310, %v4311
        %v4313 = vsub.s32 4294967266, %v4308
        %v4314 = vadd.s32 %v4313, 127
        %v4315 = vshll.u32 %v4314, 23
        %v4316 = vor.u32 4788187, %v4315
        %v4317 = vand.u32 2147483647, %v4316
        %v4319 = vcvt.s32.f32 %v4312
        %v4320 = vmul.f32 %v4319, %v4317
        %v4321 = vxor.u32 %v4320, 2147483648
        %v4322 = vsel %vm4239, %v4321, %v4320
        %v4323 = vsub.s32 4, %v4299
        %v4324 = vsel %vm4239, %v4323, %v4299
        %v4325 = vsel %vm4238, %v775, %v4322
        %v4326 = vsel %vm4238, 0, %v4324
        %v4327 = vcosq.f32.pop %v4325
        %v4328 = vsinq.f32.pop %v4325
        %vm4329 = vweird.f32 %v775
        %v4330 = vand.u32 %v4326, 3
        %vm4331 = vcmp.lt.s32.totalorder %v4330, 2
        %vm4332 = vcmp.eq.s32.totalorder %v4330, 0
        %v4333 = vxor.u32 %v4328, 2147483648
        %v4334 = vsel %vm4332, %v4327, %v4333
        %vm4335 = vcmp.eq.s32.totalorder %v4330, 2
        %v4336 = vxor.u32 %v4327, 2147483648
        %v4337 = vsel %vm4335, %v4336, %v4328
        %v4338 = vsel %vm4331, %v4334, %v4337
        %v4339 = vsel %vm4329, nan, %v4338
        %v4340 = vand.u32 2147483647, %v776
        %vm4341 = vcmp.le.f32.partialorder %v4340, 0.7853982
        %vm4342 = vcmp.lt.s32.totalorder %v776, 0
        %v4343 = vand.u32 %v776, 2139095040
        %v4344 = vshrl.u32 %v4343, 23
        %v4345 = vsub.s32 %v4344, 127
        %v4346 = vand.u32 2147483647, %v776
        %v4347 = vand.u32 %v4346, 8388607
        %v4348 = vor.u32 %v4347, 8388608
        %v4349 = vsub.s32 0, %v4348
        %v4350 = vadd.s32 %v4345, 1
        %vm4351 = vcmp.gt.s32.totalorder %v4350, 0
        %v4352 = vsel %vm4351, %v4350, 0
        %v4353 = vshrl.u32 %v4352, 5
        %v4354 = vand.u32 %v4352, 31
        %v4355 = vsub.s32 32, %v4354
        %v4356 = vshrl.u32 683565275, %v4355
        %v4357 = vshll.u32 683565275, %v4354
        %v4358 = vshrl.u32 2475754826, %v4355
        %v4359 = vor.u32 %v4357, %v4358
        %v4360 = vshll.u32 2475754826, %v4354
        %v4361 = vshrl.u32 2131351028, %v4355
        %v4362 = vor.u32 %v4360, %v4361
        %v4363 = vshll.u32 2131351028, %v4354
        %v4364 = vshrl.u32 2102212464, %v4355
        %v4365 = vor.u32 %v4363, %v4364
        %v4366 = vshll.u32 2102212464, %v4354
        %v4367 = vshrl.u32 920167782, %v4355
        %v4368 = vor.u32 %v4366, %v4367
        %v4369 = vshll.u32 920167782, %v4354
        %v4370 = vshrl.u32 1326507024, %v4355
        %v4371 = vor.u32 %v4369, %v4370
        %vm4372 = vcmp.lt.s32.totalorder %v4353, 1
        %vm4373 = vcmp.lt.s32.totalorder %v4353, 2
        %vm4374 = vcmp.lt.s32.totalorder %v4353, 3
        %vm4375 = vcmp.lt.s32.totalorder %v4353, 4
        %v4376 = vsel %vm4372, %v4356, %v4359
        %v4377 = vsel %vm4375, %v4365, 2102212464
        %v4378 = vsel %vm4374, %v4362, %v4377
        %v4379 = vsel %vm4373, %v4376, %v4378
        %v4380 = vsel %vm4372, %v4359, %v4362
        %v4381 = vsel %vm4375, %v4368, 920167782
        %v4382 = vsel %vm4374, %v4365, %v4381
        %v4383 = vsel %vm4373, %v4380, %v4382
        %v4384 = vsel %vm4372, %v4362, %v4365
        %v4385 = vsel %vm4375, %v4371, 1326507024
        %v4386 = vsel %vm4374, %v4368, %v4385
        %v4387 = vsel %vm4373, %v4384, %v4386
        %v4388 = vshll.u32 %v4348, 8
        %v4389 = vmul.u32.u64.compose %v4388, %v4387
        %v4390 = vextract.low.u32 %v4389
        %v4391 = vextract.high.u32 %v4389
        %v4392 = vmul.u32.u64.compose %v4388, %v4383
        %v4393 = vextract.low.u32 %v4392
        %v4394 = vextract.high.u32 %v4392
        %v4395 = vmul.u32 %v4388, %v4379
        %v4396 = vadd.s32 %v4391, %v4393
        %vm4397 = vc.u32 %v4391, %v4393
        %v4398 = vadd.s32 %v4394, 1
        %v4399 = vsel %vm4397, %v4398, %v4394
        %v4400 = vadd.s32 %v4395, %v4399
        %v4401 = vadd.s32 %v4400, 536870912
        %v4402 = vshrl.u32 %v4401, 30
        %v4403 = vshll.u32 %v4402, 30
        %v4404 = vsub.s32 %v4400, %v4403
        %vm4405 = vcmp.lt.s32.totalorder %v4404, 0
        %v4406 = vsub.s32 0, %v4404
        %v4407 = vsel %vm4405, %v4406, %v4404
        %v4408 = vclz %v4407
        %v4409 = vsub.s32 %v4408, 2
        %vm4410 = vcmp.gt.s32.totalorder 0, %v4409
        %v4411 = vsel %vm4410, 0, %v4409
        %v4412 = vsub.s32 32, %v4411
        %v4413 = vshll.u32 %v4404, %v4411
        %v4414 = vshrl.u32 %v4396, %v4412
        %v4415 = vor.u32 %v4413, %v4414
        %v4416 = vsub.s32 4294967266, %v4411
        %v4417 = vadd.s32 %v4416, 127
        %v4418 = vshll.u32 %v4417, 23
        %v4419 = vor.u32 4788187, %v4418
        %v4420 = vand.u32 2147483647, %v4419
        %v4422 = vcvt.s32.f32 %v4415
        %v4423 = vmul.f32 %v4422, %v4420
        %v4424 = vxor.u32 %v4423, 2147483648
        %v4425 = vsel %vm4342, %v4424, %v4423
        %v4426 = vsub.s32 4, %v4402
        %v4427 = vsel %vm4342, %v4426, %v4402
        %v4428 = vsel %vm4341, %v776, %v4425
        %v4429 = vsel %vm4341, 0, %v4427
        %v4430 = vcosq.f32.pop %v4428
        %v4431 = vsinq.f32.pop %v4428
        %vm4432 = vweird.f32 %v776
        %v4433 = vand.u32 %v4429, 3
        %vm4434 = vcmp.lt.s32.totalorder %v4433, 2
        %vm4435 = vcmp.eq.s32.totalorder %v4433, 0
        %v4436 = vxor.u32 %v4431, 2147483648
        %v4437 = vsel %vm4435, %v4430, %v4436
        %vm4438 = vcmp.eq.s32.totalorder %v4433, 2
        %v4439 = vxor.u32 %v4430, 2147483648
        %v4440 = vsel %vm4438, %v4439, %v4431
        %v4441 = vsel %vm4434, %v4437, %v4440
        %v4442 = vsel %vm4432, nan, %v4441
        %v4443 = vand.u32 2147483647, %v777
        %vm4444 = vcmp.le.f32.partialorder %v4443, 0.7853982
        %vm4445 = vcmp.lt.s32.totalorder %v777, 0
        %v4446 = vand.u32 %v777, 2139095040
        %v4447 = vshrl.u32 %v4446, 23
        %v4448 = vsub.s32 %v4447, 127
        %v4449 = vand.u32 2147483647, %v777
        %v4450 = vand.u32 %v4449, 8388607
        %v4451 = vor.u32 %v4450, 8388608
        %v4452 = vsub.s32 0, %v4451
        %v4453 = vadd.s32 %v4448, 1
        %vm4454 = vcmp.gt.s32.totalorder %v4453, 0
        %v4455 = vsel %vm4454, %v4453, 0
        %v4456 = vshrl.u32 %v4455, 5
        %v4457 = vand.u32 %v4455, 31
        %v4458 = vsub.s32 32, %v4457
        %v4459 = vshrl.u32 683565275, %v4458
        %v4460 = vshll.u32 683565275, %v4457
        %v4461 = vshrl.u32 2475754826, %v4458
        %v4462 = vor.u32 %v4460, %v4461
        %v4463 = vshll.u32 2475754826, %v4457
        %v4464 = vshrl.u32 2131351028, %v4458
        %v4465 = vor.u32 %v4463, %v4464
        %v4466 = vshll.u32 2131351028, %v4457
        %v4467 = vshrl.u32 2102212464, %v4458
        %v4468 = vor.u32 %v4466, %v4467
        %v4469 = vshll.u32 2102212464, %v4457
        %v4470 = vshrl.u32 920167782, %v4458
        %v4471 = vor.u32 %v4469, %v4470
        %v4472 = vshll.u32 920167782, %v4457
        %v4473 = vshrl.u32 1326507024, %v4458
        %v4474 = vor.u32 %v4472, %v4473
        %vm4475 = vcmp.lt.s32.totalorder %v4456, 1
        %vm4476 = vcmp.lt.s32.totalorder %v4456, 2
        %vm4477 = vcmp.lt.s32.totalorder %v4456, 3
        %vm4478 = vcmp.lt.s32.totalorder %v4456, 4
        %v4479 = vsel %vm4475, %v4459, %v4462
        %v4480 = vsel %vm4478, %v4468, 2102212464
        %v4481 = vsel %vm4477, %v4465, %v4480
        %v4482 = vsel %vm4476, %v4479, %v4481
        %v4483 = vsel %vm4475, %v4462, %v4465
        %v4484 = vsel %vm4478, %v4471, 920167782
        %v4485 = vsel %vm4477, %v4468, %v4484
        %v4486 = vsel %vm4476, %v4483, %v4485
        %v4487 = vsel %vm4475, %v4465, %v4468
        %v4488 = vsel %vm4478, %v4474, 1326507024
        %v4489 = vsel %vm4477, %v4471, %v4488
        %v4490 = vsel %vm4476, %v4487, %v4489
        %v4491 = vshll.u32 %v4451, 8
        %v4492 = vmul.u32.u64.compose %v4491, %v4490
        %v4493 = vextract.low.u32 %v4492
        %v4494 = vextract.high.u32 %v4492
        %v4495 = vmul.u32.u64.compose %v4491, %v4486
        %v4496 = vextract.low.u32 %v4495
        %v4497 = vextract.high.u32 %v4495
        %v4498 = vmul.u32 %v4491, %v4482
        %v4499 = vadd.s32 %v4494, %v4496
        %vm4500 = vc.u32 %v4494, %v4496
        %v4501 = vadd.s32 %v4497, 1
        %v4502 = vsel %vm4500, %v4501, %v4497
        %v4503 = vadd.s32 %v4498, %v4502
        %v4504 = vadd.s32 %v4503, 536870912
        %v4505 = vshrl.u32 %v4504, 30
        %v4506 = vshll.u32 %v4505, 30
        %v4507 = vsub.s32 %v4503, %v4506
        %vm4508 = vcmp.lt.s32.totalorder %v4507, 0
        %v4509 = vsub.s32 0, %v4507
        %v4510 = vsel %vm4508, %v4509, %v4507
        %v4511 = vclz %v4510
        %v4512 = vsub.s32 %v4511, 2
        %vm4513 = vcmp.gt.s32.totalorder 0, %v4512
        %v4514 = vsel %vm4513, 0, %v4512
        %v4515 = vsub.s32 32, %v4514
        %v4516 = vshll.u32 %v4507, %v4514
        %v4517 = vshrl.u32 %v4499, %v4515
        %v4518 = vor.u32 %v4516, %v4517
        %v4519 = vsub.s32 4294967266, %v4514
        %v4520 = vadd.s32 %v4519, 127
        %v4521 = vshll.u32 %v4520, 23
        %v4522 = vor.u32 4788187, %v4521
        %v4523 = vand.u32 2147483647, %v4522
        %v4525 = vcvt.s32.f32 %v4518
        %v4526 = vmul.f32 %v4525, %v4523
        %v4527 = vxor.u32 %v4526, 2147483648
        %v4528 = vsel %vm4445, %v4527, %v4526
        %v4529 = vsub.s32 4, %v4505
        %v4530 = vsel %vm4445, %v4529, %v4505
        %v4531 = vsel %vm4444, %v777, %v4528
        %v4532 = vsel %vm4444, 0, %v4530
        %v4533 = vcosq.f32.pop %v4531
        %v4534 = vsinq.f32.pop %v4531
        %vm4535 = vweird.f32 %v777
        %v4536 = vand.u32 %v4532, 3
        %vm4537 = vcmp.lt.s32.totalorder %v4536, 2
        %vm4538 = vcmp.eq.s32.totalorder %v4536, 0
        %v4539 = vxor.u32 %v4534, 2147483648
        %v4540 = vsel %vm4538, %v4533, %v4539
        %vm4541 = vcmp.eq.s32.totalorder %v4536, 2
        %v4542 = vxor.u32 %v4533, 2147483648
        %v4543 = vsel %vm4541, %v4542, %v4534
        %v4544 = vsel %vm4537, %v4540, %v4543
        %v4545 = vsel %vm4535, nan, %v4544
        %v4546 = vand.u32 2147483647, %v778
        %vm4547 = vcmp.le.f32.partialorder %v4546, 0.7853982
        %vm4548 = vcmp.lt.s32.totalorder %v778, 0
        %v4549 = vand.u32 %v778, 2139095040
        %v4550 = vshrl.u32 %v4549, 23
        %v4551 = vsub.s32 %v4550, 127
        %v4552 = vand.u32 2147483647, %v778
        %v4553 = vand.u32 %v4552, 8388607
        %v4554 = vor.u32 %v4553, 8388608
        %v4555 = vsub.s32 0, %v4554
        %v4556 = vadd.s32 %v4551, 1
        %vm4557 = vcmp.gt.s32.totalorder %v4556, 0
        %v4558 = vsel %vm4557, %v4556, 0
        %v4559 = vshrl.u32 %v4558, 5
        %v4560 = vand.u32 %v4558, 31
        %v4561 = vsub.s32 32, %v4560
        %v4562 = vshrl.u32 683565275, %v4561
        %v4563 = vshll.u32 683565275, %v4560
        %v4564 = vshrl.u32 2475754826, %v4561
        %v4565 = vor.u32 %v4563, %v4564
        %v4566 = vshll.u32 2475754826, %v4560
        %v4567 = vshrl.u32 2131351028, %v4561
        %v4568 = vor.u32 %v4566, %v4567
        %v4569 = vshll.u32 2131351028, %v4560
        %v4570 = vshrl.u32 2102212464, %v4561
        %v4571 = vor.u32 %v4569, %v4570
        %v4572 = vshll.u32 2102212464, %v4560
        %v4573 = vshrl.u32 920167782, %v4561
        %v4574 = vor.u32 %v4572, %v4573
        %v4575 = vshll.u32 920167782, %v4560
        %v4576 = vshrl.u32 1326507024, %v4561
        %v4577 = vor.u32 %v4575, %v4576
        %vm4578 = vcmp.lt.s32.totalorder %v4559, 1
        %vm4579 = vcmp.lt.s32.totalorder %v4559, 2
        %vm4580 = vcmp.lt.s32.totalorder %v4559, 3
        %vm4581 = vcmp.lt.s32.totalorder %v4559, 4
        %v4582 = vsel %vm4578, %v4562, %v4565
        %v4583 = vsel %vm4581, %v4571, 2102212464
        %v4584 = vsel %vm4580, %v4568, %v4583
        %v4585 = vsel %vm4579, %v4582, %v4584
        %v4586 = vsel %vm4578, %v4565, %v4568
        %v4587 = vsel %vm4581, %v4574, 920167782
        %v4588 = vsel %vm4580, %v4571, %v4587
        %v4589 = vsel %vm4579, %v4586, %v4588
        %v4590 = vsel %vm4578, %v4568, %v4571
        %v4591 = vsel %vm4581, %v4577, 1326507024
        %v4592 = vsel %vm4580, %v4574, %v4591
        %v4593 = vsel %vm4579, %v4590, %v4592
        %v4594 = vshll.u32 %v4554, 8
        %v4595 = vmul.u32.u64.compose %v4594, %v4593
        %v4596 = vextract.low.u32 %v4595
        %v4597 = vextract.high.u32 %v4595
        %v4598 = vmul.u32.u64.compose %v4594, %v4589
        %v4599 = vextract.low.u32 %v4598
        %v4600 = vextract.high.u32 %v4598
        %v4601 = vmul.u32 %v4594, %v4585
        %v4602 = vadd.s32 %v4597, %v4599
        %vm4603 = vc.u32 %v4597, %v4599
        %v4604 = vadd.s32 %v4600, 1
        %v4605 = vsel %vm4603, %v4604, %v4600
        %v4606 = vadd.s32 %v4601, %v4605
        %v4607 = vadd.s32 %v4606, 536870912
        %v4608 = vshrl.u32 %v4607, 30
        %v4609 = vshll.u32 %v4608, 30
        %v4610 = vsub.s32 %v4606, %v4609
        %vm4611 = vcmp.lt.s32.totalorder %v4610, 0
        %v4612 = vsub.s32 0, %v4610
        %v4613 = vsel %vm4611, %v4612, %v4610
        %v4614 = vclz %v4613
        %v4615 = vsub.s32 %v4614, 2
        %vm4616 = vcmp.gt.s32.totalorder 0, %v4615
        %v4617 = vsel %vm4616, 0, %v4615
        %v4618 = vsub.s32 32, %v4617
        %v4619 = vshll.u32 %v4610, %v4617
        %v4620 = vshrl.u32 %v4602, %v4618
        %v4621 = vor.u32 %v4619, %v4620
        %v4622 = vsub.s32 4294967266, %v4617
        %v4623 = vadd.s32 %v4622, 127
        %v4624 = vshll.u32 %v4623, 23
        %v4625 = vor.u32 4788187, %v4624
        %v4626 = vand.u32 2147483647, %v4625
        %v4628 = vcvt.s32.f32 %v4621
        %v4629 = vmul.f32 %v4628, %v4626
        %v4630 = vxor.u32 %v4629, 2147483648
        %v4631 = vsel %vm4548, %v4630, %v4629
        %v4632 = vsub.s32 4, %v4608
        %v4633 = vsel %vm4548, %v4632, %v4608
        %v4634 = vsel %vm4547, %v778, %v4631
        %v4635 = vsel %vm4547, 0, %v4633
        %v4636 = vcosq.f32.pop %v4634
        %v4637 = vsinq.f32.pop %v4634
        %vm4638 = vweird.f32 %v778
        %v4639 = vand.u32 %v4635, 3
        %vm4640 = vcmp.lt.s32.totalorder %v4639, 2
        %vm4641 = vcmp.eq.s32.totalorder %v4639, 0
        %v4642 = vxor.u32 %v4637, 2147483648
        %v4643 = vsel %vm4641, %v4636, %v4642
        %vm4644 = vcmp.eq.s32.totalorder %v4639, 2
        %v4645 = vxor.u32 %v4636, 2147483648
        %v4646 = vsel %vm4644, %v4645, %v4637
        %v4647 = vsel %vm4640, %v4643, %v4646
        %v4648 = vsel %vm4638, nan, %v4647
        %v4649 = vand.u32 2147483647, %v779
        %vm4650 = vcmp.le.f32.partialorder %v4649, 0.7853982
        %vm4651 = vcmp.lt.s32.totalorder %v779, 0
        %v4652 = vand.u32 %v779, 2139095040
        %v4653 = vshrl.u32 %v4652, 23
        %v4654 = vsub.s32 %v4653, 127
        %v4655 = vand.u32 2147483647, %v779
        %v4656 = vand.u32 %v4655, 8388607
        %v4657 = vor.u32 %v4656, 8388608
        %v4658 = vsub.s32 0, %v4657
        %v4659 = vadd.s32 %v4654, 1
        %vm4660 = vcmp.gt.s32.totalorder %v4659, 0
        %v4661 = vsel %vm4660, %v4659, 0
        %v4662 = vshrl.u32 %v4661, 5
        %v4663 = vand.u32 %v4661, 31
        %v4664 = vsub.s32 32, %v4663
        %v4665 = vshrl.u32 683565275, %v4664
        %v4666 = vshll.u32 683565275, %v4663
        %v4667 = vshrl.u32 2475754826, %v4664
        %v4668 = vor.u32 %v4666, %v4667
        %v4669 = vshll.u32 2475754826, %v4663
        %v4670 = vshrl.u32 2131351028, %v4664
        %v4671 = vor.u32 %v4669, %v4670
        %v4672 = vshll.u32 2131351028, %v4663
        %v4673 = vshrl.u32 2102212464, %v4664
        %v4674 = vor.u32 %v4672, %v4673
        %v4675 = vshll.u32 2102212464, %v4663
        %v4676 = vshrl.u32 920167782, %v4664
        %v4677 = vor.u32 %v4675, %v4676
        %v4678 = vshll.u32 920167782, %v4663
        %v4679 = vshrl.u32 1326507024, %v4664
        %v4680 = vor.u32 %v4678, %v4679
        %vm4681 = vcmp.lt.s32.totalorder %v4662, 1
        %vm4682 = vcmp.lt.s32.totalorder %v4662, 2
        %vm4683 = vcmp.lt.s32.totalorder %v4662, 3
        %vm4684 = vcmp.lt.s32.totalorder %v4662, 4
        %v4685 = vsel %vm4681, %v4665, %v4668
        %v4686 = vsel %vm4684, %v4674, 2102212464
        %v4687 = vsel %vm4683, %v4671, %v4686
        %v4688 = vsel %vm4682, %v4685, %v4687
        %v4689 = vsel %vm4681, %v4668, %v4671
        %v4690 = vsel %vm4684, %v4677, 920167782
        %v4691 = vsel %vm4683, %v4674, %v4690
        %v4692 = vsel %vm4682, %v4689, %v4691
        %v4693 = vsel %vm4681, %v4671, %v4674
        %v4694 = vsel %vm4684, %v4680, 1326507024
        %v4695 = vsel %vm4683, %v4677, %v4694
        %v4696 = vsel %vm4682, %v4693, %v4695
        %v4697 = vshll.u32 %v4657, 8
        %v4698 = vmul.u32.u64.compose %v4697, %v4696
        %v4699 = vextract.low.u32 %v4698
        %v4700 = vextract.high.u32 %v4698
        %v4701 = vmul.u32.u64.compose %v4697, %v4692
        %v4702 = vextract.low.u32 %v4701
        %v4703 = vextract.high.u32 %v4701
        %v4704 = vmul.u32 %v4697, %v4688
        %v4705 = vadd.s32 %v4700, %v4702
        %vm4706 = vc.u32 %v4700, %v4702
        %v4707 = vadd.s32 %v4703, 1
        %v4708 = vsel %vm4706, %v4707, %v4703
        %v4709 = vadd.s32 %v4704, %v4708
        %v4710 = vadd.s32 %v4709, 536870912
        %v4711 = vshrl.u32 %v4710, 30
        %v4712 = vshll.u32 %v4711, 30
        %v4713 = vsub.s32 %v4709, %v4712
        %vm4714 = vcmp.lt.s32.totalorder %v4713, 0
        %v4715 = vsub.s32 0, %v4713
        %v4716 = vsel %vm4714, %v4715, %v4713
        %v4717 = vclz %v4716
        %v4718 = vsub.s32 %v4717, 2
        %vm4719 = vcmp.gt.s32.totalorder 0, %v4718
        %v4720 = vsel %vm4719, 0, %v4718
        %v4721 = vsub.s32 32, %v4720
        %v4722 = vshll.u32 %v4713, %v4720
        %v4723 = vshrl.u32 %v4705, %v4721
        %v4724 = vor.u32 %v4722, %v4723
        %v4725 = vsub.s32 4294967266, %v4720
        %v4726 = vadd.s32 %v4725, 127
        %v4727 = vshll.u32 %v4726, 23
        %v4728 = vor.u32 4788187, %v4727
        %v4729 = vand.u32 2147483647, %v4728
        %v4731 = vcvt.s32.f32 %v4724
        %v4732 = vmul.f32 %v4731, %v4729
        %v4733 = vxor.u32 %v4732, 2147483648
        %v4734 = vsel %vm4651, %v4733, %v4732
        %v4735 = vsub.s32 4, %v4711
        %v4736 = vsel %vm4651, %v4735, %v4711
        %v4737 = vsel %vm4650, %v779, %v4734
        %v4738 = vsel %vm4650, 0, %v4736
        %v4739 = vcosq.f32.pop %v4737
        %v4740 = vsinq.f32.pop %v4737
        %vm4741 = vweird.f32 %v779
        %v4742 = vand.u32 %v4738, 3
        %vm4743 = vcmp.lt.s32.totalorder %v4742, 2
        %vm4744 = vcmp.eq.s32.totalorder %v4742, 0
        %v4745 = vxor.u32 %v4740, 2147483648
        %v4746 = vsel %vm4744, %v4739, %v4745
        %vm4747 = vcmp.eq.s32.totalorder %v4742, 2
        %v4748 = vxor.u32 %v4739, 2147483648
        %v4749 = vsel %vm4747, %v4748, %v4740
        %v4750 = vsel %vm4743, %v4746, %v4749
        %v4751 = vsel %vm4741, nan, %v4750
        %v4752 = vand.u32 2147483647, %v780
        %vm4753 = vcmp.le.f32.partialorder %v4752, 0.7853982
        %vm4754 = vcmp.lt.s32.totalorder %v780, 0
        %v4755 = vand.u32 %v780, 2139095040
        %v4756 = vshrl.u32 %v4755, 23
        %v4757 = vsub.s32 %v4756, 127
        %v4758 = vand.u32 2147483647, %v780
        %v4759 = vand.u32 %v4758, 8388607
        %v4760 = vor.u32 %v4759, 8388608
        %v4761 = vsub.s32 0, %v4760
        %v4762 = vadd.s32 %v4757, 1
        %vm4763 = vcmp.gt.s32.totalorder %v4762, 0
        %v4764 = vsel %vm4763, %v4762, 0
        %v4765 = vshrl.u32 %v4764, 5
        %v4766 = vand.u32 %v4764, 31
        %v4767 = vsub.s32 32, %v4766
        %v4768 = vshrl.u32 683565275, %v4767
        %v4769 = vshll.u32 683565275, %v4766
        %v4770 = vshrl.u32 2475754826, %v4767
        %v4771 = vor.u32 %v4769, %v4770
        %v4772 = vshll.u32 2475754826, %v4766
        %v4773 = vshrl.u32 2131351028, %v4767
        %v4774 = vor.u32 %v4772, %v4773
        %v4775 = vshll.u32 2131351028, %v4766
        %v4776 = vshrl.u32 2102212464, %v4767
        %v4777 = vor.u32 %v4775, %v4776
        %v4778 = vshll.u32 2102212464, %v4766
        %v4779 = vshrl.u32 920167782, %v4767
        %v4780 = vor.u32 %v4778, %v4779
        %v4781 = vshll.u32 920167782, %v4766
        %v4782 = vshrl.u32 1326507024, %v4767
        %v4783 = vor.u32 %v4781, %v4782
        %vm4784 = vcmp.lt.s32.totalorder %v4765, 1
        %vm4785 = vcmp.lt.s32.totalorder %v4765, 2
        %vm4786 = vcmp.lt.s32.totalorder %v4765, 3
        %vm4787 = vcmp.lt.s32.totalorder %v4765, 4
        %v4788 = vsel %vm4784, %v4768, %v4771
        %v4789 = vsel %vm4787, %v4777, 2102212464
        %v4790 = vsel %vm4786, %v4774, %v4789
        %v4791 = vsel %vm4785, %v4788, %v4790
        %v4792 = vsel %vm4784, %v4771, %v4774
        %v4793 = vsel %vm4787, %v4780, 920167782
        %v4794 = vsel %vm4786, %v4777, %v4793
        %v4795 = vsel %vm4785, %v4792, %v4794
        %v4796 = vsel %vm4784, %v4774, %v4777
        %v4797 = vsel %vm4787, %v4783, 1326507024
        %v4798 = vsel %vm4786, %v4780, %v4797
        %v4799 = vsel %vm4785, %v4796, %v4798
        %v4800 = vshll.u32 %v4760, 8
        %v4801 = vmul.u32.u64.compose %v4800, %v4799
        %v4802 = vextract.low.u32 %v4801
        %v4803 = vextract.high.u32 %v4801
        %v4804 = vmul.u32.u64.compose %v4800, %v4795
        %v4805 = vextract.low.u32 %v4804
        %v4806 = vextract.high.u32 %v4804
        %v4807 = vmul.u32 %v4800, %v4791
        %v4808 = vadd.s32 %v4803, %v4805
        %vm4809 = vc.u32 %v4803, %v4805
        %v4810 = vadd.s32 %v4806, 1
        %v4811 = vsel %vm4809, %v4810, %v4806
        %v4812 = vadd.s32 %v4807, %v4811
        %v4813 = vadd.s32 %v4812, 536870912
        %v4814 = vshrl.u32 %v4813, 30
        %v4815 = vshll.u32 %v4814, 30
        %v4816 = vsub.s32 %v4812, %v4815
        %vm4817 = vcmp.lt.s32.totalorder %v4816, 0
        %v4818 = vsub.s32 0, %v4816
        %v4819 = vsel %vm4817, %v4818, %v4816
        %v4820 = vclz %v4819
        %v4821 = vsub.s32 %v4820, 2
        %vm4822 = vcmp.gt.s32.totalorder 0, %v4821
        %v4823 = vsel %vm4822, 0, %v4821
        %v4824 = vsub.s32 32, %v4823
        %v4825 = vshll.u32 %v4816, %v4823
        %v4826 = vshrl.u32 %v4808, %v4824
        %v4827 = vor.u32 %v4825, %v4826
        %v4828 = vsub.s32 4294967266, %v4823
        %v4829 = vadd.s32 %v4828, 127
        %v4830 = vshll.u32 %v4829, 23
        %v4831 = vor.u32 4788187, %v4830
        %v4832 = vand.u32 2147483647, %v4831
        %v4834 = vcvt.s32.f32 %v4827
        %v4835 = vmul.f32 %v4834, %v4832
        %v4836 = vxor.u32 %v4835, 2147483648
        %v4837 = vsel %vm4754, %v4836, %v4835
        %v4838 = vsub.s32 4, %v4814
        %v4839 = vsel %vm4754, %v4838, %v4814
        %v4840 = vsel %vm4753, %v780, %v4837
        %v4841 = vsel %vm4753, 0, %v4839
        %v4842 = vcosq.f32.pop %v4840
        %v4843 = vsinq.f32.pop %v4840
        %vm4844 = vweird.f32 %v780
        %v4845 = vand.u32 %v4841, 3
        %vm4846 = vcmp.lt.s32.totalorder %v4845, 2
        %vm4847 = vcmp.eq.s32.totalorder %v4845, 0
        %v4848 = vxor.u32 %v4843, 2147483648
        %v4849 = vsel %vm4847, %v4842, %v4848
        %vm4850 = vcmp.eq.s32.totalorder %v4845, 2
        %v4851 = vxor.u32 %v4842, 2147483648
        %v4852 = vsel %vm4850, %v4851, %v4843
        %v4853 = vsel %vm4846, %v4849, %v4852
        %v4854 = vsel %vm4844, nan, %v4853
        %v4855 = vand.u32 2147483647, %v781
        %vm4856 = vcmp.le.f32.partialorder %v4855, 0.7853982
        %vm4857 = vcmp.lt.s32.totalorder %v781, 0
        %v4858 = vand.u32 %v781, 2139095040
        %v4859 = vshrl.u32 %v4858, 23
        %v4860 = vsub.s32 %v4859, 127
        %v4861 = vand.u32 2147483647, %v781
        %v4862 = vand.u32 %v4861, 8388607
        %v4863 = vor.u32 %v4862, 8388608
        %v4864 = vsub.s32 0, %v4863
        %v4865 = vadd.s32 %v4860, 1
        %vm4866 = vcmp.gt.s32.totalorder %v4865, 0
        %v4867 = vsel %vm4866, %v4865, 0
        %v4868 = vshrl.u32 %v4867, 5
        %v4869 = vand.u32 %v4867, 31
        %v4870 = vsub.s32 32, %v4869
        %v4871 = vshrl.u32 683565275, %v4870
        %v4872 = vshll.u32 683565275, %v4869
        %v4873 = vshrl.u32 2475754826, %v4870
        %v4874 = vor.u32 %v4872, %v4873
        %v4875 = vshll.u32 2475754826, %v4869
        %v4876 = vshrl.u32 2131351028, %v4870
        %v4877 = vor.u32 %v4875, %v4876
        %v4878 = vshll.u32 2131351028, %v4869
        %v4879 = vshrl.u32 2102212464, %v4870
        %v4880 = vor.u32 %v4878, %v4879
        %v4881 = vshll.u32 2102212464, %v4869
        %v4882 = vshrl.u32 920167782, %v4870
        %v4883 = vor.u32 %v4881, %v4882
        %v4884 = vshll.u32 920167782, %v4869
        %v4885 = vshrl.u32 1326507024, %v4870
        %v4886 = vor.u32 %v4884, %v4885
        %vm4887 = vcmp.lt.s32.totalorder %v4868, 1
        %vm4888 = vcmp.lt.s32.totalorder %v4868, 2
        %vm4889 = vcmp.lt.s32.totalorder %v4868, 3
        %vm4890 = vcmp.lt.s32.totalorder %v4868, 4
        %v4891 = vsel %vm4887, %v4871, %v4874
        %v4892 = vsel %vm4890, %v4880, 2102212464
        %v4893 = vsel %vm4889, %v4877, %v4892
        %v4894 = vsel %vm4888, %v4891, %v4893
        %v4895 = vsel %vm4887, %v4874, %v4877
        %v4896 = vsel %vm4890, %v4883, 920167782
        %v4897 = vsel %vm4889, %v4880, %v4896
        %v4898 = vsel %vm4888, %v4895, %v4897
        %v4899 = vsel %vm4887, %v4877, %v4880
        %v4900 = vsel %vm4890, %v4886, 1326507024
        %v4901 = vsel %vm4889, %v4883, %v4900
        %v4902 = vsel %vm4888, %v4899, %v4901
        %v4903 = vshll.u32 %v4863, 8
        %v4904 = vmul.u32.u64.compose %v4903, %v4902
        %v4905 = vextract.low.u32 %v4904
        %v4906 = vextract.high.u32 %v4904
        %v4907 = vmul.u32.u64.compose %v4903, %v4898
        %v4908 = vextract.low.u32 %v4907
        %v4909 = vextract.high.u32 %v4907
        %v4910 = vmul.u32 %v4903, %v4894
        %v4911 = vadd.s32 %v4906, %v4908
        %vm4912 = vc.u32 %v4906, %v4908
        %v4913 = vadd.s32 %v4909, 1
        %v4914 = vsel %vm4912, %v4913, %v4909
        %v4915 = vadd.s32 %v4910, %v4914
        %v4916 = vadd.s32 %v4915, 536870912
        %v4917 = vshrl.u32 %v4916, 30
        %v4918 = vshll.u32 %v4917, 30
        %v4919 = vsub.s32 %v4915, %v4918
        %vm4920 = vcmp.lt.s32.totalorder %v4919, 0
        %v4921 = vsub.s32 0, %v4919
        %v4922 = vsel %vm4920, %v4921, %v4919
        %v4923 = vclz %v4922
        %v4924 = vsub.s32 %v4923, 2
        %vm4925 = vcmp.gt.s32.totalorder 0, %v4924
        %v4926 = vsel %vm4925, 0, %v4924
        %v4927 = vsub.s32 32, %v4926
        %v4928 = vshll.u32 %v4919, %v4926
        %v4929 = vshrl.u32 %v4911, %v4927
        %v4930 = vor.u32 %v4928, %v4929
        %v4931 = vsub.s32 4294967266, %v4926
        %v4932 = vadd.s32 %v4931, 127
        %v4933 = vshll.u32 %v4932, 23
        %v4934 = vor.u32 4788187, %v4933
        %v4935 = vand.u32 2147483647, %v4934
        %v4937 = vcvt.s32.f32 %v4930
        %v4938 = vmul.f32 %v4937, %v4935
        %v4939 = vxor.u32 %v4938, 2147483648
        %v4940 = vsel %vm4857, %v4939, %v4938
        %v4941 = vsub.s32 4, %v4917
        %v4942 = vsel %vm4857, %v4941, %v4917
        %v4943 = vsel %vm4856, %v781, %v4940
        %v4944 = vsel %vm4856, 0, %v4942
        %v4945 = vcosq.f32.pop %v4943
        %v4946 = vsinq.f32.pop %v4943
        %vm4947 = vweird.f32 %v781
        %v4948 = vand.u32 %v4944, 3
        %vm4949 = vcmp.lt.s32.totalorder %v4948, 2
        %vm4950 = vcmp.eq.s32.totalorder %v4948, 0
        %v4951 = vxor.u32 %v4946, 2147483648
        %v4952 = vsel %vm4950, %v4945, %v4951
        %vm4953 = vcmp.eq.s32.totalorder %v4948, 2
        %v4954 = vxor.u32 %v4945, 2147483648
        %v4955 = vsel %vm4953, %v4954, %v4946
        %v4956 = vsel %vm4949, %v4952, %v4955
        %v4957 = vsel %vm4947, nan, %v4956
        %v4958 = vand.u32 2147483647, %v782
        %vm4959 = vcmp.le.f32.partialorder %v4958, 0.7853982
        %vm4960 = vcmp.lt.s32.totalorder %v782, 0
        %v4961 = vand.u32 %v782, 2139095040
        %v4962 = vshrl.u32 %v4961, 23
        %v4963 = vsub.s32 %v4962, 127
        %v4964 = vand.u32 2147483647, %v782
        %v4965 = vand.u32 %v4964, 8388607
        %v4966 = vor.u32 %v4965, 8388608
        %v4967 = vsub.s32 0, %v4966
        %v4968 = vadd.s32 %v4963, 1
        %vm4969 = vcmp.gt.s32.totalorder %v4968, 0
        %v4970 = vsel %vm4969, %v4968, 0
        %v4971 = vshrl.u32 %v4970, 5
        %v4972 = vand.u32 %v4970, 31
        %v4973 = vsub.s32 32, %v4972
        %v4974 = vshrl.u32 683565275, %v4973
        %v4975 = vshll.u32 683565275, %v4972
        %v4976 = vshrl.u32 2475754826, %v4973
        %v4977 = vor.u32 %v4975, %v4976
        %v4978 = vshll.u32 2475754826, %v4972
        %v4979 = vshrl.u32 2131351028, %v4973
        %v4980 = vor.u32 %v4978, %v4979
        %v4981 = vshll.u32 2131351028, %v4972
        %v4982 = vshrl.u32 2102212464, %v4973
        %v4983 = vor.u32 %v4981, %v4982
        %v4984 = vshll.u32 2102212464, %v4972
        %v4985 = vshrl.u32 920167782, %v4973
        %v4986 = vor.u32 %v4984, %v4985
        %v4987 = vshll.u32 920167782, %v4972
        %v4988 = vshrl.u32 1326507024, %v4973
        %v4989 = vor.u32 %v4987, %v4988
        %vm4990 = vcmp.lt.s32.totalorder %v4971, 1
        %vm4991 = vcmp.lt.s32.totalorder %v4971, 2
        %vm4992 = vcmp.lt.s32.totalorder %v4971, 3
        %vm4993 = vcmp.lt.s32.totalorder %v4971, 4
        %v4994 = vsel %vm4990, %v4974, %v4977
        %v4995 = vsel %vm4993, %v4983, 2102212464
        %v4996 = vsel %vm4992, %v4980, %v4995
        %v4997 = vsel %vm4991, %v4994, %v4996
        %v4998 = vsel %vm4990, %v4977, %v4980
        %v4999 = vsel %vm4993, %v4986, 920167782
        %v5000 = vsel %vm4992, %v4983, %v4999
        %v5001 = vsel %vm4991, %v4998, %v5000
        %v5002 = vsel %vm4990, %v4980, %v4983
        %v5003 = vsel %vm4993, %v4989, 1326507024
        %v5004 = vsel %vm4992, %v4986, %v5003
        %v5005 = vsel %vm4991, %v5002, %v5004
        %v5006 = vshll.u32 %v4966, 8
        %v5007 = vmul.u32.u64.compose %v5006, %v5005
        %v5008 = vextract.low.u32 %v5007
        %v5009 = vextract.high.u32 %v5007
        %v5010 = vmul.u32.u64.compose %v5006, %v5001
        %v5011 = vextract.low.u32 %v5010
        %v5012 = vextract.high.u32 %v5010
        %v5013 = vmul.u32 %v5006, %v4997
        %v5014 = vadd.s32 %v5009, %v5011
        %vm5015 = vc.u32 %v5009, %v5011
        %v5016 = vadd.s32 %v5012, 1
        %v5017 = vsel %vm5015, %v5016, %v5012
        %v5018 = vadd.s32 %v5013, %v5017
        %v5019 = vadd.s32 %v5018, 536870912
        %v5020 = vshrl.u32 %v5019, 30
        %v5021 = vshll.u32 %v5020, 30
        %v5022 = vsub.s32 %v5018, %v5021
        %vm5023 = vcmp.lt.s32.totalorder %v5022, 0
        %v5024 = vsub.s32 0, %v5022
        %v5025 = vsel %vm5023, %v5024, %v5022
        %v5026 = vclz %v5025
        %v5027 = vsub.s32 %v5026, 2
        %vm5028 = vcmp.gt.s32.totalorder 0, %v5027
        %v5029 = vsel %vm5028, 0, %v5027
        %v5030 = vsub.s32 32, %v5029
        %v5031 = vshll.u32 %v5022, %v5029
        %v5032 = vshrl.u32 %v5014, %v5030
        %v5033 = vor.u32 %v5031, %v5032
        %v5034 = vsub.s32 4294967266, %v5029
        %v5035 = vadd.s32 %v5034, 127
        %v5036 = vshll.u32 %v5035, 23
        %v5037 = vor.u32 4788187, %v5036
        %v5038 = vand.u32 2147483647, %v5037
        %v5040 = vcvt.s32.f32 %v5033
        %v5041 = vmul.f32 %v5040, %v5038
        %v5042 = vxor.u32 %v5041, 2147483648
        %v5043 = vsel %vm4960, %v5042, %v5041
        %v5044 = vsub.s32 4, %v5020
        %v5045 = vsel %vm4960, %v5044, %v5020
        %v5046 = vsel %vm4959, %v782, %v5043
        %v5047 = vsel %vm4959, 0, %v5045
        %v5048 = vcosq.f32.pop %v5046
        %v5049 = vsinq.f32.pop %v5046
        %vm5050 = vweird.f32 %v782
        %v5051 = vand.u32 %v5047, 3
        %vm5052 = vcmp.lt.s32.totalorder %v5051, 2
        %vm5053 = vcmp.eq.s32.totalorder %v5051, 0
        %v5054 = vxor.u32 %v5049, 2147483648
        %v5055 = vsel %vm5053, %v5048, %v5054
        %vm5056 = vcmp.eq.s32.totalorder %v5051, 2
        %v5057 = vxor.u32 %v5048, 2147483648
        %v5058 = vsel %vm5056, %v5057, %v5049
        %v5059 = vsel %vm5052, %v5055, %v5058
        %v5060 = vsel %vm5050, nan, %v5059
        %v5061 = vand.u32 2147483647, %v783
        %vm5062 = vcmp.le.f32.partialorder %v5061, 0.7853982
        %vm5063 = vcmp.lt.s32.totalorder %v783, 0
        %v5064 = vand.u32 %v783, 2139095040
        %v5065 = vshrl.u32 %v5064, 23
        %v5066 = vsub.s32 %v5065, 127
        %v5067 = vand.u32 2147483647, %v783
        %v5068 = vand.u32 %v5067, 8388607
        %v5069 = vor.u32 %v5068, 8388608
        %v5070 = vsub.s32 0, %v5069
        %v5071 = vadd.s32 %v5066, 1
        %vm5072 = vcmp.gt.s32.totalorder %v5071, 0
        %v5073 = vsel %vm5072, %v5071, 0
        %v5074 = vshrl.u32 %v5073, 5
        %v5075 = vand.u32 %v5073, 31
        %v5076 = vsub.s32 32, %v5075
        %v5077 = vshrl.u32 683565275, %v5076
        %v5078 = vshll.u32 683565275, %v5075
        %v5079 = vshrl.u32 2475754826, %v5076
        %v5080 = vor.u32 %v5078, %v5079
        %v5081 = vshll.u32 2475754826, %v5075
        %v5082 = vshrl.u32 2131351028, %v5076
        %v5083 = vor.u32 %v5081, %v5082
        %v5084 = vshll.u32 2131351028, %v5075
        %v5085 = vshrl.u32 2102212464, %v5076
        %v5086 = vor.u32 %v5084, %v5085
        %v5087 = vshll.u32 2102212464, %v5075
        %v5088 = vshrl.u32 920167782, %v5076
        %v5089 = vor.u32 %v5087, %v5088
        %v5090 = vshll.u32 920167782, %v5075
        %v5091 = vshrl.u32 1326507024, %v5076
        %v5092 = vor.u32 %v5090, %v5091
        %vm5093 = vcmp.lt.s32.totalorder %v5074, 1
        %vm5094 = vcmp.lt.s32.totalorder %v5074, 2
        %vm5095 = vcmp.lt.s32.totalorder %v5074, 3
        %vm5096 = vcmp.lt.s32.totalorder %v5074, 4
        %v5097 = vsel %vm5093, %v5077, %v5080
        %v5098 = vsel %vm5096, %v5086, 2102212464
        %v5099 = vsel %vm5095, %v5083, %v5098
        %v5100 = vsel %vm5094, %v5097, %v5099
        %v5101 = vsel %vm5093, %v5080, %v5083
        %v5102 = vsel %vm5096, %v5089, 920167782
        %v5103 = vsel %vm5095, %v5086, %v5102
        %v5104 = vsel %vm5094, %v5101, %v5103
        %v5105 = vsel %vm5093, %v5083, %v5086
        %v5106 = vsel %vm5096, %v5092, 1326507024
        %v5107 = vsel %vm5095, %v5089, %v5106
        %v5108 = vsel %vm5094, %v5105, %v5107
        %v5109 = vshll.u32 %v5069, 8
        %v5110 = vmul.u32.u64.compose %v5109, %v5108
        %v5111 = vextract.low.u32 %v5110
        %v5112 = vextract.high.u32 %v5110
        %v5113 = vmul.u32.u64.compose %v5109, %v5104
        %v5114 = vextract.low.u32 %v5113
        %v5115 = vextract.high.u32 %v5113
        %v5116 = vmul.u32 %v5109, %v5100
        %v5117 = vadd.s32 %v5112, %v5114
        %vm5118 = vc.u32 %v5112, %v5114
        %v5119 = vadd.s32 %v5115, 1
        %v5120 = vsel %vm5118, %v5119, %v5115
        %v5121 = vadd.s32 %v5116, %v5120
        %v5122 = vadd.s32 %v5121, 536870912
        %v5123 = vshrl.u32 %v5122, 30
        %v5124 = vshll.u32 %v5123, 30
        %v5125 = vsub.s32 %v5121, %v5124
        %vm5126 = vcmp.lt.s32.totalorder %v5125, 0
        %v5127 = vsub.s32 0, %v5125
        %v5128 = vsel %vm5126, %v5127, %v5125
        %v5129 = vclz %v5128
        %v5130 = vsub.s32 %v5129, 2
        %vm5131 = vcmp.gt.s32.totalorder 0, %v5130
        %v5132 = vsel %vm5131, 0, %v5130
        %v5133 = vsub.s32 32, %v5132
        %v5134 = vshll.u32 %v5125, %v5132
        %v5135 = vshrl.u32 %v5117, %v5133
        %v5136 = vor.u32 %v5134, %v5135
        %v5137 = vsub.s32 4294967266, %v5132
        %v5138 = vadd.s32 %v5137, 127
        %v5139 = vshll.u32 %v5138, 23
        %v5140 = vor.u32 4788187, %v5139
        %v5141 = vand.u32 2147483647, %v5140
        %v5143 = vcvt.s32.f32 %v5136
        %v5144 = vmul.f32 %v5143, %v5141
        %v5145 = vxor.u32 %v5144, 2147483648
        %v5146 = vsel %vm5063, %v5145, %v5144
        %v5147 = vsub.s32 4, %v5123
        %v5148 = vsel %vm5063, %v5147, %v5123
        %v5149 = vsel %vm5062, %v783, %v5146
        %v5150 = vsel %vm5062, 0, %v5148
        %v5151 = vcosq.f32.pop %v5149
        %v5152 = vsinq.f32.pop %v5149
        %vm5153 = vweird.f32 %v783
        %v5154 = vand.u32 %v5150, 3
        %vm5155 = vcmp.lt.s32.totalorder %v5154, 2
        %vm5156 = vcmp.eq.s32.totalorder %v5154, 0
        %v5157 = vxor.u32 %v5152, 2147483648
        %v5158 = vsel %vm5156, %v5151, %v5157
        %vm5159 = vcmp.eq.s32.totalorder %v5154, 2
        %v5160 = vxor.u32 %v5151, 2147483648
        %v5161 = vsel %vm5159, %v5160, %v5152
        %v5162 = vsel %vm5155, %v5158, %v5161
        %v5163 = vsel %vm5153, nan, %v5162
        %v5164 = vand.u32 2147483647, %v784
        %vm5165 = vcmp.le.f32.partialorder %v5164, 0.7853982
        %vm5166 = vcmp.lt.s32.totalorder %v784, 0
        %v5167 = vand.u32 %v784, 2139095040
        %v5168 = vshrl.u32 %v5167, 23
        %v5169 = vsub.s32 %v5168, 127
        %v5170 = vand.u32 2147483647, %v784
        %v5171 = vand.u32 %v5170, 8388607
        %v5172 = vor.u32 %v5171, 8388608
        %v5173 = vsub.s32 0, %v5172
        %v5174 = vadd.s32 %v5169, 1
        %vm5175 = vcmp.gt.s32.totalorder %v5174, 0
        %v5176 = vsel %vm5175, %v5174, 0
        %v5177 = vshrl.u32 %v5176, 5
        %v5178 = vand.u32 %v5176, 31
        %v5179 = vsub.s32 32, %v5178
        %v5180 = vshrl.u32 683565275, %v5179
        %v5181 = vshll.u32 683565275, %v5178
        %v5182 = vshrl.u32 2475754826, %v5179
        %v5183 = vor.u32 %v5181, %v5182
        %v5184 = vshll.u32 2475754826, %v5178
        %v5185 = vshrl.u32 2131351028, %v5179
        %v5186 = vor.u32 %v5184, %v5185
        %v5187 = vshll.u32 2131351028, %v5178
        %v5188 = vshrl.u32 2102212464, %v5179
        %v5189 = vor.u32 %v5187, %v5188
        %v5190 = vshll.u32 2102212464, %v5178
        %v5191 = vshrl.u32 920167782, %v5179
        %v5192 = vor.u32 %v5190, %v5191
        %v5193 = vshll.u32 920167782, %v5178
        %v5194 = vshrl.u32 1326507024, %v5179
        %v5195 = vor.u32 %v5193, %v5194
        %vm5196 = vcmp.lt.s32.totalorder %v5177, 1
        %vm5197 = vcmp.lt.s32.totalorder %v5177, 2
        %vm5198 = vcmp.lt.s32.totalorder %v5177, 3
        %vm5199 = vcmp.lt.s32.totalorder %v5177, 4
        %v5200 = vsel %vm5196, %v5180, %v5183
        %v5201 = vsel %vm5199, %v5189, 2102212464
        %v5202 = vsel %vm5198, %v5186, %v5201
        %v5203 = vsel %vm5197, %v5200, %v5202
        %v5204 = vsel %vm5196, %v5183, %v5186
        %v5205 = vsel %vm5199, %v5192, 920167782
        %v5206 = vsel %vm5198, %v5189, %v5205
        %v5207 = vsel %vm5197, %v5204, %v5206
        %v5208 = vsel %vm5196, %v5186, %v5189
        %v5209 = vsel %vm5199, %v5195, 1326507024
        %v5210 = vsel %vm5198, %v5192, %v5209
        %v5211 = vsel %vm5197, %v5208, %v5210
        %v5212 = vshll.u32 %v5172, 8
        %v5213 = vmul.u32.u64.compose %v5212, %v5211
        %v5214 = vextract.low.u32 %v5213
        %v5215 = vextract.high.u32 %v5213
        %v5216 = vmul.u32.u64.compose %v5212, %v5207
        %v5217 = vextract.low.u32 %v5216
        %v5218 = vextract.high.u32 %v5216
        %v5219 = vmul.u32 %v5212, %v5203
        %v5220 = vadd.s32 %v5215, %v5217
        %vm5221 = vc.u32 %v5215, %v5217
        %v5222 = vadd.s32 %v5218, 1
        %v5223 = vsel %vm5221, %v5222, %v5218
        %v5224 = vadd.s32 %v5219, %v5223
        %v5225 = vadd.s32 %v5224, 536870912
        %v5226 = vshrl.u32 %v5225, 30
        %v5227 = vshll.u32 %v5226, 30
        %v5228 = vsub.s32 %v5224, %v5227
        %vm5229 = vcmp.lt.s32.totalorder %v5228, 0
        %v5230 = vsub.s32 0, %v5228
        %v5231 = vsel %vm5229, %v5230, %v5228
        %v5232 = vclz %v5231
        %v5233 = vsub.s32 %v5232, 2
        %vm5234 = vcmp.gt.s32.totalorder 0, %v5233
        %v5235 = vsel %vm5234, 0, %v5233
        %v5236 = vsub.s32 32, %v5235
        %v5237 = vshll.u32 %v5228, %v5235
        %v5238 = vshrl.u32 %v5220, %v5236
        %v5239 = vor.u32 %v5237, %v5238
        %v5240 = vsub.s32 4294967266, %v5235
        %v5241 = vadd.s32 %v5240, 127
        %v5242 = vshll.u32 %v5241, 23
        %v5243 = vor.u32 4788187, %v5242
        %v5244 = vand.u32 2147483647, %v5243
        %v5246 = vcvt.s32.f32 %v5239
        %v5247 = vmul.f32 %v5246, %v5244
        %v5248 = vxor.u32 %v5247, 2147483648
        %v5249 = vsel %vm5166, %v5248, %v5247
        %v5250 = vsub.s32 4, %v5226
        %v5251 = vsel %vm5166, %v5250, %v5226
        %v5252 = vsel %vm5165, %v784, %v5249
        %v5253 = vsel %vm5165, 0, %v5251
        %v5254 = vcosq.f32.pop %v5252
        %v5255 = vsinq.f32.pop %v5252
        %vm5256 = vweird.f32 %v784
        %v5257 = vand.u32 %v5253, 3
        %vm5258 = vcmp.lt.s32.totalorder %v5257, 2
        %vm5259 = vcmp.eq.s32.totalorder %v5257, 0
        %v5260 = vxor.u32 %v5255, 2147483648
        %v5261 = vsel %vm5259, %v5254, %v5260
        %vm5262 = vcmp.eq.s32.totalorder %v5257, 2
        %v5263 = vxor.u32 %v5254, 2147483648
        %v5264 = vsel %vm5262, %v5263, %v5255
        %v5265 = vsel %vm5258, %v5261, %v5264
        %v5266 = vsel %vm5256, nan, %v5265
        %v5267 = vand.u32 2147483647, %v785
        %vm5268 = vcmp.le.f32.partialorder %v5267, 0.7853982
        %vm5269 = vcmp.lt.s32.totalorder %v785, 0
        %v5270 = vand.u32 %v785, 2139095040
        %v5271 = vshrl.u32 %v5270, 23
        %v5272 = vsub.s32 %v5271, 127
        %v5273 = vand.u32 2147483647, %v785
        %v5274 = vand.u32 %v5273, 8388607
        %v5275 = vor.u32 %v5274, 8388608
        %v5276 = vsub.s32 0, %v5275
        %v5277 = vadd.s32 %v5272, 1
        %vm5278 = vcmp.gt.s32.totalorder %v5277, 0
        %v5279 = vsel %vm5278, %v5277, 0
        %v5280 = vshrl.u32 %v5279, 5
        %v5281 = vand.u32 %v5279, 31
        %v5282 = vsub.s32 32, %v5281
        %v5283 = vshrl.u32 683565275, %v5282
        %v5284 = vshll.u32 683565275, %v5281
        %v5285 = vshrl.u32 2475754826, %v5282
        %v5286 = vor.u32 %v5284, %v5285
        %v5287 = vshll.u32 2475754826, %v5281
        %v5288 = vshrl.u32 2131351028, %v5282
        %v5289 = vor.u32 %v5287, %v5288
        %v5290 = vshll.u32 2131351028, %v5281
        %v5291 = vshrl.u32 2102212464, %v5282
        %v5292 = vor.u32 %v5290, %v5291
        %v5293 = vshll.u32 2102212464, %v5281
        %v5294 = vshrl.u32 920167782, %v5282
        %v5295 = vor.u32 %v5293, %v5294
        %v5296 = vshll.u32 920167782, %v5281
        %v5297 = vshrl.u32 1326507024, %v5282
        %v5298 = vor.u32 %v5296, %v5297
        %vm5299 = vcmp.lt.s32.totalorder %v5280, 1
        %vm5300 = vcmp.lt.s32.totalorder %v5280, 2
        %vm5301 = vcmp.lt.s32.totalorder %v5280, 3
        %vm5302 = vcmp.lt.s32.totalorder %v5280, 4
        %v5303 = vsel %vm5299, %v5283, %v5286
        %v5304 = vsel %vm5302, %v5292, 2102212464
        %v5305 = vsel %vm5301, %v5289, %v5304
        %v5306 = vsel %vm5300, %v5303, %v5305
        %v5307 = vsel %vm5299, %v5286, %v5289
        %v5308 = vsel %vm5302, %v5295, 920167782
        %v5309 = vsel %vm5301, %v5292, %v5308
        %v5310 = vsel %vm5300, %v5307, %v5309
        %v5311 = vsel %vm5299, %v5289, %v5292
        %v5312 = vsel %vm5302, %v5298, 1326507024
        %v5313 = vsel %vm5301, %v5295, %v5312
        %v5314 = vsel %vm5300, %v5311, %v5313
        %v5315 = vshll.u32 %v5275, 8
        %v5316 = vmul.u32.u64.compose %v5315, %v5314
        %v5317 = vextract.low.u32 %v5316
        %v5318 = vextract.high.u32 %v5316
        %v5319 = vmul.u32.u64.compose %v5315, %v5310
        %v5320 = vextract.low.u32 %v5319
        %v5321 = vextract.high.u32 %v5319
        %v5322 = vmul.u32 %v5315, %v5306
        %v5323 = vadd.s32 %v5318, %v5320
        %vm5324 = vc.u32 %v5318, %v5320
        %v5325 = vadd.s32 %v5321, 1
        %v5326 = vsel %vm5324, %v5325, %v5321
        %v5327 = vadd.s32 %v5322, %v5326
        %v5328 = vadd.s32 %v5327, 536870912
        %v5329 = vshrl.u32 %v5328, 30
        %v5330 = vshll.u32 %v5329, 30
        %v5331 = vsub.s32 %v5327, %v5330
        %vm5332 = vcmp.lt.s32.totalorder %v5331, 0
        %v5333 = vsub.s32 0, %v5331
        %v5334 = vsel %vm5332, %v5333, %v5331
        %v5335 = vclz %v5334
        %v5336 = vsub.s32 %v5335, 2
        %vm5337 = vcmp.gt.s32.totalorder 0, %v5336
        %v5338 = vsel %vm5337, 0, %v5336
        %v5339 = vsub.s32 32, %v5338
        %v5340 = vshll.u32 %v5331, %v5338
        %v5341 = vshrl.u32 %v5323, %v5339
        %v5342 = vor.u32 %v5340, %v5341
        %v5343 = vsub.s32 4294967266, %v5338
        %v5344 = vadd.s32 %v5343, 127
        %v5345 = vshll.u32 %v5344, 23
        %v5346 = vor.u32 4788187, %v5345
        %v5347 = vand.u32 2147483647, %v5346
        %v5349 = vcvt.s32.f32 %v5342
        %v5350 = vmul.f32 %v5349, %v5347
        %v5351 = vxor.u32 %v5350, 2147483648
        %v5352 = vsel %vm5269, %v5351, %v5350
        %v5353 = vsub.s32 4, %v5329
        %v5354 = vsel %vm5269, %v5353, %v5329
        %v5355 = vsel %vm5268, %v785, %v5352
        %v5356 = vsel %vm5268, 0, %v5354
        %v5357 = vcosq.f32.pop %v5355
        %v5358 = vsinq.f32.pop %v5355
        %vm5359 = vweird.f32 %v785
        %v5360 = vand.u32 %v5356, 3
        %vm5361 = vcmp.lt.s32.totalorder %v5360, 2
        %vm5362 = vcmp.eq.s32.totalorder %v5360, 0
        %v5363 = vxor.u32 %v5358, 2147483648
        %v5364 = vsel %vm5362, %v5357, %v5363
        %vm5365 = vcmp.eq.s32.totalorder %v5360, 2
        %v5366 = vxor.u32 %v5357, 2147483648
        %v5367 = vsel %vm5365, %v5366, %v5358
        %v5368 = vsel %vm5361, %v5364, %v5367
        %v5369 = vsel %vm5359, nan, %v5368
        %v5370 = vand.u32 2147483647, %v786
        %vm5371 = vcmp.le.f32.partialorder %v5370, 0.7853982
        %vm5372 = vcmp.lt.s32.totalorder %v786, 0
        %v5373 = vand.u32 %v786, 2139095040
        %v5374 = vshrl.u32 %v5373, 23
        %v5375 = vsub.s32 %v5374, 127
        %v5376 = vand.u32 2147483647, %v786
        %v5377 = vand.u32 %v5376, 8388607
        %v5378 = vor.u32 %v5377, 8388608
        %v5379 = vsub.s32 0, %v5378
        %v5380 = vadd.s32 %v5375, 1
        %vm5381 = vcmp.gt.s32.totalorder %v5380, 0
        %v5382 = vsel %vm5381, %v5380, 0
        %v5383 = vshrl.u32 %v5382, 5
        %v5384 = vand.u32 %v5382, 31
        %v5385 = vsub.s32 32, %v5384
        %v5386 = vshrl.u32 683565275, %v5385
        %v5387 = vshll.u32 683565275, %v5384
        %v5388 = vshrl.u32 2475754826, %v5385
        %v5389 = vor.u32 %v5387, %v5388
        %v5390 = vshll.u32 2475754826, %v5384
        %v5391 = vshrl.u32 2131351028, %v5385
        %v5392 = vor.u32 %v5390, %v5391
        %v5393 = vshll.u32 2131351028, %v5384
        %v5394 = vshrl.u32 2102212464, %v5385
        %v5395 = vor.u32 %v5393, %v5394
        %v5396 = vshll.u32 2102212464, %v5384
        %v5397 = vshrl.u32 920167782, %v5385
        %v5398 = vor.u32 %v5396, %v5397
        %v5399 = vshll.u32 920167782, %v5384
        %v5400 = vshrl.u32 1326507024, %v5385
        %v5401 = vor.u32 %v5399, %v5400
        %vm5402 = vcmp.lt.s32.totalorder %v5383, 1
        %vm5403 = vcmp.lt.s32.totalorder %v5383, 2
        %vm5404 = vcmp.lt.s32.totalorder %v5383, 3
        %vm5405 = vcmp.lt.s32.totalorder %v5383, 4
        %v5406 = vsel %vm5402, %v5386, %v5389
        %v5407 = vsel %vm5405, %v5395, 2102212464
        %v5408 = vsel %vm5404, %v5392, %v5407
        %v5409 = vsel %vm5403, %v5406, %v5408
        %v5410 = vsel %vm5402, %v5389, %v5392
        %v5411 = vsel %vm5405, %v5398, 920167782
        %v5412 = vsel %vm5404, %v5395, %v5411
        %v5413 = vsel %vm5403, %v5410, %v5412
        %v5414 = vsel %vm5402, %v5392, %v5395
        %v5415 = vsel %vm5405, %v5401, 1326507024
        %v5416 = vsel %vm5404, %v5398, %v5415
        %v5417 = vsel %vm5403, %v5414, %v5416
        %v5418 = vshll.u32 %v5378, 8
        %v5419 = vmul.u32.u64.compose %v5418, %v5417
        %v5420 = vextract.low.u32 %v5419
        %v5421 = vextract.high.u32 %v5419
        %v5422 = vmul.u32.u64.compose %v5418, %v5413
        %v5423 = vextract.low.u32 %v5422
        %v5424 = vextract.high.u32 %v5422
        %v5425 = vmul.u32 %v5418, %v5409
        %v5426 = vadd.s32 %v5421, %v5423
        %vm5427 = vc.u32 %v5421, %v5423
        %v5428 = vadd.s32 %v5424, 1
        %v5429 = vsel %vm5427, %v5428, %v5424
        %v5430 = vadd.s32 %v5425, %v5429
        %v5431 = vadd.s32 %v5430, 536870912
        %v5432 = vshrl.u32 %v5431, 30
        %v5433 = vshll.u32 %v5432, 30
        %v5434 = vsub.s32 %v5430, %v5433
        %vm5435 = vcmp.lt.s32.totalorder %v5434, 0
        %v5436 = vsub.s32 0, %v5434
        %v5437 = vsel %vm5435, %v5436, %v5434
        %v5438 = vclz %v5437
        %v5439 = vsub.s32 %v5438, 2
        %vm5440 = vcmp.gt.s32.totalorder 0, %v5439
        %v5441 = vsel %vm5440, 0, %v5439
        %v5442 = vsub.s32 32, %v5441
        %v5443 = vshll.u32 %v5434, %v5441
        %v5444 = vshrl.u32 %v5426, %v5442
        %v5445 = vor.u32 %v5443, %v5444
        %v5446 = vsub.s32 4294967266, %v5441
        %v5447 = vadd.s32 %v5446, 127
        %v5448 = vshll.u32 %v5447, 23
        %v5449 = vor.u32 4788187, %v5448
        %v5450 = vand.u32 2147483647, %v5449
        %v5452 = vcvt.s32.f32 %v5445
        %v5453 = vmul.f32 %v5452, %v5450
        %v5454 = vxor.u32 %v5453, 2147483648
        %v5455 = vsel %vm5372, %v5454, %v5453
        %v5456 = vsub.s32 4, %v5432
        %v5457 = vsel %vm5372, %v5456, %v5432
        %v5458 = vsel %vm5371, %v786, %v5455
        %v5459 = vsel %vm5371, 0, %v5457
        %v5460 = vcosq.f32.pop %v5458
        %v5461 = vsinq.f32.pop %v5458
        %vm5462 = vweird.f32 %v786
        %v5463 = vand.u32 %v5459, 3
        %vm5464 = vcmp.lt.s32.totalorder %v5463, 2
        %vm5465 = vcmp.eq.s32.totalorder %v5463, 0
        %v5466 = vxor.u32 %v5461, 2147483648
        %v5467 = vsel %vm5465, %v5460, %v5466
        %vm5468 = vcmp.eq.s32.totalorder %v5463, 2
        %v5469 = vxor.u32 %v5460, 2147483648
        %v5470 = vsel %vm5468, %v5469, %v5461
        %v5471 = vsel %vm5464, %v5467, %v5470
        %v5472 = vsel %vm5462, nan, %v5471
        %v5473 = vand.u32 2147483647, %v787
        %vm5474 = vcmp.le.f32.partialorder %v5473, 0.7853982
        %vm5475 = vcmp.lt.s32.totalorder %v787, 0
        %v5476 = vand.u32 %v787, 2139095040
        %v5477 = vshrl.u32 %v5476, 23
        %v5478 = vsub.s32 %v5477, 127
        %v5479 = vand.u32 2147483647, %v787
        %v5480 = vand.u32 %v5479, 8388607
        %v5481 = vor.u32 %v5480, 8388608
        %v5482 = vsub.s32 0, %v5481
        %v5483 = vadd.s32 %v5478, 1
        %vm5484 = vcmp.gt.s32.totalorder %v5483, 0
        %v5485 = vsel %vm5484, %v5483, 0
        %v5486 = vshrl.u32 %v5485, 5
        %v5487 = vand.u32 %v5485, 31
        %v5488 = vsub.s32 32, %v5487
        %v5489 = vshrl.u32 683565275, %v5488
        %v5490 = vshll.u32 683565275, %v5487
        %v5491 = vshrl.u32 2475754826, %v5488
        %v5492 = vor.u32 %v5490, %v5491
        %v5493 = vshll.u32 2475754826, %v5487
        %v5494 = vshrl.u32 2131351028, %v5488
        %v5495 = vor.u32 %v5493, %v5494
        %v5496 = vshll.u32 2131351028, %v5487
        %v5497 = vshrl.u32 2102212464, %v5488
        %v5498 = vor.u32 %v5496, %v5497
        %v5499 = vshll.u32 2102212464, %v5487
        %v5500 = vshrl.u32 920167782, %v5488
        %v5501 = vor.u32 %v5499, %v5500
        %v5502 = vshll.u32 920167782, %v5487
        %v5503 = vshrl.u32 1326507024, %v5488
        %v5504 = vor.u32 %v5502, %v5503
        %vm5505 = vcmp.lt.s32.totalorder %v5486, 1
        %vm5506 = vcmp.lt.s32.totalorder %v5486, 2
        %vm5507 = vcmp.lt.s32.totalorder %v5486, 3
        %vm5508 = vcmp.lt.s32.totalorder %v5486, 4
        %v5509 = vsel %vm5505, %v5489, %v5492
        %v5510 = vsel %vm5508, %v5498, 2102212464
        %v5511 = vsel %vm5507, %v5495, %v5510
        %v5512 = vsel %vm5506, %v5509, %v5511
        %v5513 = vsel %vm5505, %v5492, %v5495
        %v5514 = vsel %vm5508, %v5501, 920167782
        %v5515 = vsel %vm5507, %v5498, %v5514
        %v5516 = vsel %vm5506, %v5513, %v5515
        %v5517 = vsel %vm5505, %v5495, %v5498
        %v5518 = vsel %vm5508, %v5504, 1326507024
        %v5519 = vsel %vm5507, %v5501, %v5518
        %v5520 = vsel %vm5506, %v5517, %v5519
        %v5521 = vshll.u32 %v5481, 8
        %v5522 = vmul.u32.u64.compose %v5521, %v5520
        %v5523 = vextract.low.u32 %v5522
        %v5524 = vextract.high.u32 %v5522
        %v5525 = vmul.u32.u64.compose %v5521, %v5516
        %v5526 = vextract.low.u32 %v5525
        %v5527 = vextract.high.u32 %v5525
        %v5528 = vmul.u32 %v5521, %v5512
        %v5529 = vadd.s32 %v5524, %v5526
        %vm5530 = vc.u32 %v5524, %v5526
        %v5531 = vadd.s32 %v5527, 1
        %v5532 = vsel %vm5530, %v5531, %v5527
        %v5533 = vadd.s32 %v5528, %v5532
        %v5534 = vadd.s32 %v5533, 536870912
        %v5535 = vshrl.u32 %v5534, 30
        %v5536 = vshll.u32 %v5535, 30
        %v5537 = vsub.s32 %v5533, %v5536
        %vm5538 = vcmp.lt.s32.totalorder %v5537, 0
        %v5539 = vsub.s32 0, %v5537
        %v5540 = vsel %vm5538, %v5539, %v5537
        %v5541 = vclz %v5540
        %v5542 = vsub.s32 %v5541, 2
        %vm5543 = vcmp.gt.s32.totalorder 0, %v5542
        %v5544 = vsel %vm5543, 0, %v5542
        %v5545 = vsub.s32 32, %v5544
        %v5546 = vshll.u32 %v5537, %v5544
        %v5547 = vshrl.u32 %v5529, %v5545
        %v5548 = vor.u32 %v5546, %v5547
        %v5549 = vsub.s32 4294967266, %v5544
        %v5550 = vadd.s32 %v5549, 127
        %v5551 = vshll.u32 %v5550, 23
        %v5552 = vor.u32 4788187, %v5551
        %v5553 = vand.u32 2147483647, %v5552
        %v5555 = vcvt.s32.f32 %v5548
        %v5556 = vmul.f32 %v5555, %v5553
        %v5557 = vxor.u32 %v5556, 2147483648
        %v5558 = vsel %vm5475, %v5557, %v5556
        %v5559 = vsub.s32 4, %v5535
        %v5560 = vsel %vm5475, %v5559, %v5535
        %v5561 = vsel %vm5474, %v787, %v5558
        %v5562 = vsel %vm5474, 0, %v5560
        %v5563 = vcosq.f32.pop %v5561
        %v5564 = vsinq.f32.pop %v5561
        %vm5565 = vweird.f32 %v787
        %v5566 = vand.u32 %v5562, 3
        %vm5567 = vcmp.lt.s32.totalorder %v5566, 2
        %vm5568 = vcmp.eq.s32.totalorder %v5566, 0
        %v5569 = vxor.u32 %v5564, 2147483648
        %v5570 = vsel %vm5568, %v5563, %v5569
        %vm5571 = vcmp.eq.s32.totalorder %v5566, 2
        %v5572 = vxor.u32 %v5563, 2147483648
        %v5573 = vsel %vm5571, %v5572, %v5564
        %v5574 = vsel %vm5567, %v5570, %v5573
        %v5575 = vsel %vm5565, nan, %v5574
        %v5576 = vand.u32 2147483647, %v788
        %vm5577 = vcmp.le.f32.partialorder %v5576, 0.7853982
        %vm5578 = vcmp.lt.s32.totalorder %v788, 0
        %v5579 = vand.u32 %v788, 2139095040
        %v5580 = vshrl.u32 %v5579, 23
        %v5581 = vsub.s32 %v5580, 127
        %v5582 = vand.u32 2147483647, %v788
        %v5583 = vand.u32 %v5582, 8388607
        %v5584 = vor.u32 %v5583, 8388608
        %v5585 = vsub.s32 0, %v5584
        %v5586 = vadd.s32 %v5581, 1
        %vm5587 = vcmp.gt.s32.totalorder %v5586, 0
        %v5588 = vsel %vm5587, %v5586, 0
        %v5589 = vshrl.u32 %v5588, 5
        %v5590 = vand.u32 %v5588, 31
        %v5591 = vsub.s32 32, %v5590
        %v5592 = vshrl.u32 683565275, %v5591
        %v5593 = vshll.u32 683565275, %v5590
        %v5594 = vshrl.u32 2475754826, %v5591
        %v5595 = vor.u32 %v5593, %v5594
        %v5596 = vshll.u32 2475754826, %v5590
        %v5597 = vshrl.u32 2131351028, %v5591
        %v5598 = vor.u32 %v5596, %v5597
        %v5599 = vshll.u32 2131351028, %v5590
        %v5600 = vshrl.u32 2102212464, %v5591
        %v5601 = vor.u32 %v5599, %v5600
        %v5602 = vshll.u32 2102212464, %v5590
        %v5603 = vshrl.u32 920167782, %v5591
        %v5604 = vor.u32 %v5602, %v5603
        %v5605 = vshll.u32 920167782, %v5590
        %v5606 = vshrl.u32 1326507024, %v5591
        %v5607 = vor.u32 %v5605, %v5606
        %vm5608 = vcmp.lt.s32.totalorder %v5589, 1
        %vm5609 = vcmp.lt.s32.totalorder %v5589, 2
        %vm5610 = vcmp.lt.s32.totalorder %v5589, 3
        %vm5611 = vcmp.lt.s32.totalorder %v5589, 4
        %v5612 = vsel %vm5608, %v5592, %v5595
        %v5613 = vsel %vm5611, %v5601, 2102212464
        %v5614 = vsel %vm5610, %v5598, %v5613
        %v5615 = vsel %vm5609, %v5612, %v5614
        %v5616 = vsel %vm5608, %v5595, %v5598
        %v5617 = vsel %vm5611, %v5604, 920167782
        %v5618 = vsel %vm5610, %v5601, %v5617
        %v5619 = vsel %vm5609, %v5616, %v5618
        %v5620 = vsel %vm5608, %v5598, %v5601
        %v5621 = vsel %vm5611, %v5607, 1326507024
        %v5622 = vsel %vm5610, %v5604, %v5621
        %v5623 = vsel %vm5609, %v5620, %v5622
        %v5624 = vshll.u32 %v5584, 8
        %v5625 = vmul.u32.u64.compose %v5624, %v5623
        %v5626 = vextract.low.u32 %v5625
        %v5627 = vextract.high.u32 %v5625
        %v5628 = vmul.u32.u64.compose %v5624, %v5619
        %v5629 = vextract.low.u32 %v5628
        %v5630 = vextract.high.u32 %v5628
        %v5631 = vmul.u32 %v5624, %v5615
        %v5632 = vadd.s32 %v5627, %v5629
        %vm5633 = vc.u32 %v5627, %v5629
        %v5634 = vadd.s32 %v5630, 1
        %v5635 = vsel %vm5633, %v5634, %v5630
        %v5636 = vadd.s32 %v5631, %v5635
        %v5637 = vadd.s32 %v5636, 536870912
        %v5638 = vshrl.u32 %v5637, 30
        %v5639 = vshll.u32 %v5638, 30
        %v5640 = vsub.s32 %v5636, %v5639
        %vm5641 = vcmp.lt.s32.totalorder %v5640, 0
        %v5642 = vsub.s32 0, %v5640
        %v5643 = vsel %vm5641, %v5642, %v5640
        %v5644 = vclz %v5643
        %v5645 = vsub.s32 %v5644, 2
        %vm5646 = vcmp.gt.s32.totalorder 0, %v5645
        %v5647 = vsel %vm5646, 0, %v5645
        %v5648 = vsub.s32 32, %v5647
        %v5649 = vshll.u32 %v5640, %v5647
        %v5650 = vshrl.u32 %v5632, %v5648
        %v5651 = vor.u32 %v5649, %v5650
        %v5652 = vsub.s32 4294967266, %v5647
        %v5653 = vadd.s32 %v5652, 127
        %v5654 = vshll.u32 %v5653, 23
        %v5655 = vor.u32 4788187, %v5654
        %v5656 = vand.u32 2147483647, %v5655
        %v5658 = vcvt.s32.f32 %v5651
        %v5659 = vmul.f32 %v5658, %v5656
        %v5660 = vxor.u32 %v5659, 2147483648
        %v5661 = vsel %vm5578, %v5660, %v5659
        %v5662 = vsub.s32 4, %v5638
        %v5663 = vsel %vm5578, %v5662, %v5638
        %v5664 = vsel %vm5577, %v788, %v5661
        %v5665 = vsel %vm5577, 0, %v5663
        %v5666 = vcosq.f32.pop %v5664
        %v5667 = vsinq.f32.pop %v5664
        %vm5668 = vweird.f32 %v788
        %v5669 = vand.u32 %v5665, 3
        %vm5670 = vcmp.lt.s32.totalorder %v5669, 2
        %vm5671 = vcmp.eq.s32.totalorder %v5669, 0
        %v5672 = vxor.u32 %v5667, 2147483648
        %v5673 = vsel %vm5671, %v5666, %v5672
        %vm5674 = vcmp.eq.s32.totalorder %v5669, 2
        %v5675 = vxor.u32 %v5666, 2147483648
        %v5676 = vsel %vm5674, %v5675, %v5667
        %v5677 = vsel %vm5670, %v5673, %v5676
        %v5678 = vsel %vm5668, nan, %v5677
        %v5679 = vand.u32 2147483647, %v789
        %vm5680 = vcmp.le.f32.partialorder %v5679, 0.7853982
        %vm5681 = vcmp.lt.s32.totalorder %v789, 0
        %v5682 = vand.u32 %v789, 2139095040
        %v5683 = vshrl.u32 %v5682, 23
        %v5684 = vsub.s32 %v5683, 127
        %v5685 = vand.u32 2147483647, %v789
        %v5686 = vand.u32 %v5685, 8388607
        %v5687 = vor.u32 %v5686, 8388608
        %v5688 = vsub.s32 0, %v5687
        %v5689 = vadd.s32 %v5684, 1
        %vm5690 = vcmp.gt.s32.totalorder %v5689, 0
        %v5691 = vsel %vm5690, %v5689, 0
        %v5692 = vshrl.u32 %v5691, 5
        %v5693 = vand.u32 %v5691, 31
        %v5694 = vsub.s32 32, %v5693
        %v5695 = vshrl.u32 683565275, %v5694
        %v5696 = vshll.u32 683565275, %v5693
        %v5697 = vshrl.u32 2475754826, %v5694
        %v5698 = vor.u32 %v5696, %v5697
        %v5699 = vshll.u32 2475754826, %v5693
        %v5700 = vshrl.u32 2131351028, %v5694
        %v5701 = vor.u32 %v5699, %v5700
        %v5702 = vshll.u32 2131351028, %v5693
        %v5703 = vshrl.u32 2102212464, %v5694
        %v5704 = vor.u32 %v5702, %v5703
        %v5705 = vshll.u32 2102212464, %v5693
        %v5706 = vshrl.u32 920167782, %v5694
        %v5707 = vor.u32 %v5705, %v5706
        %v5708 = vshll.u32 920167782, %v5693
        %v5709 = vshrl.u32 1326507024, %v5694
        %v5710 = vor.u32 %v5708, %v5709
        %vm5711 = vcmp.lt.s32.totalorder %v5692, 1
        %vm5712 = vcmp.lt.s32.totalorder %v5692, 2
        %vm5713 = vcmp.lt.s32.totalorder %v5692, 3
        %vm5714 = vcmp.lt.s32.totalorder %v5692, 4
        %v5715 = vsel %vm5711, %v5695, %v5698
        %v5716 = vsel %vm5714, %v5704, 2102212464
        %v5717 = vsel %vm5713, %v5701, %v5716
        %v5718 = vsel %vm5712, %v5715, %v5717
        %v5719 = vsel %vm5711, %v5698, %v5701
        %v5720 = vsel %vm5714, %v5707, 920167782
        %v5721 = vsel %vm5713, %v5704, %v5720
        %v5722 = vsel %vm5712, %v5719, %v5721
        %v5723 = vsel %vm5711, %v5701, %v5704
        %v5724 = vsel %vm5714, %v5710, 1326507024
        %v5725 = vsel %vm5713, %v5707, %v5724
        %v5726 = vsel %vm5712, %v5723, %v5725
        %v5727 = vshll.u32 %v5687, 8
        %v5728 = vmul.u32.u64.compose %v5727, %v5726
        %v5729 = vextract.low.u32 %v5728
        %v5730 = vextract.high.u32 %v5728
        %v5731 = vmul.u32.u64.compose %v5727, %v5722
        %v5732 = vextract.low.u32 %v5731
        %v5733 = vextract.high.u32 %v5731
        %v5734 = vmul.u32 %v5727, %v5718
        %v5735 = vadd.s32 %v5730, %v5732
        %vm5736 = vc.u32 %v5730, %v5732
        %v5737 = vadd.s32 %v5733, 1
        %v5738 = vsel %vm5736, %v5737, %v5733
        %v5739 = vadd.s32 %v5734, %v5738
        %v5740 = vadd.s32 %v5739, 536870912
        %v5741 = vshrl.u32 %v5740, 30
        %v5742 = vshll.u32 %v5741, 30
        %v5743 = vsub.s32 %v5739, %v5742
        %vm5744 = vcmp.lt.s32.totalorder %v5743, 0
        %v5745 = vsub.s32 0, %v5743
        %v5746 = vsel %vm5744, %v5745, %v5743
        %v5747 = vclz %v5746
        %v5748 = vsub.s32 %v5747, 2
        %vm5749 = vcmp.gt.s32.totalorder 0, %v5748
        %v5750 = vsel %vm5749, 0, %v5748
        %v5751 = vsub.s32 32, %v5750
        %v5752 = vshll.u32 %v5743, %v5750
        %v5753 = vshrl.u32 %v5735, %v5751
        %v5754 = vor.u32 %v5752, %v5753
        %v5755 = vsub.s32 4294967266, %v5750
        %v5756 = vadd.s32 %v5755, 127
        %v5757 = vshll.u32 %v5756, 23
        %v5758 = vor.u32 4788187, %v5757
        %v5759 = vand.u32 2147483647, %v5758
        %v5761 = vcvt.s32.f32 %v5754
        %v5762 = vmul.f32 %v5761, %v5759
        %v5763 = vxor.u32 %v5762, 2147483648
        %v5764 = vsel %vm5681, %v5763, %v5762
        %v5765 = vsub.s32 4, %v5741
        %v5766 = vsel %vm5681, %v5765, %v5741
        %v5767 = vsel %vm5680, %v789, %v5764
        %v5768 = vsel %vm5680, 0, %v5766
        %v5769 = vcosq.f32.pop %v5767
        %v5770 = vsinq.f32.pop %v5767
        %vm5771 = vweird.f32 %v789
        %v5772 = vand.u32 %v5768, 3
        %vm5773 = vcmp.lt.s32.totalorder %v5772, 2
        %vm5774 = vcmp.eq.s32.totalorder %v5772, 0
        %v5775 = vxor.u32 %v5770, 2147483648
        %v5776 = vsel %vm5774, %v5769, %v5775
        %vm5777 = vcmp.eq.s32.totalorder %v5772, 2
        %v5778 = vxor.u32 %v5769, 2147483648
        %v5779 = vsel %vm5777, %v5778, %v5770
        %v5780 = vsel %vm5773, %v5776, %v5779
        %v5781 = vsel %vm5771, nan, %v5780
        %v5782 = vand.u32 2147483647, %v790
        %vm5783 = vcmp.le.f32.partialorder %v5782, 0.7853982
        %vm5784 = vcmp.lt.s32.totalorder %v790, 0
        %v5785 = vand.u32 %v790, 2139095040
        %v5786 = vshrl.u32 %v5785, 23
        %v5787 = vsub.s32 %v5786, 127
        %v5788 = vand.u32 2147483647, %v790
        %v5789 = vand.u32 %v5788, 8388607
        %v5790 = vor.u32 %v5789, 8388608
        %v5791 = vsub.s32 0, %v5790
        %v5792 = vadd.s32 %v5787, 1
        %vm5793 = vcmp.gt.s32.totalorder %v5792, 0
        %v5794 = vsel %vm5793, %v5792, 0
        %v5795 = vshrl.u32 %v5794, 5
        %v5796 = vand.u32 %v5794, 31
        %v5797 = vsub.s32 32, %v5796
        %v5798 = vshrl.u32 683565275, %v5797
        %v5799 = vshll.u32 683565275, %v5796
        %v5800 = vshrl.u32 2475754826, %v5797
        %v5801 = vor.u32 %v5799, %v5800
        %v5802 = vshll.u32 2475754826, %v5796
        %v5803 = vshrl.u32 2131351028, %v5797
        %v5804 = vor.u32 %v5802, %v5803
        %v5805 = vshll.u32 2131351028, %v5796
        %v5806 = vshrl.u32 2102212464, %v5797
        %v5807 = vor.u32 %v5805, %v5806
        %v5808 = vshll.u32 2102212464, %v5796
        %v5809 = vshrl.u32 920167782, %v5797
        %v5810 = vor.u32 %v5808, %v5809
        %v5811 = vshll.u32 920167782, %v5796
        %v5812 = vshrl.u32 1326507024, %v5797
        %v5813 = vor.u32 %v5811, %v5812
        %vm5814 = vcmp.lt.s32.totalorder %v5795, 1
        %vm5815 = vcmp.lt.s32.totalorder %v5795, 2
        %vm5816 = vcmp.lt.s32.totalorder %v5795, 3
        %vm5817 = vcmp.lt.s32.totalorder %v5795, 4
        %v5818 = vsel %vm5814, %v5798, %v5801
        %v5819 = vsel %vm5817, %v5807, 2102212464
        %v5820 = vsel %vm5816, %v5804, %v5819
        %v5821 = vsel %vm5815, %v5818, %v5820
        %v5822 = vsel %vm5814, %v5801, %v5804
        %v5823 = vsel %vm5817, %v5810, 920167782
        %v5824 = vsel %vm5816, %v5807, %v5823
        %v5825 = vsel %vm5815, %v5822, %v5824
        %v5826 = vsel %vm5814, %v5804, %v5807
        %v5827 = vsel %vm5817, %v5813, 1326507024
        %v5828 = vsel %vm5816, %v5810, %v5827
        %v5829 = vsel %vm5815, %v5826, %v5828
        %v5830 = vshll.u32 %v5790, 8
        %v5831 = vmul.u32.u64.compose %v5830, %v5829
        %v5832 = vextract.low.u32 %v5831
        %v5833 = vextract.high.u32 %v5831
        %v5834 = vmul.u32.u64.compose %v5830, %v5825
        %v5835 = vextract.low.u32 %v5834
        %v5836 = vextract.high.u32 %v5834
        %v5837 = vmul.u32 %v5830, %v5821
        %v5838 = vadd.s32 %v5833, %v5835
        %vm5839 = vc.u32 %v5833, %v5835
        %v5840 = vadd.s32 %v5836, 1
        %v5841 = vsel %vm5839, %v5840, %v5836
        %v5842 = vadd.s32 %v5837, %v5841
        %v5843 = vadd.s32 %v5842, 536870912
        %v5844 = vshrl.u32 %v5843, 30
        %v5845 = vshll.u32 %v5844, 30
        %v5846 = vsub.s32 %v5842, %v5845
        %vm5847 = vcmp.lt.s32.totalorder %v5846, 0
        %v5848 = vsub.s32 0, %v5846
        %v5849 = vsel %vm5847, %v5848, %v5846
        %v5850 = vclz %v5849
        %v5851 = vsub.s32 %v5850, 2
        %vm5852 = vcmp.gt.s32.totalorder 0, %v5851
        %v5853 = vsel %vm5852, 0, %v5851
        %v5854 = vsub.s32 32, %v5853
        %v5855 = vshll.u32 %v5846, %v5853
        %v5856 = vshrl.u32 %v5838, %v5854
        %v5857 = vor.u32 %v5855, %v5856
        %v5858 = vsub.s32 4294967266, %v5853
        %v5859 = vadd.s32 %v5858, 127
        %v5860 = vshll.u32 %v5859, 23
        %v5861 = vor.u32 4788187, %v5860
        %v5862 = vand.u32 2147483647, %v5861
        %v5864 = vcvt.s32.f32 %v5857
        %v5865 = vmul.f32 %v5864, %v5862
        %v5866 = vxor.u32 %v5865, 2147483648
        %v5867 = vsel %vm5784, %v5866, %v5865
        %v5868 = vsub.s32 4, %v5844
        %v5869 = vsel %vm5784, %v5868, %v5844
        %v5870 = vsel %vm5783, %v790, %v5867
        %v5871 = vsel %vm5783, 0, %v5869
        %v5872 = vcosq.f32.pop %v5870
        %v5873 = vsinq.f32.pop %v5870
        %vm5874 = vweird.f32 %v790
        %v5875 = vand.u32 %v5871, 3
        %vm5876 = vcmp.lt.s32.totalorder %v5875, 2
        %vm5877 = vcmp.eq.s32.totalorder %v5875, 0
        %v5878 = vxor.u32 %v5873, 2147483648
        %v5879 = vsel %vm5877, %v5872, %v5878
        %vm5880 = vcmp.eq.s32.totalorder %v5875, 2
        %v5881 = vxor.u32 %v5872, 2147483648
        %v5882 = vsel %vm5880, %v5881, %v5873
        %v5883 = vsel %vm5876, %v5879, %v5882
        %v5884 = vsel %vm5874, nan, %v5883
        %v5885 = vand.u32 2147483647, %v791
        %vm5886 = vcmp.le.f32.partialorder %v5885, 0.7853982
        %vm5887 = vcmp.lt.s32.totalorder %v791, 0
        %v5888 = vand.u32 %v791, 2139095040
        %v5889 = vshrl.u32 %v5888, 23
        %v5890 = vsub.s32 %v5889, 127
        %v5891 = vand.u32 2147483647, %v791
        %v5892 = vand.u32 %v5891, 8388607
        %v5893 = vor.u32 %v5892, 8388608
        %v5894 = vsub.s32 0, %v5893
        %v5895 = vadd.s32 %v5890, 1
        %vm5896 = vcmp.gt.s32.totalorder %v5895, 0
        %v5897 = vsel %vm5896, %v5895, 0
        %v5898 = vshrl.u32 %v5897, 5
        %v5899 = vand.u32 %v5897, 31
        %v5900 = vsub.s32 32, %v5899
        %v5901 = vshrl.u32 683565275, %v5900
        %v5902 = vshll.u32 683565275, %v5899
        %v5903 = vshrl.u32 2475754826, %v5900
        %v5904 = vor.u32 %v5902, %v5903
        %v5905 = vshll.u32 2475754826, %v5899
        %v5906 = vshrl.u32 2131351028, %v5900
        %v5907 = vor.u32 %v5905, %v5906
        %v5908 = vshll.u32 2131351028, %v5899
        %v5909 = vshrl.u32 2102212464, %v5900
        %v5910 = vor.u32 %v5908, %v5909
        %v5911 = vshll.u32 2102212464, %v5899
        %v5912 = vshrl.u32 920167782, %v5900
        %v5913 = vor.u32 %v5911, %v5912
        %v5914 = vshll.u32 920167782, %v5899
        %v5915 = vshrl.u32 1326507024, %v5900
        %v5916 = vor.u32 %v5914, %v5915
        %vm5917 = vcmp.lt.s32.totalorder %v5898, 1
        %vm5918 = vcmp.lt.s32.totalorder %v5898, 2
        %vm5919 = vcmp.lt.s32.totalorder %v5898, 3
        %vm5920 = vcmp.lt.s32.totalorder %v5898, 4
        %v5921 = vsel %vm5917, %v5901, %v5904
        %v5922 = vsel %vm5920, %v5910, 2102212464
        %v5923 = vsel %vm5919, %v5907, %v5922
        %v5924 = vsel %vm5918, %v5921, %v5923
        %v5925 = vsel %vm5917, %v5904, %v5907
        %v5926 = vsel %vm5920, %v5913, 920167782
        %v5927 = vsel %vm5919, %v5910, %v5926
        %v5928 = vsel %vm5918, %v5925, %v5927
        %v5929 = vsel %vm5917, %v5907, %v5910
        %v5930 = vsel %vm5920, %v5916, 1326507024
        %v5931 = vsel %vm5919, %v5913, %v5930
        %v5932 = vsel %vm5918, %v5929, %v5931
        %v5933 = vshll.u32 %v5893, 8
        %v5934 = vmul.u32.u64.compose %v5933, %v5932
        %v5935 = vextract.low.u32 %v5934
        %v5936 = vextract.high.u32 %v5934
        %v5937 = vmul.u32.u64.compose %v5933, %v5928
        %v5938 = vextract.low.u32 %v5937
        %v5939 = vextract.high.u32 %v5937
        %v5940 = vmul.u32 %v5933, %v5924
        %v5941 = vadd.s32 %v5936, %v5938
        %vm5942 = vc.u32 %v5936, %v5938
        %v5943 = vadd.s32 %v5939, 1
        %v5944 = vsel %vm5942, %v5943, %v5939
        %v5945 = vadd.s32 %v5940, %v5944
        %v5946 = vadd.s32 %v5945, 536870912
        %v5947 = vshrl.u32 %v5946, 30
        %v5948 = vshll.u32 %v5947, 30
        %v5949 = vsub.s32 %v5945, %v5948
        %vm5950 = vcmp.lt.s32.totalorder %v5949, 0
        %v5951 = vsub.s32 0, %v5949
        %v5952 = vsel %vm5950, %v5951, %v5949
        %v5953 = vclz %v5952
        %v5954 = vsub.s32 %v5953, 2
        %vm5955 = vcmp.gt.s32.totalorder 0, %v5954
        %v5956 = vsel %vm5955, 0, %v5954
        %v5957 = vsub.s32 32, %v5956
        %v5958 = vshll.u32 %v5949, %v5956
        %v5959 = vshrl.u32 %v5941, %v5957
        %v5960 = vor.u32 %v5958, %v5959
        %v5961 = vsub.s32 4294967266, %v5956
        %v5962 = vadd.s32 %v5961, 127
        %v5963 = vshll.u32 %v5962, 23
        %v5964 = vor.u32 4788187, %v5963
        %v5965 = vand.u32 2147483647, %v5964
        %v5967 = vcvt.s32.f32 %v5960
        %v5968 = vmul.f32 %v5967, %v5965
        %v5969 = vxor.u32 %v5968, 2147483648
        %v5970 = vsel %vm5887, %v5969, %v5968
        %v5971 = vsub.s32 4, %v5947
        %v5972 = vsel %vm5887, %v5971, %v5947
        %v5973 = vsel %vm5886, %v791, %v5970
        %v5974 = vsel %vm5886, 0, %v5972
        %v5975 = vcosq.f32.pop %v5973
        %v5976 = vsinq.f32.pop %v5973
        %vm5977 = vweird.f32 %v791
        %v5978 = vand.u32 %v5974, 3
        %vm5979 = vcmp.lt.s32.totalorder %v5978, 2
        %vm5980 = vcmp.eq.s32.totalorder %v5978, 0
        %v5981 = vxor.u32 %v5976, 2147483648
        %v5982 = vsel %vm5980, %v5975, %v5981
        %vm5983 = vcmp.eq.s32.totalorder %v5978, 2
        %v5984 = vxor.u32 %v5975, 2147483648
        %v5985 = vsel %vm5983, %v5984, %v5976
        %v5986 = vsel %vm5979, %v5982, %v5985
        %v5987 = vsel %vm5977, nan, %v5986
        %v5988 = vand.u32 2147483647, %v792
        %vm5989 = vcmp.le.f32.partialorder %v5988, 0.7853982
        %vm5990 = vcmp.lt.s32.totalorder %v792, 0
        %v5991 = vand.u32 %v792, 2139095040
        %v5992 = vshrl.u32 %v5991, 23
        %v5993 = vsub.s32 %v5992, 127
        %v5994 = vand.u32 2147483647, %v792
        %v5995 = vand.u32 %v5994, 8388607
        %v5996 = vor.u32 %v5995, 8388608
        %v5997 = vsub.s32 0, %v5996
        %v5998 = vadd.s32 %v5993, 1
        %vm5999 = vcmp.gt.s32.totalorder %v5998, 0
        %v6000 = vsel %vm5999, %v5998, 0
        %v6001 = vshrl.u32 %v6000, 5
        %v6002 = vand.u32 %v6000, 31
        %v6003 = vsub.s32 32, %v6002
        %v6004 = vshrl.u32 683565275, %v6003
        %v6005 = vshll.u32 683565275, %v6002
        %v6006 = vshrl.u32 2475754826, %v6003
        %v6007 = vor.u32 %v6005, %v6006
        %v6008 = vshll.u32 2475754826, %v6002
        %v6009 = vshrl.u32 2131351028, %v6003
        %v6010 = vor.u32 %v6008, %v6009
        %v6011 = vshll.u32 2131351028, %v6002
        %v6012 = vshrl.u32 2102212464, %v6003
        %v6013 = vor.u32 %v6011, %v6012
        %v6014 = vshll.u32 2102212464, %v6002
        %v6015 = vshrl.u32 920167782, %v6003
        %v6016 = vor.u32 %v6014, %v6015
        %v6017 = vshll.u32 920167782, %v6002
        %v6018 = vshrl.u32 1326507024, %v6003
        %v6019 = vor.u32 %v6017, %v6018
        %vm6020 = vcmp.lt.s32.totalorder %v6001, 1
        %vm6021 = vcmp.lt.s32.totalorder %v6001, 2
        %vm6022 = vcmp.lt.s32.totalorder %v6001, 3
        %vm6023 = vcmp.lt.s32.totalorder %v6001, 4
        %v6024 = vsel %vm6020, %v6004, %v6007
        %v6025 = vsel %vm6023, %v6013, 2102212464
        %v6026 = vsel %vm6022, %v6010, %v6025
        %v6027 = vsel %vm6021, %v6024, %v6026
        %v6028 = vsel %vm6020, %v6007, %v6010
        %v6029 = vsel %vm6023, %v6016, 920167782
        %v6030 = vsel %vm6022, %v6013, %v6029
        %v6031 = vsel %vm6021, %v6028, %v6030
        %v6032 = vsel %vm6020, %v6010, %v6013
        %v6033 = vsel %vm6023, %v6019, 1326507024
        %v6034 = vsel %vm6022, %v6016, %v6033
        %v6035 = vsel %vm6021, %v6032, %v6034
        %v6036 = vshll.u32 %v5996, 8
        %v6037 = vmul.u32.u64.compose %v6036, %v6035
        %v6038 = vextract.low.u32 %v6037
        %v6039 = vextract.high.u32 %v6037
        %v6040 = vmul.u32.u64.compose %v6036, %v6031
        %v6041 = vextract.low.u32 %v6040
        %v6042 = vextract.high.u32 %v6040
        %v6043 = vmul.u32 %v6036, %v6027
        %v6044 = vadd.s32 %v6039, %v6041
        %vm6045 = vc.u32 %v6039, %v6041
        %v6046 = vadd.s32 %v6042, 1
        %v6047 = vsel %vm6045, %v6046, %v6042
        %v6048 = vadd.s32 %v6043, %v6047
        %v6049 = vadd.s32 %v6048, 536870912
        %v6050 = vshrl.u32 %v6049, 30
        %v6051 = vshll.u32 %v6050, 30
        %v6052 = vsub.s32 %v6048, %v6051
        %vm6053 = vcmp.lt.s32.totalorder %v6052, 0
        %v6054 = vsub.s32 0, %v6052
        %v6055 = vsel %vm6053, %v6054, %v6052
        %v6056 = vclz %v6055
        %v6057 = vsub.s32 %v6056, 2
        %vm6058 = vcmp.gt.s32.totalorder 0, %v6057
        %v6059 = vsel %vm6058, 0, %v6057
        %v6060 = vsub.s32 32, %v6059
        %v6061 = vshll.u32 %v6052, %v6059
        %v6062 = vshrl.u32 %v6044, %v6060
        %v6063 = vor.u32 %v6061, %v6062
        %v6064 = vsub.s32 4294967266, %v6059
        %v6065 = vadd.s32 %v6064, 127
        %v6066 = vshll.u32 %v6065, 23
        %v6067 = vor.u32 4788187, %v6066
        %v6068 = vand.u32 2147483647, %v6067
        %v6070 = vcvt.s32.f32 %v6063
        %v6071 = vmul.f32 %v6070, %v6068
        %v6072 = vxor.u32 %v6071, 2147483648
        %v6073 = vsel %vm5990, %v6072, %v6071
        %v6074 = vsub.s32 4, %v6050
        %v6075 = vsel %vm5990, %v6074, %v6050
        %v6076 = vsel %vm5989, %v792, %v6073
        %v6077 = vsel %vm5989, 0, %v6075
        %v6078 = vcosq.f32.pop %v6076
        %v6079 = vsinq.f32.pop %v6076
        %vm6080 = vweird.f32 %v792
        %v6081 = vand.u32 %v6077, 3
        %vm6082 = vcmp.lt.s32.totalorder %v6081, 2
        %vm6083 = vcmp.eq.s32.totalorder %v6081, 0
        %v6084 = vxor.u32 %v6079, 2147483648
        %v6085 = vsel %vm6083, %v6078, %v6084
        %vm6086 = vcmp.eq.s32.totalorder %v6081, 2
        %v6087 = vxor.u32 %v6078, 2147483648
        %v6088 = vsel %vm6086, %v6087, %v6079
        %v6089 = vsel %vm6082, %v6085, %v6088
        %v6090 = vsel %vm6080, nan, %v6089
        %v6091 = vand.u32 2147483647, %v793
        %vm6092 = vcmp.le.f32.partialorder %v6091, 0.7853982
        %vm6093 = vcmp.lt.s32.totalorder %v793, 0
        %v6094 = vand.u32 %v793, 2139095040
        %v6095 = vshrl.u32 %v6094, 23
        %v6096 = vsub.s32 %v6095, 127
        %v6097 = vand.u32 2147483647, %v793
        %v6098 = vand.u32 %v6097, 8388607
        %v6099 = vor.u32 %v6098, 8388608
        %v6100 = vsub.s32 0, %v6099
        %v6101 = vadd.s32 %v6096, 1
        %vm6102 = vcmp.gt.s32.totalorder %v6101, 0
        %v6103 = vsel %vm6102, %v6101, 0
        %v6104 = vshrl.u32 %v6103, 5
        %v6105 = vand.u32 %v6103, 31
        %v6106 = vsub.s32 32, %v6105
        %v6107 = vshrl.u32 683565275, %v6106
        %v6108 = vshll.u32 683565275, %v6105
        %v6109 = vshrl.u32 2475754826, %v6106
        %v6110 = vor.u32 %v6108, %v6109
        %v6111 = vshll.u32 2475754826, %v6105
        %v6112 = vshrl.u32 2131351028, %v6106
        %v6113 = vor.u32 %v6111, %v6112
        %v6114 = vshll.u32 2131351028, %v6105
        %v6115 = vshrl.u32 2102212464, %v6106
        %v6116 = vor.u32 %v6114, %v6115
        %v6117 = vshll.u32 2102212464, %v6105
        %v6118 = vshrl.u32 920167782, %v6106
        %v6119 = vor.u32 %v6117, %v6118
        %v6120 = vshll.u32 920167782, %v6105
        %v6121 = vshrl.u32 1326507024, %v6106
        %v6122 = vor.u32 %v6120, %v6121
        %vm6123 = vcmp.lt.s32.totalorder %v6104, 1
        %vm6124 = vcmp.lt.s32.totalorder %v6104, 2
        %vm6125 = vcmp.lt.s32.totalorder %v6104, 3
        %vm6126 = vcmp.lt.s32.totalorder %v6104, 4
        %v6127 = vsel %vm6123, %v6107, %v6110
        %v6128 = vsel %vm6126, %v6116, 2102212464
        %v6129 = vsel %vm6125, %v6113, %v6128
        %v6130 = vsel %vm6124, %v6127, %v6129
        %v6131 = vsel %vm6123, %v6110, %v6113
        %v6132 = vsel %vm6126, %v6119, 920167782
        %v6133 = vsel %vm6125, %v6116, %v6132
        %v6134 = vsel %vm6124, %v6131, %v6133
        %v6135 = vsel %vm6123, %v6113, %v6116
        %v6136 = vsel %vm6126, %v6122, 1326507024
        %v6137 = vsel %vm6125, %v6119, %v6136
        %v6138 = vsel %vm6124, %v6135, %v6137
        %v6139 = vshll.u32 %v6099, 8
        %v6140 = vmul.u32.u64.compose %v6139, %v6138
        %v6141 = vextract.low.u32 %v6140
        %v6142 = vextract.high.u32 %v6140
        %v6143 = vmul.u32.u64.compose %v6139, %v6134
        %v6144 = vextract.low.u32 %v6143
        %v6145 = vextract.high.u32 %v6143
        %v6146 = vmul.u32 %v6139, %v6130
        %v6147 = vadd.s32 %v6142, %v6144
        %vm6148 = vc.u32 %v6142, %v6144
        %v6149 = vadd.s32 %v6145, 1
        %v6150 = vsel %vm6148, %v6149, %v6145
        %v6151 = vadd.s32 %v6146, %v6150
        %v6152 = vadd.s32 %v6151, 536870912
        %v6153 = vshrl.u32 %v6152, 30
        %v6154 = vshll.u32 %v6153, 30
        %v6155 = vsub.s32 %v6151, %v6154
        %vm6156 = vcmp.lt.s32.totalorder %v6155, 0
        %v6157 = vsub.s32 0, %v6155
        %v6158 = vsel %vm6156, %v6157, %v6155
        %v6159 = vclz %v6158
        %v6160 = vsub.s32 %v6159, 2
        %vm6161 = vcmp.gt.s32.totalorder 0, %v6160
        %v6162 = vsel %vm6161, 0, %v6160
        %v6163 = vsub.s32 32, %v6162
        %v6164 = vshll.u32 %v6155, %v6162
        %v6165 = vshrl.u32 %v6147, %v6163
        %v6166 = vor.u32 %v6164, %v6165
        %v6167 = vsub.s32 4294967266, %v6162
        %v6168 = vadd.s32 %v6167, 127
        %v6169 = vshll.u32 %v6168, 23
        %v6170 = vor.u32 4788187, %v6169
        %v6171 = vand.u32 2147483647, %v6170
        %v6173 = vcvt.s32.f32 %v6166
        %v6174 = vmul.f32 %v6173, %v6171
        %v6175 = vxor.u32 %v6174, 2147483648
        %v6176 = vsel %vm6093, %v6175, %v6174
        %v6177 = vsub.s32 4, %v6153
        %v6178 = vsel %vm6093, %v6177, %v6153
        %v6179 = vsel %vm6092, %v793, %v6176
        %v6180 = vsel %vm6092, 0, %v6178
        %v6181 = vcosq.f32.pop %v6179
        %v6182 = vsinq.f32.pop %v6179
        %vm6183 = vweird.f32 %v793
        %v6184 = vand.u32 %v6180, 3
        %vm6185 = vcmp.lt.s32.totalorder %v6184, 2
        %vm6186 = vcmp.eq.s32.totalorder %v6184, 0
        %v6187 = vxor.u32 %v6182, 2147483648
        %v6188 = vsel %vm6186, %v6181, %v6187
        %vm6189 = vcmp.eq.s32.totalorder %v6184, 2
        %v6190 = vxor.u32 %v6181, 2147483648
        %v6191 = vsel %vm6189, %v6190, %v6182
        %v6192 = vsel %vm6185, %v6188, %v6191
        %v6193 = vsel %vm6183, nan, %v6192
        %v6194 = vand.u32 2147483647, %v794
        %vm6195 = vcmp.le.f32.partialorder %v6194, 0.7853982
        %vm6196 = vcmp.lt.s32.totalorder %v794, 0
        %v6197 = vand.u32 %v794, 2139095040
        %v6198 = vshrl.u32 %v6197, 23
        %v6199 = vsub.s32 %v6198, 127
        %v6200 = vand.u32 2147483647, %v794
        %v6201 = vand.u32 %v6200, 8388607
        %v6202 = vor.u32 %v6201, 8388608
        %v6203 = vsub.s32 0, %v6202
        %v6204 = vadd.s32 %v6199, 1
        %vm6205 = vcmp.gt.s32.totalorder %v6204, 0
        %v6206 = vsel %vm6205, %v6204, 0
        %v6207 = vshrl.u32 %v6206, 5
        %v6208 = vand.u32 %v6206, 31
        %v6209 = vsub.s32 32, %v6208
        %v6210 = vshrl.u32 683565275, %v6209
        %v6211 = vshll.u32 683565275, %v6208
        %v6212 = vshrl.u32 2475754826, %v6209
        %v6213 = vor.u32 %v6211, %v6212
        %v6214 = vshll.u32 2475754826, %v6208
        %v6215 = vshrl.u32 2131351028, %v6209
        %v6216 = vor.u32 %v6214, %v6215
        %v6217 = vshll.u32 2131351028, %v6208
        %v6218 = vshrl.u32 2102212464, %v6209
        %v6219 = vor.u32 %v6217, %v6218
        %v6220 = vshll.u32 2102212464, %v6208
        %v6221 = vshrl.u32 920167782, %v6209
        %v6222 = vor.u32 %v6220, %v6221
        %v6223 = vshll.u32 920167782, %v6208
        %v6224 = vshrl.u32 1326507024, %v6209
        %v6225 = vor.u32 %v6223, %v6224
        %vm6226 = vcmp.lt.s32.totalorder %v6207, 1
        %vm6227 = vcmp.lt.s32.totalorder %v6207, 2
        %vm6228 = vcmp.lt.s32.totalorder %v6207, 3
        %vm6229 = vcmp.lt.s32.totalorder %v6207, 4
        %v6230 = vsel %vm6226, %v6210, %v6213
        %v6231 = vsel %vm6229, %v6219, 2102212464
        %v6232 = vsel %vm6228, %v6216, %v6231
        %v6233 = vsel %vm6227, %v6230, %v6232
        %v6234 = vsel %vm6226, %v6213, %v6216
        %v6235 = vsel %vm6229, %v6222, 920167782
        %v6236 = vsel %vm6228, %v6219, %v6235
        %v6237 = vsel %vm6227, %v6234, %v6236
        %v6238 = vsel %vm6226, %v6216, %v6219
        %v6239 = vsel %vm6229, %v6225, 1326507024
        %v6240 = vsel %vm6228, %v6222, %v6239
        %v6241 = vsel %vm6227, %v6238, %v6240
        %v6242 = vshll.u32 %v6202, 8
        %v6243 = vmul.u32.u64.compose %v6242, %v6241
        %v6244 = vextract.low.u32 %v6243
        %v6245 = vextract.high.u32 %v6243
        %v6246 = vmul.u32.u64.compose %v6242, %v6237
        %v6247 = vextract.low.u32 %v6246
        %v6248 = vextract.high.u32 %v6246
        %v6249 = vmul.u32 %v6242, %v6233
        %v6250 = vadd.s32 %v6245, %v6247
        %vm6251 = vc.u32 %v6245, %v6247
        %v6252 = vadd.s32 %v6248, 1
        %v6253 = vsel %vm6251, %v6252, %v6248
        %v6254 = vadd.s32 %v6249, %v6253
        %v6255 = vadd.s32 %v6254, 536870912
        %v6256 = vshrl.u32 %v6255, 30
        %v6257 = vshll.u32 %v6256, 30
        %v6258 = vsub.s32 %v6254, %v6257
        %vm6259 = vcmp.lt.s32.totalorder %v6258, 0
        %v6260 = vsub.s32 0, %v6258
        %v6261 = vsel %vm6259, %v6260, %v6258
        %v6262 = vclz %v6261
        %v6263 = vsub.s32 %v6262, 2
        %vm6264 = vcmp.gt.s32.totalorder 0, %v6263
        %v6265 = vsel %vm6264, 0, %v6263
        %v6266 = vsub.s32 32, %v6265
        %v6267 = vshll.u32 %v6258, %v6265
        %v6268 = vshrl.u32 %v6250, %v6266
        %v6269 = vor.u32 %v6267, %v6268
        %v6270 = vsub.s32 4294967266, %v6265
        %v6271 = vadd.s32 %v6270, 127
        %v6272 = vshll.u32 %v6271, 23
        %v6273 = vor.u32 4788187, %v6272
        %v6274 = vand.u32 2147483647, %v6273
        %v6276 = vcvt.s32.f32 %v6269
        %v6277 = vmul.f32 %v6276, %v6274
        %v6278 = vxor.u32 %v6277, 2147483648
        %v6279 = vsel %vm6196, %v6278, %v6277
        %v6280 = vsub.s32 4, %v6256
        %v6281 = vsel %vm6196, %v6280, %v6256
        %v6282 = vsel %vm6195, %v794, %v6279
        %v6283 = vsel %vm6195, 0, %v6281
        %v6284 = vcosq.f32.pop %v6282
        %v6285 = vsinq.f32.pop %v6282
        %vm6286 = vweird.f32 %v794
        %v6287 = vand.u32 %v6283, 3
        %vm6288 = vcmp.lt.s32.totalorder %v6287, 2
        %vm6289 = vcmp.eq.s32.totalorder %v6287, 0
        %v6290 = vxor.u32 %v6285, 2147483648
        %v6291 = vsel %vm6289, %v6284, %v6290
        %vm6292 = vcmp.eq.s32.totalorder %v6287, 2
        %v6293 = vxor.u32 %v6284, 2147483648
        %v6294 = vsel %vm6292, %v6293, %v6285
        %v6295 = vsel %vm6288, %v6291, %v6294
        %v6296 = vsel %vm6286, nan, %v6295
        %v6297 = vand.u32 2147483647, %v795
        %vm6298 = vcmp.le.f32.partialorder %v6297, 0.7853982
        %vm6299 = vcmp.lt.s32.totalorder %v795, 0
        %v6300 = vand.u32 %v795, 2139095040
        %v6301 = vshrl.u32 %v6300, 23
        %v6302 = vsub.s32 %v6301, 127
        %v6303 = vand.u32 2147483647, %v795
        %v6304 = vand.u32 %v6303, 8388607
        %v6305 = vor.u32 %v6304, 8388608
        %v6306 = vsub.s32 0, %v6305
        %v6307 = vadd.s32 %v6302, 1
        %vm6308 = vcmp.gt.s32.totalorder %v6307, 0
        %v6309 = vsel %vm6308, %v6307, 0
        %v6310 = vshrl.u32 %v6309, 5
        %v6311 = vand.u32 %v6309, 31
        %v6312 = vsub.s32 32, %v6311
        %v6313 = vshrl.u32 683565275, %v6312
        %v6314 = vshll.u32 683565275, %v6311
        %v6315 = vshrl.u32 2475754826, %v6312
        %v6316 = vor.u32 %v6314, %v6315
        %v6317 = vshll.u32 2475754826, %v6311
        %v6318 = vshrl.u32 2131351028, %v6312
        %v6319 = vor.u32 %v6317, %v6318
        %v6320 = vshll.u32 2131351028, %v6311
        %v6321 = vshrl.u32 2102212464, %v6312
        %v6322 = vor.u32 %v6320, %v6321
        %v6323 = vshll.u32 2102212464, %v6311
        %v6324 = vshrl.u32 920167782, %v6312
        %v6325 = vor.u32 %v6323, %v6324
        %v6326 = vshll.u32 920167782, %v6311
        %v6327 = vshrl.u32 1326507024, %v6312
        %v6328 = vor.u32 %v6326, %v6327
        %vm6329 = vcmp.lt.s32.totalorder %v6310, 1
        %vm6330 = vcmp.lt.s32.totalorder %v6310, 2
        %vm6331 = vcmp.lt.s32.totalorder %v6310, 3
        %vm6332 = vcmp.lt.s32.totalorder %v6310, 4
        %v6333 = vsel %vm6329, %v6313, %v6316
        %v6334 = vsel %vm6332, %v6322, 2102212464
        %v6335 = vsel %vm6331, %v6319, %v6334
        %v6336 = vsel %vm6330, %v6333, %v6335
        %v6337 = vsel %vm6329, %v6316, %v6319
        %v6338 = vsel %vm6332, %v6325, 920167782
        %v6339 = vsel %vm6331, %v6322, %v6338
        %v6340 = vsel %vm6330, %v6337, %v6339
        %v6341 = vsel %vm6329, %v6319, %v6322
        %v6342 = vsel %vm6332, %v6328, 1326507024
        %v6343 = vsel %vm6331, %v6325, %v6342
        %v6344 = vsel %vm6330, %v6341, %v6343
        %v6345 = vshll.u32 %v6305, 8
        %v6346 = vmul.u32.u64.compose %v6345, %v6344
        %v6347 = vextract.low.u32 %v6346
        %v6348 = vextract.high.u32 %v6346
        %v6349 = vmul.u32.u64.compose %v6345, %v6340
        %v6350 = vextract.low.u32 %v6349
        %v6351 = vextract.high.u32 %v6349
        %v6352 = vmul.u32 %v6345, %v6336
        %v6353 = vadd.s32 %v6348, %v6350
        %vm6354 = vc.u32 %v6348, %v6350
        %v6355 = vadd.s32 %v6351, 1
        %v6356 = vsel %vm6354, %v6355, %v6351
        %v6357 = vadd.s32 %v6352, %v6356
        %v6358 = vadd.s32 %v6357, 536870912
        %v6359 = vshrl.u32 %v6358, 30
        %v6360 = vshll.u32 %v6359, 30
        %v6361 = vsub.s32 %v6357, %v6360
        %vm6362 = vcmp.lt.s32.totalorder %v6361, 0
        %v6363 = vsub.s32 0, %v6361
        %v6364 = vsel %vm6362, %v6363, %v6361
        %v6365 = vclz %v6364
        %v6366 = vsub.s32 %v6365, 2
        %vm6367 = vcmp.gt.s32.totalorder 0, %v6366
        %v6368 = vsel %vm6367, 0, %v6366
        %v6369 = vsub.s32 32, %v6368
        %v6370 = vshll.u32 %v6361, %v6368
        %v6371 = vshrl.u32 %v6353, %v6369
        %v6372 = vor.u32 %v6370, %v6371
        %v6373 = vsub.s32 4294967266, %v6368
        %v6374 = vadd.s32 %v6373, 127
        %v6375 = vshll.u32 %v6374, 23
        %v6376 = vor.u32 4788187, %v6375
        %v6377 = vand.u32 2147483647, %v6376
        %v6379 = vcvt.s32.f32 %v6372
        %v6380 = vmul.f32 %v6379, %v6377
        %v6381 = vxor.u32 %v6380, 2147483648
        %v6382 = vsel %vm6299, %v6381, %v6380
        %v6383 = vsub.s32 4, %v6359
        %v6384 = vsel %vm6299, %v6383, %v6359
        %v6385 = vsel %vm6298, %v795, %v6382
        %v6386 = vsel %vm6298, 0, %v6384
        %v6387 = vcosq.f32.pop %v6385
        %v6388 = vsinq.f32.pop %v6385
        %vm6389 = vweird.f32 %v795
        %v6390 = vand.u32 %v6386, 3
        %vm6391 = vcmp.lt.s32.totalorder %v6390, 2
        %vm6392 = vcmp.eq.s32.totalorder %v6390, 0
        %v6393 = vxor.u32 %v6388, 2147483648
        %v6394 = vsel %vm6392, %v6387, %v6393
        %vm6395 = vcmp.eq.s32.totalorder %v6390, 2
        %v6396 = vxor.u32 %v6387, 2147483648
        %v6397 = vsel %vm6395, %v6396, %v6388
        %v6398 = vsel %vm6391, %v6394, %v6397
        %v6399 = vsel %vm6389, nan, %v6398
        %v6400 = vand.u32 2147483647, %v796
        %vm6401 = vcmp.le.f32.partialorder %v6400, 0.7853982
        %vm6402 = vcmp.lt.s32.totalorder %v796, 0
        %v6403 = vand.u32 %v796, 2139095040
        %v6404 = vshrl.u32 %v6403, 23
        %v6405 = vsub.s32 %v6404, 127
        %v6406 = vand.u32 2147483647, %v796
        %v6407 = vand.u32 %v6406, 8388607
        %v6408 = vor.u32 %v6407, 8388608
        %v6409 = vsub.s32 0, %v6408
        %v6410 = vadd.s32 %v6405, 1
        %vm6411 = vcmp.gt.s32.totalorder %v6410, 0
        %v6412 = vsel %vm6411, %v6410, 0
        %v6413 = vshrl.u32 %v6412, 5
        %v6414 = vand.u32 %v6412, 31
        %v6415 = vsub.s32 32, %v6414
        %v6416 = vshrl.u32 683565275, %v6415
        %v6417 = vshll.u32 683565275, %v6414
        %v6418 = vshrl.u32 2475754826, %v6415
        %v6419 = vor.u32 %v6417, %v6418
        %v6420 = vshll.u32 2475754826, %v6414
        %v6421 = vshrl.u32 2131351028, %v6415
        %v6422 = vor.u32 %v6420, %v6421
        %v6423 = vshll.u32 2131351028, %v6414
        %v6424 = vshrl.u32 2102212464, %v6415
        %v6425 = vor.u32 %v6423, %v6424
        %v6426 = vshll.u32 2102212464, %v6414
        %v6427 = vshrl.u32 920167782, %v6415
        %v6428 = vor.u32 %v6426, %v6427
        %v6429 = vshll.u32 920167782, %v6414
        %v6430 = vshrl.u32 1326507024, %v6415
        %v6431 = vor.u32 %v6429, %v6430
        %vm6432 = vcmp.lt.s32.totalorder %v6413, 1
        %vm6433 = vcmp.lt.s32.totalorder %v6413, 2
        %vm6434 = vcmp.lt.s32.totalorder %v6413, 3
        %vm6435 = vcmp.lt.s32.totalorder %v6413, 4
        %v6436 = vsel %vm6432, %v6416, %v6419
        %v6437 = vsel %vm6435, %v6425, 2102212464
        %v6438 = vsel %vm6434, %v6422, %v6437
        %v6439 = vsel %vm6433, %v6436, %v6438
        %v6440 = vsel %vm6432, %v6419, %v6422
        %v6441 = vsel %vm6435, %v6428, 920167782
        %v6442 = vsel %vm6434, %v6425, %v6441
        %v6443 = vsel %vm6433, %v6440, %v6442
        %v6444 = vsel %vm6432, %v6422, %v6425
        %v6445 = vsel %vm6435, %v6431, 1326507024
        %v6446 = vsel %vm6434, %v6428, %v6445
        %v6447 = vsel %vm6433, %v6444, %v6446
        %v6448 = vshll.u32 %v6408, 8
        %v6449 = vmul.u32.u64.compose %v6448, %v6447
        %v6450 = vextract.low.u32 %v6449
        %v6451 = vextract.high.u32 %v6449
        %v6452 = vmul.u32.u64.compose %v6448, %v6443
        %v6453 = vextract.low.u32 %v6452
        %v6454 = vextract.high.u32 %v6452
        %v6455 = vmul.u32 %v6448, %v6439
        %v6456 = vadd.s32 %v6451, %v6453
        %vm6457 = vc.u32 %v6451, %v6453
        %v6458 = vadd.s32 %v6454, 1
        %v6459 = vsel %vm6457, %v6458, %v6454
        %v6460 = vadd.s32 %v6455, %v6459
        %v6461 = vadd.s32 %v6460, 536870912
        %v6462 = vshrl.u32 %v6461, 30
        %v6463 = vshll.u32 %v6462, 30
        %v6464 = vsub.s32 %v6460, %v6463
        %vm6465 = vcmp.lt.s32.totalorder %v6464, 0
        %v6466 = vsub.s32 0, %v6464
        %v6467 = vsel %vm6465, %v6466, %v6464
        %v6468 = vclz %v6467
        %v6469 = vsub.s32 %v6468, 2
        %vm6470 = vcmp.gt.s32.totalorder 0, %v6469
        %v6471 = vsel %vm6470, 0, %v6469
        %v6472 = vsub.s32 32, %v6471
        %v6473 = vshll.u32 %v6464, %v6471
        %v6474 = vshrl.u32 %v6456, %v6472
        %v6475 = vor.u32 %v6473, %v6474
        %v6476 = vsub.s32 4294967266, %v6471
        %v6477 = vadd.s32 %v6476, 127
        %v6478 = vshll.u32 %v6477, 23
        %v6479 = vor.u32 4788187, %v6478
        %v6480 = vand.u32 2147483647, %v6479
        %v6482 = vcvt.s32.f32 %v6475
        %v6483 = vmul.f32 %v6482, %v6480
        %v6484 = vxor.u32 %v6483, 2147483648
        %v6485 = vsel %vm6402, %v6484, %v6483
        %v6486 = vsub.s32 4, %v6462
        %v6487 = vsel %vm6402, %v6486, %v6462
        %v6488 = vsel %vm6401, %v796, %v6485
        %v6489 = vsel %vm6401, 0, %v6487
        %v6490 = vcosq.f32.pop %v6488
        %v6491 = vsinq.f32.pop %v6488
        %vm6492 = vweird.f32 %v796
        %v6493 = vand.u32 %v6489, 3
        %vm6494 = vcmp.lt.s32.totalorder %v6493, 2
        %vm6495 = vcmp.eq.s32.totalorder %v6493, 0
        %v6496 = vxor.u32 %v6491, 2147483648
        %v6497 = vsel %vm6495, %v6490, %v6496
        %vm6498 = vcmp.eq.s32.totalorder %v6493, 2
        %v6499 = vxor.u32 %v6490, 2147483648
        %v6500 = vsel %vm6498, %v6499, %v6491
        %v6501 = vsel %vm6494, %v6497, %v6500
        %v6502 = vsel %vm6492, nan, %v6501
        %v6503 = vand.u32 2147483647, %v797
        %vm6504 = vcmp.le.f32.partialorder %v6503, 0.7853982
        %vm6505 = vcmp.lt.s32.totalorder %v797, 0
        %v6506 = vand.u32 %v797, 2139095040
        %v6507 = vshrl.u32 %v6506, 23
        %v6508 = vsub.s32 %v6507, 127
        %v6509 = vand.u32 2147483647, %v797
        %v6510 = vand.u32 %v6509, 8388607
        %v6511 = vor.u32 %v6510, 8388608
        %v6512 = vsub.s32 0, %v6511
        %v6513 = vadd.s32 %v6508, 1
        %vm6514 = vcmp.gt.s32.totalorder %v6513, 0
        %v6515 = vsel %vm6514, %v6513, 0
        %v6516 = vshrl.u32 %v6515, 5
        %v6517 = vand.u32 %v6515, 31
        %v6518 = vsub.s32 32, %v6517
        %v6519 = vshrl.u32 683565275, %v6518
        %v6520 = vshll.u32 683565275, %v6517
        %v6521 = vshrl.u32 2475754826, %v6518
        %v6522 = vor.u32 %v6520, %v6521
        %v6523 = vshll.u32 2475754826, %v6517
        %v6524 = vshrl.u32 2131351028, %v6518
        %v6525 = vor.u32 %v6523, %v6524
        %v6526 = vshll.u32 2131351028, %v6517
        %v6527 = vshrl.u32 2102212464, %v6518
        %v6528 = vor.u32 %v6526, %v6527
        %v6529 = vshll.u32 2102212464, %v6517
        %v6530 = vshrl.u32 920167782, %v6518
        %v6531 = vor.u32 %v6529, %v6530
        %v6532 = vshll.u32 920167782, %v6517
        %v6533 = vshrl.u32 1326507024, %v6518
        %v6534 = vor.u32 %v6532, %v6533
        %vm6535 = vcmp.lt.s32.totalorder %v6516, 1
        %vm6536 = vcmp.lt.s32.totalorder %v6516, 2
        %vm6537 = vcmp.lt.s32.totalorder %v6516, 3
        %vm6538 = vcmp.lt.s32.totalorder %v6516, 4
        %v6539 = vsel %vm6535, %v6519, %v6522
        %v6540 = vsel %vm6538, %v6528, 2102212464
        %v6541 = vsel %vm6537, %v6525, %v6540
        %v6542 = vsel %vm6536, %v6539, %v6541
        %v6543 = vsel %vm6535, %v6522, %v6525
        %v6544 = vsel %vm6538, %v6531, 920167782
        %v6545 = vsel %vm6537, %v6528, %v6544
        %v6546 = vsel %vm6536, %v6543, %v6545
        %v6547 = vsel %vm6535, %v6525, %v6528
        %v6548 = vsel %vm6538, %v6534, 1326507024
        %v6549 = vsel %vm6537, %v6531, %v6548
        %v6550 = vsel %vm6536, %v6547, %v6549
        %v6551 = vshll.u32 %v6511, 8
        %v6552 = vmul.u32.u64.compose %v6551, %v6550
        %v6553 = vextract.low.u32 %v6552
        %v6554 = vextract.high.u32 %v6552
        %v6555 = vmul.u32.u64.compose %v6551, %v6546
        %v6556 = vextract.low.u32 %v6555
        %v6557 = vextract.high.u32 %v6555
        %v6558 = vmul.u32 %v6551, %v6542
        %v6559 = vadd.s32 %v6554, %v6556
        %vm6560 = vc.u32 %v6554, %v6556
        %v6561 = vadd.s32 %v6557, 1
        %v6562 = vsel %vm6560, %v6561, %v6557
        %v6563 = vadd.s32 %v6558, %v6562
        %v6564 = vadd.s32 %v6563, 536870912
        %v6565 = vshrl.u32 %v6564, 30
        %v6566 = vshll.u32 %v6565, 30
        %v6567 = vsub.s32 %v6563, %v6566
        %vm6568 = vcmp.lt.s32.totalorder %v6567, 0
        %v6569 = vsub.s32 0, %v6567
        %v6570 = vsel %vm6568, %v6569, %v6567
        %v6571 = vclz %v6570
        %v6572 = vsub.s32 %v6571, 2
        %vm6573 = vcmp.gt.s32.totalorder 0, %v6572
        %v6574 = vsel %vm6573, 0, %v6572
        %v6575 = vsub.s32 32, %v6574
        %v6576 = vshll.u32 %v6567, %v6574
        %v6577 = vshrl.u32 %v6559, %v6575
        %v6578 = vor.u32 %v6576, %v6577
        %v6579 = vsub.s32 4294967266, %v6574
        %v6580 = vadd.s32 %v6579, 127
        %v6581 = vshll.u32 %v6580, 23
        %v6582 = vor.u32 4788187, %v6581
        %v6583 = vand.u32 2147483647, %v6582
        %v6585 = vcvt.s32.f32 %v6578
        %v6586 = vmul.f32 %v6585, %v6583
        %v6587 = vxor.u32 %v6586, 2147483648
        %v6588 = vsel %vm6505, %v6587, %v6586
        %v6589 = vsub.s32 4, %v6565
        %v6590 = vsel %vm6505, %v6589, %v6565
        %v6591 = vsel %vm6504, %v797, %v6588
        %v6592 = vsel %vm6504, 0, %v6590
        %v6593 = vcosq.f32.pop %v6591
        %v6594 = vsinq.f32.pop %v6591
        %vm6595 = vweird.f32 %v797
        %v6596 = vand.u32 %v6592, 3
        %vm6597 = vcmp.lt.s32.totalorder %v6596, 2
        %vm6598 = vcmp.eq.s32.totalorder %v6596, 0
        %v6599 = vxor.u32 %v6594, 2147483648
        %v6600 = vsel %vm6598, %v6593, %v6599
        %vm6601 = vcmp.eq.s32.totalorder %v6596, 2
        %v6602 = vxor.u32 %v6593, 2147483648
        %v6603 = vsel %vm6601, %v6602, %v6594
        %v6604 = vsel %vm6597, %v6600, %v6603
        %v6605 = vsel %vm6595, nan, %v6604
        %v6606 = vand.u32 2147483647, %v798
        %vm6607 = vcmp.le.f32.partialorder %v6606, 0.7853982
        %vm6608 = vcmp.lt.s32.totalorder %v798, 0
        %v6609 = vand.u32 %v798, 2139095040
        %v6610 = vshrl.u32 %v6609, 23
        %v6611 = vsub.s32 %v6610, 127
        %v6612 = vand.u32 2147483647, %v798
        %v6613 = vand.u32 %v6612, 8388607
        %v6614 = vor.u32 %v6613, 8388608
        %v6615 = vsub.s32 0, %v6614
        %v6616 = vadd.s32 %v6611, 1
        %vm6617 = vcmp.gt.s32.totalorder %v6616, 0
        %v6618 = vsel %vm6617, %v6616, 0
        %v6619 = vshrl.u32 %v6618, 5
        %v6620 = vand.u32 %v6618, 31
        %v6621 = vsub.s32 32, %v6620
        %v6622 = vshrl.u32 683565275, %v6621
        %v6623 = vshll.u32 683565275, %v6620
        %v6624 = vshrl.u32 2475754826, %v6621
        %v6625 = vor.u32 %v6623, %v6624
        %v6626 = vshll.u32 2475754826, %v6620
        %v6627 = vshrl.u32 2131351028, %v6621
        %v6628 = vor.u32 %v6626, %v6627
        %v6629 = vshll.u32 2131351028, %v6620
        %v6630 = vshrl.u32 2102212464, %v6621
        %v6631 = vor.u32 %v6629, %v6630
        %v6632 = vshll.u32 2102212464, %v6620
        %v6633 = vshrl.u32 920167782, %v6621
        %v6634 = vor.u32 %v6632, %v6633
        %v6635 = vshll.u32 920167782, %v6620
        %v6636 = vshrl.u32 1326507024, %v6621
        %v6637 = vor.u32 %v6635, %v6636
        %vm6638 = vcmp.lt.s32.totalorder %v6619, 1
        %vm6639 = vcmp.lt.s32.totalorder %v6619, 2
        %vm6640 = vcmp.lt.s32.totalorder %v6619, 3
        %vm6641 = vcmp.lt.s32.totalorder %v6619, 4
        %v6642 = vsel %vm6638, %v6622, %v6625
        %v6643 = vsel %vm6641, %v6631, 2102212464
        %v6644 = vsel %vm6640, %v6628, %v6643
        %v6645 = vsel %vm6639, %v6642, %v6644
        %v6646 = vsel %vm6638, %v6625, %v6628
        %v6647 = vsel %vm6641, %v6634, 920167782
        %v6648 = vsel %vm6640, %v6631, %v6647
        %v6649 = vsel %vm6639, %v6646, %v6648
        %v6650 = vsel %vm6638, %v6628, %v6631
        %v6651 = vsel %vm6641, %v6637, 1326507024
        %v6652 = vsel %vm6640, %v6634, %v6651
        %v6653 = vsel %vm6639, %v6650, %v6652
        %v6654 = vshll.u32 %v6614, 8
        %v6655 = vmul.u32.u64.compose %v6654, %v6653
        %v6656 = vextract.low.u32 %v6655
        %v6657 = vextract.high.u32 %v6655
        %v6658 = vmul.u32.u64.compose %v6654, %v6649
        %v6659 = vextract.low.u32 %v6658
        %v6660 = vextract.high.u32 %v6658
        %v6661 = vmul.u32 %v6654, %v6645
        %v6662 = vadd.s32 %v6657, %v6659
        %vm6663 = vc.u32 %v6657, %v6659
        %v6664 = vadd.s32 %v6660, 1
        %v6665 = vsel %vm6663, %v6664, %v6660
        %v6666 = vadd.s32 %v6661, %v6665
        %v6667 = vadd.s32 %v6666, 536870912
        %v6668 = vshrl.u32 %v6667, 30
        %v6669 = vshll.u32 %v6668, 30
        %v6670 = vsub.s32 %v6666, %v6669
        %vm6671 = vcmp.lt.s32.totalorder %v6670, 0
        %v6672 = vsub.s32 0, %v6670
        %v6673 = vsel %vm6671, %v6672, %v6670
        %v6674 = vclz %v6673
        %v6675 = vsub.s32 %v6674, 2
        %vm6676 = vcmp.gt.s32.totalorder 0, %v6675
        %v6677 = vsel %vm6676, 0, %v6675
        %v6678 = vsub.s32 32, %v6677
        %v6679 = vshll.u32 %v6670, %v6677
        %v6680 = vshrl.u32 %v6662, %v6678
        %v6681 = vor.u32 %v6679, %v6680
        %v6682 = vsub.s32 4294967266, %v6677
        %v6683 = vadd.s32 %v6682, 127
        %v6684 = vshll.u32 %v6683, 23
        %v6685 = vor.u32 4788187, %v6684
        %v6686 = vand.u32 2147483647, %v6685
        %v6688 = vcvt.s32.f32 %v6681
        %v6689 = vmul.f32 %v6688, %v6686
        %v6690 = vxor.u32 %v6689, 2147483648
        %v6691 = vsel %vm6608, %v6690, %v6689
        %v6692 = vsub.s32 4, %v6668
        %v6693 = vsel %vm6608, %v6692, %v6668
        %v6694 = vsel %vm6607, %v798, %v6691
        %v6695 = vsel %vm6607, 0, %v6693
        %v6696 = vcosq.f32.pop %v6694
        %v6697 = vsinq.f32.pop %v6694
        %vm6698 = vweird.f32 %v798
        %v6699 = vand.u32 %v6695, 3
        %vm6700 = vcmp.lt.s32.totalorder %v6699, 2
        %vm6701 = vcmp.eq.s32.totalorder %v6699, 0
        %v6702 = vxor.u32 %v6697, 2147483648
        %v6703 = vsel %vm6701, %v6696, %v6702
        %vm6704 = vcmp.eq.s32.totalorder %v6699, 2
        %v6705 = vxor.u32 %v6696, 2147483648
        %v6706 = vsel %vm6704, %v6705, %v6697
        %v6707 = vsel %vm6700, %v6703, %v6706
        %v6708 = vsel %vm6698, nan, %v6707
        %v6709 = vand.u32 2147483647, %v799
        %vm6710 = vcmp.le.f32.partialorder %v6709, 0.7853982
        %vm6711 = vcmp.lt.s32.totalorder %v799, 0
        %v6712 = vand.u32 %v799, 2139095040
        %v6713 = vshrl.u32 %v6712, 23
        %v6714 = vsub.s32 %v6713, 127
        %v6715 = vand.u32 2147483647, %v799
        %v6716 = vand.u32 %v6715, 8388607
        %v6717 = vor.u32 %v6716, 8388608
        %v6718 = vsub.s32 0, %v6717
        %v6719 = vadd.s32 %v6714, 1
        %vm6720 = vcmp.gt.s32.totalorder %v6719, 0
        %v6721 = vsel %vm6720, %v6719, 0
        %v6722 = vshrl.u32 %v6721, 5
        %v6723 = vand.u32 %v6721, 31
        %v6724 = vsub.s32 32, %v6723
        %v6725 = vshrl.u32 683565275, %v6724
        %v6726 = vshll.u32 683565275, %v6723
        %v6727 = vshrl.u32 2475754826, %v6724
        %v6728 = vor.u32 %v6726, %v6727
        %v6729 = vshll.u32 2475754826, %v6723
        %v6730 = vshrl.u32 2131351028, %v6724
        %v6731 = vor.u32 %v6729, %v6730
        %v6732 = vshll.u32 2131351028, %v6723
        %v6733 = vshrl.u32 2102212464, %v6724
        %v6734 = vor.u32 %v6732, %v6733
        %v6735 = vshll.u32 2102212464, %v6723
        %v6736 = vshrl.u32 920167782, %v6724
        %v6737 = vor.u32 %v6735, %v6736
        %v6738 = vshll.u32 920167782, %v6723
        %v6739 = vshrl.u32 1326507024, %v6724
        %v6740 = vor.u32 %v6738, %v6739
        %vm6741 = vcmp.lt.s32.totalorder %v6722, 1
        %vm6742 = vcmp.lt.s32.totalorder %v6722, 2
        %vm6743 = vcmp.lt.s32.totalorder %v6722, 3
        %vm6744 = vcmp.lt.s32.totalorder %v6722, 4
        %v6745 = vsel %vm6741, %v6725, %v6728
        %v6746 = vsel %vm6744, %v6734, 2102212464
        %v6747 = vsel %vm6743, %v6731, %v6746
        %v6748 = vsel %vm6742, %v6745, %v6747
        %v6749 = vsel %vm6741, %v6728, %v6731
        %v6750 = vsel %vm6744, %v6737, 920167782
        %v6751 = vsel %vm6743, %v6734, %v6750
        %v6752 = vsel %vm6742, %v6749, %v6751
        %v6753 = vsel %vm6741, %v6731, %v6734
        %v6754 = vsel %vm6744, %v6740, 1326507024
        %v6755 = vsel %vm6743, %v6737, %v6754
        %v6756 = vsel %vm6742, %v6753, %v6755
        %v6757 = vshll.u32 %v6717, 8
        %v6758 = vmul.u32.u64.compose %v6757, %v6756
        %v6759 = vextract.low.u32 %v6758
        %v6760 = vextract.high.u32 %v6758
        %v6761 = vmul.u32.u64.compose %v6757, %v6752
        %v6762 = vextract.low.u32 %v6761
        %v6763 = vextract.high.u32 %v6761
        %v6764 = vmul.u32 %v6757, %v6748
        %v6765 = vadd.s32 %v6760, %v6762
        %vm6766 = vc.u32 %v6760, %v6762
        %v6767 = vadd.s32 %v6763, 1
        %v6768 = vsel %vm6766, %v6767, %v6763
        %v6769 = vadd.s32 %v6764, %v6768
        %v6770 = vadd.s32 %v6769, 536870912
        %v6771 = vshrl.u32 %v6770, 30
        %v6772 = vshll.u32 %v6771, 30
        %v6773 = vsub.s32 %v6769, %v6772
        %vm6774 = vcmp.lt.s32.totalorder %v6773, 0
        %v6775 = vsub.s32 0, %v6773
        %v6776 = vsel %vm6774, %v6775, %v6773
        %v6777 = vclz %v6776
        %v6778 = vsub.s32 %v6777, 2
        %vm6779 = vcmp.gt.s32.totalorder 0, %v6778
        %v6780 = vsel %vm6779, 0, %v6778
        %v6781 = vsub.s32 32, %v6780
        %v6782 = vshll.u32 %v6773, %v6780
        %v6783 = vshrl.u32 %v6765, %v6781
        %v6784 = vor.u32 %v6782, %v6783
        %v6785 = vsub.s32 4294967266, %v6780
        %v6786 = vadd.s32 %v6785, 127
        %v6787 = vshll.u32 %v6786, 23
        %v6788 = vor.u32 4788187, %v6787
        %v6789 = vand.u32 2147483647, %v6788
        %v6791 = vcvt.s32.f32 %v6784
        %v6792 = vmul.f32 %v6791, %v6789
        %v6793 = vxor.u32 %v6792, 2147483648
        %v6794 = vsel %vm6711, %v6793, %v6792
        %v6795 = vsub.s32 4, %v6771
        %v6796 = vsel %vm6711, %v6795, %v6771
        %v6797 = vsel %vm6710, %v799, %v6794
        %v6798 = vsel %vm6710, 0, %v6796
        %v6799 = vcosq.f32.pop %v6797
        %v6800 = vsinq.f32.pop %v6797
        %vm6801 = vweird.f32 %v799
        %v6802 = vand.u32 %v6798, 3
        %vm6803 = vcmp.lt.s32.totalorder %v6802, 2
        %vm6804 = vcmp.eq.s32.totalorder %v6802, 0
        %v6805 = vxor.u32 %v6800, 2147483648
        %v6806 = vsel %vm6804, %v6799, %v6805
        %vm6807 = vcmp.eq.s32.totalorder %v6802, 2
        %v6808 = vxor.u32 %v6799, 2147483648
        %v6809 = vsel %vm6807, %v6808, %v6800
        %v6810 = vsel %vm6803, %v6806, %v6809
        %v6811 = vsel %vm6801, nan, %v6810
        %v6812 = vand.u32 2147483647, %v800
        %vm6813 = vcmp.le.f32.partialorder %v6812, 0.7853982
        %vm6814 = vcmp.lt.s32.totalorder %v800, 0
        %v6815 = vand.u32 %v800, 2139095040
        %v6816 = vshrl.u32 %v6815, 23
        %v6817 = vsub.s32 %v6816, 127
        %v6818 = vand.u32 2147483647, %v800
        %v6819 = vand.u32 %v6818, 8388607
        %v6820 = vor.u32 %v6819, 8388608
        %v6821 = vsub.s32 0, %v6820
        %v6822 = vadd.s32 %v6817, 1
        %vm6823 = vcmp.gt.s32.totalorder %v6822, 0
        %v6824 = vsel %vm6823, %v6822, 0
        %v6825 = vshrl.u32 %v6824, 5
        %v6826 = vand.u32 %v6824, 31
        %v6827 = vsub.s32 32, %v6826
        %v6828 = vshrl.u32 683565275, %v6827
        %v6829 = vshll.u32 683565275, %v6826
        %v6830 = vshrl.u32 2475754826, %v6827
        %v6831 = vor.u32 %v6829, %v6830
        %v6832 = vshll.u32 2475754826, %v6826
        %v6833 = vshrl.u32 2131351028, %v6827
        %v6834 = vor.u32 %v6832, %v6833
        %v6835 = vshll.u32 2131351028, %v6826
        %v6836 = vshrl.u32 2102212464, %v6827
        %v6837 = vor.u32 %v6835, %v6836
        %v6838 = vshll.u32 2102212464, %v6826
        %v6839 = vshrl.u32 920167782, %v6827
        %v6840 = vor.u32 %v6838, %v6839
        %v6841 = vshll.u32 920167782, %v6826
        %v6842 = vshrl.u32 1326507024, %v6827
        %v6843 = vor.u32 %v6841, %v6842
        %vm6844 = vcmp.lt.s32.totalorder %v6825, 1
        %vm6845 = vcmp.lt.s32.totalorder %v6825, 2
        %vm6846 = vcmp.lt.s32.totalorder %v6825, 3
        %vm6847 = vcmp.lt.s32.totalorder %v6825, 4
        %v6848 = vsel %vm6844, %v6828, %v6831
        %v6849 = vsel %vm6847, %v6837, 2102212464
        %v6850 = vsel %vm6846, %v6834, %v6849
        %v6851 = vsel %vm6845, %v6848, %v6850
        %v6852 = vsel %vm6844, %v6831, %v6834
        %v6853 = vsel %vm6847, %v6840, 920167782
        %v6854 = vsel %vm6846, %v6837, %v6853
        %v6855 = vsel %vm6845, %v6852, %v6854
        %v6856 = vsel %vm6844, %v6834, %v6837
        %v6857 = vsel %vm6847, %v6843, 1326507024
        %v6858 = vsel %vm6846, %v6840, %v6857
        %v6859 = vsel %vm6845, %v6856, %v6858
        %v6860 = vshll.u32 %v6820, 8
        %v6861 = vmul.u32.u64.compose %v6860, %v6859
        %v6862 = vextract.low.u32 %v6861
        %v6863 = vextract.high.u32 %v6861
        %v6864 = vmul.u32.u64.compose %v6860, %v6855
        %v6865 = vextract.low.u32 %v6864
        %v6866 = vextract.high.u32 %v6864
        %v6867 = vmul.u32 %v6860, %v6851
        %v6868 = vadd.s32 %v6863, %v6865
        %vm6869 = vc.u32 %v6863, %v6865
        %v6870 = vadd.s32 %v6866, 1
        %v6871 = vsel %vm6869, %v6870, %v6866
        %v6872 = vadd.s32 %v6867, %v6871
        %v6873 = vadd.s32 %v6872, 536870912
        %v6874 = vshrl.u32 %v6873, 30
        %v6875 = vshll.u32 %v6874, 30
        %v6876 = vsub.s32 %v6872, %v6875
        %vm6877 = vcmp.lt.s32.totalorder %v6876, 0
        %v6878 = vsub.s32 0, %v6876
        %v6879 = vsel %vm6877, %v6878, %v6876
        %v6880 = vclz %v6879
        %v6881 = vsub.s32 %v6880, 2
        %vm6882 = vcmp.gt.s32.totalorder 0, %v6881
        %v6883 = vsel %vm6882, 0, %v6881
        %v6884 = vsub.s32 32, %v6883
        %v6885 = vshll.u32 %v6876, %v6883
        %v6886 = vshrl.u32 %v6868, %v6884
        %v6887 = vor.u32 %v6885, %v6886
        %v6888 = vsub.s32 4294967266, %v6883
        %v6889 = vadd.s32 %v6888, 127
        %v6890 = vshll.u32 %v6889, 23
        %v6891 = vor.u32 4788187, %v6890
        %v6892 = vand.u32 2147483647, %v6891
        %v6894 = vcvt.s32.f32 %v6887
        %v6895 = vmul.f32 %v6894, %v6892
        %v6896 = vxor.u32 %v6895, 2147483648
        %v6897 = vsel %vm6814, %v6896, %v6895
        %v6898 = vsub.s32 4, %v6874
        %v6899 = vsel %vm6814, %v6898, %v6874
        %v6900 = vsel %vm6813, %v800, %v6897
        %v6901 = vsel %vm6813, 0, %v6899
        %v6902 = vcosq.f32.pop %v6900
        %v6903 = vsinq.f32.pop %v6900
        %vm6904 = vweird.f32 %v800
        %v6905 = vand.u32 %v6901, 3
        %vm6906 = vcmp.lt.s32.totalorder %v6905, 2
        %vm6907 = vcmp.eq.s32.totalorder %v6905, 0
        %v6908 = vxor.u32 %v6903, 2147483648
        %v6909 = vsel %vm6907, %v6902, %v6908
        %vm6910 = vcmp.eq.s32.totalorder %v6905, 2
        %v6911 = vxor.u32 %v6902, 2147483648
        %v6912 = vsel %vm6910, %v6911, %v6903
        %v6913 = vsel %vm6906, %v6909, %v6912
        %v6914 = vsel %vm6904, nan, %v6913
        %v6915 = vand.u32 2147483647, %v801
        %vm6916 = vcmp.le.f32.partialorder %v6915, 0.7853982
        %vm6917 = vcmp.lt.s32.totalorder %v801, 0
        %v6918 = vand.u32 %v801, 2139095040
        %v6919 = vshrl.u32 %v6918, 23
        %v6920 = vsub.s32 %v6919, 127
        %v6921 = vand.u32 2147483647, %v801
        %v6922 = vand.u32 %v6921, 8388607
        %v6923 = vor.u32 %v6922, 8388608
        %v6924 = vsub.s32 0, %v6923
        %v6925 = vadd.s32 %v6920, 1
        %vm6926 = vcmp.gt.s32.totalorder %v6925, 0
        %v6927 = vsel %vm6926, %v6925, 0
        %v6928 = vshrl.u32 %v6927, 5
        %v6929 = vand.u32 %v6927, 31
        %v6930 = vsub.s32 32, %v6929
        %v6931 = vshrl.u32 683565275, %v6930
        %v6932 = vshll.u32 683565275, %v6929
        %v6933 = vshrl.u32 2475754826, %v6930
        %v6934 = vor.u32 %v6932, %v6933
        %v6935 = vshll.u32 2475754826, %v6929
        %v6936 = vshrl.u32 2131351028, %v6930
        %v6937 = vor.u32 %v6935, %v6936
        %v6938 = vshll.u32 2131351028, %v6929
        %v6939 = vshrl.u32 2102212464, %v6930
        %v6940 = vor.u32 %v6938, %v6939
        %v6941 = vshll.u32 2102212464, %v6929
        %v6942 = vshrl.u32 920167782, %v6930
        %v6943 = vor.u32 %v6941, %v6942
        %v6944 = vshll.u32 920167782, %v6929
        %v6945 = vshrl.u32 1326507024, %v6930
        %v6946 = vor.u32 %v6944, %v6945
        %vm6947 = vcmp.lt.s32.totalorder %v6928, 1
        %vm6948 = vcmp.lt.s32.totalorder %v6928, 2
        %vm6949 = vcmp.lt.s32.totalorder %v6928, 3
        %vm6950 = vcmp.lt.s32.totalorder %v6928, 4
        %v6951 = vsel %vm6947, %v6931, %v6934
        %v6952 = vsel %vm6950, %v6940, 2102212464
        %v6953 = vsel %vm6949, %v6937, %v6952
        %v6954 = vsel %vm6948, %v6951, %v6953
        %v6955 = vsel %vm6947, %v6934, %v6937
        %v6956 = vsel %vm6950, %v6943, 920167782
        %v6957 = vsel %vm6949, %v6940, %v6956
        %v6958 = vsel %vm6948, %v6955, %v6957
        %v6959 = vsel %vm6947, %v6937, %v6940
        %v6960 = vsel %vm6950, %v6946, 1326507024
        %v6961 = vsel %vm6949, %v6943, %v6960
        %v6962 = vsel %vm6948, %v6959, %v6961
        %v6963 = vshll.u32 %v6923, 8
        %v6964 = vmul.u32.u64.compose %v6963, %v6962
        %v6965 = vextract.low.u32 %v6964
        %v6966 = vextract.high.u32 %v6964
        %v6967 = vmul.u32.u64.compose %v6963, %v6958
        %v6968 = vextract.low.u32 %v6967
        %v6969 = vextract.high.u32 %v6967
        %v6970 = vmul.u32 %v6963, %v6954
        %v6971 = vadd.s32 %v6966, %v6968
        %vm6972 = vc.u32 %v6966, %v6968
        %v6973 = vadd.s32 %v6969, 1
        %v6974 = vsel %vm6972, %v6973, %v6969
        %v6975 = vadd.s32 %v6970, %v6974
        %v6976 = vadd.s32 %v6975, 536870912
        %v6977 = vshrl.u32 %v6976, 30
        %v6978 = vshll.u32 %v6977, 30
        %v6979 = vsub.s32 %v6975, %v6978
        %vm6980 = vcmp.lt.s32.totalorder %v6979, 0
        %v6981 = vsub.s32 0, %v6979
        %v6982 = vsel %vm6980, %v6981, %v6979
        %v6983 = vclz %v6982
        %v6984 = vsub.s32 %v6983, 2
        %vm6985 = vcmp.gt.s32.totalorder 0, %v6984
        %v6986 = vsel %vm6985, 0, %v6984
        %v6987 = vsub.s32 32, %v6986
        %v6988 = vshll.u32 %v6979, %v6986
        %v6989 = vshrl.u32 %v6971, %v6987
        %v6990 = vor.u32 %v6988, %v6989
        %v6991 = vsub.s32 4294967266, %v6986
        %v6992 = vadd.s32 %v6991, 127
        %v6993 = vshll.u32 %v6992, 23
        %v6994 = vor.u32 4788187, %v6993
        %v6995 = vand.u32 2147483647, %v6994
        %v6997 = vcvt.s32.f32 %v6990
        %v6998 = vmul.f32 %v6997, %v6995
        %v6999 = vxor.u32 %v6998, 2147483648
        %v7000 = vsel %vm6917, %v6999, %v6998
        %v7001 = vsub.s32 4, %v6977
        %v7002 = vsel %vm6917, %v7001, %v6977
        %v7003 = vsel %vm6916, %v801, %v7000
        %v7004 = vsel %vm6916, 0, %v7002
        %v7005 = vcosq.f32.pop %v7003
        %v7006 = vsinq.f32.pop %v7003
        %vm7007 = vweird.f32 %v801
        %v7008 = vand.u32 %v7004, 3
        %vm7009 = vcmp.lt.s32.totalorder %v7008, 2
        %vm7010 = vcmp.eq.s32.totalorder %v7008, 0
        %v7011 = vxor.u32 %v7006, 2147483648
        %v7012 = vsel %vm7010, %v7005, %v7011
        %vm7013 = vcmp.eq.s32.totalorder %v7008, 2
        %v7014 = vxor.u32 %v7005, 2147483648
        %v7015 = vsel %vm7013, %v7014, %v7006
        %v7016 = vsel %vm7009, %v7012, %v7015
        %v7017 = vsel %vm7007, nan, %v7016
        %v7018 = vand.u32 2147483647, %v802
        %vm7019 = vcmp.le.f32.partialorder %v7018, 0.7853982
        %vm7020 = vcmp.lt.s32.totalorder %v802, 0
        %v7021 = vand.u32 %v802, 2139095040
        %v7022 = vshrl.u32 %v7021, 23
        %v7023 = vsub.s32 %v7022, 127
        %v7024 = vand.u32 2147483647, %v802
        %v7025 = vand.u32 %v7024, 8388607
        %v7026 = vor.u32 %v7025, 8388608
        %v7027 = vsub.s32 0, %v7026
        %v7028 = vadd.s32 %v7023, 1
        %vm7029 = vcmp.gt.s32.totalorder %v7028, 0
        %v7030 = vsel %vm7029, %v7028, 0
        %v7031 = vshrl.u32 %v7030, 5
        %v7032 = vand.u32 %v7030, 31
        %v7033 = vsub.s32 32, %v7032
        %v7034 = vshrl.u32 683565275, %v7033
        %v7035 = vshll.u32 683565275, %v7032
        %v7036 = vshrl.u32 2475754826, %v7033
        %v7037 = vor.u32 %v7035, %v7036
        %v7038 = vshll.u32 2475754826, %v7032
        %v7039 = vshrl.u32 2131351028, %v7033
        %v7040 = vor.u32 %v7038, %v7039
        %v7041 = vshll.u32 2131351028, %v7032
        %v7042 = vshrl.u32 2102212464, %v7033
        %v7043 = vor.u32 %v7041, %v7042
        %v7044 = vshll.u32 2102212464, %v7032
        %v7045 = vshrl.u32 920167782, %v7033
        %v7046 = vor.u32 %v7044, %v7045
        %v7047 = vshll.u32 920167782, %v7032
        %v7048 = vshrl.u32 1326507024, %v7033
        %v7049 = vor.u32 %v7047, %v7048
        %vm7050 = vcmp.lt.s32.totalorder %v7031, 1
        %vm7051 = vcmp.lt.s32.totalorder %v7031, 2
        %vm7052 = vcmp.lt.s32.totalorder %v7031, 3
        %vm7053 = vcmp.lt.s32.totalorder %v7031, 4
        %v7054 = vsel %vm7050, %v7034, %v7037
        %v7055 = vsel %vm7053, %v7043, 2102212464
        %v7056 = vsel %vm7052, %v7040, %v7055
        %v7057 = vsel %vm7051, %v7054, %v7056
        %v7058 = vsel %vm7050, %v7037, %v7040
        %v7059 = vsel %vm7053, %v7046, 920167782
        %v7060 = vsel %vm7052, %v7043, %v7059
        %v7061 = vsel %vm7051, %v7058, %v7060
        %v7062 = vsel %vm7050, %v7040, %v7043
        %v7063 = vsel %vm7053, %v7049, 1326507024
        %v7064 = vsel %vm7052, %v7046, %v7063
        %v7065 = vsel %vm7051, %v7062, %v7064
        %v7066 = vshll.u32 %v7026, 8
        %v7067 = vmul.u32.u64.compose %v7066, %v7065
        %v7068 = vextract.low.u32 %v7067
        %v7069 = vextract.high.u32 %v7067
        %v7070 = vmul.u32.u64.compose %v7066, %v7061
        %v7071 = vextract.low.u32 %v7070
        %v7072 = vextract.high.u32 %v7070
        %v7073 = vmul.u32 %v7066, %v7057
        %v7074 = vadd.s32 %v7069, %v7071
        %vm7075 = vc.u32 %v7069, %v7071
        %v7076 = vadd.s32 %v7072, 1
        %v7077 = vsel %vm7075, %v7076, %v7072
        %v7078 = vadd.s32 %v7073, %v7077
        %v7079 = vadd.s32 %v7078, 536870912
        %v7080 = vshrl.u32 %v7079, 30
        %v7081 = vshll.u32 %v7080, 30
        %v7082 = vsub.s32 %v7078, %v7081
        %vm7083 = vcmp.lt.s32.totalorder %v7082, 0
        %v7084 = vsub.s32 0, %v7082
        %v7085 = vsel %vm7083, %v7084, %v7082
        %v7086 = vclz %v7085
        %v7087 = vsub.s32 %v7086, 2
        %vm7088 = vcmp.gt.s32.totalorder 0, %v7087
        %v7089 = vsel %vm7088, 0, %v7087
        %v7090 = vsub.s32 32, %v7089
        %v7091 = vshll.u32 %v7082, %v7089
        %v7092 = vshrl.u32 %v7074, %v7090
        %v7093 = vor.u32 %v7091, %v7092
        %v7094 = vsub.s32 4294967266, %v7089
        %v7095 = vadd.s32 %v7094, 127
        %v7096 = vshll.u32 %v7095, 23
        %v7097 = vor.u32 4788187, %v7096
        %v7098 = vand.u32 2147483647, %v7097
        %v7100 = vcvt.s32.f32 %v7093
        %v7101 = vmul.f32 %v7100, %v7098
        %v7102 = vxor.u32 %v7101, 2147483648
        %v7103 = vsel %vm7020, %v7102, %v7101
        %v7104 = vsub.s32 4, %v7080
        %v7105 = vsel %vm7020, %v7104, %v7080
        %v7106 = vsel %vm7019, %v802, %v7103
        %v7107 = vsel %vm7019, 0, %v7105
        %v7108 = vcosq.f32.pop %v7106
        %v7109 = vsinq.f32.pop %v7106
        %vm7110 = vweird.f32 %v802
        %v7111 = vand.u32 %v7107, 3
        %vm7112 = vcmp.lt.s32.totalorder %v7111, 2
        %vm7113 = vcmp.eq.s32.totalorder %v7111, 0
        %v7114 = vxor.u32 %v7109, 2147483648
        %v7115 = vsel %vm7113, %v7108, %v7114
        %vm7116 = vcmp.eq.s32.totalorder %v7111, 2
        %v7117 = vxor.u32 %v7108, 2147483648
        %v7118 = vsel %vm7116, %v7117, %v7109
        %v7119 = vsel %vm7112, %v7115, %v7118
        %v7120 = vsel %vm7110, nan, %v7119
        %v7121 = vand.u32 2147483647, %v803
        %vm7122 = vcmp.le.f32.partialorder %v7121, 0.7853982
        %vm7123 = vcmp.lt.s32.totalorder %v803, 0
        %v7124 = vand.u32 %v803, 2139095040
        %v7125 = vshrl.u32 %v7124, 23
        %v7126 = vsub.s32 %v7125, 127
        %v7127 = vand.u32 2147483647, %v803
        %v7128 = vand.u32 %v7127, 8388607
        %v7129 = vor.u32 %v7128, 8388608
        %v7130 = vsub.s32 0, %v7129
        %v7131 = vadd.s32 %v7126, 1
        %vm7132 = vcmp.gt.s32.totalorder %v7131, 0
        %v7133 = vsel %vm7132, %v7131, 0
        %v7134 = vshrl.u32 %v7133, 5
        %v7135 = vand.u32 %v7133, 31
        %v7136 = vsub.s32 32, %v7135
        %v7137 = vshrl.u32 683565275, %v7136
        %v7138 = vshll.u32 683565275, %v7135
        %v7139 = vshrl.u32 2475754826, %v7136
        %v7140 = vor.u32 %v7138, %v7139
        %v7141 = vshll.u32 2475754826, %v7135
        %v7142 = vshrl.u32 2131351028, %v7136
        %v7143 = vor.u32 %v7141, %v7142
        %v7144 = vshll.u32 2131351028, %v7135
        %v7145 = vshrl.u32 2102212464, %v7136
        %v7146 = vor.u32 %v7144, %v7145
        %v7147 = vshll.u32 2102212464, %v7135
        %v7148 = vshrl.u32 920167782, %v7136
        %v7149 = vor.u32 %v7147, %v7148
        %v7150 = vshll.u32 920167782, %v7135
        %v7151 = vshrl.u32 1326507024, %v7136
        %v7152 = vor.u32 %v7150, %v7151
        %vm7153 = vcmp.lt.s32.totalorder %v7134, 1
        %vm7154 = vcmp.lt.s32.totalorder %v7134, 2
        %vm7155 = vcmp.lt.s32.totalorder %v7134, 3
        %vm7156 = vcmp.lt.s32.totalorder %v7134, 4
        %v7157 = vsel %vm7153, %v7137, %v7140
        %v7158 = vsel %vm7156, %v7146, 2102212464
        %v7159 = vsel %vm7155, %v7143, %v7158
        %v7160 = vsel %vm7154, %v7157, %v7159
        %v7161 = vsel %vm7153, %v7140, %v7143
        %v7162 = vsel %vm7156, %v7149, 920167782
        %v7163 = vsel %vm7155, %v7146, %v7162
        %v7164 = vsel %vm7154, %v7161, %v7163
        %v7165 = vsel %vm7153, %v7143, %v7146
        %v7166 = vsel %vm7156, %v7152, 1326507024
        %v7167 = vsel %vm7155, %v7149, %v7166
        %v7168 = vsel %vm7154, %v7165, %v7167
        %v7169 = vshll.u32 %v7129, 8
        %v7170 = vmul.u32.u64.compose %v7169, %v7168
        %v7171 = vextract.low.u32 %v7170
        %v7172 = vextract.high.u32 %v7170
        %v7173 = vmul.u32.u64.compose %v7169, %v7164
        %v7174 = vextract.low.u32 %v7173
        %v7175 = vextract.high.u32 %v7173
        %v7176 = vmul.u32 %v7169, %v7160
        %v7177 = vadd.s32 %v7172, %v7174
        %vm7178 = vc.u32 %v7172, %v7174
        %v7179 = vadd.s32 %v7175, 1
        %v7180 = vsel %vm7178, %v7179, %v7175
        %v7181 = vadd.s32 %v7176, %v7180
        %v7182 = vadd.s32 %v7181, 536870912
        %v7183 = vshrl.u32 %v7182, 30
        %v7184 = vshll.u32 %v7183, 30
        %v7185 = vsub.s32 %v7181, %v7184
        %vm7186 = vcmp.lt.s32.totalorder %v7185, 0
        %v7187 = vsub.s32 0, %v7185
        %v7188 = vsel %vm7186, %v7187, %v7185
        %v7189 = vclz %v7188
        %v7190 = vsub.s32 %v7189, 2
        %vm7191 = vcmp.gt.s32.totalorder 0, %v7190
        %v7192 = vsel %vm7191, 0, %v7190
        %v7193 = vsub.s32 32, %v7192
        %v7194 = vshll.u32 %v7185, %v7192
        %v7195 = vshrl.u32 %v7177, %v7193
        %v7196 = vor.u32 %v7194, %v7195
        %v7197 = vsub.s32 4294967266, %v7192
        %v7198 = vadd.s32 %v7197, 127
        %v7199 = vshll.u32 %v7198, 23
        %v7200 = vor.u32 4788187, %v7199
        %v7201 = vand.u32 2147483647, %v7200
        %v7203 = vcvt.s32.f32 %v7196
        %v7204 = vmul.f32 %v7203, %v7201
        %v7205 = vxor.u32 %v7204, 2147483648
        %v7206 = vsel %vm7123, %v7205, %v7204
        %v7207 = vsub.s32 4, %v7183
        %v7208 = vsel %vm7123, %v7207, %v7183
        %v7209 = vsel %vm7122, %v803, %v7206
        %v7210 = vsel %vm7122, 0, %v7208
        %v7211 = vcosq.f32.pop %v7209
        %v7212 = vsinq.f32.pop %v7209
        %vm7213 = vweird.f32 %v803
        %v7214 = vand.u32 %v7210, 3
        %vm7215 = vcmp.lt.s32.totalorder %v7214, 2
        %vm7216 = vcmp.eq.s32.totalorder %v7214, 0
        %v7217 = vxor.u32 %v7212, 2147483648
        %v7218 = vsel %vm7216, %v7211, %v7217
        %vm7219 = vcmp.eq.s32.totalorder %v7214, 2
        %v7220 = vxor.u32 %v7211, 2147483648
        %v7221 = vsel %vm7219, %v7220, %v7212
        %v7222 = vsel %vm7215, %v7218, %v7221
        %v7223 = vsel %vm7213, nan, %v7222
        %v7224 = vand.u32 2147483647, %v804
        %vm7225 = vcmp.le.f32.partialorder %v7224, 0.7853982
        %vm7226 = vcmp.lt.s32.totalorder %v804, 0
        %v7227 = vand.u32 %v804, 2139095040
        %v7228 = vshrl.u32 %v7227, 23
        %v7229 = vsub.s32 %v7228, 127
        %v7230 = vand.u32 2147483647, %v804
        %v7231 = vand.u32 %v7230, 8388607
        %v7232 = vor.u32 %v7231, 8388608
        %v7233 = vsub.s32 0, %v7232
        %v7234 = vadd.s32 %v7229, 1
        %vm7235 = vcmp.gt.s32.totalorder %v7234, 0
        %v7236 = vsel %vm7235, %v7234, 0
        %v7237 = vshrl.u32 %v7236, 5
        %v7238 = vand.u32 %v7236, 31
        %v7239 = vsub.s32 32, %v7238
        %v7240 = vshrl.u32 683565275, %v7239
        %v7241 = vshll.u32 683565275, %v7238
        %v7242 = vshrl.u32 2475754826, %v7239
        %v7243 = vor.u32 %v7241, %v7242
        %v7244 = vshll.u32 2475754826, %v7238
        %v7245 = vshrl.u32 2131351028, %v7239
        %v7246 = vor.u32 %v7244, %v7245
        %v7247 = vshll.u32 2131351028, %v7238
        %v7248 = vshrl.u32 2102212464, %v7239
        %v7249 = vor.u32 %v7247, %v7248
        %v7250 = vshll.u32 2102212464, %v7238
        %v7251 = vshrl.u32 920167782, %v7239
        %v7252 = vor.u32 %v7250, %v7251
        %v7253 = vshll.u32 920167782, %v7238
        %v7254 = vshrl.u32 1326507024, %v7239
        %v7255 = vor.u32 %v7253, %v7254
        %vm7256 = vcmp.lt.s32.totalorder %v7237, 1
        %vm7257 = vcmp.lt.s32.totalorder %v7237, 2
        %vm7258 = vcmp.lt.s32.totalorder %v7237, 3
        %vm7259 = vcmp.lt.s32.totalorder %v7237, 4
        %v7260 = vsel %vm7256, %v7240, %v7243
        %v7261 = vsel %vm7259, %v7249, 2102212464
        %v7262 = vsel %vm7258, %v7246, %v7261
        %v7263 = vsel %vm7257, %v7260, %v7262
        %v7264 = vsel %vm7256, %v7243, %v7246
        %v7265 = vsel %vm7259, %v7252, 920167782
        %v7266 = vsel %vm7258, %v7249, %v7265
        %v7267 = vsel %vm7257, %v7264, %v7266
        %v7268 = vsel %vm7256, %v7246, %v7249
        %v7269 = vsel %vm7259, %v7255, 1326507024
        %v7270 = vsel %vm7258, %v7252, %v7269
        %v7271 = vsel %vm7257, %v7268, %v7270
        %v7272 = vshll.u32 %v7232, 8
        %v7273 = vmul.u32.u64.compose %v7272, %v7271
        %v7274 = vextract.low.u32 %v7273
        %v7275 = vextract.high.u32 %v7273
        %v7276 = vmul.u32.u64.compose %v7272, %v7267
        %v7277 = vextract.low.u32 %v7276
        %v7278 = vextract.high.u32 %v7276
        %v7279 = vmul.u32 %v7272, %v7263
        %v7280 = vadd.s32 %v7275, %v7277
        %vm7281 = vc.u32 %v7275, %v7277
        %v7282 = vadd.s32 %v7278, 1
        %v7283 = vsel %vm7281, %v7282, %v7278
        %v7284 = vadd.s32 %v7279, %v7283
        %v7285 = vadd.s32 %v7284, 536870912
        %v7286 = vshrl.u32 %v7285, 30
        %v7287 = vshll.u32 %v7286, 30
        %v7288 = vsub.s32 %v7284, %v7287
        %vm7289 = vcmp.lt.s32.totalorder %v7288, 0
        %v7290 = vsub.s32 0, %v7288
        %v7291 = vsel %vm7289, %v7290, %v7288
        %v7292 = vclz %v7291
        %v7293 = vsub.s32 %v7292, 2
        %vm7294 = vcmp.gt.s32.totalorder 0, %v7293
        %v7295 = vsel %vm7294, 0, %v7293
        %v7296 = vsub.s32 32, %v7295
        %v7297 = vshll.u32 %v7288, %v7295
        %v7298 = vshrl.u32 %v7280, %v7296
        %v7299 = vor.u32 %v7297, %v7298
        %v7300 = vsub.s32 4294967266, %v7295
        %v7301 = vadd.s32 %v7300, 127
        %v7302 = vshll.u32 %v7301, 23
        %v7303 = vor.u32 4788187, %v7302
        %v7304 = vand.u32 2147483647, %v7303
        %v7306 = vcvt.s32.f32 %v7299
        %v7307 = vmul.f32 %v7306, %v7304
        %v7308 = vxor.u32 %v7307, 2147483648
        %v7309 = vsel %vm7226, %v7308, %v7307
        %v7310 = vsub.s32 4, %v7286
        %v7311 = vsel %vm7226, %v7310, %v7286
        %v7312 = vsel %vm7225, %v804, %v7309
        %v7313 = vsel %vm7225, 0, %v7311
        %v7314 = vcosq.f32.pop %v7312
        %v7315 = vsinq.f32.pop %v7312
        %vm7316 = vweird.f32 %v804
        %v7317 = vand.u32 %v7313, 3
        %vm7318 = vcmp.lt.s32.totalorder %v7317, 2
        %vm7319 = vcmp.eq.s32.totalorder %v7317, 0
        %v7320 = vxor.u32 %v7315, 2147483648
        %v7321 = vsel %vm7319, %v7314, %v7320
        %vm7322 = vcmp.eq.s32.totalorder %v7317, 2
        %v7323 = vxor.u32 %v7314, 2147483648
        %v7324 = vsel %vm7322, %v7323, %v7315
        %v7325 = vsel %vm7318, %v7321, %v7324
        %v7326 = vsel %vm7316, nan, %v7325
        %v7327 = vand.u32 2147483647, %v805
        %vm7328 = vcmp.le.f32.partialorder %v7327, 0.7853982
        %vm7329 = vcmp.lt.s32.totalorder %v805, 0
        %v7330 = vand.u32 %v805, 2139095040
        %v7331 = vshrl.u32 %v7330, 23
        %v7332 = vsub.s32 %v7331, 127
        %v7333 = vand.u32 2147483647, %v805
        %v7334 = vand.u32 %v7333, 8388607
        %v7335 = vor.u32 %v7334, 8388608
        %v7336 = vsub.s32 0, %v7335
        %v7337 = vadd.s32 %v7332, 1
        %vm7338 = vcmp.gt.s32.totalorder %v7337, 0
        %v7339 = vsel %vm7338, %v7337, 0
        %v7340 = vshrl.u32 %v7339, 5
        %v7341 = vand.u32 %v7339, 31
        %v7342 = vsub.s32 32, %v7341
        %v7343 = vshrl.u32 683565275, %v7342
        %v7344 = vshll.u32 683565275, %v7341
        %v7345 = vshrl.u32 2475754826, %v7342
        %v7346 = vor.u32 %v7344, %v7345
        %v7347 = vshll.u32 2475754826, %v7341
        %v7348 = vshrl.u32 2131351028, %v7342
        %v7349 = vor.u32 %v7347, %v7348
        %v7350 = vshll.u32 2131351028, %v7341
        %v7351 = vshrl.u32 2102212464, %v7342
        %v7352 = vor.u32 %v7350, %v7351
        %v7353 = vshll.u32 2102212464, %v7341
        %v7354 = vshrl.u32 920167782, %v7342
        %v7355 = vor.u32 %v7353, %v7354
        %v7356 = vshll.u32 920167782, %v7341
        %v7357 = vshrl.u32 1326507024, %v7342
        %v7358 = vor.u32 %v7356, %v7357
        %vm7359 = vcmp.lt.s32.totalorder %v7340, 1
        %vm7360 = vcmp.lt.s32.totalorder %v7340, 2
        %vm7361 = vcmp.lt.s32.totalorder %v7340, 3
        %vm7362 = vcmp.lt.s32.totalorder %v7340, 4
        %v7363 = vsel %vm7359, %v7343, %v7346
        %v7364 = vsel %vm7362, %v7352, 2102212464
        %v7365 = vsel %vm7361, %v7349, %v7364
        %v7366 = vsel %vm7360, %v7363, %v7365
        %v7367 = vsel %vm7359, %v7346, %v7349
        %v7368 = vsel %vm7362, %v7355, 920167782
        %v7369 = vsel %vm7361, %v7352, %v7368
        %v7370 = vsel %vm7360, %v7367, %v7369
        %v7371 = vsel %vm7359, %v7349, %v7352
        %v7372 = vsel %vm7362, %v7358, 1326507024
        %v7373 = vsel %vm7361, %v7355, %v7372
        %v7374 = vsel %vm7360, %v7371, %v7373
        %v7375 = vshll.u32 %v7335, 8
        %v7376 = vmul.u32.u64.compose %v7375, %v7374
        %v7377 = vextract.low.u32 %v7376
        %v7378 = vextract.high.u32 %v7376
        %v7379 = vmul.u32.u64.compose %v7375, %v7370
        %v7380 = vextract.low.u32 %v7379
        %v7381 = vextract.high.u32 %v7379
        %v7382 = vmul.u32 %v7375, %v7366
        %v7383 = vadd.s32 %v7378, %v7380
        %vm7384 = vc.u32 %v7378, %v7380
        %v7385 = vadd.s32 %v7381, 1
        %v7386 = vsel %vm7384, %v7385, %v7381
        %v7387 = vadd.s32 %v7382, %v7386
        %v7388 = vadd.s32 %v7387, 536870912
        %v7389 = vshrl.u32 %v7388, 30
        %v7390 = vshll.u32 %v7389, 30
        %v7391 = vsub.s32 %v7387, %v7390
        %vm7392 = vcmp.lt.s32.totalorder %v7391, 0
        %v7393 = vsub.s32 0, %v7391
        %v7394 = vsel %vm7392, %v7393, %v7391
        %v7395 = vclz %v7394
        %v7396 = vsub.s32 %v7395, 2
        %vm7397 = vcmp.gt.s32.totalorder 0, %v7396
        %v7398 = vsel %vm7397, 0, %v7396
        %v7399 = vsub.s32 32, %v7398
        %v7400 = vshll.u32 %v7391, %v7398
        %v7401 = vshrl.u32 %v7383, %v7399
        %v7402 = vor.u32 %v7400, %v7401
        %v7403 = vsub.s32 4294967266, %v7398
        %v7404 = vadd.s32 %v7403, 127
        %v7405 = vshll.u32 %v7404, 23
        %v7406 = vor.u32 4788187, %v7405
        %v7407 = vand.u32 2147483647, %v7406
        %v7409 = vcvt.s32.f32 %v7402
        %v7410 = vmul.f32 %v7409, %v7407
        %v7411 = vxor.u32 %v7410, 2147483648
        %v7412 = vsel %vm7329, %v7411, %v7410
        %v7413 = vsub.s32 4, %v7389
        %v7414 = vsel %vm7329, %v7413, %v7389
        %v7415 = vsel %vm7328, %v805, %v7412
        %v7416 = vsel %vm7328, 0, %v7414
        %v7417 = vcosq.f32.pop %v7415
        %v7418 = vsinq.f32.pop %v7415
        %vm7419 = vweird.f32 %v805
        %v7420 = vand.u32 %v7416, 3
        %vm7421 = vcmp.lt.s32.totalorder %v7420, 2
        %vm7422 = vcmp.eq.s32.totalorder %v7420, 0
        %v7423 = vxor.u32 %v7418, 2147483648
        %v7424 = vsel %vm7422, %v7417, %v7423
        %vm7425 = vcmp.eq.s32.totalorder %v7420, 2
        %v7426 = vxor.u32 %v7417, 2147483648
        %v7427 = vsel %vm7425, %v7426, %v7418
        %v7428 = vsel %vm7421, %v7424, %v7427
        %v7429 = vsel %vm7419, nan, %v7428
        %v7430 = vld [vmem:[%s2] sm:$0xff]
        %v7431 = vld [vmem:[%s3] sm:$0xff]
        %vm7432 = vcmask 64512
        %v7434 = vsel %vm7432, %v4236, 0
        %v7437 = vsel %vm7432, %v4339, 0
        %v7440 = vsel %vm7432, %v4442, 0
        %v7443 = vsel %vm7432, %v4545, 0
        %v7446 = vsel %vm7432, %v4648, 0
        %v7449 = vsel %vm7432, %v4751, 0
        %v7452 = vsel %vm7432, %v4854, 0
        %v7455 = vsel %vm7432, %v4957, 0
        %v7458 = vsel %vm7432, %v5060, 0
        %v7461 = vsel %vm7432, %v5163, 0
        %v7464 = vsel %vm7432, %v5266, 0
        %v7467 = vsel %vm7432, %v5369, 0
        %v7470 = vsel %vm7432, %v5472, 0
        %v7473 = vsel %vm7432, %v5575, 0
        %v7476 = vsel %vm7432, %v5678, 0
        %v7479 = vsel %vm7432, %v5781, 0
        %v7482 = vsel %vm7432, %v5884, 0
        %v7485 = vsel %vm7432, %v5987, 0
        %v7488 = vsel %vm7432, %v6090, 0
        %v7491 = vsel %vm7432, %v6193, 0
        %v7494 = vsel %vm7432, %v6296, 0
        %v7497 = vsel %vm7432, %v6399, 0
        %v7500 = vsel %vm7432, %v6502, 0
        %v7503 = vsel %vm7432, %v6605, 0
        %v7506 = vsel %vm7432, %v6708, 0
        %v7509 = vsel %vm7432, %v6811, 0
        %v7512 = vsel %vm7432, %v6914, 0
        %v7515 = vsel %vm7432, %v7017, 0
        %v7518 = vsel %vm7432, %v7120, 0
        %v7521 = vsel %vm7432, %v7223, 0
        %v7524 = vsel %vm7432, %v7326, 0
        %v7527 = vsel %vm7432, %v7429, 0
        %7529 = vmatprep.subr.mxu0 0.0
        %7530 = vmatpush1.msra.mxu0 %v7431
        %7531 = vmatprep.subr.mxu0 0.0
        %7532 = vmatpush1.msra.mxu0 0.0
        %7533 = vmatprep.subr.mxu0 0.0
        %7534 = vmatpush1.msra.mxu0 0.0
        %7535 = vmatprep.subr.mxu0 0.0
        %7536 = vmatpush1.msra.mxu0 0.0
        %7537 = vmatprep.subr.mxu0 0.0
        %7538 = vmatpush1.msra.mxu0 0.0
        %7539 = vmatprep.subr.mxu0 0.0
        %7540 = vmatpush1.msra.mxu0 0.0
        %7541 = vmatprep.subr.mxu0 0.0
        %7542 = vmatpush1.msra.mxu0 0.0
        %7543 = vmatprep.subr.mxu0 0.0
        %7544 = vmatpush1.msra.mxu0 0.0
        %7545 = vmatprep.subr.mxu0 0.0
        %7546 = vmatpush1.msra.mxu0 0.0
        %7547 = vmatprep.subr.mxu0 0.0
        %7548 = vmatpush1.msra.mxu0 0.0
        %7549 = vmatprep.subr.mxu0 0.0
        %7550 = vmatpush1.msra.mxu0 0.0
        %7551 = vmatprep.subr.mxu0 0.0
        %7552 = vmatpush1.msra.mxu0 0.0
        %7553 = vmatprep.subr.mxu0 0.0
        %7554 = vmatpush1.msra.mxu0 0.0
        %7555 = vmatprep.subr.mxu0 0.0
        %7556 = vmatpush1.msra.mxu0 0.0
        %7557 = vmatprep.subr.mxu0 0.0
        %7558 = vmatpush1.msra.mxu0 0.0
        %7559 = vmatprep.subr.mxu0 0.0
        %7560 = vmatpush1.msra.mxu0 0.0
        %7561 = vmatprep.subr.mxu0 0.0
        %7562 = vmatpush1.msra.mxu0 0.0
        %7563 = vmatprep.subr.mxu0 0.0
        %7564 = vmatpush1.msra.mxu0 0.0
        %7565 = vmatprep.subr.mxu0 0.0
        %7566 = vmatpush1.msra.mxu0 0.0
        %7567 = vmatprep.subr.mxu0 0.0
        %7568 = vmatpush1.msra.mxu0 0.0
        %7569 = vmatprep.subr.mxu0 0.0
        %7570 = vmatpush1.msra.mxu0 0.0
        %7571 = vmatprep.subr.mxu0 0.0
        %7572 = vmatpush1.msra.mxu0 0.0
        %7573 = vmatprep.subr.mxu0 0.0
        %7574 = vmatpush1.msra.mxu0 0.0
        %7575 = vmatprep.subr.mxu0 0.0
        %7576 = vmatpush1.msra.mxu0 0.0
        %7577 = vmatprep.subr.mxu0 0.0
        %7578 = vmatpush1.msra.mxu0 0.0
        %7579 = vmatprep.subr.mxu0 0.0
        %7580 = vmatpush1.msra.mxu0 0.0
        %7581 = vmatprep.subr.mxu0 0.0
        %7582 = vmatpush1.msra.mxu0 0.0
        %7583 = vmatprep.subr.mxu0 0.0
        %7584 = vmatpush1.msra.mxu0 0.0
        %7585 = vmatprep.subr.mxu0 0.0
        %7586 = vmatpush1.msra.mxu0 0.0
        %7587 = vmatprep.subr.mxu0 0.0
        %7588 = vmatpush1.msra.mxu0 0.0
        %7589 = vmatprep.subr.mxu0 0.0
        %7590 = vmatpush1.msra.mxu0 0.0
        %7591 = vmatprep.subr.mxu0 0.0
        %7592 = vmatpush1.msra.mxu0 0.0
        %7593 = vmatprep.mubr.f32.mxu0 0.0
        %7594 = vmatmul.mubr.f32.gmra.mrb[0].mxu0 %v7434
        %v7595 = vpop.f32.mrb[0].mxu0
        %v7596 = vadd.f32 0.0, %v7595
        %v7597 = vpop.f32.mrb[0].mxu0
        %7598 = vmatprep.mubr.f32.mxu0 0.0
        %7599 = vmatmul.mubr.f32.gmra.mrb[0].mxu0 %v7437
        %v7600 = vpop.f32.mrb[0].mxu0
        %v7601 = vadd.f32 0.0, %v7600
        %v7602 = vpop.f32.mrb[0].mxu0
        %7603 = vmatprep.mubr.f32.mxu0 0.0
        %7604 = vmatmul.mubr.f32.gmra.mrb[0].mxu0 %v7440
        %v7605 = vpop.f32.mrb[0].mxu0
        %v7606 = vadd.f32 0.0, %v7605
        %v7607 = vpop.f32.mrb[0].mxu0
        %7608 = vmatprep.mubr.f32.mxu0 0.0
        %7609 = vmatmul.mubr.f32.gmra.mrb[0].mxu0 %v7443
        %v7610 = vpop.f32.mrb[0].mxu0
        %v7611 = vadd.f32 0.0, %v7610
        %v7612 = vpop.f32.mrb[0].mxu0
        %7613 = vmatprep.mubr.f32.mxu0 0.0
        %7614 = vmatmul.mubr.f32.gmra.mrb[0].mxu0 %v7446
        %v7615 = vpop.f32.mrb[0].mxu0
        %v7616 = vadd.f32 0.0, %v7615
        %v7617 = vpop.f32.mrb[0].mxu0
        %7618 = vmatprep.mubr.f32.mxu0 0.0
        %7619 = vmatmul.mubr.f32.gmra.mrb[0].mxu0 %v7449
        %v7620 = vpop.f32.mrb[0].mxu0
        %v7621 = vadd.f32 0.0, %v7620
        %v7622 = vpop.f32.mrb[0].mxu0
        %7623 = vmatprep.mubr.f32.mxu0 0.0
        %7624 = vmatmul.mubr.f32.gmra.mrb[0].mxu0 %v7452
        %v7625 = vpop.f32.mrb[0].mxu0
        %v7626 = vadd.f32 0.0, %v7625
        %v7627 = vpop.f32.mrb[0].mxu0
        %7628 = vmatprep.mubr.f32.mxu0 0.0
        %7629 = vmatmul.mubr.f32.gmra.mrb[0].mxu0 %v7455
        %v7630 = vpop.f32.mrb[0].mxu0
        %v7631 = vadd.f32 0.0, %v7630
        %v7632 = vpop.f32.mrb[0].mxu0
        %7633 = vmatprep.mubr.f32.mxu0 0.0
        %7634 = vmatmul.mubr.f32.gmra.mrb[0].mxu0 %v7458
        %v7635 = vpop.f32.mrb[0].mxu0
        %v7636 = vadd.f32 0.0, %v7635
        %v7637 = vpop.f32.mrb[0].mxu0
        %7638 = vmatprep.mubr.f32.mxu0 0.0
        %7639 = vmatmul.mubr.f32.gmra.mrb[0].mxu0 %v7461
        %v7640 = vpop.f32.mrb[0].mxu0
        %v7641 = vadd.f32 0.0, %v7640
        %v7642 = vpop.f32.mrb[0].mxu0
        %7643 = vmatprep.mubr.f32.mxu0 0.0
        %7644 = vmatmul.mubr.f32.gmra.mrb[0].mxu0 %v7464
        %v7645 = vpop.f32.mrb[0].mxu0
        %v7646 = vadd.f32 0.0, %v7645
        %v7647 = vpop.f32.mrb[0].mxu0
        %7648 = vmatprep.mubr.f32.mxu0 0.0
        %7649 = vmatmul.mubr.f32.gmra.mrb[0].mxu0 %v7467
        %v7650 = vpop.f32.mrb[0].mxu0
        %v7651 = vadd.f32 0.0, %v7650
        %v7652 = vpop.f32.mrb[0].mxu0
        %7653 = vmatprep.mubr.f32.mxu0 0.0
        %7654 = vmatmul.mubr.f32.gmra.mrb[0].mxu0 %v7470
        %v7655 = vpop.f32.mrb[0].mxu0
        %v7656 = vadd.f32 0.0, %v7655
        %v7657 = vpop.f32.mrb[0].mxu0
        %7658 = vmatprep.mubr.f32.mxu0 0.0
        %7659 = vmatmul.mubr.f32.gmra.mrb[0].mxu0 %v7473
        %v7660 = vpop.f32.mrb[0].mxu0
        %v7661 = vadd.f32 0.0, %v7660
        %v7662 = vpop.f32.mrb[0].mxu0
        %7663 = vmatprep.mubr.f32.mxu0 0.0
        %7664 = vmatmul.mubr.f32.gmra.mrb[0].mxu0 %v7476
        %v7665 = vpop.f32.mrb[0].mxu0
        %v7666 = vadd.f32 0.0, %v7665
        %v7667 = vpop.f32.mrb[0].mxu0
        %7668 = vmatprep.mubr.f32.mxu0 0.0
        %7669 = vmatmul.mubr.f32.gmra.mrb[0].mxu0 %v7479
        %v7670 = vpop.f32.mrb[0].mxu0
        %v7671 = vadd.f32 0.0, %v7670
        %v7672 = vpop.f32.mrb[0].mxu0
        %7673 = vmatprep.mubr.f32.mxu0 0.0
        %7674 = vmatmul.mubr.f32.gmra.mrb[0].mxu0 %v7482
        %v7675 = vpop.f32.mrb[0].mxu0
        %v7676 = vadd.f32 0.0, %v7675
        %v7677 = vpop.f32.mrb[0].mxu0
        %7678 = vmatprep.mubr.f32.mxu0 0.0
        %7679 = vmatmul.mubr.f32.gmra.mrb[0].mxu0 %v7485
        %v7680 = vpop.f32.mrb[0].mxu0
        %v7681 = vadd.f32 0.0, %v7680
        %v7682 = vpop.f32.mrb[0].mxu0
        %7683 = vmatprep.mubr.f32.mxu0 0.0
        %7684 = vmatmul.mubr.f32.gmra.mrb[0].mxu0 %v7488
        %v7685 = vpop.f32.mrb[0].mxu0
        %v7686 = vadd.f32 0.0, %v7685
        %v7687 = vpop.f32.mrb[0].mxu0
        %7688 = vmatprep.mubr.f32.mxu0 0.0
        %7689 = vmatmul.mubr.f32.gmra.mrb[0].mxu0 %v7491
        %v7690 = vpop.f32.mrb[0].mxu0
        %v7691 = vadd.f32 0.0, %v7690
        %v7692 = vpop.f32.mrb[0].mxu0
        %7693 = vmatprep.mubr.f32.mxu0 0.0
        %7694 = vmatmul.mubr.f32.gmra.mrb[0].mxu0 %v7494
        %v7695 = vpop.f32.mrb[0].mxu0
        %v7696 = vadd.f32 0.0, %v7695
        %v7697 = vpop.f32.mrb[0].mxu0
        %7698 = vmatprep.mubr.f32.mxu0 0.0
        %7699 = vmatmul.mubr.f32.gmra.mrb[0].mxu0 %v7497
        %v7700 = vpop.f32.mrb[0].mxu0
        %v7701 = vadd.f32 0.0, %v7700
        %v7702 = vpop.f32.mrb[0].mxu0
        %7703 = vmatprep.mubr.f32.mxu0 0.0
        %7704 = vmatmul.mubr.f32.gmra.mrb[0].mxu0 %v7500
        %v7705 = vpop.f32.mrb[0].mxu0
        %v7706 = vadd.f32 0.0, %v7705
        %v7707 = vpop.f32.mrb[0].mxu0
        %7708 = vmatprep.mubr.f32.mxu0 0.0
        %7709 = vmatmul.mubr.f32.gmra.mrb[0].mxu0 %v7503
        %v7710 = vpop.f32.mrb[0].mxu0
        %v7711 = vadd.f32 0.0, %v7710
        %v7712 = vpop.f32.mrb[0].mxu0
        %7713 = vmatprep.mubr.f32.mxu0 0.0
        %7714 = vmatmul.mubr.f32.gmra.mrb[0].mxu0 %v7506
        %v7715 = vpop.f32.mrb[0].mxu0
        %v7716 = vadd.f32 0.0, %v7715
        %v7717 = vpop.f32.mrb[0].mxu0
        %7718 = vmatprep.mubr.f32.mxu0 0.0
        %7719 = vmatmul.mubr.f32.gmra.mrb[0].mxu0 %v7509
        %v7720 = vpop.f32.mrb[0].mxu0
        %v7721 = vadd.f32 0.0, %v7720
        %v7722 = vpop.f32.mrb[0].mxu0
        %7723 = vmatprep.mubr.f32.mxu0 0.0
        %7724 = vmatmul.mubr.f32.gmra.mrb[0].mxu0 %v7512
        %v7725 = vpop.f32.mrb[0].mxu0
        %v7726 = vadd.f32 0.0, %v7725
        %v7727 = vpop.f32.mrb[0].mxu0
        %7728 = vmatprep.mubr.f32.mxu0 0.0
        %7729 = vmatmul.mubr.f32.gmra.mrb[0].mxu0 %v7515
        %v7730 = vpop.f32.mrb[0].mxu0
        %v7731 = vadd.f32 0.0, %v7730
        %v7732 = vpop.f32.mrb[0].mxu0
        %7733 = vmatprep.mubr.f32.mxu0 0.0
        %7734 = vmatmul.mubr.f32.gmra.mrb[0].mxu0 %v7518
        %v7735 = vpop.f32.mrb[0].mxu0
        %v7736 = vadd.f32 0.0, %v7735
        %v7737 = vpop.f32.mrb[0].mxu0
        %7738 = vmatprep.mubr.f32.mxu0 0.0
        %7739 = vmatmul.mubr.f32.gmra.mrb[0].mxu0 %v7521
        %v7740 = vpop.f32.mrb[0].mxu0
        %v7741 = vadd.f32 0.0, %v7740
        %v7742 = vpop.f32.mrb[0].mxu0
        %7743 = vmatprep.mubr.f32.mxu0 0.0
        %7744 = vmatmul.mubr.f32.gmra.mrb[0].mxu0 %v7524
        %v7745 = vpop.f32.mrb[0].mxu0
        %v7746 = vadd.f32 0.0, %v7745
        %v7747 = vpop.f32.mrb[0].mxu0
        %7748 = vmatprep.mubr.f32.mxu0 0.0
        %7749 = vmatmul.mubr.f32.gmra.mrb[0].mxu0 %v7527
        %v7750 = vpop.f32.mrb[0].mxu0
        %v7751 = vadd.f32 0.0, %v7750
        %v7752 = vpop.f32.mrb[0].mxu0
        %7753 = vdwg.mxu0
        %v7755 = vsel %vm7432, %v909, 0
        %v7758 = vsel %vm7432, %v1013, 0
        %v7761 = vsel %vm7432, %v1117, 0
        %v7764 = vsel %vm7432, %v1221, 0
        %v7767 = vsel %vm7432, %v1325, 0
        %v7770 = vsel %vm7432, %v1429, 0
        %v7773 = vsel %vm7432, %v1533, 0
        %v7776 = vsel %vm7432, %v1637, 0
        %v7779 = vsel %vm7432, %v1741, 0
        %v7782 = vsel %vm7432, %v1845, 0
        %v7785 = vsel %vm7432, %v1949, 0
        %v7788 = vsel %vm7432, %v2053, 0
        %v7791 = vsel %vm7432, %v2157, 0
        %v7794 = vsel %vm7432, %v2261, 0
        %v7797 = vsel %vm7432, %v2365, 0
        %v7800 = vsel %vm7432, %v2469, 0
        %v7803 = vsel %vm7432, %v2573, 0
        %v7806 = vsel %vm7432, %v2677, 0
        %v7809 = vsel %vm7432, %v2781, 0
        %v7812 = vsel %vm7432, %v2885, 0
        %v7815 = vsel %vm7432, %v2989, 0
        %v7818 = vsel %vm7432, %v3093, 0
        %v7821 = vsel %vm7432, %v3197, 0
        %v7824 = vsel %vm7432, %v3301, 0
        %v7827 = vsel %vm7432, %v3405, 0
        %v7830 = vsel %vm7432, %v3509, 0
        %v7833 = vsel %vm7432, %v3613, 0
        %v7836 = vsel %vm7432, %v3717, 0
        %v7839 = vsel %vm7432, %v3821, 0
        %v7842 = vsel %vm7432, %v3925, 0
        %v7845 = vsel %vm7432, %v4029, 0
        %v7848 = vsel %vm7432, %v4133, 0
        %7850 = vmatprep.subr.mxu0 0.0
        %7851 = vmatpush1.msra.mxu0 %v7430
        %7852 = vmatprep.subr.mxu0 0.0
        %7853 = vmatpush1.msra.mxu0 0.0
        %7854 = vmatprep.subr.mxu0 0.0
        %7855 = vmatpush1.msra.mxu0 0.0
        %7856 = vmatprep.subr.mxu0 0.0
        %7857 = vmatpush1.msra.mxu0 0.0
        %7858 = vmatprep.subr.mxu0 0.0
        %7859 = vmatpush1.msra.mxu0 0.0
        %7860 = vmatprep.subr.mxu0 0.0
        %7861 = vmatpush1.msra.mxu0 0.0
        %7862 = vmatprep.subr.mxu0 0.0
        %7863 = vmatpush1.msra.mxu0 0.0
        %7864 = vmatprep.subr.mxu0 0.0
        %7865 = vmatpush1.msra.mxu0 0.0
        %7866 = vmatprep.subr.mxu0 0.0
        %7867 = vmatpush1.msra.mxu0 0.0
        %7868 = vmatprep.subr.mxu0 0.0
        %7869 = vmatpush1.msra.mxu0 0.0
        %7870 = vmatprep.subr.mxu0 0.0
        %7871 = vmatpush1.msra.mxu0 0.0
        %7872 = vmatprep.subr.mxu0 0.0
        %7873 = vmatpush1.msra.mxu0 0.0
        %7874 = vmatprep.subr.mxu0 0.0
        %7875 = vmatpush1.msra.mxu0 0.0
        %7876 = vmatprep.subr.mxu0 0.0
        %7877 = vmatpush1.msra.mxu0 0.0
        %7878 = vmatprep.subr.mxu0 0.0
        %7879 = vmatpush1.msra.mxu0 0.0
        %7880 = vmatprep.subr.mxu0 0.0
        %7881 = vmatpush1.msra.mxu0 0.0
        %7882 = vmatprep.subr.mxu0 0.0
        %7883 = vmatpush1.msra.mxu0 0.0
        %7884 = vmatprep.subr.mxu0 0.0
        %7885 = vmatpush1.msra.mxu0 0.0
        %7886 = vmatprep.subr.mxu0 0.0
        %7887 = vmatpush1.msra.mxu0 0.0
        %7888 = vmatprep.subr.mxu0 0.0
        %7889 = vmatpush1.msra.mxu0 0.0
        %7890 = vmatprep.subr.mxu0 0.0
        %7891 = vmatpush1.msra.mxu0 0.0
        %7892 = vmatprep.subr.mxu0 0.0
        %7893 = vmatpush1.msra.mxu0 0.0
        %7894 = vmatprep.subr.mxu0 0.0
        %7895 = vmatpush1.msra.mxu0 0.0
        %7896 = vmatprep.subr.mxu0 0.0
        %7897 = vmatpush1.msra.mxu0 0.0
        %7898 = vmatprep.subr.mxu0 0.0
        %7899 = vmatpush1.msra.mxu0 0.0
        %7900 = vmatprep.subr.mxu0 0.0
        %7901 = vmatpush1.msra.mxu0 0.0
        %7902 = vmatprep.subr.mxu0 0.0
        %7903 = vmatpush1.msra.mxu0 0.0
        %7904 = vmatprep.subr.mxu0 0.0
        %7905 = vmatpush1.msra.mxu0 0.0
        %7906 = vmatprep.subr.mxu0 0.0
        %7907 = vmatpush1.msra.mxu0 0.0
        %7908 = vmatprep.subr.mxu0 0.0
        %7909 = vmatpush1.msra.mxu0 0.0
        %7910 = vmatprep.subr.mxu0 0.0
        %7911 = vmatpush1.msra.mxu0 0.0
        %7912 = vmatprep.subr.mxu0 0.0
        %7913 = vmatpush1.msra.mxu0 0.0
        %7914 = vmatprep.mubr.f32.mxu0 0.0
        %7915 = vmatmul.mubr.f32.gmra.mrb[0].mxu0 %v7755
        %v7916 = vpop.f32.mrb[0].mxu0
        %v7917 = vadd.f32 %v7596, %v7916
        %v7918 = vpop.f32.mrb[0].mxu0
        %7919 = vmatprep.mubr.f32.mxu0 0.0
        %7920 = vmatmul.mubr.f32.gmra.mrb[0].mxu0 %v7758
        %v7921 = vpop.f32.mrb[0].mxu0
        %v7922 = vadd.f32 %v7601, %v7921
        %v7923 = vpop.f32.mrb[0].mxu0
        %7924 = vmatprep.mubr.f32.mxu0 0.0
        %7925 = vmatmul.mubr.f32.gmra.mrb[0].mxu0 %v7761
        %v7926 = vpop.f32.mrb[0].mxu0
        %v7927 = vadd.f32 %v7606, %v7926
        %v7928 = vpop.f32.mrb[0].mxu0
        %7929 = vmatprep.mubr.f32.mxu0 0.0
        %7930 = vmatmul.mubr.f32.gmra.mrb[0].mxu0 %v7764
        %v7931 = vpop.f32.mrb[0].mxu0
        %v7932 = vadd.f32 %v7611, %v7931
        %v7933 = vpop.f32.mrb[0].mxu0
        %7934 = vmatprep.mubr.f32.mxu0 0.0
        %7935 = vmatmul.mubr.f32.gmra.mrb[0].mxu0 %v7767
        %v7936 = vpop.f32.mrb[0].mxu0
        %v7937 = vadd.f32 %v7616, %v7936
        %v7938 = vpop.f32.mrb[0].mxu0
        %7939 = vmatprep.mubr.f32.mxu0 0.0
        %7940 = vmatmul.mubr.f32.gmra.mrb[0].mxu0 %v7770
        %v7941 = vpop.f32.mrb[0].mxu0
        %v7942 = vadd.f32 %v7621, %v7941
        %v7943 = vpop.f32.mrb[0].mxu0
        %7944 = vmatprep.mubr.f32.mxu0 0.0
        %7945 = vmatmul.mubr.f32.gmra.mrb[0].mxu0 %v7773
        %v7946 = vpop.f32.mrb[0].mxu0
        %v7947 = vadd.f32 %v7626, %v7946
        %v7948 = vpop.f32.mrb[0].mxu0
        %7949 = vmatprep.mubr.f32.mxu0 0.0
        %7950 = vmatmul.mubr.f32.gmra.mrb[0].mxu0 %v7776
        %v7951 = vpop.f32.mrb[0].mxu0
        %v7952 = vadd.f32 %v7631, %v7951
        %v7953 = vpop.f32.mrb[0].mxu0
        %7954 = vmatprep.mubr.f32.mxu0 0.0
        %7955 = vmatmul.mubr.f32.gmra.mrb[0].mxu0 %v7779
        %v7956 = vpop.f32.mrb[0].mxu0
        %v7957 = vadd.f32 %v7636, %v7956
        %v7958 = vpop.f32.mrb[0].mxu0
        %7959 = vmatprep.mubr.f32.mxu0 0.0
        %7960 = vmatmul.mubr.f32.gmra.mrb[0].mxu0 %v7782
        %v7961 = vpop.f32.mrb[0].mxu0
        %v7962 = vadd.f32 %v7641, %v7961
        %v7963 = vpop.f32.mrb[0].mxu0
        %7964 = vmatprep.mubr.f32.mxu0 0.0
        %7965 = vmatmul.mubr.f32.gmra.mrb[0].mxu0 %v7785
        %v7966 = vpop.f32.mrb[0].mxu0
        %v7967 = vadd.f32 %v7646, %v7966
        %v7968 = vpop.f32.mrb[0].mxu0
        %7969 = vmatprep.mubr.f32.mxu0 0.0
        %7970 = vmatmul.mubr.f32.gmra.mrb[0].mxu0 %v7788
        %v7971 = vpop.f32.mrb[0].mxu0
        %v7972 = vadd.f32 %v7651, %v7971
        %v7973 = vpop.f32.mrb[0].mxu0
        %7974 = vmatprep.mubr.f32.mxu0 0.0
        %7975 = vmatmul.mubr.f32.gmra.mrb[0].mxu0 %v7791
        %v7976 = vpop.f32.mrb[0].mxu0
        %v7977 = vadd.f32 %v7656, %v7976
        %v7978 = vpop.f32.mrb[0].mxu0
        %7979 = vmatprep.mubr.f32.mxu0 0.0
        %7980 = vmatmul.mubr.f32.gmra.mrb[0].mxu0 %v7794
        %v7981 = vpop.f32.mrb[0].mxu0
        %v7982 = vadd.f32 %v7661, %v7981
        %v7983 = vpop.f32.mrb[0].mxu0
        %7984 = vmatprep.mubr.f32.mxu0 0.0
        %7985 = vmatmul.mubr.f32.gmra.mrb[0].mxu0 %v7797
        %v7986 = vpop.f32.mrb[0].mxu0
        %v7987 = vadd.f32 %v7666, %v7986
        %v7988 = vpop.f32.mrb[0].mxu0
        %7989 = vmatprep.mubr.f32.mxu0 0.0
        %7990 = vmatmul.mubr.f32.gmra.mrb[0].mxu0 %v7800
        %v7991 = vpop.f32.mrb[0].mxu0
        %v7992 = vadd.f32 %v7671, %v7991
        %v7993 = vpop.f32.mrb[0].mxu0
        %7994 = vmatprep.mubr.f32.mxu0 0.0
        %7995 = vmatmul.mubr.f32.gmra.mrb[0].mxu0 %v7803
        %v7996 = vpop.f32.mrb[0].mxu0
        %v7997 = vadd.f32 %v7676, %v7996
        %v7998 = vpop.f32.mrb[0].mxu0
        %7999 = vmatprep.mubr.f32.mxu0 0.0
        %8000 = vmatmul.mubr.f32.gmra.mrb[0].mxu0 %v7806
        %v8001 = vpop.f32.mrb[0].mxu0
        %v8002 = vadd.f32 %v7681, %v8001
        %v8003 = vpop.f32.mrb[0].mxu0
        %8004 = vmatprep.mubr.f32.mxu0 0.0
        %8005 = vmatmul.mubr.f32.gmra.mrb[0].mxu0 %v7809
        %v8006 = vpop.f32.mrb[0].mxu0
        %v8007 = vadd.f32 %v7686, %v8006
        %v8008 = vpop.f32.mrb[0].mxu0
        %8009 = vmatprep.mubr.f32.mxu0 0.0
        %8010 = vmatmul.mubr.f32.gmra.mrb[0].mxu0 %v7812
        %v8011 = vpop.f32.mrb[0].mxu0
        %v8012 = vadd.f32 %v7691, %v8011
        %v8013 = vpop.f32.mrb[0].mxu0
        %8014 = vmatprep.mubr.f32.mxu0 0.0
        %8015 = vmatmul.mubr.f32.gmra.mrb[0].mxu0 %v7815
        %v8016 = vpop.f32.mrb[0].mxu0
        %v8017 = vadd.f32 %v7696, %v8016
        %v8018 = vpop.f32.mrb[0].mxu0
        %8019 = vmatprep.mubr.f32.mxu0 0.0
        %8020 = vmatmul.mubr.f32.gmra.mrb[0].mxu0 %v7818
        %v8021 = vpop.f32.mrb[0].mxu0
        %v8022 = vadd.f32 %v7701, %v8021
        %v8023 = vpop.f32.mrb[0].mxu0
        %8024 = vmatprep.mubr.f32.mxu0 0.0
        %8025 = vmatmul.mubr.f32.gmra.mrb[0].mxu0 %v7821
        %v8026 = vpop.f32.mrb[0].mxu0
        %v8027 = vadd.f32 %v7706, %v8026
        %v8028 = vpop.f32.mrb[0].mxu0
        %8029 = vmatprep.mubr.f32.mxu0 0.0
        %8030 = vmatmul.mubr.f32.gmra.mrb[0].mxu0 %v7824
        %v8031 = vpop.f32.mrb[0].mxu0
        %v8032 = vadd.f32 %v7711, %v8031
        %v8033 = vpop.f32.mrb[0].mxu0
        %8034 = vmatprep.mubr.f32.mxu0 0.0
        %8035 = vmatmul.mubr.f32.gmra.mrb[0].mxu0 %v7827
        %v8036 = vpop.f32.mrb[0].mxu0
        %v8037 = vadd.f32 %v7716, %v8036
        %v8038 = vpop.f32.mrb[0].mxu0
        %8039 = vmatprep.mubr.f32.mxu0 0.0
        %8040 = vmatmul.mubr.f32.gmra.mrb[0].mxu0 %v7830
        %v8041 = vpop.f32.mrb[0].mxu0
        %v8042 = vadd.f32 %v7721, %v8041
        %v8043 = vpop.f32.mrb[0].mxu0
        %8044 = vmatprep.mubr.f32.mxu0 0.0
        %8045 = vmatmul.mubr.f32.gmra.mrb[0].mxu0 %v7833
        %v8046 = vpop.f32.mrb[0].mxu0
        %v8047 = vadd.f32 %v7726, %v8046
        %v8048 = vpop.f32.mrb[0].mxu0
        %8049 = vmatprep.mubr.f32.mxu0 0.0
        %8050 = vmatmul.mubr.f32.gmra.mrb[0].mxu0 %v7836
        %v8051 = vpop.f32.mrb[0].mxu0
        %v8052 = vadd.f32 %v7731, %v8051
        %v8053 = vpop.f32.mrb[0].mxu0
        %8054 = vmatprep.mubr.f32.mxu0 0.0
        %8055 = vmatmul.mubr.f32.gmra.mrb[0].mxu0 %v7839
        %v8056 = vpop.f32.mrb[0].mxu0
        %v8057 = vadd.f32 %v7736, %v8056
        %v8058 = vpop.f32.mrb[0].mxu0
        %8059 = vmatprep.mubr.f32.mxu0 0.0
        %8060 = vmatmul.mubr.f32.gmra.mrb[0].mxu0 %v7842
        %v8061 = vpop.f32.mrb[0].mxu0
        %v8062 = vadd.f32 %v7741, %v8061
        %v8063 = vpop.f32.mrb[0].mxu0
        %8064 = vmatprep.mubr.f32.mxu0 0.0
        %8065 = vmatmul.mubr.f32.gmra.mrb[0].mxu0 %v7845
        %v8066 = vpop.f32.mrb[0].mxu0
        %v8067 = vadd.f32 %v7746, %v8066
        %v8068 = vpop.f32.mrb[0].mxu0
        %8069 = vmatprep.mubr.f32.mxu0 0.0
        %8070 = vmatmul.mubr.f32.gmra.mrb[0].mxu0 %v7848
        %v8071 = vpop.f32.mrb[0].mxu0
        %v8072 = vadd.f32 %v7751, %v8071
        %v8073 = vpop.f32.mrb[0].mxu0
        %8074 = vdwg.mxu0
        %v8075 = vld [vmem:[%s4] sm:$0x1]
        %v8077 = vlaneseq
        %v8078 = vshrl.u32 %v8077, 7
        %v8079 = vsub.s32 0, %v8078
        %v8080 = vrot.slane %v8075, %v8079
        %v8082 = vadd.f32 %v7917, %v8080
        %v8083 = vadd.f32 %v7922, %v8080
        %v8084 = vadd.f32 %v7927, %v8080
        %v8085 = vadd.f32 %v7932, %v8080
        %v8086 = vadd.f32 %v7937, %v8080
        %v8087 = vadd.f32 %v7942, %v8080
        %v8088 = vadd.f32 %v7947, %v8080
        %v8089 = vadd.f32 %v7952, %v8080
        %v8090 = vadd.f32 %v7957, %v8080
        %v8091 = vadd.f32 %v7962, %v8080
        %v8092 = vadd.f32 %v7967, %v8080
        %v8093 = vadd.f32 %v7972, %v8080
        %v8094 = vadd.f32 %v7977, %v8080
        %v8095 = vadd.f32 %v7982, %v8080
        %v8096 = vadd.f32 %v7987, %v8080
        %v8097 = vadd.f32 %v7992, %v8080
        %v8098 = vadd.f32 %v7997, %v8080
        %v8099 = vadd.f32 %v8002, %v8080
        %v8100 = vadd.f32 %v8007, %v8080
        %v8101 = vadd.f32 %v8012, %v8080
        %v8102 = vadd.f32 %v8017, %v8080
        %v8103 = vadd.f32 %v8022, %v8080
        %v8104 = vadd.f32 %v8027, %v8080
        %v8105 = vadd.f32 %v8032, %v8080
        %v8106 = vadd.f32 %v8037, %v8080
        %v8107 = vadd.f32 %v8042, %v8080
        %v8108 = vadd.f32 %v8047, %v8080
        %v8109 = vadd.f32 %v8052, %v8080
        %v8110 = vadd.f32 %v8057, %v8080
        %v8111 = vadd.f32 %v8062, %v8080
        %v8112 = vadd.f32 %v8067, %v8080
        %v8113 = vadd.f32 %v8072, %v8080
        %v8114 = vmax.f32 %v8082, 0.0
        %v8115 = vmax.f32 %v8083, 0.0
        %v8116 = vmax.f32 %v8084, 0.0
        %v8117 = vmax.f32 %v8085, 0.0
        %v8118 = vmax.f32 %v8086, 0.0
        %v8119 = vmax.f32 %v8087, 0.0
        %v8120 = vmax.f32 %v8088, 0.0
        %v8121 = vmax.f32 %v8089, 0.0
        %v8122 = vmax.f32 %v8090, 0.0
        %v8123 = vmax.f32 %v8091, 0.0
        %v8124 = vmax.f32 %v8092, 0.0
        %v8125 = vmax.f32 %v8093, 0.0
        %v8126 = vmax.f32 %v8094, 0.0
        %v8127 = vmax.f32 %v8095, 0.0
        %v8128 = vmax.f32 %v8096, 0.0
        %v8129 = vmax.f32 %v8097, 0.0
        %v8130 = vmax.f32 %v8098, 0.0
        %v8131 = vmax.f32 %v8099, 0.0
        %v8132 = vmax.f32 %v8100, 0.0
        %v8133 = vmax.f32 %v8101, 0.0
        %v8134 = vmax.f32 %v8102, 0.0
        %v8135 = vmax.f32 %v8103, 0.0
        %v8136 = vmax.f32 %v8104, 0.0
        %v8137 = vmax.f32 %v8105, 0.0
        %v8138 = vmax.f32 %v8106, 0.0
        %v8139 = vmax.f32 %v8107, 0.0
        %v8140 = vmax.f32 %v8108, 0.0
        %v8141 = vmax.f32 %v8109, 0.0
        %v8142 = vmax.f32 %v8110, 0.0
        %v8143 = vmax.f32 %v8111, 0.0
        %v8144 = vmax.f32 %v8112, 0.0
        %v8145 = vmax.f32 %v8113, 0.0
        %v8146 = vld [vmem:[%s5] sm:$0xff]
        %v8147 = vld [vmem:[%s5 + $0x8] sm:$0xff]
        %v8148 = vld [vmem:[%s5 + $0x10] sm:$0xff]
        %v8149 = vld [vmem:[%s5 + $0x18] sm:$0xff]
        %v8150 = vld [vmem:[%s6] sm:$0x1]
        %v8152 = vlaneseq
        %v8153 = vshrl.u32 %v8152, 7
        %v8154 = vsub.s32 0, %v8153
        %v8155 = vrot.slane %v8150, %v8154
        %vm8157 = vcmask 261120
        %v8159 = vsel %vm8157, %v8114, 0
        %v8162 = vsel %vm8157, %v8115, 0
        %v8165 = vsel %vm8157, %v8116, 0
        %v8168 = vsel %vm8157, %v8117, 0
        %v8171 = vsel %vm8157, %v8118, 0
        %v8174 = vsel %vm8157, %v8119, 0
        %v8177 = vsel %vm8157, %v8120, 0
        %v8180 = vsel %vm8157, %v8121, 0
        %v8183 = vsel %vm8157, %v8122, 0
        %v8186 = vsel %vm8157, %v8123, 0
        %v8189 = vsel %vm8157, %v8124, 0
        %v8192 = vsel %vm8157, %v8125, 0
        %v8195 = vsel %vm8157, %v8126, 0
        %v8198 = vsel %vm8157, %v8127, 0
        %v8201 = vsel %vm8157, %v8128, 0
        %v8204 = vsel %vm8157, %v8129, 0
        %v8207 = vsel %vm8157, %v8130, 0
        %v8210 = vsel %vm8157, %v8131, 0
        %v8213 = vsel %vm8157, %v8132, 0
        %v8216 = vsel %vm8157, %v8133, 0
        %v8219 = vsel %vm8157, %v8134, 0
        %v8222 = vsel %vm8157, %v8135, 0
        %v8225 = vsel %vm8157, %v8136, 0
        %v8228 = vsel %vm8157, %v8137, 0
        %v8231 = vsel %vm8157, %v8138, 0
        %v8234 = vsel %vm8157, %v8139, 0
        %v8237 = vsel %vm8157, %v8140, 0
        %v8240 = vsel %vm8157, %v8141, 0
        %v8243 = vsel %vm8157, %v8142, 0
        %v8246 = vsel %vm8157, %v8143, 0
        %v8249 = vsel %vm8157, %v8144, 0
        %v8252 = vsel %vm8157, %v8145, 0
        %8254 = vmatprep.subr.mxu0 0.0
        %8255 = vmatpush1.msra.mxu0 %v8146
        %8256 = vmatprep.subr.mxu0 0.0
        %8257 = vmatpush1.msra.mxu0 %v8147
        %8258 = vmatprep.subr.mxu0 0.0
        %8259 = vmatpush1.msra.mxu0 %v8148
        %8260 = vmatprep.subr.mxu0 0.0
        %8261 = vmatpush1.msra.mxu0 %v8149
        %8262 = vmatprep.subr.mxu0 0.0
        %8263 = vmatpush1.msra.mxu0 0.0
        %8264 = vmatprep.subr.mxu0 0.0
        %8265 = vmatpush1.msra.mxu0 0.0
        %8266 = vmatprep.subr.mxu0 0.0
        %8267 = vmatpush1.msra.mxu0 0.0
        %8268 = vmatprep.subr.mxu0 0.0
        %8269 = vmatpush1.msra.mxu0 0.0
        %8270 = vmatprep.subr.mxu0 0.0
        %8271 = vmatpush1.msra.mxu0 0.0
        %8272 = vmatprep.subr.mxu0 0.0
        %8273 = vmatpush1.msra.mxu0 0.0
        %8274 = vmatprep.subr.mxu0 0.0
        %8275 = vmatpush1.msra.mxu0 0.0
        %8276 = vmatprep.subr.mxu0 0.0
        %8277 = vmatpush1.msra.mxu0 0.0
        %8278 = vmatprep.subr.mxu0 0.0
        %8279 = vmatpush1.msra.mxu0 0.0
        %8280 = vmatprep.subr.mxu0 0.0
        %8281 = vmatpush1.msra.mxu0 0.0
        %8282 = vmatprep.subr.mxu0 0.0
        %8283 = vmatpush1.msra.mxu0 0.0
        %8284 = vmatprep.subr.mxu0 0.0
        %8285 = vmatpush1.msra.mxu0 0.0
        %8286 = vmatprep.subr.mxu0 0.0
        %8287 = vmatpush1.msra.mxu0 0.0
        %8288 = vmatprep.subr.mxu0 0.0
        %8289 = vmatpush1.msra.mxu0 0.0
        %8290 = vmatprep.subr.mxu0 0.0
        %8291 = vmatpush1.msra.mxu0 0.0
        %8292 = vmatprep.subr.mxu0 0.0
        %8293 = vmatpush1.msra.mxu0 0.0
        %8294 = vmatprep.subr.mxu0 0.0
        %8295 = vmatpush1.msra.mxu0 0.0
        %8296 = vmatprep.subr.mxu0 0.0
        %8297 = vmatpush1.msra.mxu0 0.0
        %8298 = vmatprep.subr.mxu0 0.0
        %8299 = vmatpush1.msra.mxu0 0.0
        %8300 = vmatprep.subr.mxu0 0.0
        %8301 = vmatpush1.msra.mxu0 0.0
        %8302 = vmatprep.subr.mxu0 0.0
        %8303 = vmatpush1.msra.mxu0 0.0
        %8304 = vmatprep.subr.mxu0 0.0
        %8305 = vmatpush1.msra.mxu0 0.0
        %8306 = vmatprep.subr.mxu0 0.0
        %8307 = vmatpush1.msra.mxu0 0.0
        %8308 = vmatprep.subr.mxu0 0.0
        %8309 = vmatpush1.msra.mxu0 0.0
        %8310 = vmatprep.subr.mxu0 0.0
        %8311 = vmatpush1.msra.mxu0 0.0
        %8312 = vmatprep.subr.mxu0 0.0
        %8313 = vmatpush1.msra.mxu0 0.0
        %8314 = vmatprep.subr.mxu0 0.0
        %8315 = vmatpush1.msra.mxu0 0.0
        %8316 = vmatprep.subr.mxu0 0.0
        %8317 = vmatpush1.msra.mxu0 0.0
        %8318 = vmatprep.mubr.f32.mxu0 0.0
        %8319 = vmatmul.mubr.f32.gmra.mrb[0].mxu0 %v8159
        %v8320 = vpop.f32.mrb[0].mxu0
        %v8321 = vadd.f32 %v8155, %v8320
        %v8322 = vpop.f32.mrb[0].mxu0
        %8323 = vmatprep.mubr.f32.mxu0 0.0
        %8324 = vmatmul.mubr.f32.gmra.mrb[0].mxu0 %v8162
        %v8325 = vpop.f32.mrb[0].mxu0
        %v8326 = vadd.f32 %v8155, %v8325
        %v8327 = vpop.f32.mrb[0].mxu0
        %8328 = vmatprep.mubr.f32.mxu0 0.0
        %8329 = vmatmul.mubr.f32.gmra.mrb[0].mxu0 %v8165
        %v8330 = vpop.f32.mrb[0].mxu0
        %v8331 = vadd.f32 %v8155, %v8330
        %v8332 = vpop.f32.mrb[0].mxu0
        %8333 = vmatprep.mubr.f32.mxu0 0.0
        %8334 = vmatmul.mubr.f32.gmra.mrb[0].mxu0 %v8168
        %v8335 = vpop.f32.mrb[0].mxu0
        %v8336 = vadd.f32 %v8155, %v8335
        %v8337 = vpop.f32.mrb[0].mxu0
        %8338 = vmatprep.mubr.f32.mxu0 0.0
        %8339 = vmatmul.mubr.f32.gmra.mrb[0].mxu0 %v8171
        %v8340 = vpop.f32.mrb[0].mxu0
        %v8341 = vadd.f32 %v8155, %v8340
        %v8342 = vpop.f32.mrb[0].mxu0
        %8343 = vmatprep.mubr.f32.mxu0 0.0
        %8344 = vmatmul.mubr.f32.gmra.mrb[0].mxu0 %v8174
        %v8345 = vpop.f32.mrb[0].mxu0
        %v8346 = vadd.f32 %v8155, %v8345
        %v8347 = vpop.f32.mrb[0].mxu0
        %8348 = vmatprep.mubr.f32.mxu0 0.0
        %8349 = vmatmul.mubr.f32.gmra.mrb[0].mxu0 %v8177
        %v8350 = vpop.f32.mrb[0].mxu0
        %v8351 = vadd.f32 %v8155, %v8350
        %v8352 = vpop.f32.mrb[0].mxu0
        %8353 = vmatprep.mubr.f32.mxu0 0.0
        %8354 = vmatmul.mubr.f32.gmra.mrb[0].mxu0 %v8180
        %v8355 = vpop.f32.mrb[0].mxu0
        %v8356 = vadd.f32 %v8155, %v8355
        %v8357 = vpop.f32.mrb[0].mxu0
        %8358 = vmatprep.mubr.f32.mxu0 0.0
        %8359 = vmatmul.mubr.f32.gmra.mrb[0].mxu0 %v8183
        %v8360 = vpop.f32.mrb[0].mxu0
        %v8361 = vadd.f32 %v8155, %v8360
        %v8362 = vpop.f32.mrb[0].mxu0
        %8363 = vmatprep.mubr.f32.mxu0 0.0
        %8364 = vmatmul.mubr.f32.gmra.mrb[0].mxu0 %v8186
        %v8365 = vpop.f32.mrb[0].mxu0
        %v8366 = vadd.f32 %v8155, %v8365
        %v8367 = vpop.f32.mrb[0].mxu0
        %8368 = vmatprep.mubr.f32.mxu0 0.0
        %8369 = vmatmul.mubr.f32.gmra.mrb[0].mxu0 %v8189
        %v8370 = vpop.f32.mrb[0].mxu0
        %v8371 = vadd.f32 %v8155, %v8370
        %v8372 = vpop.f32.mrb[0].mxu0
        %8373 = vmatprep.mubr.f32.mxu0 0.0
        %8374 = vmatmul.mubr.f32.gmra.mrb[0].mxu0 %v8192
        %v8375 = vpop.f32.mrb[0].mxu0
        %v8376 = vadd.f32 %v8155, %v8375
        %v8377 = vpop.f32.mrb[0].mxu0
        %8378 = vmatprep.mubr.f32.mxu0 0.0
        %8379 = vmatmul.mubr.f32.gmra.mrb[0].mxu0 %v8195
        %v8380 = vpop.f32.mrb[0].mxu0
        %v8381 = vadd.f32 %v8155, %v8380
        %v8382 = vpop.f32.mrb[0].mxu0
        %8383 = vmatprep.mubr.f32.mxu0 0.0
        %8384 = vmatmul.mubr.f32.gmra.mrb[0].mxu0 %v8198
        %v8385 = vpop.f32.mrb[0].mxu0
        %v8386 = vadd.f32 %v8155, %v8385
        %v8387 = vpop.f32.mrb[0].mxu0
        %8388 = vmatprep.mubr.f32.mxu0 0.0
        %8389 = vmatmul.mubr.f32.gmra.mrb[0].mxu0 %v8201
        %v8390 = vpop.f32.mrb[0].mxu0
        %v8391 = vadd.f32 %v8155, %v8390
        %v8392 = vpop.f32.mrb[0].mxu0
        %8393 = vmatprep.mubr.f32.mxu0 0.0
        %8394 = vmatmul.mubr.f32.gmra.mrb[0].mxu0 %v8204
        %v8395 = vpop.f32.mrb[0].mxu0
        %v8396 = vadd.f32 %v8155, %v8395
        %v8397 = vpop.f32.mrb[0].mxu0
        %8398 = vmatprep.mubr.f32.mxu0 0.0
        %8399 = vmatmul.mubr.f32.gmra.mrb[0].mxu0 %v8207
        %v8400 = vpop.f32.mrb[0].mxu0
        %v8401 = vadd.f32 %v8155, %v8400
        %v8402 = vpop.f32.mrb[0].mxu0
        %8403 = vmatprep.mubr.f32.mxu0 0.0
        %8404 = vmatmul.mubr.f32.gmra.mrb[0].mxu0 %v8210
        %v8405 = vpop.f32.mrb[0].mxu0
        %v8406 = vadd.f32 %v8155, %v8405
        %v8407 = vpop.f32.mrb[0].mxu0
        %8408 = vmatprep.mubr.f32.mxu0 0.0
        %8409 = vmatmul.mubr.f32.gmra.mrb[0].mxu0 %v8213
        %v8410 = vpop.f32.mrb[0].mxu0
        %v8411 = vadd.f32 %v8155, %v8410
        %v8412 = vpop.f32.mrb[0].mxu0
        %8413 = vmatprep.mubr.f32.mxu0 0.0
        %8414 = vmatmul.mubr.f32.gmra.mrb[0].mxu0 %v8216
        %v8415 = vpop.f32.mrb[0].mxu0
        %v8416 = vadd.f32 %v8155, %v8415
        %v8417 = vpop.f32.mrb[0].mxu0
        %8418 = vmatprep.mubr.f32.mxu0 0.0
        %8419 = vmatmul.mubr.f32.gmra.mrb[0].mxu0 %v8219
        %v8420 = vpop.f32.mrb[0].mxu0
        %v8421 = vadd.f32 %v8155, %v8420
        %v8422 = vpop.f32.mrb[0].mxu0
        %8423 = vmatprep.mubr.f32.mxu0 0.0
        %8424 = vmatmul.mubr.f32.gmra.mrb[0].mxu0 %v8222
        %v8425 = vpop.f32.mrb[0].mxu0
        %v8426 = vadd.f32 %v8155, %v8425
        %v8427 = vpop.f32.mrb[0].mxu0
        %8428 = vmatprep.mubr.f32.mxu0 0.0
        %8429 = vmatmul.mubr.f32.gmra.mrb[0].mxu0 %v8225
        %v8430 = vpop.f32.mrb[0].mxu0
        %v8431 = vadd.f32 %v8155, %v8430
        %v8432 = vpop.f32.mrb[0].mxu0
        %8433 = vmatprep.mubr.f32.mxu0 0.0
        %8434 = vmatmul.mubr.f32.gmra.mrb[0].mxu0 %v8228
        %v8435 = vpop.f32.mrb[0].mxu0
        %v8436 = vadd.f32 %v8155, %v8435
        %v8437 = vpop.f32.mrb[0].mxu0
        %8438 = vmatprep.mubr.f32.mxu0 0.0
        %8439 = vmatmul.mubr.f32.gmra.mrb[0].mxu0 %v8231
        %v8440 = vpop.f32.mrb[0].mxu0
        %v8441 = vadd.f32 %v8155, %v8440
        %v8442 = vpop.f32.mrb[0].mxu0
        %8443 = vmatprep.mubr.f32.mxu0 0.0
        %8444 = vmatmul.mubr.f32.gmra.mrb[0].mxu0 %v8234
        %v8445 = vpop.f32.mrb[0].mxu0
        %v8446 = vadd.f32 %v8155, %v8445
        %v8447 = vpop.f32.mrb[0].mxu0
        %8448 = vmatprep.mubr.f32.mxu0 0.0
        %8449 = vmatmul.mubr.f32.gmra.mrb[0].mxu0 %v8237
        %v8450 = vpop.f32.mrb[0].mxu0
        %v8451 = vadd.f32 %v8155, %v8450
        %v8452 = vpop.f32.mrb[0].mxu0
        %8453 = vmatprep.mubr.f32.mxu0 0.0
        %8454 = vmatmul.mubr.f32.gmra.mrb[0].mxu0 %v8240
        %v8455 = vpop.f32.mrb[0].mxu0
        %v8456 = vadd.f32 %v8155, %v8455
        %v8457 = vpop.f32.mrb[0].mxu0
        %8458 = vmatprep.mubr.f32.mxu0 0.0
        %8459 = vmatmul.mubr.f32.gmra.mrb[0].mxu0 %v8243
        %v8460 = vpop.f32.mrb[0].mxu0
        %v8461 = vadd.f32 %v8155, %v8460
        %v8462 = vpop.f32.mrb[0].mxu0
        %8463 = vmatprep.mubr.f32.mxu0 0.0
        %8464 = vmatmul.mubr.f32.gmra.mrb[0].mxu0 %v8246
        %v8465 = vpop.f32.mrb[0].mxu0
        %v8466 = vadd.f32 %v8155, %v8465
        %v8467 = vpop.f32.mrb[0].mxu0
        %8468 = vmatprep.mubr.f32.mxu0 0.0
        %8469 = vmatmul.mubr.f32.gmra.mrb[0].mxu0 %v8249
        %v8470 = vpop.f32.mrb[0].mxu0
        %v8471 = vadd.f32 %v8155, %v8470
        %v8472 = vpop.f32.mrb[0].mxu0
        %8473 = vmatprep.mubr.f32.mxu0 0.0
        %8474 = vmatmul.mubr.f32.gmra.mrb[0].mxu0 %v8252
        %v8475 = vpop.f32.mrb[0].mxu0
        %v8476 = vadd.f32 %v8155, %v8475
        %v8477 = vpop.f32.mrb[0].mxu0
        %8478 = vdwg.mxu0
        %v8479 = vmax.f32 %v8321, 0.0
        %v8480 = vmax.f32 %v8326, 0.0
        %v8481 = vmax.f32 %v8331, 0.0
        %v8482 = vmax.f32 %v8336, 0.0
        %v8483 = vmax.f32 %v8341, 0.0
        %v8484 = vmax.f32 %v8346, 0.0
        %v8485 = vmax.f32 %v8351, 0.0
        %v8486 = vmax.f32 %v8356, 0.0
        %v8487 = vmax.f32 %v8361, 0.0
        %v8488 = vmax.f32 %v8366, 0.0
        %v8489 = vmax.f32 %v8371, 0.0
        %v8490 = vmax.f32 %v8376, 0.0
        %v8491 = vmax.f32 %v8381, 0.0
        %v8492 = vmax.f32 %v8386, 0.0
        %v8493 = vmax.f32 %v8391, 0.0
        %v8494 = vmax.f32 %v8396, 0.0
        %v8495 = vmax.f32 %v8401, 0.0
        %v8496 = vmax.f32 %v8406, 0.0
        %v8497 = vmax.f32 %v8411, 0.0
        %v8498 = vmax.f32 %v8416, 0.0
        %v8499 = vmax.f32 %v8421, 0.0
        %v8500 = vmax.f32 %v8426, 0.0
        %v8501 = vmax.f32 %v8431, 0.0
        %v8502 = vmax.f32 %v8436, 0.0
        %v8503 = vmax.f32 %v8441, 0.0
        %v8504 = vmax.f32 %v8446, 0.0
        %v8505 = vmax.f32 %v8451, 0.0
        %v8506 = vmax.f32 %v8456, 0.0
        %v8507 = vmax.f32 %v8461, 0.0
        %v8508 = vmax.f32 %v8466, 0.0
        %v8509 = vmax.f32 %v8471, 0.0
        %v8510 = vmax.f32 %v8476, 0.0
        %v8512 = vsel %vm8157, %v8479, 0
        %v8515 = vsel %vm8157, %v8480, 0
        %v8518 = vsel %vm8157, %v8481, 0
        %v8521 = vsel %vm8157, %v8482, 0
        %v8524 = vsel %vm8157, %v8483, 0
        %v8527 = vsel %vm8157, %v8484, 0
        %v8530 = vsel %vm8157, %v8485, 0
        %v8533 = vsel %vm8157, %v8486, 0
        %v8536 = vsel %vm8157, %v8487, 0
        %v8539 = vsel %vm8157, %v8488, 0
        %v8542 = vsel %vm8157, %v8489, 0
        %v8545 = vsel %vm8157, %v8490, 0
        %v8548 = vsel %vm8157, %v8491, 0
        %v8551 = vsel %vm8157, %v8492, 0
        %v8554 = vsel %vm8157, %v8493, 0
        %v8557 = vsel %vm8157, %v8494, 0
        %v8560 = vsel %vm8157, %v8495, 0
        %v8563 = vsel %vm8157, %v8496, 0
        %v8566 = vsel %vm8157, %v8497, 0
        %v8569 = vsel %vm8157, %v8498, 0
        %v8572 = vsel %vm8157, %v8499, 0
        %v8575 = vsel %vm8157, %v8500, 0
        %v8578 = vsel %vm8157, %v8501, 0
        %v8581 = vsel %vm8157, %v8502, 0
        %v8584 = vsel %vm8157, %v8503, 0
        %v8587 = vsel %vm8157, %v8504, 0
        %v8590 = vsel %vm8157, %v8505, 0
        %v8593 = vsel %vm8157, %v8506, 0
        %v8596 = vsel %vm8157, %v8507, 0
        %v8599 = vsel %vm8157, %v8508, 0
        %v8602 = vsel %vm8157, %v8509, 0
        %v8605 = vsel %vm8157, %v8510, 0
        %8607 = vmatprep.subr.mxu0 0.0
        %8608 = vmatpush1.msra.mxu0 %v8146
        %8609 = vmatprep.subr.mxu0 0.0
        %8610 = vmatpush1.msra.mxu0 %v8147
        %8611 = vmatprep.subr.mxu0 0.0
        %8612 = vmatpush1.msra.mxu0 %v8148
        %8613 = vmatprep.subr.mxu0 0.0
        %8614 = vmatpush1.msra.mxu0 %v8149
        %8615 = vmatprep.subr.mxu0 0.0
        %8616 = vmatpush1.msra.mxu0 0.0
        %8617 = vmatprep.subr.mxu0 0.0
        %8618 = vmatpush1.msra.mxu0 0.0
        %8619 = vmatprep.subr.mxu0 0.0
        %8620 = vmatpush1.msra.mxu0 0.0
        %8621 = vmatprep.subr.mxu0 0.0
        %8622 = vmatpush1.msra.mxu0 0.0
        %8623 = vmatprep.subr.mxu0 0.0
        %8624 = vmatpush1.msra.mxu0 0.0
        %8625 = vmatprep.subr.mxu0 0.0
        %8626 = vmatpush1.msra.mxu0 0.0
        %8627 = vmatprep.subr.mxu0 0.0
        %8628 = vmatpush1.msra.mxu0 0.0
        %8629 = vmatprep.subr.mxu0 0.0
        %8630 = vmatpush1.msra.mxu0 0.0
        %8631 = vmatprep.subr.mxu0 0.0
        %8632 = vmatpush1.msra.mxu0 0.0
        %8633 = vmatprep.subr.mxu0 0.0
        %8634 = vmatpush1.msra.mxu0 0.0
        %8635 = vmatprep.subr.mxu0 0.0
        %8636 = vmatpush1.msra.mxu0 0.0
        %8637 = vmatprep.subr.mxu0 0.0
        %8638 = vmatpush1.msra.mxu0 0.0
        %8639 = vmatprep.subr.mxu0 0.0
        %8640 = vmatpush1.msra.mxu0 0.0
        %8641 = vmatprep.subr.mxu0 0.0
        %8642 = vmatpush1.msra.mxu0 0.0
        %8643 = vmatprep.subr.mxu0 0.0
        %8644 = vmatpush1.msra.mxu0 0.0
        %8645 = vmatprep.subr.mxu0 0.0
        %8646 = vmatpush1.msra.mxu0 0.0
        %8647 = vmatprep.subr.mxu0 0.0
        %8648 = vmatpush1.msra.mxu0 0.0
        %8649 = vmatprep.subr.mxu0 0.0
        %8650 = vmatpush1.msra.mxu0 0.0
        %8651 = vmatprep.subr.mxu0 0.0
        %8652 = vmatpush1.msra.mxu0 0.0
        %8653 = vmatprep.subr.mxu0 0.0
        %8654 = vmatpush1.msra.mxu0 0.0
        %8655 = vmatprep.subr.mxu0 0.0
        %8656 = vmatpush1.msra.mxu0 0.0
        %8657 = vmatprep.subr.mxu0 0.0
        %8658 = vmatpush1.msra.mxu0 0.0
        %8659 = vmatprep.subr.mxu0 0.0
        %8660 = vmatpush1.msra.mxu0 0.0
        %8661 = vmatprep.subr.mxu0 0.0
        %8662 = vmatpush1.msra.mxu0 0.0
        %8663 = vmatprep.subr.mxu0 0.0
        %8664 = vmatpush1.msra.mxu0 0.0
        %8665 = vmatprep.subr.mxu0 0.0
        %8666 = vmatpush1.msra.mxu0 0.0
        %8667 = vmatprep.subr.mxu0 0.0
        %8668 = vmatpush1.msra.mxu0 0.0
        %8669 = vmatprep.subr.mxu0 0.0
        %8670 = vmatpush1.msra.mxu0 0.0
        %8671 = vmatprep.mubr.f32.mxu0 0.0
        %8672 = vmatmul.mubr.f32.gmra.mrb[0].mxu0 %v8512
        %v8673 = vpop.f32.mrb[0].mxu0
        %v8674 = vadd.f32 %v8155, %v8673
        %v8675 = vpop.f32.mrb[0].mxu0
        %8676 = vmatprep.mubr.f32.mxu0 0.0
        %8677 = vmatmul.mubr.f32.gmra.mrb[0].mxu0 %v8515
        %v8678 = vpop.f32.mrb[0].mxu0
        %v8679 = vadd.f32 %v8155, %v8678
        %v8680 = vpop.f32.mrb[0].mxu0
        %8681 = vmatprep.mubr.f32.mxu0 0.0
        %8682 = vmatmul.mubr.f32.gmra.mrb[0].mxu0 %v8518
        %v8683 = vpop.f32.mrb[0].mxu0
        %v8684 = vadd.f32 %v8155, %v8683
        %v8685 = vpop.f32.mrb[0].mxu0
        %8686 = vmatprep.mubr.f32.mxu0 0.0
        %8687 = vmatmul.mubr.f32.gmra.mrb[0].mxu0 %v8521
        %v8688 = vpop.f32.mrb[0].mxu0
        %v8689 = vadd.f32 %v8155, %v8688
        %v8690 = vpop.f32.mrb[0].mxu0
        %8691 = vmatprep.mubr.f32.mxu0 0.0
        %8692 = vmatmul.mubr.f32.gmra.mrb[0].mxu0 %v8524
        %v8693 = vpop.f32.mrb[0].mxu0
        %v8694 = vadd.f32 %v8155, %v8693
        %v8695 = vpop.f32.mrb[0].mxu0
        %8696 = vmatprep.mubr.f32.mxu0 0.0
        %8697 = vmatmul.mubr.f32.gmra.mrb[0].mxu0 %v8527
        %v8698 = vpop.f32.mrb[0].mxu0
        %v8699 = vadd.f32 %v8155, %v8698
        %v8700 = vpop.f32.mrb[0].mxu0
        %8701 = vmatprep.mubr.f32.mxu0 0.0
        %8702 = vmatmul.mubr.f32.gmra.mrb[0].mxu0 %v8530
        %v8703 = vpop.f32.mrb[0].mxu0
        %v8704 = vadd.f32 %v8155, %v8703
        %v8705 = vpop.f32.mrb[0].mxu0
        %8706 = vmatprep.mubr.f32.mxu0 0.0
        %8707 = vmatmul.mubr.f32.gmra.mrb[0].mxu0 %v8533
        %v8708 = vpop.f32.mrb[0].mxu0
        %v8709 = vadd.f32 %v8155, %v8708
        %v8710 = vpop.f32.mrb[0].mxu0
        %8711 = vmatprep.mubr.f32.mxu0 0.0
        %8712 = vmatmul.mubr.f32.gmra.mrb[0].mxu0 %v8536
        %v8713 = vpop.f32.mrb[0].mxu0
        %v8714 = vadd.f32 %v8155, %v8713
        %v8715 = vpop.f32.mrb[0].mxu0
        %8716 = vmatprep.mubr.f32.mxu0 0.0
        %8717 = vmatmul.mubr.f32.gmra.mrb[0].mxu0 %v8539
        %v8718 = vpop.f32.mrb[0].mxu0
        %v8719 = vadd.f32 %v8155, %v8718
        %v8720 = vpop.f32.mrb[0].mxu0
        %8721 = vmatprep.mubr.f32.mxu0 0.0
        %8722 = vmatmul.mubr.f32.gmra.mrb[0].mxu0 %v8542
        %v8723 = vpop.f32.mrb[0].mxu0
        %v8724 = vadd.f32 %v8155, %v8723
        %v8725 = vpop.f32.mrb[0].mxu0
        %8726 = vmatprep.mubr.f32.mxu0 0.0
        %8727 = vmatmul.mubr.f32.gmra.mrb[0].mxu0 %v8545
        %v8728 = vpop.f32.mrb[0].mxu0
        %v8729 = vadd.f32 %v8155, %v8728
        %v8730 = vpop.f32.mrb[0].mxu0
        %8731 = vmatprep.mubr.f32.mxu0 0.0
        %8732 = vmatmul.mubr.f32.gmra.mrb[0].mxu0 %v8548
        %v8733 = vpop.f32.mrb[0].mxu0
        %v8734 = vadd.f32 %v8155, %v8733
        %v8735 = vpop.f32.mrb[0].mxu0
        %8736 = vmatprep.mubr.f32.mxu0 0.0
        %8737 = vmatmul.mubr.f32.gmra.mrb[0].mxu0 %v8551
        %v8738 = vpop.f32.mrb[0].mxu0
        %v8739 = vadd.f32 %v8155, %v8738
        %v8740 = vpop.f32.mrb[0].mxu0
        %8741 = vmatprep.mubr.f32.mxu0 0.0
        %8742 = vmatmul.mubr.f32.gmra.mrb[0].mxu0 %v8554
        %v8743 = vpop.f32.mrb[0].mxu0
        %v8744 = vadd.f32 %v8155, %v8743
        %v8745 = vpop.f32.mrb[0].mxu0
        %8746 = vmatprep.mubr.f32.mxu0 0.0
        %8747 = vmatmul.mubr.f32.gmra.mrb[0].mxu0 %v8557
        %v8748 = vpop.f32.mrb[0].mxu0
        %v8749 = vadd.f32 %v8155, %v8748
        %v8750 = vpop.f32.mrb[0].mxu0
        %8751 = vmatprep.mubr.f32.mxu0 0.0
        %8752 = vmatmul.mubr.f32.gmra.mrb[0].mxu0 %v8560
        %v8753 = vpop.f32.mrb[0].mxu0
        %v8754 = vadd.f32 %v8155, %v8753
        %v8755 = vpop.f32.mrb[0].mxu0
        %8756 = vmatprep.mubr.f32.mxu0 0.0
        %8757 = vmatmul.mubr.f32.gmra.mrb[0].mxu0 %v8563
        %v8758 = vpop.f32.mrb[0].mxu0
        %v8759 = vadd.f32 %v8155, %v8758
        %v8760 = vpop.f32.mrb[0].mxu0
        %8761 = vmatprep.mubr.f32.mxu0 0.0
        %8762 = vmatmul.mubr.f32.gmra.mrb[0].mxu0 %v8566
        %v8763 = vpop.f32.mrb[0].mxu0
        %v8764 = vadd.f32 %v8155, %v8763
        %v8765 = vpop.f32.mrb[0].mxu0
        %8766 = vmatprep.mubr.f32.mxu0 0.0
        %8767 = vmatmul.mubr.f32.gmra.mrb[0].mxu0 %v8569
        %v8768 = vpop.f32.mrb[0].mxu0
        %v8769 = vadd.f32 %v8155, %v8768
        %v8770 = vpop.f32.mrb[0].mxu0
        %8771 = vmatprep.mubr.f32.mxu0 0.0
        %8772 = vmatmul.mubr.f32.gmra.mrb[0].mxu0 %v8572
        %v8773 = vpop.f32.mrb[0].mxu0
        %v8774 = vadd.f32 %v8155, %v8773
        %v8775 = vpop.f32.mrb[0].mxu0
        %8776 = vmatprep.mubr.f32.mxu0 0.0
        %8777 = vmatmul.mubr.f32.gmra.mrb[0].mxu0 %v8575
        %v8778 = vpop.f32.mrb[0].mxu0
        %v8779 = vadd.f32 %v8155, %v8778
        %v8780 = vpop.f32.mrb[0].mxu0
        %8781 = vmatprep.mubr.f32.mxu0 0.0
        %8782 = vmatmul.mubr.f32.gmra.mrb[0].mxu0 %v8578
        %v8783 = vpop.f32.mrb[0].mxu0
        %v8784 = vadd.f32 %v8155, %v8783
        %v8785 = vpop.f32.mrb[0].mxu0
        %8786 = vmatprep.mubr.f32.mxu0 0.0
        %8787 = vmatmul.mubr.f32.gmra.mrb[0].mxu0 %v8581
        %v8788 = vpop.f32.mrb[0].mxu0
        %v8789 = vadd.f32 %v8155, %v8788
        %v8790 = vpop.f32.mrb[0].mxu0
        %8791 = vmatprep.mubr.f32.mxu0 0.0
        %8792 = vmatmul.mubr.f32.gmra.mrb[0].mxu0 %v8584
        %v8793 = vpop.f32.mrb[0].mxu0
        %v8794 = vadd.f32 %v8155, %v8793
        %v8795 = vpop.f32.mrb[0].mxu0
        %8796 = vmatprep.mubr.f32.mxu0 0.0
        %8797 = vmatmul.mubr.f32.gmra.mrb[0].mxu0 %v8587
        %v8798 = vpop.f32.mrb[0].mxu0
        %v8799 = vadd.f32 %v8155, %v8798
        %v8800 = vpop.f32.mrb[0].mxu0
        %8801 = vmatprep.mubr.f32.mxu0 0.0
        %8802 = vmatmul.mubr.f32.gmra.mrb[0].mxu0 %v8590
        %v8803 = vpop.f32.mrb[0].mxu0
        %v8804 = vadd.f32 %v8155, %v8803
        %v8805 = vpop.f32.mrb[0].mxu0
        %8806 = vmatprep.mubr.f32.mxu0 0.0
        %8807 = vmatmul.mubr.f32.gmra.mrb[0].mxu0 %v8593
        %v8808 = vpop.f32.mrb[0].mxu0
        %v8809 = vadd.f32 %v8155, %v8808
        %v8810 = vpop.f32.mrb[0].mxu0
        %8811 = vmatprep.mubr.f32.mxu0 0.0
        %8812 = vmatmul.mubr.f32.gmra.mrb[0].mxu0 %v8596
        %v8813 = vpop.f32.mrb[0].mxu0
        %v8814 = vadd.f32 %v8155, %v8813
        %v8815 = vpop.f32.mrb[0].mxu0
        %8816 = vmatprep.mubr.f32.mxu0 0.0
        %8817 = vmatmul.mubr.f32.gmra.mrb[0].mxu0 %v8599
        %v8818 = vpop.f32.mrb[0].mxu0
        %v8819 = vadd.f32 %v8155, %v8818
        %v8820 = vpop.f32.mrb[0].mxu0
        %8821 = vmatprep.mubr.f32.mxu0 0.0
        %8822 = vmatmul.mubr.f32.gmra.mrb[0].mxu0 %v8602
        %v8823 = vpop.f32.mrb[0].mxu0
        %v8824 = vadd.f32 %v8155, %v8823
        %v8825 = vpop.f32.mrb[0].mxu0
        %8826 = vmatprep.mubr.f32.mxu0 0.0
        %8827 = vmatmul.mubr.f32.gmra.mrb[0].mxu0 %v8605
        %v8828 = vpop.f32.mrb[0].mxu0
        %v8829 = vadd.f32 %v8155, %v8828
        %v8830 = vpop.f32.mrb[0].mxu0
        %8831 = vdwg.mxu0
        %v8832 = vmax.f32 %v8674, 0.0
        %v8833 = vmax.f32 %v8679, 0.0
        %v8834 = vmax.f32 %v8684, 0.0
        %v8835 = vmax.f32 %v8689, 0.0
        %v8836 = vmax.f32 %v8694, 0.0
        %v8837 = vmax.f32 %v8699, 0.0
        %v8838 = vmax.f32 %v8704, 0.0
        %v8839 = vmax.f32 %v8709, 0.0
        %v8840 = vmax.f32 %v8714, 0.0
        %v8841 = vmax.f32 %v8719, 0.0
        %v8842 = vmax.f32 %v8724, 0.0
        %v8843 = vmax.f32 %v8729, 0.0
        %v8844 = vmax.f32 %v8734, 0.0
        %v8845 = vmax.f32 %v8739, 0.0
        %v8846 = vmax.f32 %v8744, 0.0
        %v8847 = vmax.f32 %v8749, 0.0
        %v8848 = vmax.f32 %v8754, 0.0
        %v8849 = vmax.f32 %v8759, 0.0
        %v8850 = vmax.f32 %v8764, 0.0
        %v8851 = vmax.f32 %v8769, 0.0
        %v8852 = vmax.f32 %v8774, 0.0
        %v8853 = vmax.f32 %v8779, 0.0
        %v8854 = vmax.f32 %v8784, 0.0
        %v8855 = vmax.f32 %v8789, 0.0
        %v8856 = vmax.f32 %v8794, 0.0
        %v8857 = vmax.f32 %v8799, 0.0
        %v8858 = vmax.f32 %v8804, 0.0
        %v8859 = vmax.f32 %v8809, 0.0
        %v8860 = vmax.f32 %v8814, 0.0
        %v8861 = vmax.f32 %v8819, 0.0
        %v8862 = vmax.f32 %v8824, 0.0
        %v8863 = vmax.f32 %v8829, 0.0
        %v8864 = vld [vmem:[%s7] sm:$0xff]
        %v8865 = vld [vmem:[%s7 + $0x8] sm:$0xff]
        %v8866 = vld [vmem:[%s7 + $0x10] sm:$0xff]
        %v8867 = vld [vmem:[%s7 + $0x18] sm:$0xff]
        %v8868 = vld [vmem:[%s8] sm:$0x1]
        %v8870 = vlaneseq
        %v8871 = vshrl.u32 %v8870, 7
        %v8872 = vsub.s32 0, %v8871
        %v8873 = vrot.slane %v8868, %v8872
        %v8876 = vsel %vm8157, %v8832, 0
        %v8879 = vsel %vm8157, %v8833, 0
        %v8882 = vsel %vm8157, %v8834, 0
        %v8885 = vsel %vm8157, %v8835, 0
        %v8888 = vsel %vm8157, %v8836, 0
        %v8891 = vsel %vm8157, %v8837, 0
        %v8894 = vsel %vm8157, %v8838, 0
        %v8897 = vsel %vm8157, %v8839, 0
        %v8900 = vsel %vm8157, %v8840, 0
        %v8903 = vsel %vm8157, %v8841, 0
        %v8906 = vsel %vm8157, %v8842, 0
        %v8909 = vsel %vm8157, %v8843, 0
        %v8912 = vsel %vm8157, %v8844, 0
        %v8915 = vsel %vm8157, %v8845, 0
        %v8918 = vsel %vm8157, %v8846, 0
        %v8921 = vsel %vm8157, %v8847, 0
        %v8924 = vsel %vm8157, %v8848, 0
        %v8927 = vsel %vm8157, %v8849, 0
        %v8930 = vsel %vm8157, %v8850, 0
        %v8933 = vsel %vm8157, %v8851, 0
        %v8936 = vsel %vm8157, %v8852, 0
        %v8939 = vsel %vm8157, %v8853, 0
        %v8942 = vsel %vm8157, %v8854, 0
        %v8945 = vsel %vm8157, %v8855, 0
        %v8948 = vsel %vm8157, %v8856, 0
        %v8951 = vsel %vm8157, %v8857, 0
        %v8954 = vsel %vm8157, %v8858, 0
        %v8957 = vsel %vm8157, %v8859, 0
        %v8960 = vsel %vm8157, %v8860, 0
        %v8963 = vsel %vm8157, %v8861, 0
        %v8966 = vsel %vm8157, %v8862, 0
        %v8969 = vsel %vm8157, %v8863, 0
        %8971 = vmatprep.subr.mxu0 0.0
        %8972 = vmatpush1.msra.mxu0 %v8864
        %8973 = vmatprep.subr.mxu0 0.0
        %8974 = vmatpush1.msra.mxu0 %v8865
        %8975 = vmatprep.subr.mxu0 0.0
        %8976 = vmatpush1.msra.mxu0 %v8866
        %8977 = vmatprep.subr.mxu0 0.0
        %8978 = vmatpush1.msra.mxu0 %v8867
        %8979 = vmatprep.subr.mxu0 0.0
        %8980 = vmatpush1.msra.mxu0 0.0
        %8981 = vmatprep.subr.mxu0 0.0
        %8982 = vmatpush1.msra.mxu0 0.0
        %8983 = vmatprep.subr.mxu0 0.0
        %8984 = vmatpush1.msra.mxu0 0.0
        %8985 = vmatprep.subr.mxu0 0.0
        %8986 = vmatpush1.msra.mxu0 0.0
        %8987 = vmatprep.subr.mxu0 0.0
        %8988 = vmatpush1.msra.mxu0 0.0
        %8989 = vmatprep.subr.mxu0 0.0
        %8990 = vmatpush1.msra.mxu0 0.0
        %8991 = vmatprep.subr.mxu0 0.0
        %8992 = vmatpush1.msra.mxu0 0.0
        %8993 = vmatprep.subr.mxu0 0.0
        %8994 = vmatpush1.msra.mxu0 0.0
        %8995 = vmatprep.subr.mxu0 0.0
        %8996 = vmatpush1.msra.mxu0 0.0
        %8997 = vmatprep.subr.mxu0 0.0
        %8998 = vmatpush1.msra.mxu0 0.0
        %8999 = vmatprep.subr.mxu0 0.0
        %9000 = vmatpush1.msra.mxu0 0.0
        %9001 = vmatprep.subr.mxu0 0.0
        %9002 = vmatpush1.msra.mxu0 0.0
        %9003 = vmatprep.subr.mxu0 0.0
        %9004 = vmatpush1.msra.mxu0 0.0
        %9005 = vmatprep.subr.mxu0 0.0
        %9006 = vmatpush1.msra.mxu0 0.0
        %9007 = vmatprep.subr.mxu0 0.0
        %9008 = vmatpush1.msra.mxu0 0.0
        %9009 = vmatprep.subr.mxu0 0.0
        %9010 = vmatpush1.msra.mxu0 0.0
        %9011 = vmatprep.subr.mxu0 0.0
        %9012 = vmatpush1.msra.mxu0 0.0
        %9013 = vmatprep.subr.mxu0 0.0
        %9014 = vmatpush1.msra.mxu0 0.0
        %9015 = vmatprep.subr.mxu0 0.0
        %9016 = vmatpush1.msra.mxu0 0.0
        %9017 = vmatprep.subr.mxu0 0.0
        %9018 = vmatpush1.msra.mxu0 0.0
        %9019 = vmatprep.subr.mxu0 0.0
        %9020 = vmatpush1.msra.mxu0 0.0
        %9021 = vmatprep.subr.mxu0 0.0
        %9022 = vmatpush1.msra.mxu0 0.0
        %9023 = vmatprep.subr.mxu0 0.0
        %9024 = vmatpush1.msra.mxu0 0.0
        %9025 = vmatprep.subr.mxu0 0.0
        %9026 = vmatpush1.msra.mxu0 0.0
        %9027 = vmatprep.subr.mxu0 0.0
        %9028 = vmatpush1.msra.mxu0 0.0
        %9029 = vmatprep.subr.mxu0 0.0
        %9030 = vmatpush1.msra.mxu0 0.0
        %9031 = vmatprep.subr.mxu0 0.0
        %9032 = vmatpush1.msra.mxu0 0.0
        %9033 = vmatprep.subr.mxu0 0.0
        %9034 = vmatpush1.msra.mxu0 0.0
        %9035 = vmatprep.mubr.f32.mxu0 0.0
        %9036 = vmatmul.mubr.f32.gmra.mrb[0].mxu0 %v8876
        %v9037 = vpop.f32.mrb[0].mxu0
        %v9038 = vadd.f32 %v8873, %v9037
        %v9039 = vpop.f32.mrb[0].mxu0
        %9040 = vmatprep.mubr.f32.mxu0 0.0
        %9041 = vmatmul.mubr.f32.gmra.mrb[0].mxu0 %v8879
        %v9042 = vpop.f32.mrb[0].mxu0
        %v9043 = vadd.f32 %v8873, %v9042
        %v9044 = vpop.f32.mrb[0].mxu0
        %9045 = vmatprep.mubr.f32.mxu0 0.0
        %9046 = vmatmul.mubr.f32.gmra.mrb[0].mxu0 %v8882
        %v9047 = vpop.f32.mrb[0].mxu0
        %v9048 = vadd.f32 %v8873, %v9047
        %v9049 = vpop.f32.mrb[0].mxu0
        %9050 = vmatprep.mubr.f32.mxu0 0.0
        %9051 = vmatmul.mubr.f32.gmra.mrb[0].mxu0 %v8885
        %v9052 = vpop.f32.mrb[0].mxu0
        %v9053 = vadd.f32 %v8873, %v9052
        %v9054 = vpop.f32.mrb[0].mxu0
        %9055 = vmatprep.mubr.f32.mxu0 0.0
        %9056 = vmatmul.mubr.f32.gmra.mrb[0].mxu0 %v8888
        %v9057 = vpop.f32.mrb[0].mxu0
        %v9058 = vadd.f32 %v8873, %v9057
        %v9059 = vpop.f32.mrb[0].mxu0
        %9060 = vmatprep.mubr.f32.mxu0 0.0
        %9061 = vmatmul.mubr.f32.gmra.mrb[0].mxu0 %v8891
        %v9062 = vpop.f32.mrb[0].mxu0
        %v9063 = vadd.f32 %v8873, %v9062
        %v9064 = vpop.f32.mrb[0].mxu0
        %9065 = vmatprep.mubr.f32.mxu0 0.0
        %9066 = vmatmul.mubr.f32.gmra.mrb[0].mxu0 %v8894
        %v9067 = vpop.f32.mrb[0].mxu0
        %v9068 = vadd.f32 %v8873, %v9067
        %v9069 = vpop.f32.mrb[0].mxu0
        %9070 = vmatprep.mubr.f32.mxu0 0.0
        %9071 = vmatmul.mubr.f32.gmra.mrb[0].mxu0 %v8897
        %v9072 = vpop.f32.mrb[0].mxu0
        %v9073 = vadd.f32 %v8873, %v9072
        %v9074 = vpop.f32.mrb[0].mxu0
        %9075 = vmatprep.mubr.f32.mxu0 0.0
        %9076 = vmatmul.mubr.f32.gmra.mrb[0].mxu0 %v8900
        %v9077 = vpop.f32.mrb[0].mxu0
        %v9078 = vadd.f32 %v8873, %v9077
        %v9079 = vpop.f32.mrb[0].mxu0
        %9080 = vmatprep.mubr.f32.mxu0 0.0
        %9081 = vmatmul.mubr.f32.gmra.mrb[0].mxu0 %v8903
        %v9082 = vpop.f32.mrb[0].mxu0
        %v9083 = vadd.f32 %v8873, %v9082
        %v9084 = vpop.f32.mrb[0].mxu0
        %9085 = vmatprep.mubr.f32.mxu0 0.0
        %9086 = vmatmul.mubr.f32.gmra.mrb[0].mxu0 %v8906
        %v9087 = vpop.f32.mrb[0].mxu0
        %v9088 = vadd.f32 %v8873, %v9087
        %v9089 = vpop.f32.mrb[0].mxu0
        %9090 = vmatprep.mubr.f32.mxu0 0.0
        %9091 = vmatmul.mubr.f32.gmra.mrb[0].mxu0 %v8909
        %v9092 = vpop.f32.mrb[0].mxu0
        %v9093 = vadd.f32 %v8873, %v9092
        %v9094 = vpop.f32.mrb[0].mxu0
        %9095 = vmatprep.mubr.f32.mxu0 0.0
        %9096 = vmatmul.mubr.f32.gmra.mrb[0].mxu0 %v8912
        %v9097 = vpop.f32.mrb[0].mxu0
        %v9098 = vadd.f32 %v8873, %v9097
        %v9099 = vpop.f32.mrb[0].mxu0
        %9100 = vmatprep.mubr.f32.mxu0 0.0
        %9101 = vmatmul.mubr.f32.gmra.mrb[0].mxu0 %v8915
        %v9102 = vpop.f32.mrb[0].mxu0
        %v9103 = vadd.f32 %v8873, %v9102
        %v9104 = vpop.f32.mrb[0].mxu0
        %9105 = vmatprep.mubr.f32.mxu0 0.0
        %9106 = vmatmul.mubr.f32.gmra.mrb[0].mxu0 %v8918
        %v9107 = vpop.f32.mrb[0].mxu0
        %v9108 = vadd.f32 %v8873, %v9107
        %v9109 = vpop.f32.mrb[0].mxu0
        %9110 = vmatprep.mubr.f32.mxu0 0.0
        %9111 = vmatmul.mubr.f32.gmra.mrb[0].mxu0 %v8921
        %v9112 = vpop.f32.mrb[0].mxu0
        %v9113 = vadd.f32 %v8873, %v9112
        %v9114 = vpop.f32.mrb[0].mxu0
        %9115 = vmatprep.mubr.f32.mxu0 0.0
        %9116 = vmatmul.mubr.f32.gmra.mrb[0].mxu0 %v8924
        %v9117 = vpop.f32.mrb[0].mxu0
        %v9118 = vadd.f32 %v8873, %v9117
        %v9119 = vpop.f32.mrb[0].mxu0
        %9120 = vmatprep.mubr.f32.mxu0 0.0
        %9121 = vmatmul.mubr.f32.gmra.mrb[0].mxu0 %v8927
        %v9122 = vpop.f32.mrb[0].mxu0
        %v9123 = vadd.f32 %v8873, %v9122
        %v9124 = vpop.f32.mrb[0].mxu0
        %9125 = vmatprep.mubr.f32.mxu0 0.0
        %9126 = vmatmul.mubr.f32.gmra.mrb[0].mxu0 %v8930
        %v9127 = vpop.f32.mrb[0].mxu0
        %v9128 = vadd.f32 %v8873, %v9127
        %v9129 = vpop.f32.mrb[0].mxu0
        %9130 = vmatprep.mubr.f32.mxu0 0.0
        %9131 = vmatmul.mubr.f32.gmra.mrb[0].mxu0 %v8933
        %v9132 = vpop.f32.mrb[0].mxu0
        %v9133 = vadd.f32 %v8873, %v9132
        %v9134 = vpop.f32.mrb[0].mxu0
        %9135 = vmatprep.mubr.f32.mxu0 0.0
        %9136 = vmatmul.mubr.f32.gmra.mrb[0].mxu0 %v8936
        %v9137 = vpop.f32.mrb[0].mxu0
        %v9138 = vadd.f32 %v8873, %v9137
        %v9139 = vpop.f32.mrb[0].mxu0
        %9140 = vmatprep.mubr.f32.mxu0 0.0
        %9141 = vmatmul.mubr.f32.gmra.mrb[0].mxu0 %v8939
        %v9142 = vpop.f32.mrb[0].mxu0
        %v9143 = vadd.f32 %v8873, %v9142
        %v9144 = vpop.f32.mrb[0].mxu0
        %9145 = vmatprep.mubr.f32.mxu0 0.0
        %9146 = vmatmul.mubr.f32.gmra.mrb[0].mxu0 %v8942
        %v9147 = vpop.f32.mrb[0].mxu0
        %v9148 = vadd.f32 %v8873, %v9147
        %v9149 = vpop.f32.mrb[0].mxu0
        %9150 = vmatprep.mubr.f32.mxu0 0.0
        %9151 = vmatmul.mubr.f32.gmra.mrb[0].mxu0 %v8945
        %v9152 = vpop.f32.mrb[0].mxu0
        %v9153 = vadd.f32 %v8873, %v9152
        %v9154 = vpop.f32.mrb[0].mxu0
        %9155 = vmatprep.mubr.f32.mxu0 0.0
        %9156 = vmatmul.mubr.f32.gmra.mrb[0].mxu0 %v8948
        %v9157 = vpop.f32.mrb[0].mxu0
        %v9158 = vadd.f32 %v8873, %v9157
        %v9159 = vpop.f32.mrb[0].mxu0
        %9160 = vmatprep.mubr.f32.mxu0 0.0
        %9161 = vmatmul.mubr.f32.gmra.mrb[0].mxu0 %v8951
        %v9162 = vpop.f32.mrb[0].mxu0
        %v9163 = vadd.f32 %v8873, %v9162
        %v9164 = vpop.f32.mrb[0].mxu0
        %9165 = vmatprep.mubr.f32.mxu0 0.0
        %9166 = vmatmul.mubr.f32.gmra.mrb[0].mxu0 %v8954
        %v9167 = vpop.f32.mrb[0].mxu0
        %v9168 = vadd.f32 %v8873, %v9167
        %v9169 = vpop.f32.mrb[0].mxu0
        %9170 = vmatprep.mubr.f32.mxu0 0.0
        %9171 = vmatmul.mubr.f32.gmra.mrb[0].mxu0 %v8957
        %v9172 = vpop.f32.mrb[0].mxu0
        %v9173 = vadd.f32 %v8873, %v9172
        %v9174 = vpop.f32.mrb[0].mxu0
        %9175 = vmatprep.mubr.f32.mxu0 0.0
        %9176 = vmatmul.mubr.f32.gmra.mrb[0].mxu0 %v8960
        %v9177 = vpop.f32.mrb[0].mxu0
        %v9178 = vadd.f32 %v8873, %v9177
        %v9179 = vpop.f32.mrb[0].mxu0
        %9180 = vmatprep.mubr.f32.mxu0 0.0
        %9181 = vmatmul.mubr.f32.gmra.mrb[0].mxu0 %v8963
        %v9182 = vpop.f32.mrb[0].mxu0
        %v9183 = vadd.f32 %v8873, %v9182
        %v9184 = vpop.f32.mrb[0].mxu0
        %9185 = vmatprep.mubr.f32.mxu0 0.0
        %9186 = vmatmul.mubr.f32.gmra.mrb[0].mxu0 %v8966
        %v9187 = vpop.f32.mrb[0].mxu0
        %v9188 = vadd.f32 %v8873, %v9187
        %v9189 = vpop.f32.mrb[0].mxu0
        %9190 = vmatprep.mubr.f32.mxu0 0.0
        %9191 = vmatmul.mubr.f32.gmra.mrb[0].mxu0 %v8969
        %v9192 = vpop.f32.mrb[0].mxu0
        %v9193 = vadd.f32 %v8873, %v9192
        %v9194 = vpop.f32.mrb[0].mxu0
        %9195 = vdwg.mxu0
        %v9196 = vmax.f32 %v9038, 0.0
        %v9197 = vmax.f32 %v9043, 0.0
        %v9198 = vmax.f32 %v9048, 0.0
        %v9199 = vmax.f32 %v9053, 0.0
        %v9200 = vmax.f32 %v9058, 0.0
        %v9201 = vmax.f32 %v9063, 0.0
        %v9202 = vmax.f32 %v9068, 0.0
        %v9203 = vmax.f32 %v9073, 0.0
        %v9204 = vmax.f32 %v9078, 0.0
        %v9205 = vmax.f32 %v9083, 0.0
        %v9206 = vmax.f32 %v9088, 0.0
        %v9207 = vmax.f32 %v9093, 0.0
        %v9208 = vmax.f32 %v9098, 0.0
        %v9209 = vmax.f32 %v9103, 0.0
        %v9210 = vmax.f32 %v9108, 0.0
        %v9211 = vmax.f32 %v9113, 0.0
        %v9212 = vmax.f32 %v9118, 0.0
        %v9213 = vmax.f32 %v9123, 0.0
        %v9214 = vmax.f32 %v9128, 0.0
        %v9215 = vmax.f32 %v9133, 0.0
        %v9216 = vmax.f32 %v9138, 0.0
        %v9217 = vmax.f32 %v9143, 0.0
        %v9218 = vmax.f32 %v9148, 0.0
        %v9219 = vmax.f32 %v9153, 0.0
        %v9220 = vmax.f32 %v9158, 0.0
        %v9221 = vmax.f32 %v9163, 0.0
        %v9222 = vmax.f32 %v9168, 0.0
        %v9223 = vmax.f32 %v9173, 0.0
        %v9224 = vmax.f32 %v9178, 0.0
        %v9225 = vmax.f32 %v9183, 0.0
        %v9226 = vmax.f32 %v9188, 0.0
        %v9227 = vmax.f32 %v9193, 0.0
        %v9228 = vld [vmem:[%s9] sm:$0xff]
        %v9229 = vld [vmem:[%s9 + $0x8] sm:$0xff]
        %v9230 = vld [vmem:[%s9 + $0x10] sm:$0xff]
        %v9231 = vld [vmem:[%s9 + $0x18] sm:$0xff]
        %v9232 = vld [vmem:[%s10] sm:$0x1]
        %v9234 = vlaneseq
        %v9235 = vshrl.u32 %v9234, 7
        %v9236 = vsub.s32 0, %v9235
        %v9237 = vrot.slane %v9232, %v9236
        %v9240 = vsel %vm8157, %v9196, 0
        %v9243 = vsel %vm8157, %v9197, 0
        %v9246 = vsel %vm8157, %v9198, 0
        %v9249 = vsel %vm8157, %v9199, 0
        %v9252 = vsel %vm8157, %v9200, 0
        %v9255 = vsel %vm8157, %v9201, 0
        %v9258 = vsel %vm8157, %v9202, 0
        %v9261 = vsel %vm8157, %v9203, 0
        %v9264 = vsel %vm8157, %v9204, 0
        %v9267 = vsel %vm8157, %v9205, 0
        %v9270 = vsel %vm8157, %v9206, 0
        %v9273 = vsel %vm8157, %v9207, 0
        %v9276 = vsel %vm8157, %v9208, 0
        %v9279 = vsel %vm8157, %v9209, 0
        %v9282 = vsel %vm8157, %v9210, 0
        %v9285 = vsel %vm8157, %v9211, 0
        %v9288 = vsel %vm8157, %v9212, 0
        %v9291 = vsel %vm8157, %v9213, 0
        %v9294 = vsel %vm8157, %v9214, 0
        %v9297 = vsel %vm8157, %v9215, 0
        %v9300 = vsel %vm8157, %v9216, 0
        %v9303 = vsel %vm8157, %v9217, 0
        %v9306 = vsel %vm8157, %v9218, 0
        %v9309 = vsel %vm8157, %v9219, 0
        %v9312 = vsel %vm8157, %v9220, 0
        %v9315 = vsel %vm8157, %v9221, 0
        %v9318 = vsel %vm8157, %v9222, 0
        %v9321 = vsel %vm8157, %v9223, 0
        %v9324 = vsel %vm8157, %v9224, 0
        %v9327 = vsel %vm8157, %v9225, 0
        %v9330 = vsel %vm8157, %v9226, 0
        %v9333 = vsel %vm8157, %v9227, 0
        %9335 = vmatprep.subr.mxu0 0.0
        %9336 = vmatpush1.msra.mxu0 %v9228
        %9337 = vmatprep.subr.mxu0 0.0
        %9338 = vmatpush1.msra.mxu0 %v9229
        %9339 = vmatprep.subr.mxu0 0.0
        %9340 = vmatpush1.msra.mxu0 %v9230
        %9341 = vmatprep.subr.mxu0 0.0
        %9342 = vmatpush1.msra.mxu0 %v9231
        %9343 = vmatprep.subr.mxu0 0.0
        %9344 = vmatpush1.msra.mxu0 0.0
        %9345 = vmatprep.subr.mxu0 0.0
        %9346 = vmatpush1.msra.mxu0 0.0
        %9347 = vmatprep.subr.mxu0 0.0
        %9348 = vmatpush1.msra.mxu0 0.0
        %9349 = vmatprep.subr.mxu0 0.0
        %9350 = vmatpush1.msra.mxu0 0.0
        %9351 = vmatprep.subr.mxu0 0.0
        %9352 = vmatpush1.msra.mxu0 0.0
        %9353 = vmatprep.subr.mxu0 0.0
        %9354 = vmatpush1.msra.mxu0 0.0
        %9355 = vmatprep.subr.mxu0 0.0
        %9356 = vmatpush1.msra.mxu0 0.0
        %9357 = vmatprep.subr.mxu0 0.0
        %9358 = vmatpush1.msra.mxu0 0.0
        %9359 = vmatprep.subr.mxu0 0.0
        %9360 = vmatpush1.msra.mxu0 0.0
        %9361 = vmatprep.subr.mxu0 0.0
        %9362 = vmatpush1.msra.mxu0 0.0
        %9363 = vmatprep.subr.mxu0 0.0
        %9364 = vmatpush1.msra.mxu0 0.0
        %9365 = vmatprep.subr.mxu0 0.0
        %9366 = vmatpush1.msra.mxu0 0.0
        %9367 = vmatprep.subr.mxu0 0.0
        %9368 = vmatpush1.msra.mxu0 0.0
        %9369 = vmatprep.subr.mxu0 0.0
        %9370 = vmatpush1.msra.mxu0 0.0
        %9371 = vmatprep.subr.mxu0 0.0
        %9372 = vmatpush1.msra.mxu0 0.0
        %9373 = vmatprep.subr.mxu0 0.0
        %9374 = vmatpush1.msra.mxu0 0.0
        %9375 = vmatprep.subr.mxu0 0.0
        %9376 = vmatpush1.msra.mxu0 0.0
        %9377 = vmatprep.subr.mxu0 0.0
        %9378 = vmatpush1.msra.mxu0 0.0
        %9379 = vmatprep.subr.mxu0 0.0
        %9380 = vmatpush1.msra.mxu0 0.0
        %9381 = vmatprep.subr.mxu0 0.0
        %9382 = vmatpush1.msra.mxu0 0.0
        %9383 = vmatprep.subr.mxu0 0.0
        %9384 = vmatpush1.msra.mxu0 0.0
        %9385 = vmatprep.subr.mxu0 0.0
        %9386 = vmatpush1.msra.mxu0 0.0
        %9387 = vmatprep.subr.mxu0 0.0
        %9388 = vmatpush1.msra.mxu0 0.0
        %9389 = vmatprep.subr.mxu0 0.0
        %9390 = vmatpush1.msra.mxu0 0.0
        %9391 = vmatprep.subr.mxu0 0.0
        %9392 = vmatpush1.msra.mxu0 0.0
        %9393 = vmatprep.subr.mxu0 0.0
        %9394 = vmatpush1.msra.mxu0 0.0
        %9395 = vmatprep.subr.mxu0 0.0
        %9396 = vmatpush1.msra.mxu0 0.0
        %9397 = vmatprep.subr.mxu0 0.0
        %9398 = vmatpush1.msra.mxu0 0.0
        %9399 = vmatprep.mubr.f32.mxu0 0.0
        %9400 = vmatmul.mubr.f32.gmra.mrb[0].mxu0 %v9240
        %v9401 = vpop.f32.mrb[0].mxu0
        %v9402 = vadd.f32 %v9237, %v9401
        %v9403 = vpop.f32.mrb[0].mxu0
        %9404 = vmatprep.mubr.f32.mxu0 0.0
        %9405 = vmatmul.mubr.f32.gmra.mrb[0].mxu0 %v9243
        %v9406 = vpop.f32.mrb[0].mxu0
        %v9407 = vadd.f32 %v9237, %v9406
        %v9408 = vpop.f32.mrb[0].mxu0
        %9409 = vmatprep.mubr.f32.mxu0 0.0
        %9410 = vmatmul.mubr.f32.gmra.mrb[0].mxu0 %v9246
        %v9411 = vpop.f32.mrb[0].mxu0
        %v9412 = vadd.f32 %v9237, %v9411
        %v9413 = vpop.f32.mrb[0].mxu0
        %9414 = vmatprep.mubr.f32.mxu0 0.0
        %9415 = vmatmul.mubr.f32.gmra.mrb[0].mxu0 %v9249
        %v9416 = vpop.f32.mrb[0].mxu0
        %v9417 = vadd.f32 %v9237, %v9416
        %v9418 = vpop.f32.mrb[0].mxu0
        %9419 = vmatprep.mubr.f32.mxu0 0.0
        %9420 = vmatmul.mubr.f32.gmra.mrb[0].mxu0 %v9252
        %v9421 = vpop.f32.mrb[0].mxu0
        %v9422 = vadd.f32 %v9237, %v9421
        %v9423 = vpop.f32.mrb[0].mxu0
        %9424 = vmatprep.mubr.f32.mxu0 0.0
        %9425 = vmatmul.mubr.f32.gmra.mrb[0].mxu0 %v9255
        %v9426 = vpop.f32.mrb[0].mxu0
        %v9427 = vadd.f32 %v9237, %v9426
        %v9428 = vpop.f32.mrb[0].mxu0
        %9429 = vmatprep.mubr.f32.mxu0 0.0
        %9430 = vmatmul.mubr.f32.gmra.mrb[0].mxu0 %v9258
        %v9431 = vpop.f32.mrb[0].mxu0
        %v9432 = vadd.f32 %v9237, %v9431
        %v9433 = vpop.f32.mrb[0].mxu0
        %9434 = vmatprep.mubr.f32.mxu0 0.0
        %9435 = vmatmul.mubr.f32.gmra.mrb[0].mxu0 %v9261
        %v9436 = vpop.f32.mrb[0].mxu0
        %v9437 = vadd.f32 %v9237, %v9436
        %v9438 = vpop.f32.mrb[0].mxu0
        %9439 = vmatprep.mubr.f32.mxu0 0.0
        %9440 = vmatmul.mubr.f32.gmra.mrb[0].mxu0 %v9264
        %v9441 = vpop.f32.mrb[0].mxu0
        %v9442 = vadd.f32 %v9237, %v9441
        %v9443 = vpop.f32.mrb[0].mxu0
        %9444 = vmatprep.mubr.f32.mxu0 0.0
        %9445 = vmatmul.mubr.f32.gmra.mrb[0].mxu0 %v9267
        %v9446 = vpop.f32.mrb[0].mxu0
        %v9447 = vadd.f32 %v9237, %v9446
        %v9448 = vpop.f32.mrb[0].mxu0
        %9449 = vmatprep.mubr.f32.mxu0 0.0
        %9450 = vmatmul.mubr.f32.gmra.mrb[0].mxu0 %v9270
        %v9451 = vpop.f32.mrb[0].mxu0
        %v9452 = vadd.f32 %v9237, %v9451
        %v9453 = vpop.f32.mrb[0].mxu0
        %9454 = vmatprep.mubr.f32.mxu0 0.0
        %9455 = vmatmul.mubr.f32.gmra.mrb[0].mxu0 %v9273
        %v9456 = vpop.f32.mrb[0].mxu0
        %v9457 = vadd.f32 %v9237, %v9456
        %v9458 = vpop.f32.mrb[0].mxu0
        %9459 = vmatprep.mubr.f32.mxu0 0.0
        %9460 = vmatmul.mubr.f32.gmra.mrb[0].mxu0 %v9276
        %v9461 = vpop.f32.mrb[0].mxu0
        %v9462 = vadd.f32 %v9237, %v9461
        %v9463 = vpop.f32.mrb[0].mxu0
        %9464 = vmatprep.mubr.f32.mxu0 0.0
        %9465 = vmatmul.mubr.f32.gmra.mrb[0].mxu0 %v9279
        %v9466 = vpop.f32.mrb[0].mxu0
        %v9467 = vadd.f32 %v9237, %v9466
        %v9468 = vpop.f32.mrb[0].mxu0
        %9469 = vmatprep.mubr.f32.mxu0 0.0
        %9470 = vmatmul.mubr.f32.gmra.mrb[0].mxu0 %v9282
        %v9471 = vpop.f32.mrb[0].mxu0
        %v9472 = vadd.f32 %v9237, %v9471
        %v9473 = vpop.f32.mrb[0].mxu0
        %9474 = vmatprep.mubr.f32.mxu0 0.0
        %9475 = vmatmul.mubr.f32.gmra.mrb[0].mxu0 %v9285
        %v9476 = vpop.f32.mrb[0].mxu0
        %v9477 = vadd.f32 %v9237, %v9476
        %v9478 = vpop.f32.mrb[0].mxu0
        %9479 = vmatprep.mubr.f32.mxu0 0.0
        %9480 = vmatmul.mubr.f32.gmra.mrb[0].mxu0 %v9288
        %v9481 = vpop.f32.mrb[0].mxu0
        %v9482 = vadd.f32 %v9237, %v9481
        %v9483 = vpop.f32.mrb[0].mxu0
        %9484 = vmatprep.mubr.f32.mxu0 0.0
        %9485 = vmatmul.mubr.f32.gmra.mrb[0].mxu0 %v9291
        %v9486 = vpop.f32.mrb[0].mxu0
        %v9487 = vadd.f32 %v9237, %v9486
        %v9488 = vpop.f32.mrb[0].mxu0
        %9489 = vmatprep.mubr.f32.mxu0 0.0
        %9490 = vmatmul.mubr.f32.gmra.mrb[0].mxu0 %v9294
        %v9491 = vpop.f32.mrb[0].mxu0
        %v9492 = vadd.f32 %v9237, %v9491
        %v9493 = vpop.f32.mrb[0].mxu0
        %9494 = vmatprep.mubr.f32.mxu0 0.0
        %9495 = vmatmul.mubr.f32.gmra.mrb[0].mxu0 %v9297
        %v9496 = vpop.f32.mrb[0].mxu0
        %v9497 = vadd.f32 %v9237, %v9496
        %v9498 = vpop.f32.mrb[0].mxu0
        %9499 = vmatprep.mubr.f32.mxu0 0.0
        %9500 = vmatmul.mubr.f32.gmra.mrb[0].mxu0 %v9300
        %v9501 = vpop.f32.mrb[0].mxu0
        %v9502 = vadd.f32 %v9237, %v9501
        %v9503 = vpop.f32.mrb[0].mxu0
        %9504 = vmatprep.mubr.f32.mxu0 0.0
        %9505 = vmatmul.mubr.f32.gmra.mrb[0].mxu0 %v9303
        %v9506 = vpop.f32.mrb[0].mxu0
        %v9507 = vadd.f32 %v9237, %v9506
        %v9508 = vpop.f32.mrb[0].mxu0
        %9509 = vmatprep.mubr.f32.mxu0 0.0
        %9510 = vmatmul.mubr.f32.gmra.mrb[0].mxu0 %v9306
        %v9511 = vpop.f32.mrb[0].mxu0
        %v9512 = vadd.f32 %v9237, %v9511
        %v9513 = vpop.f32.mrb[0].mxu0
        %9514 = vmatprep.mubr.f32.mxu0 0.0
        %9515 = vmatmul.mubr.f32.gmra.mrb[0].mxu0 %v9309
        %v9516 = vpop.f32.mrb[0].mxu0
        %v9517 = vadd.f32 %v9237, %v9516
        %v9518 = vpop.f32.mrb[0].mxu0
        %9519 = vmatprep.mubr.f32.mxu0 0.0
        %9520 = vmatmul.mubr.f32.gmra.mrb[0].mxu0 %v9312
        %v9521 = vpop.f32.mrb[0].mxu0
        %v9522 = vadd.f32 %v9237, %v9521
        %v9523 = vpop.f32.mrb[0].mxu0
        %9524 = vmatprep.mubr.f32.mxu0 0.0
        %9525 = vmatmul.mubr.f32.gmra.mrb[0].mxu0 %v9315
        %v9526 = vpop.f32.mrb[0].mxu0
        %v9527 = vadd.f32 %v9237, %v9526
        %v9528 = vpop.f32.mrb[0].mxu0
        %9529 = vmatprep.mubr.f32.mxu0 0.0
        %9530 = vmatmul.mubr.f32.gmra.mrb[0].mxu0 %v9318
        %v9531 = vpop.f32.mrb[0].mxu0
        %v9532 = vadd.f32 %v9237, %v9531
        %v9533 = vpop.f32.mrb[0].mxu0
        %9534 = vmatprep.mubr.f32.mxu0 0.0
        %9535 = vmatmul.mubr.f32.gmra.mrb[0].mxu0 %v9321
        %v9536 = vpop.f32.mrb[0].mxu0
        %v9537 = vadd.f32 %v9237, %v9536
        %v9538 = vpop.f32.mrb[0].mxu0
        %9539 = vmatprep.mubr.f32.mxu0 0.0
        %9540 = vmatmul.mubr.f32.gmra.mrb[0].mxu0 %v9324
        %v9541 = vpop.f32.mrb[0].mxu0
        %v9542 = vadd.f32 %v9237, %v9541
        %v9543 = vpop.f32.mrb[0].mxu0
        %9544 = vmatprep.mubr.f32.mxu0 0.0
        %9545 = vmatmul.mubr.f32.gmra.mrb[0].mxu0 %v9327
        %v9546 = vpop.f32.mrb[0].mxu0
        %v9547 = vadd.f32 %v9237, %v9546
        %v9548 = vpop.f32.mrb[0].mxu0
        %9549 = vmatprep.mubr.f32.mxu0 0.0
        %9550 = vmatmul.mubr.f32.gmra.mrb[0].mxu0 %v9330
        %v9551 = vpop.f32.mrb[0].mxu0
        %v9552 = vadd.f32 %v9237, %v9551
        %v9553 = vpop.f32.mrb[0].mxu0
        %9554 = vmatprep.mubr.f32.mxu0 0.0
        %9555 = vmatmul.mubr.f32.gmra.mrb[0].mxu0 %v9333
        %v9556 = vpop.f32.mrb[0].mxu0
        %v9557 = vadd.f32 %v9237, %v9556
        %v9558 = vpop.f32.mrb[0].mxu0
        %9559 = vdwg.mxu0
        %v9560 = vlaneseq
        %v9561 = vand.u32 %v9560, 127
        %v9562 = vsub.f32 0.0, %v9402
        %v9563 = vsub.f32 0.0, %v9407
        %v9564 = vsub.f32 0.0, %v9412
        %v9565 = vsub.f32 0.0, %v9417
        %v9566 = vsub.f32 0.0, %v9422
        %v9567 = vsub.f32 0.0, %v9427
        %v9568 = vsub.f32 0.0, %v9432
        %v9569 = vsub.f32 0.0, %v9437
        %v9570 = vsub.f32 0.0, %v9442
        %v9571 = vsub.f32 0.0, %v9447
        %v9572 = vsub.f32 0.0, %v9452
        %v9573 = vsub.f32 0.0, %v9457
        %v9574 = vsub.f32 0.0, %v9462
        %v9575 = vsub.f32 0.0, %v9467
        %v9576 = vsub.f32 0.0, %v9472
        %v9577 = vsub.f32 0.0, %v9477
        %v9578 = vsub.f32 0.0, %v9482
        %v9579 = vsub.f32 0.0, %v9487
        %v9580 = vsub.f32 0.0, %v9492
        %v9581 = vsub.f32 0.0, %v9497
        %v9582 = vsub.f32 0.0, %v9502
        %v9583 = vsub.f32 0.0, %v9507
        %v9584 = vsub.f32 0.0, %v9512
        %v9585 = vsub.f32 0.0, %v9517
        %v9586 = vsub.f32 0.0, %v9522
        %v9587 = vsub.f32 0.0, %v9527
        %v9588 = vsub.f32 0.0, %v9532
        %v9589 = vsub.f32 0.0, %v9537
        %v9590 = vsub.f32 0.0, %v9542
        %v9591 = vsub.f32 0.0, %v9547
        %v9592 = vsub.f32 0.0, %v9552
        %v9593 = vsub.f32 0.0, %v9557
        %v9594 = vmul.f32 %v9562, 1.442695
        %v9595 = vpow.pop %v9594
        %v9596 = vmul.f32 %v9563, 1.442695
        %v9597 = vpow.pop %v9596
        %v9598 = vmul.f32 %v9564, 1.442695
        %v9599 = vpow.pop %v9598
        %v9600 = vmul.f32 %v9565, 1.442695
        %v9601 = vpow.pop %v9600
        %v9602 = vmul.f32 %v9566, 1.442695
        %v9603 = vpow.pop %v9602
        %v9604 = vmul.f32 %v9567, 1.442695
        %v9605 = vpow.pop %v9604
        %v9606 = vmul.f32 %v9568, 1.442695
        %v9607 = vpow.pop %v9606
        %v9608 = vmul.f32 %v9569, 1.442695
        %v9609 = vpow.pop %v9608
        %v9610 = vmul.f32 %v9570, 1.442695
        %v9611 = vpow.pop %v9610
        %v9612 = vmul.f32 %v9571, 1.442695
        %v9613 = vpow.pop %v9612
        %v9614 = vmul.f32 %v9572, 1.442695
        %v9615 = vpow.pop %v9614
        %v9616 = vmul.f32 %v9573, 1.442695
        %v9617 = vpow.pop %v9616
        %v9618 = vmul.f32 %v9574, 1.442695
        %v9619 = vpow.pop %v9618
        %v9620 = vmul.f32 %v9575, 1.442695
        %v9621 = vpow.pop %v9620
        %v9622 = vmul.f32 %v9576, 1.442695
        %v9623 = vpow.pop %v9622
        %v9624 = vmul.f32 %v9577, 1.442695
        %v9625 = vpow.pop %v9624
        %v9626 = vmul.f32 %v9578, 1.442695
        %v9627 = vpow.pop %v9626
        %v9628 = vmul.f32 %v9579, 1.442695
        %v9629 = vpow.pop %v9628
        %v9630 = vmul.f32 %v9580, 1.442695
        %v9631 = vpow.pop %v9630
        %v9632 = vmul.f32 %v9581, 1.442695
        %v9633 = vpow.pop %v9632
        %v9634 = vmul.f32 %v9582, 1.442695
        %v9635 = vpow.pop %v9634
        %v9636 = vmul.f32 %v9583, 1.442695
        %v9637 = vpow.pop %v9636
        %v9638 = vmul.f32 %v9584, 1.442695
        %v9639 = vpow.pop %v9638
        %v9640 = vmul.f32 %v9585, 1.442695
        %v9641 = vpow.pop %v9640
        %v9642 = vmul.f32 %v9586, 1.442695
        %v9643 = vpow.pop %v9642
        %v9644 = vmul.f32 %v9587, 1.442695
        %v9645 = vpow.pop %v9644
        %v9646 = vmul.f32 %v9588, 1.442695
        %v9647 = vpow.pop %v9646
        %v9648 = vmul.f32 %v9589, 1.442695
        %v9649 = vpow.pop %v9648
        %v9650 = vmul.f32 %v9590, 1.442695
        %v9651 = vpow.pop %v9650
        %v9652 = vmul.f32 %v9591, 1.442695
        %v9653 = vpow.pop %v9652
        %v9654 = vmul.f32 %v9592, 1.442695
        %v9655 = vpow.pop %v9654
        %v9656 = vmul.f32 %v9593, 1.442695
        %v9657 = vpow.pop %v9656
        %v9658 = vadd.f32 %v9595, 1.0
        %v9659 = vadd.f32 %v9597, 1.0
        %v9660 = vadd.f32 %v9599, 1.0
        %v9661 = vadd.f32 %v9601, 1.0
        %v9662 = vadd.f32 %v9603, 1.0
        %v9663 = vadd.f32 %v9605, 1.0
        %v9664 = vadd.f32 %v9607, 1.0
        %v9665 = vadd.f32 %v9609, 1.0
        %v9666 = vadd.f32 %v9611, 1.0
        %v9667 = vadd.f32 %v9613, 1.0
        %v9668 = vadd.f32 %v9615, 1.0
        %v9669 = vadd.f32 %v9617, 1.0
        %v9670 = vadd.f32 %v9619, 1.0
        %v9671 = vadd.f32 %v9621, 1.0
        %v9672 = vadd.f32 %v9623, 1.0
        %v9673 = vadd.f32 %v9625, 1.0
        %v9674 = vadd.f32 %v9627, 1.0
        %v9675 = vadd.f32 %v9629, 1.0
        %v9676 = vadd.f32 %v9631, 1.0
        %v9677 = vadd.f32 %v9633, 1.0
        %v9678 = vadd.f32 %v9635, 1.0
        %v9679 = vadd.f32 %v9637, 1.0
        %v9680 = vadd.f32 %v9639, 1.0
        %v9681 = vadd.f32 %v9641, 1.0
        %v9682 = vadd.f32 %v9643, 1.0
        %v9683 = vadd.f32 %v9645, 1.0
        %v9684 = vadd.f32 %v9647, 1.0
        %v9685 = vadd.f32 %v9649, 1.0
        %v9686 = vadd.f32 %v9651, 1.0
        %v9687 = vadd.f32 %v9653, 1.0
        %v9688 = vadd.f32 %v9655, 1.0
        %v9689 = vadd.f32 %v9657, 1.0
        %v9690 = vrcp.pop %v9658
        %v9691 = vmul.f32 1.0, %v9690
        %v9692 = vrcp.pop %v9659
        %v9693 = vmul.f32 1.0, %v9692
        %v9694 = vrcp.pop %v9660
        %v9695 = vmul.f32 1.0, %v9694
        %v9696 = vrcp.pop %v9661
        %v9697 = vmul.f32 1.0, %v9696
        %v9698 = vrcp.pop %v9662
        %v9699 = vmul.f32 1.0, %v9698
        %v9700 = vrcp.pop %v9663
        %v9701 = vmul.f32 1.0, %v9700
        %v9702 = vrcp.pop %v9664
        %v9703 = vmul.f32 1.0, %v9702
        %v9704 = vrcp.pop %v9665
        %v9705 = vmul.f32 1.0, %v9704
        %v9706 = vrcp.pop %v9666
        %v9707 = vmul.f32 1.0, %v9706
        %v9708 = vrcp.pop %v9667
        %v9709 = vmul.f32 1.0, %v9708
        %v9710 = vrcp.pop %v9668
        %v9711 = vmul.f32 1.0, %v9710
        %v9712 = vrcp.pop %v9669
        %v9713 = vmul.f32 1.0, %v9712
        %v9714 = vrcp.pop %v9670
        %v9715 = vmul.f32 1.0, %v9714
        %v9716 = vrcp.pop %v9671
        %v9717 = vmul.f32 1.0, %v9716
        %v9718 = vrcp.pop %v9672
        %v9719 = vmul.f32 1.0, %v9718
        %v9720 = vrcp.pop %v9673
        %v9721 = vmul.f32 1.0, %v9720
        %v9722 = vrcp.pop %v9674
        %v9723 = vmul.f32 1.0, %v9722
        %v9724 = vrcp.pop %v9675
        %v9725 = vmul.f32 1.0, %v9724
        %v9726 = vrcp.pop %v9676
        %v9727 = vmul.f32 1.0, %v9726
        %v9728 = vrcp.pop %v9677
        %v9729 = vmul.f32 1.0, %v9728
        %v9730 = vrcp.pop %v9678
        %v9731 = vmul.f32 1.0, %v9730
        %v9732 = vrcp.pop %v9679
        %v9733 = vmul.f32 1.0, %v9732
        %v9734 = vrcp.pop %v9680
        %v9735 = vmul.f32 1.0, %v9734
        %v9736 = vrcp.pop %v9681
        %v9737 = vmul.f32 1.0, %v9736
        %v9738 = vrcp.pop %v9682
        %v9739 = vmul.f32 1.0, %v9738
        %v9740 = vrcp.pop %v9683
        %v9741 = vmul.f32 1.0, %v9740
        %v9742 = vrcp.pop %v9684
        %v9743 = vmul.f32 1.0, %v9742
        %v9744 = vrcp.pop %v9685
        %v9745 = vmul.f32 1.0, %v9744
        %v9746 = vrcp.pop %v9686
        %v9747 = vmul.f32 1.0, %v9746
        %v9748 = vrcp.pop %v9687
        %v9749 = vmul.f32 1.0, %v9748
        %v9750 = vrcp.pop %v9688
        %v9751 = vmul.f32 1.0, %v9750
        %v9752 = vrcp.pop %v9689
        %v9753 = vmul.f32 1.0, %v9752
        %v9754 = vmax.f32 %v9402, 0.0
        %v9755 = vmax.f32 %v9407, 0.0
        %v9756 = vmax.f32 %v9412, 0.0
        %v9757 = vmax.f32 %v9417, 0.0
        %v9758 = vmax.f32 %v9422, 0.0
        %v9759 = vmax.f32 %v9427, 0.0
        %v9760 = vmax.f32 %v9432, 0.0
        %v9761 = vmax.f32 %v9437, 0.0
        %v9762 = vmax.f32 %v9442, 0.0
        %v9763 = vmax.f32 %v9447, 0.0
        %v9764 = vmax.f32 %v9452, 0.0
        %v9765 = vmax.f32 %v9457, 0.0
        %v9766 = vmax.f32 %v9462, 0.0
        %v9767 = vmax.f32 %v9467, 0.0
        %v9768 = vmax.f32 %v9472, 0.0
        %v9769 = vmax.f32 %v9477, 0.0
        %v9770 = vmax.f32 %v9482, 0.0
        %v9771 = vmax.f32 %v9487, 0.0
        %v9772 = vmax.f32 %v9492, 0.0
        %v9773 = vmax.f32 %v9497, 0.0
        %v9774 = vmax.f32 %v9502, 0.0
        %v9775 = vmax.f32 %v9507, 0.0
        %v9776 = vmax.f32 %v9512, 0.0
        %v9777 = vmax.f32 %v9517, 0.0
        %v9778 = vmax.f32 %v9522, 0.0
        %v9779 = vmax.f32 %v9527, 0.0
        %v9780 = vmax.f32 %v9532, 0.0
        %v9781 = vmax.f32 %v9537, 0.0
        %v9782 = vmax.f32 %v9542, 0.0
        %v9783 = vmax.f32 %v9547, 0.0
        %v9784 = vmax.f32 %v9552, 0.0
        %v9785 = vmax.f32 %v9557, 0.0
        %v9786 = vand.u32 2147483647, %v9402
        %v9787 = vand.u32 2147483647, %v9407
        %v9788 = vand.u32 2147483647, %v9412
        %v9789 = vand.u32 2147483647, %v9417
        %v9790 = vand.u32 2147483647, %v9422
        %v9791 = vand.u32 2147483647, %v9427
        %v9792 = vand.u32 2147483647, %v9432
        %v9793 = vand.u32 2147483647, %v9437
        %v9794 = vand.u32 2147483647, %v9442
        %v9795 = vand.u32 2147483647, %v9447
        %v9796 = vand.u32 2147483647, %v9452
        %v9797 = vand.u32 2147483647, %v9457
        %v9798 = vand.u32 2147483647, %v9462
        %v9799 = vand.u32 2147483647, %v9467
        %v9800 = vand.u32 2147483647, %v9472
        %v9801 = vand.u32 2147483647, %v9477
        %v9802 = vand.u32 2147483647, %v9482
        %v9803 = vand.u32 2147483647, %v9487
        %v9804 = vand.u32 2147483647, %v9492
        %v9805 = vand.u32 2147483647, %v9497
        %v9806 = vand.u32 2147483647, %v9502
        %v9807 = vand.u32 2147483647, %v9507
        %v9808 = vand.u32 2147483647, %v9512
        %v9809 = vand.u32 2147483647, %v9517
        %v9810 = vand.u32 2147483647, %v9522
        %v9811 = vand.u32 2147483647, %v9527
        %v9812 = vand.u32 2147483647, %v9532
        %v9813 = vand.u32 2147483647, %v9537
        %v9814 = vand.u32 2147483647, %v9542
        %v9815 = vand.u32 2147483647, %v9547
        %v9816 = vand.u32 2147483647, %v9552
        %v9817 = vand.u32 2147483647, %v9557
        %v9818 = vsub.f32 0.0, %v9786
        %v9819 = vsub.f32 0.0, %v9787
        %v9820 = vsub.f32 0.0, %v9788
        %v9821 = vsub.f32 0.0, %v9789
        %v9822 = vsub.f32 0.0, %v9790
        %v9823 = vsub.f32 0.0, %v9791
        %v9824 = vsub.f32 0.0, %v9792
        %v9825 = vsub.f32 0.0, %v9793
        %v9826 = vsub.f32 0.0, %v9794
        %v9827 = vsub.f32 0.0, %v9795
        %v9828 = vsub.f32 0.0, %v9796
        %v9829 = vsub.f32 0.0, %v9797
        %v9830 = vsub.f32 0.0, %v9798
        %v9831 = vsub.f32 0.0, %v9799
        %v9832 = vsub.f32 0.0, %v9800
        %v9833 = vsub.f32 0.0, %v9801
        %v9834 = vsub.f32 0.0, %v9802
        %v9835 = vsub.f32 0.0, %v9803
        %v9836 = vsub.f32 0.0, %v9804
        %v9837 = vsub.f32 0.0, %v9805
        %v9838 = vsub.f32 0.0, %v9806
        %v9839 = vsub.f32 0.0, %v9807
        %v9840 = vsub.f32 0.0, %v9808
        %v9841 = vsub.f32 0.0, %v9809
        %v9842 = vsub.f32 0.0, %v9810
        %v9843 = vsub.f32 0.0, %v9811
        %v9844 = vsub.f32 0.0, %v9812
        %v9845 = vsub.f32 0.0, %v9813
        %v9846 = vsub.f32 0.0, %v9814
        %v9847 = vsub.f32 0.0, %v9815
        %v9848 = vsub.f32 0.0, %v9816
        %v9849 = vsub.f32 0.0, %v9817
        %v9850 = vmul.f32 %v9818, 1.442695
        %v9851 = vpow.pop %v9850
        %v9852 = vmul.f32 %v9819, 1.442695
        %v9853 = vpow.pop %v9852
        %v9854 = vmul.f32 %v9820, 1.442695
        %v9855 = vpow.pop %v9854
        %v9856 = vmul.f32 %v9821, 1.442695
        %v9857 = vpow.pop %v9856
        %v9858 = vmul.f32 %v9822, 1.442695
        %v9859 = vpow.pop %v9858
        %v9860 = vmul.f32 %v9823, 1.442695
        %v9861 = vpow.pop %v9860
        %v9862 = vmul.f32 %v9824, 1.442695
        %v9863 = vpow.pop %v9862
        %v9864 = vmul.f32 %v9825, 1.442695
        %v9865 = vpow.pop %v9864
        %v9866 = vmul.f32 %v9826, 1.442695
        %v9867 = vpow.pop %v9866
        %v9868 = vmul.f32 %v9827, 1.442695
        %v9869 = vpow.pop %v9868
        %v9870 = vmul.f32 %v9828, 1.442695
        %v9871 = vpow.pop %v9870
        %v9872 = vmul.f32 %v9829, 1.442695
        %v9873 = vpow.pop %v9872
        %v9874 = vmul.f32 %v9830, 1.442695
        %v9875 = vpow.pop %v9874
        %v9876 = vmul.f32 %v9831, 1.442695
        %v9877 = vpow.pop %v9876
        %v9878 = vmul.f32 %v9832, 1.442695
        %v9879 = vpow.pop %v9878
        %v9880 = vmul.f32 %v9833, 1.442695
        %v9881 = vpow.pop %v9880
        %v9882 = vmul.f32 %v9834, 1.442695
        %v9883 = vpow.pop %v9882
        %v9884 = vmul.f32 %v9835, 1.442695
        %v9885 = vpow.pop %v9884
        %v9886 = vmul.f32 %v9836, 1.442695
        %v9887 = vpow.pop %v9886
        %v9888 = vmul.f32 %v9837, 1.442695
        %v9889 = vpow.pop %v9888
        %v9890 = vmul.f32 %v9838, 1.442695
        %v9891 = vpow.pop %v9890
        %v9892 = vmul.f32 %v9839, 1.442695
        %v9893 = vpow.pop %v9892
        %v9894 = vmul.f32 %v9840, 1.442695
        %v9895 = vpow.pop %v9894
        %v9896 = vmul.f32 %v9841, 1.442695
        %v9897 = vpow.pop %v9896
        %v9898 = vmul.f32 %v9842, 1.442695
        %v9899 = vpow.pop %v9898
        %v9900 = vmul.f32 %v9843, 1.442695
        %v9901 = vpow.pop %v9900
        %v9902 = vmul.f32 %v9844, 1.442695
        %v9903 = vpow.pop %v9902
        %v9904 = vmul.f32 %v9845, 1.442695
        %v9905 = vpow.pop %v9904
        %v9906 = vmul.f32 %v9846, 1.442695
        %v9907 = vpow.pop %v9906
        %v9908 = vmul.f32 %v9847, 1.442695
        %v9909 = vpow.pop %v9908
        %v9910 = vmul.f32 %v9848, 1.442695
        %v9911 = vpow.pop %v9910
        %v9912 = vmul.f32 %v9849, 1.442695
        %v9913 = vpow.pop %v9912
        %v9914 = vadd.f32 %v9851, 1.0
        %v9915 = vadd.f32 %v9853, 1.0
        %v9916 = vadd.f32 %v9855, 1.0
        %v9917 = vadd.f32 %v9857, 1.0
        %v9918 = vadd.f32 %v9859, 1.0
        %v9919 = vadd.f32 %v9861, 1.0
        %v9920 = vadd.f32 %v9863, 1.0
        %v9921 = vadd.f32 %v9865, 1.0
        %v9922 = vadd.f32 %v9867, 1.0
        %v9923 = vadd.f32 %v9869, 1.0
        %v9924 = vadd.f32 %v9871, 1.0
        %v9925 = vadd.f32 %v9873, 1.0
        %v9926 = vadd.f32 %v9875, 1.0
        %v9927 = vadd.f32 %v9877, 1.0
        %v9928 = vadd.f32 %v9879, 1.0
        %v9929 = vadd.f32 %v9881, 1.0
        %v9930 = vadd.f32 %v9883, 1.0
        %v9931 = vadd.f32 %v9885, 1.0
        %v9932 = vadd.f32 %v9887, 1.0
        %v9933 = vadd.f32 %v9889, 1.0
        %v9934 = vadd.f32 %v9891, 1.0
        %v9935 = vadd.f32 %v9893, 1.0
        %v9936 = vadd.f32 %v9895, 1.0
        %v9937 = vadd.f32 %v9897, 1.0
        %v9938 = vadd.f32 %v9899, 1.0
        %v9939 = vadd.f32 %v9901, 1.0
        %v9940 = vadd.f32 %v9903, 1.0
        %v9941 = vadd.f32 %v9905, 1.0
        %v9942 = vadd.f32 %v9907, 1.0
        %v9943 = vadd.f32 %v9909, 1.0
        %v9944 = vadd.f32 %v9911, 1.0
        %v9945 = vadd.f32 %v9913, 1.0
        %v9946 = vlog2.pop %v9914
        %v9947 = vmul.f32 %v9946, 0.6931472
        %v9948 = vlog2.pop %v9915
        %v9949 = vmul.f32 %v9948, 0.6931472
        %v9950 = vlog2.pop %v9916
        %v9951 = vmul.f32 %v9950, 0.6931472
        %v9952 = vlog2.pop %v9917
        %v9953 = vmul.f32 %v9952, 0.6931472
        %v9954 = vlog2.pop %v9918
        %v9955 = vmul.f32 %v9954, 0.6931472
        %v9956 = vlog2.pop %v9919
        %v9957 = vmul.f32 %v9956, 0.6931472
        %v9958 = vlog2.pop %v9920
        %v9959 = vmul.f32 %v9958, 0.6931472
        %v9960 = vlog2.pop %v9921
        %v9961 = vmul.f32 %v9960, 0.6931472
        %v9962 = vlog2.pop %v9922
        %v9963 = vmul.f32 %v9962, 0.6931472
        %v9964 = vlog2.pop %v9923
        %v9965 = vmul.f32 %v9964, 0.6931472
        %v9966 = vlog2.pop %v9924
        %v9967 = vmul.f32 %v9966, 0.6931472
        %v9968 = vlog2.pop %v9925
        %v9969 = vmul.f32 %v9968, 0.6931472
        %v9970 = vlog2.pop %v9926
        %v9971 = vmul.f32 %v9970, 0.6931472
        %v9972 = vlog2.pop %v9927
        %v9973 = vmul.f32 %v9972, 0.6931472
        %v9974 = vlog2.pop %v9928
        %v9975 = vmul.f32 %v9974, 0.6931472
        %v9976 = vlog2.pop %v9929
        %v9977 = vmul.f32 %v9976, 0.6931472
        %v9978 = vlog2.pop %v9930
        %v9979 = vmul.f32 %v9978, 0.6931472
        %v9980 = vlog2.pop %v9931
        %v9981 = vmul.f32 %v9980, 0.6931472
        %v9982 = vlog2.pop %v9932
        %v9983 = vmul.f32 %v9982, 0.6931472
        %v9984 = vlog2.pop %v9933
        %v9985 = vmul.f32 %v9984, 0.6931472
        %v9986 = vlog2.pop %v9934
        %v9987 = vmul.f32 %v9986, 0.6931472
        %v9988 = vlog2.pop %v9935
        %v9989 = vmul.f32 %v9988, 0.6931472
        %v9990 = vlog2.pop %v9936
        %v9991 = vmul.f32 %v9990, 0.6931472
        %v9992 = vlog2.pop %v9937
        %v9993 = vmul.f32 %v9992, 0.6931472
        %v9994 = vlog2.pop %v9938
        %v9995 = vmul.f32 %v9994, 0.6931472
        %v9996 = vlog2.pop %v9939
        %v9997 = vmul.f32 %v9996, 0.6931472
        %v9998 = vlog2.pop %v9940
        %v9999 = vmul.f32 %v9998, 0.6931472
        %v10000 = vlog2.pop %v9941
        %v10001 = vmul.f32 %v10000, 0.6931472
        %v10002 = vlog2.pop %v9942
        %v10003 = vmul.f32 %v10002, 0.6931472
        %v10004 = vlog2.pop %v9943
        %v10005 = vmul.f32 %v10004, 0.6931472
        %v10006 = vlog2.pop %v9944
        %v10007 = vmul.f32 %v10006, 0.6931472
        %v10008 = vlog2.pop %v9945
        %v10009 = vmul.f32 %v10008, 0.6931472
        %v10010 = vadd.f32 %v9754, %v9947
        %v10011 = vadd.f32 %v9755, %v9949
        %v10012 = vadd.f32 %v9756, %v9951
        %v10013 = vadd.f32 %v9757, %v9953
        %v10014 = vadd.f32 %v9758, %v9955
        %v10015 = vadd.f32 %v9759, %v9957
        %v10016 = vadd.f32 %v9760, %v9959
        %v10017 = vadd.f32 %v9761, %v9961
        %v10018 = vadd.f32 %v9762, %v9963
        %v10019 = vadd.f32 %v9763, %v9965
        %v10020 = vadd.f32 %v9764, %v9967
        %v10021 = vadd.f32 %v9765, %v9969
        %v10022 = vadd.f32 %v9766, %v9971
        %v10023 = vadd.f32 %v9767, %v9973
        %v10024 = vadd.f32 %v9768, %v9975
        %v10025 = vadd.f32 %v9769, %v9977
        %v10026 = vadd.f32 %v9770, %v9979
        %v10027 = vadd.f32 %v9771, %v9981
        %v10028 = vadd.f32 %v9772, %v9983
        %v10029 = vadd.f32 %v9773, %v9985
        %v10030 = vadd.f32 %v9774, %v9987
        %v10031 = vadd.f32 %v9775, %v9989
        %v10032 = vadd.f32 %v9776, %v9991
        %v10033 = vadd.f32 %v9777, %v9993
        %v10034 = vadd.f32 %v9778, %v9995
        %v10035 = vadd.f32 %v9779, %v9997
        %v10036 = vadd.f32 %v9780, %v9999
        %v10037 = vadd.f32 %v9781, %v10001
        %v10038 = vadd.f32 %v9782, %v10003
        %v10039 = vadd.f32 %v9783, %v10005
        %v10040 = vadd.f32 %v9784, %v10007
        %v10041 = vadd.f32 %v9785, %v10009
        %vm10042 = vcmp.lt.s32.totalorder %v9561, 14
        %vm10043 = vcmp.eq.s32.totalorder %v9561, 18
        %v10044 = vsel %vm10043, %v10010, %v9691
        %v10045 = vsel %vm10043, %v10011, %v9693
        %v10046 = vsel %vm10043, %v10012, %v9695
        %v10047 = vsel %vm10043, %v10013, %v9697
        %v10048 = vsel %vm10043, %v10014, %v9699
        %v10049 = vsel %vm10043, %v10015, %v9701
        %v10050 = vsel %vm10043, %v10016, %v9703
        %v10051 = vsel %vm10043, %v10017, %v9705
        %v10052 = vsel %vm10043, %v10018, %v9707
        %v10053 = vsel %vm10043, %v10019, %v9709
        %v10054 = vsel %vm10043, %v10020, %v9711
        %v10055 = vsel %vm10043, %v10021, %v9713
        %v10056 = vsel %vm10043, %v10022, %v9715
        %v10057 = vsel %vm10043, %v10023, %v9717
        %v10058 = vsel %vm10043, %v10024, %v9719
        %v10059 = vsel %vm10043, %v10025, %v9721
        %v10060 = vsel %vm10043, %v10026, %v9723
        %v10061 = vsel %vm10043, %v10027, %v9725
        %v10062 = vsel %vm10043, %v10028, %v9727
        %v10063 = vsel %vm10043, %v10029, %v9729
        %v10064 = vsel %vm10043, %v10030, %v9731
        %v10065 = vsel %vm10043, %v10031, %v9733
        %v10066 = vsel %vm10043, %v10032, %v9735
        %v10067 = vsel %vm10043, %v10033, %v9737
        %v10068 = vsel %vm10043, %v10034, %v9739
        %v10069 = vsel %vm10043, %v10035, %v9741
        %v10070 = vsel %vm10043, %v10036, %v9743
        %v10071 = vsel %vm10043, %v10037, %v9745
        %v10072 = vsel %vm10043, %v10038, %v9747
        %v10073 = vsel %vm10043, %v10039, %v9749
        %v10074 = vsel %vm10043, %v10040, %v9751
        %v10075 = vsel %vm10043, %v10041, %v9753
        %v10076 = vsel %vm10042, %v9402, %v10044
        %v10077 = vsel %vm10042, %v9407, %v10045
        %v10078 = vsel %vm10042, %v9412, %v10046
        %v10079 = vsel %vm10042, %v9417, %v10047
        %v10080 = vsel %vm10042, %v9422, %v10048
        %v10081 = vsel %vm10042, %v9427, %v10049
        %v10082 = vsel %vm10042, %v9432, %v10050
        %v10083 = vsel %vm10042, %v9437, %v10051
        %v10084 = vsel %vm10042, %v9442, %v10052
        %v10085 = vsel %vm10042, %v9447, %v10053
        %v10086 = vsel %vm10042, %v9452, %v10054
        %v10087 = vsel %vm10042, %v9457, %v10055
        %v10088 = vsel %vm10042, %v9462, %v10056
        %v10089 = vsel %vm10042, %v9467, %v10057
        %v10090 = vsel %vm10042, %v9472, %v10058
        %v10091 = vsel %vm10042, %v9477, %v10059
        %v10092 = vsel %vm10042, %v9482, %v10060
        %v10093 = vsel %vm10042, %v9487, %v10061
        %v10094 = vsel %vm10042, %v9492, %v10062
        %v10095 = vsel %vm10042, %v9497, %v10063
        %v10096 = vsel %vm10042, %v9502, %v10064
        %v10097 = vsel %vm10042, %v9507, %v10065
        %v10098 = vsel %vm10042, %v9512, %v10066
        %v10099 = vsel %vm10042, %v9517, %v10067
        %v10100 = vsel %vm10042, %v9522, %v10068
        %v10101 = vsel %vm10042, %v9527, %v10069
        %v10102 = vsel %vm10042, %v9532, %v10070
        %v10103 = vsel %vm10042, %v9537, %v10071
        %v10104 = vsel %vm10042, %v9542, %v10072
        %v10105 = vsel %vm10042, %v9547, %v10073
        %v10106 = vsel %vm10042, %v9552, %v10074
        %v10107 = vsel %vm10042, %v9557, %v10075
        %v10108 = vld [vmem:[%s11] sm:$0x1]
        %v10110 = vlaneseq
        %v10111 = vshrl.u32 %v10110, 7
        %v10112 = vsub.s32 0, %v10111
        %v10113 = vrot.slane %v10108, %v10112
        %v10115 = vmul.f32 %v10076, %v10113
        %v10116 = vmul.f32 %v10077, %v10113
        %v10117 = vmul.f32 %v10078, %v10113
        %v10118 = vmul.f32 %v10079, %v10113
        %v10119 = vmul.f32 %v10080, %v10113
        %v10120 = vmul.f32 %v10081, %v10113
        %v10121 = vmul.f32 %v10082, %v10113
        %v10122 = vmul.f32 %v10083, %v10113
        %v10123 = vmul.f32 %v10084, %v10113
        %v10124 = vmul.f32 %v10085, %v10113
        %v10125 = vmul.f32 %v10086, %v10113
        %v10126 = vmul.f32 %v10087, %v10113
        %v10127 = vmul.f32 %v10088, %v10113
        %v10128 = vmul.f32 %v10089, %v10113
        %v10129 = vmul.f32 %v10090, %v10113
        %v10130 = vmul.f32 %v10091, %v10113
        %v10131 = vmul.f32 %v10092, %v10113
        %v10132 = vmul.f32 %v10093, %v10113
        %v10133 = vmul.f32 %v10094, %v10113
        %v10134 = vmul.f32 %v10095, %v10113
        %v10135 = vmul.f32 %v10096, %v10113
        %v10136 = vmul.f32 %v10097, %v10113
        %v10137 = vmul.f32 %v10098, %v10113
        %v10138 = vmul.f32 %v10099, %v10113
        %v10139 = vmul.f32 %v10100, %v10113
        %v10140 = vmul.f32 %v10101, %v10113
        %v10141 = vmul.f32 %v10102, %v10113
        %v10142 = vmul.f32 %v10103, %v10113
        %v10143 = vmul.f32 %v10104, %v10113
        %v10144 = vmul.f32 %v10105, %v10113
        %v10145 = vmul.f32 %v10106, %v10113
        %v10146 = vmul.f32 %v10107, %v10113
        %10147 = vst [vmem:[%s407] sm:$0xff] %v10115
        %10148 = vst [vmem:[%s407 + $0x8] sm:$0xff] %v10116
        %10149 = vst [vmem:[%s407 + $0x10] sm:$0xff] %v10117
        %10150 = vst [vmem:[%s407 + $0x18] sm:$0xff] %v10118
        %10151 = vst [vmem:[%s407 + $0x20] sm:$0xff] %v10119
        %10152 = vst [vmem:[%s407 + $0x28] sm:$0xff] %v10120
        %10153 = vst [vmem:[%s407 + $0x30] sm:$0xff] %v10121
        %10154 = vst [vmem:[%s407 + $0x38] sm:$0xff] %v10122
        %10155 = vst [vmem:[%s407 + $0x40] sm:$0xff] %v10123
        %10156 = vst [vmem:[%s407 + $0x48] sm:$0xff] %v10124
        %10157 = vst [vmem:[%s407 + $0x50] sm:$0xff] %v10125
        %10158 = vst [vmem:[%s407 + $0x58] sm:$0xff] %v10126
        %10159 = vst [vmem:[%s407 + $0x60] sm:$0xff] %v10127
        %10160 = vst [vmem:[%s407 + $0x68] sm:$0xff] %v10128
        %10161 = vst [vmem:[%s407 + $0x70] sm:$0xff] %v10129
        %10162 = vst [vmem:[%s407 + $0x78] sm:$0xff] %v10130
        %10163 = vst [vmem:[%s407 + $0x80] sm:$0xff] %v10131
        %10164 = vst [vmem:[%s407 + $0x88] sm:$0xff] %v10132
        %10165 = vst [vmem:[%s407 + $0x90] sm:$0xff] %v10133
        %10166 = vst [vmem:[%s407 + $0x98] sm:$0xff] %v10134
        %10167 = vst [vmem:[%s407 + $0xa0] sm:$0xff] %v10135
        %10168 = vst [vmem:[%s407 + $0xa8] sm:$0xff] %v10136
        %10169 = vst [vmem:[%s407 + $0xb0] sm:$0xff] %v10137
        %10170 = vst [vmem:[%s407 + $0xb8] sm:$0xff] %v10138
        %10171 = vst [vmem:[%s407 + $0xc0] sm:$0xff] %v10139
        %10172 = vst [vmem:[%s407 + $0xc8] sm:$0xff] %v10140
        %10173 = vst [vmem:[%s407 + $0xd0] sm:$0xff] %v10141
        %10174 = vst [vmem:[%s407 + $0xd8] sm:$0xff] %v10142
        %10175 = vst [vmem:[%s407 + $0xe0] sm:$0xff] %v10143
        %10176 = vst [vmem:[%s407 + $0xe8] sm:$0xff] %v10144
        %10177 = vst [vmem:[%s407 + $0xf0] sm:$0xff] %v10145
        %10178 = vst [vmem:[%s407 + $0xf8] sm:$0xff] %v10146
        %s10179 = sand.u32 %s291, 1
        %s10180 = scalar_lea.sflag [#allocation3], %s10179
        %s10181 = sand.u32 %s291, 1
        %s10182 = smul.addr %s10181, 256
        %s10183 = scalar_lea.vmem [#allocation2], %s10182
        // Predicated region
        $region69: #{tpu_custom_call.1} parent=67 // pred_check
          %p10184 = pneg %p301
        $region70: #{tpu_custom_call.1} parent=67 // pred_check_branch
          %10186 = sbr.rel (%p10184) target = $region72
        $region71: #{tpu_custom_call.1} parent=67 // pred_region
          %s10187 = smul.u32 32, %s26
          %s10189 = ssub.s32 4096, 4096
          %10190 = vsyncadd %s10180, %s10189
          %s10191 = smul.addr %s10187, 128
          %s10192 = scalar_lea.hbm %s12, %s10191
          %s10193 = sshll.u32 %s10183, 4
          %s10194 = int_to_ptr.vmem [resolvable:$true] %s10193
          %10199 = dma.vmem_to_hbm [thread:$0]  %s10194, 4096, %s10192, %s10180, 128, 128, 8
        $region72: #{tpu_custom_call.1} parent=67 // pred_fallthru
          _
      $region68: #{tpu_custom_call.1} parent=5 // pred_fallthru
        _
      %p10200 = scmp.le.s32.totalorder 2, %s21
      // Predicated region
      $region73: #{tpu_custom_call.1} parent=5 // pred_check
        %p10201 = pneg %p10200
      $region74: #{tpu_custom_call.1} parent=5 // pred_check_branch
        %10203 = sbr.rel (%p10201) target = $region76
      $region75: #{tpu_custom_call.1} parent=5 // pred_region
        %s10204 = ssub.s32 %s21, 2
        // Predicated region
        $region77: #{tpu_custom_call.1} parent=75 // pred_check
          %p10205 = pneg %p307
        $region78: #{tpu_custom_call.1} parent=75 // pred_check_branch
          %10207 = sbr.rel (%p10205) target = $region80
        $region79: #{tpu_custom_call.1} parent=75 // pred_region
          %s10208 = sand.u32 %s292, 1
          %s10209 = scalar_lea.sflag [#allocation3], %s10208
          %s10210 = sand.u32 %s292, 1
          %s10211 = smul.addr %s10210, 256
          %s10212 = scalar_lea.vmem [#allocation2], %s10211
          %10213 = dma.done %s10209, 4096
        $region80: #{tpu_custom_call.1} parent=75 // pred_fallthru
          _
      $region76: #{tpu_custom_call.1} parent=5 // pred_fallthru
        _
    $region6: #{tpu_custom_call.1} parent=1 // loop_footer
      %s25 = sadd.s32 1, %s21
    $region7: #{tpu_custom_call.1} parent=1 // loop_footer_branch
      %20 = sbr.rel target = $region3
    $region8: #{tpu_custom_call.1} parent=1 // loop_exit
      _
    %10214 = vsyncpa [#allocation3], 1
    %s10215 = scalar_lea.sflag [#allocation3], 1
    %10216 = vsyncpa %s10215, 1

</llo_original>
